<compile_context>
chip_gen: v7x
topology: tpu7x:2x2x1
jax: 0.10.0
libtpu: 0.0.40
codegen_flags: <defaults>
</compile_context>

<pallas_src>
import jax
import jax.numpy as jnp
from jax.experimental import pallas as pl
from jax.experimental.pallas import tpu as pltpu

ALPHA = 8.0
GAMMA = 0.98
LN_EPS = 1e-5


def _layernorm_1pass(x, g, b):
    """Single-pass layernorm over the last (lane) axis; x must be f32."""
    mean = jnp.mean(x, axis=-1, keepdims=True)
    msq = jnp.mean(x * x, axis=-1, keepdims=True)
    var = msq - mean * mean
    return (x - mean) * jax.lax.rsqrt(var + LN_EPS) * g + b


def mdu_kernel(v_ref, q_ref, wrow_ref,           # (N,H) bf16, (N,H) bf16, (N,1) f32
               g1_ref, b1_ref, g2_ref, b2_ref,   # layernorm params (1,H) f32
               w1_ref, c1_ref, w2_ref, c2_ref,   # FCN params (H,H) bf16 / (1,H) f32
               mm_out_ref):                      # (N,H) bf16
    # ---- mm = norm1(v + q), f32 math on the flattened (TB*R, H) tile ----
    x = v_ref[...].astype(jnp.float32) + q_ref[...].astype(jnp.float32)
    mm = _layernorm_1pass(x, g1_ref[...], b1_ref[...])

    # ---- re-weight each row by its precomputed focal weight w[b, r] ----
    mm = wrow_ref[...] * mm                      # (N,1) lane-broadcast multiply

    # ---- FCN: Linear -> ReLU -> Linear; bf16 operands, f32 accumulation ----
    h = jnp.dot(mm.astype(jnp.bfloat16), w1_ref[...],
                preferred_element_type=jnp.float32) + c1_ref[...]
    h = jnp.maximum(h, 0.0)
    y = jnp.dot(h.astype(jnp.bfloat16), w2_ref[...],
                preferred_element_type=jnp.float32) + c2_ref[...]

    # ---- mm = norm2(mm + dropout(fc(mm)))   (dropout = identity in eval) ----
    mm_out_ref[...] = _layernorm_1pass(mm + y, g2_ref[...], b2_ref[...]
                                       ).astype(mm_out_ref.dtype)


def _default_tile_batch(bs):
    # Largest tile <= 64 that divides bs while leaving >= 4 grid steps
    # (keeps double-buffering and megacore sharding busy); fall back to any
    # divisor, then the whole batch.  Working set at TB=64 (~4-5 MiB) fits the
    # smallest default scoped VMEM (16 MiB on v5e) with no flags; on v7x
    # (64 MiB physical, 2 TCs) prefer tile_batch <= bs // 8.
    for tb in (64, 32, 16, 8):
        if bs % tb == 0 and bs // tb >= 4:
            return tb
    for tb in (64, 32, 16, 8):
        if bs % tb == 0:
            return tb
    return bs


def mdu_forward(v, q, att_map, ru, params, *, tile_batch=None):
    """MDU.forward(v, q, att_map, ru) -> (mm, ru_new).

    Heavy (bs*R, H) work (layernorms, re-weighting, FCN + residual) runs in one
    Pallas kernel; the tiny (bs, 36) recurrent-state math runs as plain JAX.
    For best performance feed v/q already stored as bf16 (the cast here is a
    no-op then); f32 inputs are accepted but add one extra HBM pass.
    """
    g1, b1, g2, b2, w1, c1, w2, c2 = params
    bs, R, H = v.shape
    assert att_map.shape[:2] == (bs, R) and ru.shape == (bs, R)

    TB = tile_batch if tile_batch is not None else _default_tile_batch(bs)
    assert bs % TB == 0, "batch must be divisible by the batch tile"
    assert TB % 8 == 0 or TB == bs, "batch tile must be a multiple of 8"
    n_steps = bs // TB
    N = TB * R

    # ---- tiny (bs, R) state math, hoisted out of the kernel (plain JAX) ----
    rg = jnp.sum(att_map.astype(jnp.float32), axis=-1)            # (bs, R)
    ru_f = ru.astype(jnp.float32)
    ru_new = ru_f * GAMMA + rg
    # global `ru.sum() == 0` condition (spans all batches, like the PyTorch `if`)
    ru_upd = jnp.where(jnp.sum(ru_f) == 0, ru_new, ru_new / (1.0 + GAMMA))
    # focal_att with queryL=1, sourceL=36:
    #   funcF[b,i] = ru[b,i] * sum_j sqrt(ru[b,j]) - sum_j ru[b,j]*sqrt(ru[b,j])
    sqrt_ru = jnp.sqrt(ru_upd)
    s = jnp.sum(sqrt_ru, axis=-1, keepdims=True)
    t = jnp.sum(ru_upd * sqrt_ru, axis=-1, keepdims=True)
    rm = (ru_upd * s - t > 0).astype(jnp.float32)
    ru_out = ALPHA * ru_upd * rm + (1.0 / ALPHA) * ru_upd * (1.0 - rm)
    w = ALPHA * rg * rm + (1.0 / ALPHA) * rg * (1.0 - rm)          # (bs, R)

    # ---- kernel inputs: flattened rows (free row-major view), bf16 storage ----
    v2 = v.reshape(bs * R, H).astype(jnp.bfloat16)
    q2 = q.reshape(bs * R, H).astype(jnp.bfloat16)
    w_col = w.reshape(bs * R, 1)                                   # f32 per-row weight
    w1b = w1.astype(jnp.bfloat16)
    w2b = w2.astype(jnp.bfloat16)

    row_spec = pl.BlockSpec((N, H), lambda b: (b, 0))
    col_spec = pl.BlockSpec((N, 1), lambda b: (b, 0))
    pspec = lambda shape: pl.BlockSpec(shape, lambda b: (0, 0))

    grid_spec = pltpu.PrefetchScalarGridSpec(
        num_scalar_prefetch=0,
        grid=(n_steps,),
        in_specs=[
            row_spec,            # v  (flattened, bf16)
            row_spec,            # q  (flattened, bf16)
            col_spec,            # per-row focal weight (f32)
            pspec((1, H)),       # g1
            pspec((1, H)),       # b1
            pspec((1, H)),       # g2
            pspec((1, H)),       # b2
            pspec((H, H)),       # w1 (bf16)
            pspec((1, H)),       # c1
            pspec((H, H)),       # w2 (bf16)
            pspec((1, H)),       # c2
        ],
        out_specs=row_spec,      # mm out (flattened, bf16)
    )

    cost = pl.CostEstimate(
        flops=4 * bs * R * H * H,            # two (bs*R,H)@(H,H) matmuls
        transcendentals=2 * bs * R,          # one rsqrt per row per layernorm
        bytes_accessed=(3 * bs * R * H * 2   # v, q reads + mm write (bf16)
                        + bs * R * 4         # f32 weight column
                        + 2 * H * H * 2      # FCN weights (bf16)
                        + 6 * H * 4),        # layernorm params + biases (f32)
    )

    mm_flat = pl.pallas_call(
        mdu_kernel,
        out_shape=jax.ShapeDtypeStruct((bs * R, H), jnp.bfloat16),
        grid_spec=grid_spec,
        compiler_params=pltpu.CompilerParams(
            dimension_semantics=("parallel",)),   # batch-tile axis shards across TCs
        cost_estimate=cost,
    )(v2, q2, w_col, g1, b1, g2, b2, w1b, c1, w2b, c2)

    return mm_flat.reshape(bs, R, H), ru_out


def mdu_reference(v, q, att_map, ru, params):
    """Pure-JAX reference of the same MDU forward (numerical sanity check)."""
    g1, b1, g2, b2, w1, c1, w2, c2 = params
    hp = jax.lax.Precision.HIGHEST
    v = v.astype(jnp.float32)
    q = q.astype(jnp.float32)
    att_map = att_map.astype(jnp.float32)
    ru = ru.astype(jnp.float32)

    def ln(x, g, b):
        mean = jnp.mean(x, axis=-1, keepdims=True)
        var = jnp.mean(jnp.square(x - mean), axis=-1, keepdims=True)
        return (x - mean) * jax.lax.rsqrt(var + LN_EPS) * g + b

    mm = ln(v + q, g1, b1)
    rg = jnp.sum(att_map, axis=-1)
    ru_new = ru * GAMMA + rg
    ru_upd = jnp.where(jnp.sum(ru) == 0, ru_new, ru_new / (1.0 + GAMMA))
    sqrt_ru = jnp.sqrt(ru_upd)
    s = jnp.sum(sqrt_ru, axis=-1, keepdims=True)
    t = jnp.sum(ru_upd * sqrt_ru, axis=-1, keepdims=True)
    rm = (ru_upd * s - t > 0).astype(jnp.float32)
    ru_out = ALPHA * ru_upd * rm + (1.0 / ALPHA) * ru_upd * (1.0 - rm)
    w = ALPHA * rg * rm + (1.0 / ALPHA) * rg * (1.0 - rm)
    mm = w[..., None] * mm
    h = jax.nn.relu(jnp.einsum('brh,hk->brk', mm, w1, precision=hp) + c1)
    y = jnp.einsum('brh,hk->brk', h, w2, precision=hp) + c2
    return ln(mm + y, g2, b2), ru_out


if __name__ == "__main__":
    # R=36 is forced by focal_att's hardcoded sourceL; H=128 keeps lanes dense
    # (MXU / vst-friendly).  bs=128 keeps the demo small while exercising the
    # default tile heuristic (TB=32 -> 4 grid steps).
    bs, R, H, S = 128, 36, 128, 36

    key = jax.random.PRNGKey(0)
    k = jax.random.split(key, 5)

    # activations stored in bf16 (the kernel's native HBM dtype)
    v = jax.random.normal(k[0], (bs, R, H), dtype=jnp.float32).astype(jnp.bfloat16)
    q = jax.random.normal(k[1], (bs, R, H), dtype=jnp.float32).astype(jnp.bfloat16)
    # mimic CoAtt's returned attention (softmax over the region axis, dim=2 in
    # the PyTorch code) so rg = att_map.sum(-1) is non-degenerate.
    att_map = jax.nn.softmax(jax.random.normal(k[2], (bs, R, S)), axis=1)
    ru0 = jnp.zeros((bs, R), dtype=jnp.float32)   # exercises the ru.sum()==0 branch

    # deterministic synthetic parameters (checkpoint-style f32)
    g1 = jnp.ones((1, H), jnp.float32); b1 = jnp.zeros((1, H), jnp.float32)
    g2 = jnp.ones((1, H), jnp.float32); b2 = jnp.zeros((1, H), jnp.float32)
    w1 = 0.05 * jax.random.normal(k[3], (H, H), dtype=jnp.float32)
    c1 = jnp.zeros((1, H), jnp.float32)
    w2 = 0.05 * jax.random.normal(k[4], (H, H), dtype=jnp.float32)
    c2 = jnp.zeros((1, H), jnp.float32)
    params = (g1, b1, g2, b2, w1, c1, w2, c2)

    fwd = jax.jit(mdu_forward)

    # call 1: ru == 0 branch; call 2: recurrent step exercising the (1+gamma) branch
    mm1, ru1 = fwd(v, q, att_map, ru0, params)
    mm2, ru2 = fwd(v, q, att_map, ru1, params)
    jax.block_until_ready((mm1, ru1, mm2, ru2))

    # numerical sanity check against the pure-JAX reference
    mm1_r, ru1_r = mdu_reference(v, q, att_map, ru0, params)
    mm2_r, ru2_r = mdu_reference(v, q, att_map, ru1, params)
    assert jnp.allclose(ru1, ru1_r, rtol=1e-3, atol=1e-3), "ru mismatch (call 1)"
    assert jnp.allclose(mm1.astype(jnp.float32), mm1_r, rtol=1e-1, atol=1e-1), \
        "mm mismatch (call 1)"
    assert jnp.allclose(ru2, ru2_r, rtol=1e-3, atol=1e-3), "ru mismatch (call 2)"
    assert jnp.allclose(mm2.astype(jnp.float32), mm2_r, rtol=1e-1, atol=1e-1), \
        "mm mismatch (call 2)"

    print("KERNEL_OK")
</pallas_src>

<mosaic_0001>
module attributes {stable_mosaic.version = 11 : i64} {
  func.func @mdu_kernel(%arg0: i32, %arg1: memref<1152x128xbf16, #tpu.memory_space<vmem>>, %arg2: memref<1152x128xbf16, #tpu.memory_space<vmem>>, %arg3: memref<1152x1xf32, #tpu.memory_space<vmem>>, %arg4: memref<1x128xf32, #tpu.memory_space<vmem>>, %arg5: memref<1x128xf32, #tpu.memory_space<vmem>>, %arg6: memref<1x128xf32, #tpu.memory_space<vmem>>, %arg7: memref<1x128xf32, #tpu.memory_space<vmem>>, %arg8: memref<128x128xbf16, #tpu.memory_space<vmem>>, %arg9: memref<1x128xf32, #tpu.memory_space<vmem>>, %arg10: memref<128x128xbf16, #tpu.memory_space<vmem>>, %arg11: memref<1x128xf32, #tpu.memory_space<vmem>>, %arg12: memref<1152x128xbf16, #tpu.memory_space<vmem>>) attributes {dimension_semantics = [#tpu.dimension_semantics<parallel>], iteration_bounds = array<i64: 4>, scalar_prefetch = 0 : i64, scratch_operands = 0 : i64, tpu.core_type = #tpu.core_type<tc>, window_params = [{transform_indices = @transform_0, window_bounds = array<i64: 1152, 128>}, {transform_indices = @transform_1, window_bounds = array<i64: 1152, 128>}, {transform_indices = @transform_2, window_bounds = array<i64: 1152, 1>}, {pipeline_mode = #tpu.pipeline_mode<synchronous>, transform_indices = @transform_3, window_bounds = array<i64: 1, 128>}, {pipeline_mode = #tpu.pipeline_mode<synchronous>, transform_indices = @transform_4, window_bounds = array<i64: 1, 128>}, {pipeline_mode = #tpu.pipeline_mode<synchronous>, transform_indices = @transform_5, window_bounds = array<i64: 1, 128>}, {pipeline_mode = #tpu.pipeline_mode<synchronous>, transform_indices = @transform_6, window_bounds = array<i64: 1, 128>}, {pipeline_mode = #tpu.pipeline_mode<synchronous>, transform_indices = @transform_7, window_bounds = array<i64: 128, 128>}, {pipeline_mode = #tpu.pipeline_mode<synchronous>, transform_indices = @transform_8, window_bounds = array<i64: 1, 128>}, {pipeline_mode = #tpu.pipeline_mode<synchronous>, transform_indices = @transform_9, window_bounds = array<i64: 128, 128>}, {pipeline_mode = #tpu.pipeline_mode<synchronous>, transform_indices = @transform_10, window_bounds = array<i64: 1, 128>}, {transform_indices = @transform_11, window_bounds = array<i64: 1152, 128>}]} {
    %c0 = arith.constant 0 : index
    %c0_0 = arith.constant 0 : index
    %0 = vector.load %arg1[%c0, %c0_0] : memref<1152x128xbf16, #tpu.memory_space<vmem>>, vector<1152x128xbf16>
    %1 = arith.extf %0 : vector<1152x128xbf16> to vector<1152x128xf32>
    %c0_1 = arith.constant 0 : index
    %c0_2 = arith.constant 0 : index
    %2 = vector.load %arg2[%c0_1, %c0_2] : memref<1152x128xbf16, #tpu.memory_space<vmem>>, vector<1152x128xbf16>
    %3 = arith.extf %2 : vector<1152x128xbf16> to vector<1152x128xf32>
    %4 = arith.addf %1, %3 : vector<1152x128xf32>
    %c0_3 = arith.constant 0 : index
    %c0_4 = arith.constant 0 : index
    %5 = vector.load %arg4[%c0_3, %c0_4] : memref<1x128xf32, #tpu.memory_space<vmem>>, vector<1x128xf32>
    %c0_5 = arith.constant 0 : index
    %c0_6 = arith.constant 0 : index
    %6 = vector.load %arg5[%c0_5, %c0_6] : memref<1x128xf32, #tpu.memory_space<vmem>>, vector<1x128xf32>
    %cst = arith.constant dense<0.000000e+00> : vector<1152xf32>
    %7 = vector.multi_reduction <add>, %4, %cst [1] : vector<1152x128xf32> to vector<1152xf32>
    %8 = vector.shape_cast %7 : vector<1152xf32> to vector<1152x1xf32>
    %cst_7 = arith.constant 1.280000e+02 : f32
    %9 = vector.broadcast %cst_7 : f32 to vector<1152x1xf32>
    %10 = arith.divf %8, %9 : vector<1152x1xf32>
    %11 = arith.mulf %4, %4 : vector<1152x128xf32>
    %cst_8 = arith.constant dense<0.000000e+00> : vector<1152xf32>
    %12 = vector.multi_reduction <add>, %11, %cst_8 [1] : vector<1152x128xf32> to vector<1152xf32>
    %13 = vector.shape_cast %12 : vector<1152xf32> to vector<1152x1xf32>
    %cst_9 = arith.constant 1.280000e+02 : f32
    %14 = vector.broadcast %cst_9 : f32 to vector<1152x1xf32>
    %15 = arith.divf %13, %14 : vector<1152x1xf32>
    %16 = arith.mulf %10, %10 : vector<1152x1xf32>
    %17 = arith.subf %15, %16 : vector<1152x1xf32>
    %18 = vector.broadcast %10 : vector<1152x1xf32> to vector<1152x128xf32>
    %19 = arith.subf %4, %18 : vector<1152x128xf32>
    %cst_10 = arith.constant 9.99999974E-6 : f32
    %20 = vector.broadcast %cst_10 : f32 to vector<1152x1xf32>
    %21 = arith.addf %17, %20 : vector<1152x1xf32>
    %22 = math.rsqrt %21 : vector<1152x1xf32>
    %23 = vector.broadcast %22 : vector<1152x1xf32> to vector<1152x128xf32>
    %24 = arith.mulf %19, %23 : vector<1152x128xf32>
    %25 = vector.broadcast %5 : vector<1x128xf32> to vector<1152x128xf32>
    %26 = arith.mulf %24, %25 : vector<1152x128xf32>
    %27 = vector.broadcast %6 : vector<1x128xf32> to vector<1152x128xf32>
    %28 = arith.addf %26, %27 : vector<1152x128xf32>
    %c0_11 = arith.constant 0 : index
    %c0_12 = arith.constant 0 : index
    %29 = vector.load %arg3[%c0_11, %c0_12] : memref<1152x1xf32, #tpu.memory_space<vmem>>, vector<1152x1xf32>
    %30 = vector.broadcast %29 : vector<1152x1xf32> to vector<1152x128xf32>
    %31 = arith.mulf %30, %28 : vector<1152x128xf32>
    %32 = arith.truncf %31 : vector<1152x128xf32> to vector<1152x128xbf16>
    %c0_13 = arith.constant 0 : index
    %c0_14 = arith.constant 0 : index
    %33 = vector.load %arg8[%c0_13, %c0_14] : memref<128x128xbf16, #tpu.memory_space<vmem>>, vector<128x128xbf16>
    %cst_15 = arith.constant dense<0.000000e+00> : vector<1152x128xf32>
    %34 = tpu.matmul %32, %33, %cst_15 {dimension_numbers = #tpu.dot_dimension_numbers<[1], [0], [0], [1], [0, 0, 1, 1], [], []>} : vector<1152x128xbf16>, vector<128x128xbf16>, vector<1152x128xf32> -> vector<1152x128xf32>
    %c0_16 = arith.constant 0 : index
    %c0_17 = arith.constant 0 : index
    %35 = vector.load %arg9[%c0_16, %c0_17] : memref<1x128xf32, #tpu.memory_space<vmem>>, vector<1x128xf32>
    %36 = vector.broadcast %35 : vector<1x128xf32> to vector<1152x128xf32>
    %37 = arith.addf %34, %36 : vector<1152x128xf32>
    %cst_18 = arith.constant 0.000000e+00 : f32
    %38 = vector.broadcast %cst_18 : f32 to vector<1152x128xf32>
    %39 = arith.maximumf %37, %38 : vector<1152x128xf32>
    %40 = arith.truncf %39 : vector<1152x128xf32> to vector<1152x128xbf16>
    %c0_19 = arith.constant 0 : index
    %c0_20 = arith.constant 0 : index
    %41 = vector.load %arg10[%c0_19, %c0_20] : memref<128x128xbf16, #tpu.memory_space<vmem>>, vector<128x128xbf16>
    %cst_21 = arith.constant dense<0.000000e+00> : vector<1152x128xf32>
    %42 = tpu.matmul %40, %41, %cst_21 {dimension_numbers = #tpu.dot_dimension_numbers<[1], [0], [0], [1], [0, 0, 1, 1], [], []>} : vector<1152x128xbf16>, vector<128x128xbf16>, vector<1152x128xf32> -> vector<1152x128xf32>
    %c0_22 = arith.constant 0 : index
    %c0_23 = arith.constant 0 : index
    %43 = vector.load %arg11[%c0_22, %c0_23] : memref<1x128xf32, #tpu.memory_space<vmem>>, vector<1x128xf32>
    %44 = vector.broadcast %43 : vector<1x128xf32> to vector<1152x128xf32>
    %45 = arith.addf %42, %44 : vector<1152x128xf32>
    %46 = arith.addf %31, %45 : vector<1152x128xf32>
    %c0_24 = arith.constant 0 : index
    %c0_25 = arith.constant 0 : index
    %47 = vector.load %arg6[%c0_24, %c0_25] : memref<1x128xf32, #tpu.memory_space<vmem>>, vector<1x128xf32>
    %c0_26 = arith.constant 0 : index
    %c0_27 = arith.constant 0 : index
    %48 = vector.load %arg7[%c0_26, %c0_27] : memref<1x128xf32, #tpu.memory_space<vmem>>, vector<1x128xf32>
    %cst_28 = arith.constant dense<0.000000e+00> : vector<1152xf32>
    %49 = vector.multi_reduction <add>, %46, %cst_28 [1] : vector<1152x128xf32> to vector<1152xf32>
    %50 = vector.shape_cast %49 : vector<1152xf32> to vector<1152x1xf32>
    %cst_29 = arith.constant 1.280000e+02 : f32
    %51 = vector.broadcast %cst_29 : f32 to vector<1152x1xf32>
    %52 = arith.divf %50, %51 : vector<1152x1xf32>
    %53 = arith.mulf %46, %46 : vector<1152x128xf32>
    %cst_30 = arith.constant dense<0.000000e+00> : vector<1152xf32>
    %54 = vector.multi_reduction <add>, %53, %cst_30 [1] : vector<1152x128xf32> to vector<1152xf32>
    %55 = vector.shape_cast %54 : vector<1152xf32> to vector<1152x1xf32>
    %cst_31 = arith.constant 1.280000e+02 : f32
    %56 = vector.broadcast %cst_31 : f32 to vector<1152x1xf32>
    %57 = arith.divf %55, %56 : vector<1152x1xf32>
    %58 = arith.mulf %52, %52 : vector<1152x1xf32>
    %59 = arith.subf %57, %58 : vector<1152x1xf32>
    %60 = vector.broadcast %52 : vector<1152x1xf32> to vector<1152x128xf32>
    %61 = arith.subf %46, %60 : vector<1152x128xf32>
    %cst_32 = arith.constant 9.99999974E-6 : f32
    %62 = vector.broadcast %cst_32 : f32 to vector<1152x1xf32>
    %63 = arith.addf %59, %62 : vector<1152x1xf32>
    %64 = math.rsqrt %63 : vector<1152x1xf32>
    %65 = vector.broadcast %64 : vector<1152x1xf32> to vector<1152x128xf32>
    %66 = arith.mulf %61, %65 : vector<1152x128xf32>
    %67 = vector.broadcast %47 : vector<1x128xf32> to vector<1152x128xf32>
    %68 = arith.mulf %66, %67 : vector<1152x128xf32>
    %69 = vector.broadcast %48 : vector<1x128xf32> to vector<1152x128xf32>
    %70 = arith.addf %68, %69 : vector<1152x128xf32>
    %71 = arith.truncf %70 : vector<1152x128xf32> to vector<1152x128xbf16>
    %c0_33 = arith.constant 0 : index
    %c0_34 = arith.constant 0 : index
    %72 = vector.load %arg12[%c0_33, %c0_34] : memref<1152x128xbf16, #tpu.memory_space<vmem>>, vector<1152x128xbf16>
    tpu.vector_store %arg12[%c0_33, %c0_34], %71 {strides = array<i32>} : memref<1152x128xbf16, #tpu.memory_space<vmem>>, vector<1152x128xbf16>,
    return
  }
  func.func @transform_0(%arg0: i32) -> (i32, i32) {
    %c0_i32 = arith.constant 0 : i32
    %c0_i32_0 = arith.constant 0 : i32
    return %arg0, %c0_i32 : i32, i32
  }
  func.func @transform_1(%arg0: i32) -> (i32, i32) {
    %c0_i32 = arith.constant 0 : i32
    %c0_i32_0 = arith.constant 0 : i32
    return %arg0, %c0_i32 : i32, i32
  }
  func.func @transform_2(%arg0: i32) -> (i32, i32) {
    %c0_i32 = arith.constant 0 : i32
    %c0_i32_0 = arith.constant 0 : i32
    return %arg0, %c0_i32 : i32, i32
  }
  func.func @transform_3(%arg0: i32) -> (i32, i32) {
    %c0_i32 = arith.constant 0 : i32
    %c0_i32_0 = arith.constant 0 : i32
    %c0_i32_1 = arith.constant 0 : i32
    return %c0_i32, %c0_i32_0 : i32, i32
  }
  func.func @transform_4(%arg0: i32) -> (i32, i32) {
    %c0_i32 = arith.constant 0 : i32
    %c0_i32_0 = arith.constant 0 : i32
    %c0_i32_1 = arith.constant 0 : i32
    return %c0_i32, %c0_i32_0 : i32, i32
  }
  func.func @transform_5(%arg0: i32) -> (i32, i32) {
    %c0_i32 = arith.constant 0 : i32
    %c0_i32_0 = arith.constant 0 : i32
    %c0_i32_1 = arith.constant 0 : i32
    return %c0_i32, %c0_i32_0 : i32, i32
  }
  func.func @transform_6(%arg0: i32) -> (i32, i32) {
    %c0_i32 = arith.constant 0 : i32
    %c0_i32_0 = arith.constant 0 : i32
    %c0_i32_1 = arith.constant 0 : i32
    return %c0_i32, %c0_i32_0 : i32, i32
  }
  func.func @transform_7(%arg0: i32) -> (i32, i32) {
    %c0_i32 = arith.constant 0 : i32
    %c0_i32_0 = arith.constant 0 : i32
    %c0_i32_1 = arith.constant 0 : i32
    return %c0_i32, %c0_i32_0 : i32, i32
  }
  func.func @transform_8(%arg0: i32) -> (i32, i32) {
    %c0_i32 = arith.constant 0 : i32
    %c0_i32_0 = arith.constant 0 : i32
    %c0_i32_1 = arith.constant 0 : i32
    return %c0_i32, %c0_i32_0 : i32, i32
  }
  func.func @transform_9(%arg0: i32) -> (i32, i32) {
    %c0_i32 = arith.constant 0 : i32
    %c0_i32_0 = arith.constant 0 : i32
    %c0_i32_1 = arith.constant 0 : i32
    return %c0_i32, %c0_i32_0 : i32, i32
  }
  func.func @transform_10(%arg0: i32) -> (i32, i32) {
    %c0_i32 = arith.constant 0 : i32
    %c0_i32_0 = arith.constant 0 : i32
    %c0_i32_1 = arith.constant 0 : i32
    return %c0_i32, %c0_i32_0 : i32, i32
  }
  func.func @transform_11(%arg0: i32) -> (i32, i32) {
    %c0_i32 = arith.constant 0 : i32
    %c0_i32_0 = arith.constant 0 : i32
    return %arg0, %c0_i32 : i32, i32
  }
}

</mosaic_0001>

<llo_original>
// kernel: mdu_forward.1
$region0: #{mdu_forward.1}
  #allocation0 [shape = 'u32[]', space=smem, size = 0x4, offset = 0x4, fixed_abs, tag = 'smem constant byte address 0x4 - core index']
  #allocation1 [shape = 'u32[144,128]{1,0:T(1,128)}', space=vmem, size = 0x12000, scoped, tag = 'internal scratch']
  %s0 = inlined_call_operand.vmem [shape: bf16[4608,128], index: 0, kind: input, shape index: {}]
  %s1 = inlined_call_operand.vmem [shape: bf16[4608,128], index: 1, kind: input, shape index: {}]
  %s2 = inlined_call_operand.vmem [shape: f32[4608,1], index: 2, kind: input, shape index: {}]
  %s3 = inlined_call_operand.vmem [shape: f32[1,128], index: 3, kind: input, shape index: {}]
  %s4 = inlined_call_operand.vmem [shape: f32[1,128], index: 4, kind: input, shape index: {}]
  %s5 = inlined_call_operand.vmem [shape: f32[1,128], index: 5, kind: input, shape index: {}]
  %s6 = inlined_call_operand.vmem [shape: f32[1,128], index: 6, kind: input, shape index: {}]
  %s7 = inlined_call_operand.vmem [shape: bf16[128,128], index: 7, kind: input, shape index: {}]
  %s8 = inlined_call_operand.vmem [shape: f32[1,128], index: 8, kind: input, shape index: {}]
  %s9 = inlined_call_operand.vmem [shape: bf16[128,128], index: 9, kind: input, shape index: {}]
  %s10 = inlined_call_operand.vmem [shape: f32[1,128], index: 10, kind: input, shape index: {}]
  %s11 = inlined_call_operand.vmem [shape: bf16[4608,128], index: 11, kind: output, shape index: {}]
  %s12 = sld [smem:[#allocation0]]
  $region77: #{mdu_forward.1} parent=0
    _
  %s14 = ssub.s32 1, %s12
  %s15 = scalar_select 0, %s14, %s12
  loop: start=0, step=1, limit=6
  $region2: #{mdu_forward.1} parent=0 // loop_pre_header
    _
  $region3: #{mdu_forward.1} parent=0 // loop_header
    %s17 = sphi 0, %s21
    %p18 = scmp.ge.s32.totalorder %s17, 6
    %s27 = sphi 0, %s29
    %s30 = sphi 0, %s27
    %s31 = sphi 0, %s30
    %s47 = sphi 0, %s31
    %s53 = sphi 0, %s55
    %s56 = sphi 0, %s53
    %s57 = sphi 0, %s56
    %s73 = sphi 0, %s57
    %s79 = sphi 0, %s81
    %s82 = sphi 0, %s79
    %s83 = sphi 0, %s82
    %s99 = sphi 0, %s83
    %s103 = sphi 0, %s103
    %s105 = sphi 0, %s103
    %s106 = sphi 0, %s105
    %s120 = sphi 0, %s106
    %s124 = sphi 0, %s124
    %s126 = sphi 0, %s124
    %s127 = sphi 0, %s126
    %s141 = sphi 0, %s127
    %s145 = sphi 0, %s145
    %s147 = sphi 0, %s145
    %s148 = sphi 0, %s147
    %s162 = sphi 0, %s148
    %s166 = sphi 0, %s166
    %s168 = sphi 0, %s166
    %s169 = sphi 0, %s168
    %s183 = sphi 0, %s169
    %s187 = sphi 0, %s187
    %s189 = sphi 0, %s187
    %s190 = sphi 0, %s189
    %s204 = sphi 0, %s190
    %s208 = sphi 0, %s208
    %s210 = sphi 0, %s208
    %s211 = sphi 0, %s210
    %s225 = sphi 0, %s211
    %s229 = sphi 0, %s229
    %s231 = sphi 0, %s229
    %s232 = sphi 0, %s231
    %s246 = sphi 0, %s232
    %s250 = sphi 0, %s250
    %s252 = sphi 0, %s250
    %s253 = sphi 0, %s252
    %s267 = sphi 0, %s253
    %s273 = sphi 0, %s275
    %s276 = sphi 0, %s273
    %s277 = sphi 0, %s276
    %s293 = sphi 0, %s277
  $region4: #{mdu_forward.1} parent=0 // loop_header_branch
    %20 = sbr.rel (%p18) target = $region8
  $region5: #{mdu_forward.1} parent=0 // loop_body
    %s22 = ssub.s32 %s17, 1
    %s23 = ssub.s32 %s17, 2
    %s24 = sadd.s32 %s17, 1
    %s25 = ssub.s32 %s17, %s24
    %p26 = scmp.eq.s32.totalorder %s25, 0
    %s28 = sadd.s32 %s27, 1
    %s29 = scalar_select %p26, %s27, %s28
    %p32 = pneg %p26
    %p33 = scmp.eq.s32.totalorder %s17, 3
    %p34 = por %p32, %p33
    %p35 = scmp.ne.s32.totalorder %s27, %s30
    %p36 = scmp.eq.s32.totalorder %s17, 0
    %p37 = por %p35, %p36
    %p38 = scmp.ne.s32.totalorder %s27, %s30
    %p39 = scmp.eq.s32.totalorder %s22, 3
    %p40 = por %p38, %p39
    %p41 = scmp.ne.s32.totalorder %s30, %s31
    %p42 = scmp.eq.s32.totalorder %s22, 0
    %p43 = por %p41, %p42
    %p44 = scmp.ne.s32.totalorder %s30, %s31
    %p45 = scmp.eq.s32.totalorder %s23, 3
    %p46 = por %p44, %p45
    %p48 = scmp.ne.s32.totalorder %s31, %s47
    %p49 = scmp.eq.s32.totalorder %s23, 0
    %p50 = por %p48, %p49
    %s51 = ssub.s32 %s17, %s24
    %p52 = scmp.eq.s32.totalorder %s51, 0
    %s54 = sadd.s32 %s53, 1
    %s55 = scalar_select %p52, %s53, %s54
    %p58 = pneg %p52
    %p59 = scmp.eq.s32.totalorder %s17, 3
    %p60 = por %p58, %p59
    %p61 = scmp.ne.s32.totalorder %s53, %s56
    %p62 = scmp.eq.s32.totalorder %s17, 0
    %p63 = por %p61, %p62
    %p64 = scmp.ne.s32.totalorder %s53, %s56
    %p65 = scmp.eq.s32.totalorder %s22, 3
    %p66 = por %p64, %p65
    %p67 = scmp.ne.s32.totalorder %s56, %s57
    %p68 = scmp.eq.s32.totalorder %s22, 0
    %p69 = por %p67, %p68
    %p70 = scmp.ne.s32.totalorder %s56, %s57
    %p71 = scmp.eq.s32.totalorder %s23, 3
    %p72 = por %p70, %p71
    %p74 = scmp.ne.s32.totalorder %s57, %s73
    %p75 = scmp.eq.s32.totalorder %s23, 0
    %p76 = por %p74, %p75
    %s77 = ssub.s32 %s17, %s24
    %p78 = scmp.eq.s32.totalorder %s77, 0
    %s80 = sadd.s32 %s79, 1
    %s81 = scalar_select %p78, %s79, %s80
    %p84 = pneg %p78
    %p85 = scmp.eq.s32.totalorder %s17, 3
    %p86 = por %p84, %p85
    %p87 = scmp.ne.s32.totalorder %s79, %s82
    %p88 = scmp.eq.s32.totalorder %s17, 0
    %p89 = por %p87, %p88
    %p90 = scmp.ne.s32.totalorder %s79, %s82
    %p91 = scmp.eq.s32.totalorder %s22, 3
    %p92 = por %p90, %p91
    %p93 = scmp.ne.s32.totalorder %s82, %s83
    %p94 = scmp.eq.s32.totalorder %s22, 0
    %p95 = por %p93, %p94
    %p96 = scmp.ne.s32.totalorder %s82, %s83
    %p97 = scmp.eq.s32.totalorder %s23, 3
    %p98 = por %p96, %p97
    %p100 = scmp.ne.s32.totalorder %s83, %s99
    %p101 = scmp.eq.s32.totalorder %s23, 0
    %p102 = por %p100, %p101
    %s104 = sadd.s32 %s103, 1
    %p107 = scmp.eq.s32.totalorder %s17, 3
    %p108 = scmp.ne.s32.totalorder %s103, %s105
    %p109 = scmp.eq.s32.totalorder %s17, 0
    %p110 = por %p108, %p109
    %p111 = scmp.ne.s32.totalorder %s103, %s105
    %p112 = scmp.eq.s32.totalorder %s22, 3
    %p113 = por %p111, %p112
    %p114 = scmp.ne.s32.totalorder %s105, %s106
    %p115 = scmp.eq.s32.totalorder %s22, 0
    %p116 = por %p114, %p115
    %p117 = scmp.ne.s32.totalorder %s105, %s106
    %p118 = scmp.eq.s32.totalorder %s23, 3
    %p119 = por %p117, %p118
    %p121 = scmp.ne.s32.totalorder %s106, %s120
    %p122 = scmp.eq.s32.totalorder %s23, 0
    %p123 = por %p121, %p122
    %s125 = sadd.s32 %s124, 1
    %p128 = scmp.eq.s32.totalorder %s17, 3
    %p129 = scmp.ne.s32.totalorder %s124, %s126
    %p130 = scmp.eq.s32.totalorder %s17, 0
    %p131 = por %p129, %p130
    %p132 = scmp.ne.s32.totalorder %s124, %s126
    %p133 = scmp.eq.s32.totalorder %s22, 3
    %p134 = por %p132, %p133
    %p135 = scmp.ne.s32.totalorder %s126, %s127
    %p136 = scmp.eq.s32.totalorder %s22, 0
    %p137 = por %p135, %p136
    %p138 = scmp.ne.s32.totalorder %s126, %s127
    %p139 = scmp.eq.s32.totalorder %s23, 3
    %p140 = por %p138, %p139
    %p142 = scmp.ne.s32.totalorder %s127, %s141
    %p143 = scmp.eq.s32.totalorder %s23, 0
    %p144 = por %p142, %p143
    %s146 = sadd.s32 %s145, 1
    %p149 = scmp.eq.s32.totalorder %s17, 3
    %p150 = scmp.ne.s32.totalorder %s145, %s147
    %p151 = scmp.eq.s32.totalorder %s17, 0
    %p152 = por %p150, %p151
    %p153 = scmp.ne.s32.totalorder %s145, %s147
    %p154 = scmp.eq.s32.totalorder %s22, 3
    %p155 = por %p153, %p154
    %p156 = scmp.ne.s32.totalorder %s147, %s148
    %p157 = scmp.eq.s32.totalorder %s22, 0
    %p158 = por %p156, %p157
    %p159 = scmp.ne.s32.totalorder %s147, %s148
    %p160 = scmp.eq.s32.totalorder %s23, 3
    %p161 = por %p159, %p160
    %p163 = scmp.ne.s32.totalorder %s148, %s162
    %p164 = scmp.eq.s32.totalorder %s23, 0
    %p165 = por %p163, %p164
    %s167 = sadd.s32 %s166, 1
    %p170 = scmp.eq.s32.totalorder %s17, 3
    %p171 = scmp.ne.s32.totalorder %s166, %s168
    %p172 = scmp.eq.s32.totalorder %s17, 0
    %p173 = por %p171, %p172
    %p174 = scmp.ne.s32.totalorder %s166, %s168
    %p175 = scmp.eq.s32.totalorder %s22, 3
    %p176 = por %p174, %p175
    %p177 = scmp.ne.s32.totalorder %s168, %s169
    %p178 = scmp.eq.s32.totalorder %s22, 0
    %p179 = por %p177, %p178
    %p180 = scmp.ne.s32.totalorder %s168, %s169
    %p181 = scmp.eq.s32.totalorder %s23, 3
    %p182 = por %p180, %p181
    %p184 = scmp.ne.s32.totalorder %s169, %s183
    %p185 = scmp.eq.s32.totalorder %s23, 0
    %p186 = por %p184, %p185
    %s188 = sadd.s32 %s187, 1
    %p191 = scmp.eq.s32.totalorder %s17, 3
    %p192 = scmp.ne.s32.totalorder %s187, %s189
    %p193 = scmp.eq.s32.totalorder %s17, 0
    %p194 = por %p192, %p193
    %p195 = scmp.ne.s32.totalorder %s187, %s189
    %p196 = scmp.eq.s32.totalorder %s22, 3
    %p197 = por %p195, %p196
    %p198 = scmp.ne.s32.totalorder %s189, %s190
    %p199 = scmp.eq.s32.totalorder %s22, 0
    %p200 = por %p198, %p199
    %p201 = scmp.ne.s32.totalorder %s189, %s190
    %p202 = scmp.eq.s32.totalorder %s23, 3
    %p203 = por %p201, %p202
    %p205 = scmp.ne.s32.totalorder %s190, %s204
    %p206 = scmp.eq.s32.totalorder %s23, 0
    %p207 = por %p205, %p206
    %s209 = sadd.s32 %s208, 1
    %p212 = scmp.eq.s32.totalorder %s17, 3
    %p213 = scmp.ne.s32.totalorder %s208, %s210
    %p214 = scmp.eq.s32.totalorder %s17, 0
    %p215 = por %p213, %p214
    %p216 = scmp.ne.s32.totalorder %s208, %s210
    %p217 = scmp.eq.s32.totalorder %s22, 3
    %p218 = por %p216, %p217
    %p219 = scmp.ne.s32.totalorder %s210, %s211
    %p220 = scmp.eq.s32.totalorder %s22, 0
    %p221 = por %p219, %p220
    %p222 = scmp.ne.s32.totalorder %s210, %s211
    %p223 = scmp.eq.s32.totalorder %s23, 3
    %p224 = por %p222, %p223
    %p226 = scmp.ne.s32.totalorder %s211, %s225
    %p227 = scmp.eq.s32.totalorder %s23, 0
    %p228 = por %p226, %p227
    %s230 = sadd.s32 %s229, 1
    %p233 = scmp.eq.s32.totalorder %s17, 3
    %p234 = scmp.ne.s32.totalorder %s229, %s231
    %p235 = scmp.eq.s32.totalorder %s17, 0
    %p236 = por %p234, %p235
    %p237 = scmp.ne.s32.totalorder %s229, %s231
    %p238 = scmp.eq.s32.totalorder %s22, 3
    %p239 = por %p237, %p238
    %p240 = scmp.ne.s32.totalorder %s231, %s232
    %p241 = scmp.eq.s32.totalorder %s22, 0
    %p242 = por %p240, %p241
    %p243 = scmp.ne.s32.totalorder %s231, %s232
    %p244 = scmp.eq.s32.totalorder %s23, 3
    %p245 = por %p243, %p244
    %p247 = scmp.ne.s32.totalorder %s232, %s246
    %p248 = scmp.eq.s32.totalorder %s23, 0
    %p249 = por %p247, %p248
    %s251 = sadd.s32 %s250, 1
    %p254 = scmp.eq.s32.totalorder %s17, 3
    %p255 = scmp.ne.s32.totalorder %s250, %s252
    %p256 = scmp.eq.s32.totalorder %s17, 0
    %p257 = por %p255, %p256
    %p258 = scmp.ne.s32.totalorder %s250, %s252
    %p259 = scmp.eq.s32.totalorder %s22, 3
    %p260 = por %p258, %p259
    %p261 = scmp.ne.s32.totalorder %s252, %s253
    %p262 = scmp.eq.s32.totalorder %s22, 0
    %p263 = por %p261, %p262
    %p264 = scmp.ne.s32.totalorder %s252, %s253
    %p265 = scmp.eq.s32.totalorder %s23, 3
    %p266 = por %p264, %p265
    %p268 = scmp.ne.s32.totalorder %s253, %s267
    %p269 = scmp.eq.s32.totalorder %s23, 0
    %p270 = por %p268, %p269
    %s271 = ssub.s32 %s17, %s24
    %p272 = scmp.eq.s32.totalorder %s271, 0
    %s274 = sadd.s32 %s273, 1
    %s275 = scalar_select %p272, %s273, %s274
    %p278 = pneg %p272
    %p279 = scmp.eq.s32.totalorder %s17, 3
    %p280 = por %p278, %p279
    %p281 = scmp.ne.s32.totalorder %s273, %s276
    %p282 = scmp.eq.s32.totalorder %s17, 0
    %p283 = por %p281, %p282
    %p284 = scmp.ne.s32.totalorder %s273, %s276
    %p285 = scmp.eq.s32.totalorder %s22, 3
    %p286 = por %p284, %p285
    %p287 = scmp.ne.s32.totalorder %s276, %s277
    %p288 = scmp.eq.s32.totalorder %s22, 0
    %p289 = por %p287, %p288
    %p290 = scmp.ne.s32.totalorder %s276, %s277
    %p291 = scmp.eq.s32.totalorder %s23, 3
    %p292 = por %p290, %p291
    %p294 = scmp.ne.s32.totalorder %s277, %s293
    %p295 = scmp.eq.s32.totalorder %s23, 0
    %p296 = por %p294, %p295
    %p297 = scmp.le.s32.totalorder 1, %s17
    %p298 = scmp.lt.s32.totalorder %s17, 5
    %p299 = pnand %p297, %p298
    %p300 = pneg %p299
    // Predicated region
    $region9: #{mdu_forward.1} parent=5 // pred_check
      _
    $region10: #{mdu_forward.1} parent=5 // pred_check_branch
      %302 = sbr.rel (%p299) target = $region12
    $region11: #{mdu_forward.1} parent=5 // pred_region
      %s303 = ssub.s32 %s17, 1
      // Predicated region
      $region13: #{mdu_forward.1} parent=11 // pred_check
        %p304 = pneg %p116
      $region14: #{mdu_forward.1} parent=11 // pred_check_branch
        %306 = sbr.rel (%p304) target = $region16
      $region15: #{mdu_forward.1} parent=11 // pred_region
        _
      $region16: #{mdu_forward.1} parent=11 // pred_fallthru
        _
      // Predicated region
      $region17: #{mdu_forward.1} parent=11 // pred_check
        %p307 = pneg %p137
      $region18: #{mdu_forward.1} parent=11 // pred_check_branch
        %309 = sbr.rel (%p307) target = $region20
      $region19: #{mdu_forward.1} parent=11 // pred_region
        _
      $region20: #{mdu_forward.1} parent=11 // pred_fallthru
        _
      // Predicated region
      $region21: #{mdu_forward.1} parent=11 // pred_check
        %p310 = pneg %p158
      $region22: #{mdu_forward.1} parent=11 // pred_check_branch
        %312 = sbr.rel (%p310) target = $region24
      $region23: #{mdu_forward.1} parent=11 // pred_region
        _
      $region24: #{mdu_forward.1} parent=11 // pred_fallthru
        _
      // Predicated region
      $region25: #{mdu_forward.1} parent=11 // pred_check
        %p313 = pneg %p179
      $region26: #{mdu_forward.1} parent=11 // pred_check_branch
        %315 = sbr.rel (%p313) target = $region28
      $region27: #{mdu_forward.1} parent=11 // pred_region
        _
      $region28: #{mdu_forward.1} parent=11 // pred_fallthru
        _
      // Predicated region
      $region29: #{mdu_forward.1} parent=11 // pred_check
        %p316 = pneg %p200
      $region30: #{mdu_forward.1} parent=11 // pred_check_branch
        %318 = sbr.rel (%p316) target = $region32
      $region31: #{mdu_forward.1} parent=11 // pred_region
        _
      $region32: #{mdu_forward.1} parent=11 // pred_fallthru
        _
      // Predicated region
      $region33: #{mdu_forward.1} parent=11 // pred_check
        %p319 = pneg %p221
      $region34: #{mdu_forward.1} parent=11 // pred_check_branch
        %321 = sbr.rel (%p319) target = $region36
      $region35: #{mdu_forward.1} parent=11 // pred_region
        _
      $region36: #{mdu_forward.1} parent=11 // pred_fallthru
        _
      // Predicated region
      $region37: #{mdu_forward.1} parent=11 // pred_check
        %p322 = pneg %p242
      $region38: #{mdu_forward.1} parent=11 // pred_check_branch
        %324 = sbr.rel (%p322) target = $region40
      $region39: #{mdu_forward.1} parent=11 // pred_region
        _
      $region40: #{mdu_forward.1} parent=11 // pred_fallthru
        _
      // Predicated region
      $region41: #{mdu_forward.1} parent=11 // pred_check
        %p325 = pneg %p263
      $region42: #{mdu_forward.1} parent=11 // pred_check_branch
        %327 = sbr.rel (%p325) target = $region44
      $region43: #{mdu_forward.1} parent=11 // pred_region
        _
      $region44: #{mdu_forward.1} parent=11 // pred_fallthru
        _
    $region12: #{mdu_forward.1} parent=5 // pred_fallthru
      _
    %p328 = scmp.lt.s32.totalorder %s17, 4
    // Predicated region
    $region45: #{mdu_forward.1} parent=5 // pred_check
      %p329 = pneg %p328
    $region46: #{mdu_forward.1} parent=5 // pred_check_branch
      %331 = sbr.rel (%p329) target = $region48
    $region47: #{mdu_forward.1} parent=5 // pred_region
      // Predicated region
      $region49: #{mdu_forward.1} parent=47 // pred_check
        %p332 = pneg %p37
      $region50: #{mdu_forward.1} parent=47 // pred_check_branch
        %334 = sbr.rel (%p332) target = $region52
      $region51: #{mdu_forward.1} parent=47 // pred_region
        %s335 = smul.u32 144, %s17
        %p336 = scmp.lt.s32.totalorder %s335, 575
        %s337 = scalar_select %p336, %s335, 575
        %s338 = smul.addr %s337, 4
        %s339 = scalar_lea.vmem %s0, %s338
        %s340 = smul.u32 144, %s17
      $region52: #{mdu_forward.1} parent=47 // pred_fallthru
        _
      // Predicated region
      $region53: #{mdu_forward.1} parent=47 // pred_check
        %p341 = pneg %p63
      $region54: #{mdu_forward.1} parent=47 // pred_check_branch
        %343 = sbr.rel (%p341) target = $region56
      $region55: #{mdu_forward.1} parent=47 // pred_region
        %s344 = smul.u32 144, %s17
        %p345 = scmp.lt.s32.totalorder %s344, 575
        %s346 = scalar_select %p345, %s344, 575
        %s347 = smul.addr %s346, 4
        %s348 = scalar_lea.vmem %s1, %s347
        %s349 = smul.u32 144, %s17
      $region56: #{mdu_forward.1} parent=47 // pred_fallthru
        _
      // Predicated region
      $region57: #{mdu_forward.1} parent=47 // pred_check
        %p350 = pneg %p89
      $region58: #{mdu_forward.1} parent=47 // pred_check_branch
        %352 = sbr.rel (%p350) target = $region60
      $region59: #{mdu_forward.1} parent=47 // pred_region
        %s353 = smul.u32 144, %s17
        %p354 = scmp.lt.s32.totalorder %s353, 575
        %s355 = scalar_select %p354, %s353, 575
        %s356 = smul.addr %s355, 8
        %s357 = scalar_lea.vmem %s2, %s356
        %s358 = smul.u32 144, %s17
      $region60: #{mdu_forward.1} parent=47 // pred_fallthru
        _
    $region48: #{mdu_forward.1} parent=5 // pred_fallthru
      _
    %p359 = scmp.le.s32.totalorder 1, %s17
    %p360 = scmp.lt.s32.totalorder %s17, 5
    %p361 = pnand %p359, %p360
    %p362 = pneg %p361
    // Predicated region
    $region61: #{mdu_forward.1} parent=5 // pred_check
      _
    $region62: #{mdu_forward.1} parent=5 // pred_check_branch
      %364 = sbr.rel (%p361) target = $region64
    $region63: #{mdu_forward.1} parent=5 // pred_region
      %s365 = ssub.s32 %s17, 1
      %s366 = smul.u32 144, %s22
      %p367 = scmp.lt.s32.totalorder %s366, 575
      %s368 = scalar_select %p367, %s366, 575
      %s369 = smul.addr %s368, 4
      %s370 = scalar_lea.vmem %s0, %s369
      %p371 = pneg %p43
      %p372 = pneg %p40
      %s373 = smul.u32 144, %s22
      %p374 = scmp.lt.s32.totalorder %s373, 575
      %s375 = scalar_select %p374, %s373, 575
      %s376 = smul.addr %s375, 4
      %s377 = scalar_lea.vmem %s1, %s376
      %p378 = pneg %p69
      %p379 = pneg %p66
      %s380 = smul.u32 144, %s22
      %p381 = scmp.lt.s32.totalorder %s380, 575
      %s382 = scalar_select %p381, %s380, 575
      %s383 = smul.addr %s382, 8
      %s384 = scalar_lea.vmem %s2, %s383
      %p385 = pneg %p95
      %p386 = pneg %p92
      %p387 = pneg %p116
      %p388 = pneg %p113
      %p389 = pneg %p137
      %p390 = pneg %p134
      %p391 = pneg %p158
      %p392 = pneg %p155
      %p393 = pneg %p179
      %p394 = pneg %p176
      %p395 = pneg %p200
      %p396 = pneg %p197
      %p397 = pneg %p221
      %p398 = pneg %p218
      %p399 = pneg %p242
      %p400 = pneg %p239
      %p401 = pneg %p263
      %p402 = pneg %p260
      %p403 = pneg %p289
      %p404 = pneg %p286
      %s405 = smul.u32 144, %s22
      %p406 = scmp.lt.s32.totalorder %s405, 575
      %s407 = scalar_select %p406, %s405, 575
      %s408 = smul.addr %s407, 4
      %s409 = scalar_lea.vmem %s11, %s408
      %s410 = smul.u32 144, %s22
      %p411 = scmp.lt.s32.totalorder %s410, 575
      %s412 = scalar_select %p411, %s410, 575
      %s413 = smul.addr %s412, 4
      %s414 = scalar_lea.vmem %s0, %s413
      %s415 = smul.u32 144, %s22
      %s416 = smul.u32 144, %s22
      %p417 = scmp.lt.s32.totalorder %s416, 575
      %s418 = scalar_select %p417, %s416, 575
      %s419 = smul.addr %s418, 4
      %s420 = scalar_lea.vmem %s1, %s419
      %s421 = smul.u32 144, %s22
      %s422 = smul.u32 144, %s22
      %p423 = scmp.lt.s32.totalorder %s422, 575
      %s424 = scalar_select %p423, %s422, 575
      %s425 = smul.addr %s424, 8
      %s426 = scalar_lea.vmem %s2, %s425
      %s427 = smul.u32 144, %s22
      %s428 = smul.u32 144, %s22
      %p429 = scmp.lt.s32.totalorder %s428, 575
      %s430 = scalar_select %p429, %s428, 575
      %s431 = smul.addr %s430, 4
      %s432 = scalar_lea.vmem %s11, %s431
      %s433 = smul.u32 144, %s22
      %v435 = vld [vmem:[%s414] sm:$0xf]
      %v436 = vld [vmem:[%s414 + $0x4] sm:$0xf]
      %v437 = vld [vmem:[%s414 + $0x8] sm:$0xf]
      %v438 = vld [vmem:[%s414 + $0xc] sm:$0xf]
      %v439 = vld [vmem:[%s414 + $0x10] sm:$0xf]
      %v440 = vld [vmem:[%s414 + $0x14] sm:$0xf]
      %v441 = vld [vmem:[%s414 + $0x18] sm:$0xf]
      %v442 = vld [vmem:[%s414 + $0x1c] sm:$0xf]
      %v443 = vld [vmem:[%s414 + $0x20] sm:$0xf]
      %v444 = vld [vmem:[%s414 + $0x24] sm:$0xf]
      %v445 = vld [vmem:[%s414 + $0x28] sm:$0xf]
      %v446 = vld [vmem:[%s414 + $0x2c] sm:$0xf]
      %v447 = vld [vmem:[%s414 + $0x30] sm:$0xf]
      %v448 = vld [vmem:[%s414 + $0x34] sm:$0xf]
      %v449 = vld [vmem:[%s414 + $0x38] sm:$0xf]
      %v450 = vld [vmem:[%s414 + $0x3c] sm:$0xf]
      %v451 = vld [vmem:[%s414 + $0x40] sm:$0xf]
      %v452 = vld [vmem:[%s414 + $0x44] sm:$0xf]
      %v453 = vld [vmem:[%s414 + $0x48] sm:$0xf]
      %v454 = vld [vmem:[%s414 + $0x4c] sm:$0xf]
      %v455 = vld [vmem:[%s414 + $0x50] sm:$0xf]
      %v456 = vld [vmem:[%s414 + $0x54] sm:$0xf]
      %v457 = vld [vmem:[%s414 + $0x58] sm:$0xf]
      %v458 = vld [vmem:[%s414 + $0x5c] sm:$0xf]
      %v459 = vld [vmem:[%s414 + $0x60] sm:$0xf]
      %v460 = vld [vmem:[%s414 + $0x64] sm:$0xf]
      %v461 = vld [vmem:[%s414 + $0x68] sm:$0xf]
      %v462 = vld [vmem:[%s414 + $0x6c] sm:$0xf]
      %v463 = vld [vmem:[%s414 + $0x70] sm:$0xf]
      %v464 = vld [vmem:[%s414 + $0x74] sm:$0xf]
      %v465 = vld [vmem:[%s414 + $0x78] sm:$0xf]
      %v466 = vld [vmem:[%s414 + $0x7c] sm:$0xf]
      %v467 = vld [vmem:[%s414 + $0x80] sm:$0xf]
      %v468 = vld [vmem:[%s414 + $0x84] sm:$0xf]
      %v469 = vld [vmem:[%s414 + $0x88] sm:$0xf]
      %v470 = vld [vmem:[%s414 + $0x8c] sm:$0xf]
      %v471 = vld [vmem:[%s414 + $0x90] sm:$0xf]
      %v472 = vld [vmem:[%s414 + $0x94] sm:$0xf]
      %v473 = vld [vmem:[%s414 + $0x98] sm:$0xf]
      %v474 = vld [vmem:[%s414 + $0x9c] sm:$0xf]
      %v475 = vld [vmem:[%s414 + $0xa0] sm:$0xf]
      %v476 = vld [vmem:[%s414 + $0xa4] sm:$0xf]
      %v477 = vld [vmem:[%s414 + $0xa8] sm:$0xf]
      %v478 = vld [vmem:[%s414 + $0xac] sm:$0xf]
      %v479 = vld [vmem:[%s414 + $0xb0] sm:$0xf]
      %v480 = vld [vmem:[%s414 + $0xb4] sm:$0xf]
      %v481 = vld [vmem:[%s414 + $0xb8] sm:$0xf]
      %v482 = vld [vmem:[%s414 + $0xbc] sm:$0xf]
      %v483 = vld [vmem:[%s414 + $0xc0] sm:$0xf]
      %v484 = vld [vmem:[%s414 + $0xc4] sm:$0xf]
      %v485 = vld [vmem:[%s414 + $0xc8] sm:$0xf]
      %v486 = vld [vmem:[%s414 + $0xcc] sm:$0xf]
      %v487 = vld [vmem:[%s414 + $0xd0] sm:$0xf]
      %v488 = vld [vmem:[%s414 + $0xd4] sm:$0xf]
      %v489 = vld [vmem:[%s414 + $0xd8] sm:$0xf]
      %v490 = vld [vmem:[%s414 + $0xdc] sm:$0xf]
      %v491 = vld [vmem:[%s414 + $0xe0] sm:$0xf]
      %v492 = vld [vmem:[%s414 + $0xe4] sm:$0xf]
      %v493 = vld [vmem:[%s414 + $0xe8] sm:$0xf]
      %v494 = vld [vmem:[%s414 + $0xec] sm:$0xf]
      %v495 = vld [vmem:[%s414 + $0xf0] sm:$0xf]
      %v496 = vld [vmem:[%s414 + $0xf4] sm:$0xf]
      %v497 = vld [vmem:[%s414 + $0xf8] sm:$0xf]
      %v498 = vld [vmem:[%s414 + $0xfc] sm:$0xf]
      %v499 = vld [vmem:[%s414 + $0x100] sm:$0xf]
      %v500 = vld [vmem:[%s414 + $0x104] sm:$0xf]
      %v501 = vld [vmem:[%s414 + $0x108] sm:$0xf]
      %v502 = vld [vmem:[%s414 + $0x10c] sm:$0xf]
      %v503 = vld [vmem:[%s414 + $0x110] sm:$0xf]
      %v504 = vld [vmem:[%s414 + $0x114] sm:$0xf]
      %v505 = vld [vmem:[%s414 + $0x118] sm:$0xf]
      %v506 = vld [vmem:[%s414 + $0x11c] sm:$0xf]
      %v507 = vld [vmem:[%s414 + $0x120] sm:$0xf]
      %v508 = vld [vmem:[%s414 + $0x124] sm:$0xf]
      %v509 = vld [vmem:[%s414 + $0x128] sm:$0xf]
      %v510 = vld [vmem:[%s414 + $0x12c] sm:$0xf]
      %v511 = vld [vmem:[%s414 + $0x130] sm:$0xf]
      %v512 = vld [vmem:[%s414 + $0x134] sm:$0xf]
      %v513 = vld [vmem:[%s414 + $0x138] sm:$0xf]
      %v514 = vld [vmem:[%s414 + $0x13c] sm:$0xf]
      %v515 = vld [vmem:[%s414 + $0x140] sm:$0xf]
      %v516 = vld [vmem:[%s414 + $0x144] sm:$0xf]
      %v517 = vld [vmem:[%s414 + $0x148] sm:$0xf]
      %v518 = vld [vmem:[%s414 + $0x14c] sm:$0xf]
      %v519 = vld [vmem:[%s414 + $0x150] sm:$0xf]
      %v520 = vld [vmem:[%s414 + $0x154] sm:$0xf]
      %v521 = vld [vmem:[%s414 + $0x158] sm:$0xf]
      %v522 = vld [vmem:[%s414 + $0x15c] sm:$0xf]
      %v523 = vld [vmem:[%s414 + $0x160] sm:$0xf]
      %v524 = vld [vmem:[%s414 + $0x164] sm:$0xf]
      %v525 = vld [vmem:[%s414 + $0x168] sm:$0xf]
      %v526 = vld [vmem:[%s414 + $0x16c] sm:$0xf]
      %v527 = vld [vmem:[%s414 + $0x170] sm:$0xf]
      %v528 = vld [vmem:[%s414 + $0x174] sm:$0xf]
      %v529 = vld [vmem:[%s414 + $0x178] sm:$0xf]
      %v530 = vld [vmem:[%s414 + $0x17c] sm:$0xf]
      %v531 = vld [vmem:[%s414 + $0x180] sm:$0xf]
      %v532 = vld [vmem:[%s414 + $0x184] sm:$0xf]
      %v533 = vld [vmem:[%s414 + $0x188] sm:$0xf]
      %v534 = vld [vmem:[%s414 + $0x18c] sm:$0xf]
      %v535 = vld [vmem:[%s414 + $0x190] sm:$0xf]
      %v536 = vld [vmem:[%s414 + $0x194] sm:$0xf]
      %v537 = vld [vmem:[%s414 + $0x198] sm:$0xf]
      %v538 = vld [vmem:[%s414 + $0x19c] sm:$0xf]
      %v539 = vld [vmem:[%s414 + $0x1a0] sm:$0xf]
      %v540 = vld [vmem:[%s414 + $0x1a4] sm:$0xf]
      %v541 = vld [vmem:[%s414 + $0x1a8] sm:$0xf]
      %v542 = vld [vmem:[%s414 + $0x1ac] sm:$0xf]
      %v543 = vld [vmem:[%s414 + $0x1b0] sm:$0xf]
      %v544 = vld [vmem:[%s414 + $0x1b4] sm:$0xf]
      %v545 = vld [vmem:[%s414 + $0x1b8] sm:$0xf]
      %v546 = vld [vmem:[%s414 + $0x1bc] sm:$0xf]
      %v547 = vld [vmem:[%s414 + $0x1c0] sm:$0xf]
      %v548 = vld [vmem:[%s414 + $0x1c4] sm:$0xf]
      %v549 = vld [vmem:[%s414 + $0x1c8] sm:$0xf]
      %v550 = vld [vmem:[%s414 + $0x1cc] sm:$0xf]
      %v551 = vld [vmem:[%s414 + $0x1d0] sm:$0xf]
      %v552 = vld [vmem:[%s414 + $0x1d4] sm:$0xf]
      %v553 = vld [vmem:[%s414 + $0x1d8] sm:$0xf]
      %v554 = vld [vmem:[%s414 + $0x1dc] sm:$0xf]
      %v555 = vld [vmem:[%s414 + $0x1e0] sm:$0xf]
      %v556 = vld [vmem:[%s414 + $0x1e4] sm:$0xf]
      %v557 = vld [vmem:[%s414 + $0x1e8] sm:$0xf]
      %v558 = vld [vmem:[%s414 + $0x1ec] sm:$0xf]
      %v559 = vld [vmem:[%s414 + $0x1f0] sm:$0xf]
      %v560 = vld [vmem:[%s414 + $0x1f4] sm:$0xf]
      %v561 = vld [vmem:[%s414 + $0x1f8] sm:$0xf]
      %v562 = vld [vmem:[%s414 + $0x1fc] sm:$0xf]
      %v563 = vld [vmem:[%s414 + $0x200] sm:$0xf]
      %v564 = vld [vmem:[%s414 + $0x204] sm:$0xf]
      %v565 = vld [vmem:[%s414 + $0x208] sm:$0xf]
      %v566 = vld [vmem:[%s414 + $0x20c] sm:$0xf]
      %v567 = vld [vmem:[%s414 + $0x210] sm:$0xf]
      %v568 = vld [vmem:[%s414 + $0x214] sm:$0xf]
      %v569 = vld [vmem:[%s414 + $0x218] sm:$0xf]
      %v570 = vld [vmem:[%s414 + $0x21c] sm:$0xf]
      %v571 = vld [vmem:[%s414 + $0x220] sm:$0xf]
      %v572 = vld [vmem:[%s414 + $0x224] sm:$0xf]
      %v573 = vld [vmem:[%s414 + $0x228] sm:$0xf]
      %v574 = vld [vmem:[%s414 + $0x22c] sm:$0xf]
      %v575 = vld [vmem:[%s414 + $0x230] sm:$0xf]
      %v576 = vld [vmem:[%s414 + $0x234] sm:$0xf]
      %v577 = vld [vmem:[%s414 + $0x238] sm:$0xf]
      %v578 = vld [vmem:[%s414 + $0x23c] sm:$0xf]
      %v579 = vunpack.c.l.bf16 %v435
      %v580 = vunpack.c.l.bf16 %v436
      %v581 = vunpack.c.l.bf16 %v437
      %v582 = vunpack.c.l.bf16 %v438
      %v583 = vunpack.c.l.bf16 %v439
      %v584 = vunpack.c.l.bf16 %v440
      %v585 = vunpack.c.l.bf16 %v441
      %v586 = vunpack.c.l.bf16 %v442
      %v587 = vunpack.c.l.bf16 %v443
      %v588 = vunpack.c.l.bf16 %v444
      %v589 = vunpack.c.l.bf16 %v445
      %v590 = vunpack.c.l.bf16 %v446
      %v591 = vunpack.c.l.bf16 %v447
      %v592 = vunpack.c.l.bf16 %v448
      %v593 = vunpack.c.l.bf16 %v449
      %v594 = vunpack.c.l.bf16 %v450
      %v595 = vunpack.c.l.bf16 %v451
      %v596 = vunpack.c.l.bf16 %v452
      %v597 = vunpack.c.l.bf16 %v453
      %v598 = vunpack.c.l.bf16 %v454
      %v599 = vunpack.c.l.bf16 %v455
      %v600 = vunpack.c.l.bf16 %v456
      %v601 = vunpack.c.l.bf16 %v457
      %v602 = vunpack.c.l.bf16 %v458
      %v603 = vunpack.c.l.bf16 %v459
      %v604 = vunpack.c.l.bf16 %v460
      %v605 = vunpack.c.l.bf16 %v461
      %v606 = vunpack.c.l.bf16 %v462
      %v607 = vunpack.c.l.bf16 %v463
      %v608 = vunpack.c.l.bf16 %v464
      %v609 = vunpack.c.l.bf16 %v465
      %v610 = vunpack.c.l.bf16 %v466
      %v611 = vunpack.c.l.bf16 %v467
      %v612 = vunpack.c.l.bf16 %v468
      %v613 = vunpack.c.l.bf16 %v469
      %v614 = vunpack.c.l.bf16 %v470
      %v615 = vunpack.c.l.bf16 %v471
      %v616 = vunpack.c.l.bf16 %v472
      %v617 = vunpack.c.l.bf16 %v473
      %v618 = vunpack.c.l.bf16 %v474
      %v619 = vunpack.c.l.bf16 %v475
      %v620 = vunpack.c.l.bf16 %v476
      %v621 = vunpack.c.l.bf16 %v477
      %v622 = vunpack.c.l.bf16 %v478
      %v623 = vunpack.c.l.bf16 %v479
      %v624 = vunpack.c.l.bf16 %v480
      %v625 = vunpack.c.l.bf16 %v481
      %v626 = vunpack.c.l.bf16 %v482
      %v627 = vunpack.c.l.bf16 %v483
      %v628 = vunpack.c.l.bf16 %v484
      %v629 = vunpack.c.l.bf16 %v485
      %v630 = vunpack.c.l.bf16 %v486
      %v631 = vunpack.c.l.bf16 %v487
      %v632 = vunpack.c.l.bf16 %v488
      %v633 = vunpack.c.l.bf16 %v489
      %v634 = vunpack.c.l.bf16 %v490
      %v635 = vunpack.c.l.bf16 %v491
      %v636 = vunpack.c.l.bf16 %v492
      %v637 = vunpack.c.l.bf16 %v493
      %v638 = vunpack.c.l.bf16 %v494
      %v639 = vunpack.c.l.bf16 %v495
      %v640 = vunpack.c.l.bf16 %v496
      %v641 = vunpack.c.l.bf16 %v497
      %v642 = vunpack.c.l.bf16 %v498
      %v643 = vunpack.c.l.bf16 %v499
      %v644 = vunpack.c.l.bf16 %v500
      %v645 = vunpack.c.l.bf16 %v501
      %v646 = vunpack.c.l.bf16 %v502
      %v647 = vunpack.c.l.bf16 %v503
      %v648 = vunpack.c.l.bf16 %v504
      %v649 = vunpack.c.l.bf16 %v505
      %v650 = vunpack.c.l.bf16 %v506
      %v651 = vunpack.c.l.bf16 %v507
      %v652 = vunpack.c.l.bf16 %v508
      %v653 = vunpack.c.l.bf16 %v509
      %v654 = vunpack.c.l.bf16 %v510
      %v655 = vunpack.c.l.bf16 %v511
      %v656 = vunpack.c.l.bf16 %v512
      %v657 = vunpack.c.l.bf16 %v513
      %v658 = vunpack.c.l.bf16 %v514
      %v659 = vunpack.c.l.bf16 %v515
      %v660 = vunpack.c.l.bf16 %v516
      %v661 = vunpack.c.l.bf16 %v517
      %v662 = vunpack.c.l.bf16 %v518
      %v663 = vunpack.c.l.bf16 %v519
      %v664 = vunpack.c.l.bf16 %v520
      %v665 = vunpack.c.l.bf16 %v521
      %v666 = vunpack.c.l.bf16 %v522
      %v667 = vunpack.c.l.bf16 %v523
      %v668 = vunpack.c.l.bf16 %v524
      %v669 = vunpack.c.l.bf16 %v525
      %v670 = vunpack.c.l.bf16 %v526
      %v671 = vunpack.c.l.bf16 %v527
      %v672 = vunpack.c.l.bf16 %v528
      %v673 = vunpack.c.l.bf16 %v529
      %v674 = vunpack.c.l.bf16 %v530
      %v675 = vunpack.c.l.bf16 %v531
      %v676 = vunpack.c.l.bf16 %v532
      %v677 = vunpack.c.l.bf16 %v533
      %v678 = vunpack.c.l.bf16 %v534
      %v679 = vunpack.c.l.bf16 %v535
      %v680 = vunpack.c.l.bf16 %v536
      %v681 = vunpack.c.l.bf16 %v537
      %v682 = vunpack.c.l.bf16 %v538
      %v683 = vunpack.c.l.bf16 %v539
      %v684 = vunpack.c.l.bf16 %v540
      %v685 = vunpack.c.l.bf16 %v541
      %v686 = vunpack.c.l.bf16 %v542
      %v687 = vunpack.c.l.bf16 %v543
      %v688 = vunpack.c.l.bf16 %v544
      %v689 = vunpack.c.l.bf16 %v545
      %v690 = vunpack.c.l.bf16 %v546
      %v691 = vunpack.c.l.bf16 %v547
      %v692 = vunpack.c.l.bf16 %v548
      %v693 = vunpack.c.l.bf16 %v549
      %v694 = vunpack.c.l.bf16 %v550
      %v695 = vunpack.c.l.bf16 %v551
      %v696 = vunpack.c.l.bf16 %v552
      %v697 = vunpack.c.l.bf16 %v553
      %v698 = vunpack.c.l.bf16 %v554
      %v699 = vunpack.c.l.bf16 %v555
      %v700 = vunpack.c.l.bf16 %v556
      %v701 = vunpack.c.l.bf16 %v557
      %v702 = vunpack.c.l.bf16 %v558
      %v703 = vunpack.c.l.bf16 %v559
      %v704 = vunpack.c.l.bf16 %v560
      %v705 = vunpack.c.l.bf16 %v561
      %v706 = vunpack.c.l.bf16 %v562
      %v707 = vunpack.c.l.bf16 %v563
      %v708 = vunpack.c.l.bf16 %v564
      %v709 = vunpack.c.l.bf16 %v565
      %v710 = vunpack.c.l.bf16 %v566
      %v711 = vunpack.c.l.bf16 %v567
      %v712 = vunpack.c.l.bf16 %v568
      %v713 = vunpack.c.l.bf16 %v569
      %v714 = vunpack.c.l.bf16 %v570
      %v715 = vunpack.c.l.bf16 %v571
      %v716 = vunpack.c.l.bf16 %v572
      %v717 = vunpack.c.l.bf16 %v573
      %v718 = vunpack.c.l.bf16 %v574
      %v719 = vunpack.c.l.bf16 %v575
      %v720 = vunpack.c.l.bf16 %v576
      %v721 = vunpack.c.l.bf16 %v577
      %v722 = vunpack.c.l.bf16 %v578
      %v723 = vld [vmem:[%s420] sm:$0xf]
      %v724 = vld [vmem:[%s420 + $0x4] sm:$0xf]
      %v725 = vld [vmem:[%s420 + $0x8] sm:$0xf]
      %v726 = vld [vmem:[%s420 + $0xc] sm:$0xf]
      %v727 = vld [vmem:[%s420 + $0x10] sm:$0xf]
      %v728 = vld [vmem:[%s420 + $0x14] sm:$0xf]
      %v729 = vld [vmem:[%s420 + $0x18] sm:$0xf]
      %v730 = vld [vmem:[%s420 + $0x1c] sm:$0xf]
      %v731 = vld [vmem:[%s420 + $0x20] sm:$0xf]
      %v732 = vld [vmem:[%s420 + $0x24] sm:$0xf]
      %v733 = vld [vmem:[%s420 + $0x28] sm:$0xf]
      %v734 = vld [vmem:[%s420 + $0x2c] sm:$0xf]
      %v735 = vld [vmem:[%s420 + $0x30] sm:$0xf]
      %v736 = vld [vmem:[%s420 + $0x34] sm:$0xf]
      %v737 = vld [vmem:[%s420 + $0x38] sm:$0xf]
      %v738 = vld [vmem:[%s420 + $0x3c] sm:$0xf]
      %v739 = vld [vmem:[%s420 + $0x40] sm:$0xf]
      %v740 = vld [vmem:[%s420 + $0x44] sm:$0xf]
      %v741 = vld [vmem:[%s420 + $0x48] sm:$0xf]
      %v742 = vld [vmem:[%s420 + $0x4c] sm:$0xf]
      %v743 = vld [vmem:[%s420 + $0x50] sm:$0xf]
      %v744 = vld [vmem:[%s420 + $0x54] sm:$0xf]
      %v745 = vld [vmem:[%s420 + $0x58] sm:$0xf]
      %v746 = vld [vmem:[%s420 + $0x5c] sm:$0xf]
      %v747 = vld [vmem:[%s420 + $0x60] sm:$0xf]
      %v748 = vld [vmem:[%s420 + $0x64] sm:$0xf]
      %v749 = vld [vmem:[%s420 + $0x68] sm:$0xf]
      %v750 = vld [vmem:[%s420 + $0x6c] sm:$0xf]
      %v751 = vld [vmem:[%s420 + $0x70] sm:$0xf]
      %v752 = vld [vmem:[%s420 + $0x74] sm:$0xf]
      %v753 = vld [vmem:[%s420 + $0x78] sm:$0xf]
      %v754 = vld [vmem:[%s420 + $0x7c] sm:$0xf]
      %v755 = vld [vmem:[%s420 + $0x80] sm:$0xf]
      %v756 = vld [vmem:[%s420 + $0x84] sm:$0xf]
      %v757 = vld [vmem:[%s420 + $0x88] sm:$0xf]
      %v758 = vld [vmem:[%s420 + $0x8c] sm:$0xf]
      %v759 = vld [vmem:[%s420 + $0x90] sm:$0xf]
      %v760 = vld [vmem:[%s420 + $0x94] sm:$0xf]
      %v761 = vld [vmem:[%s420 + $0x98] sm:$0xf]
      %v762 = vld [vmem:[%s420 + $0x9c] sm:$0xf]
      %v763 = vld [vmem:[%s420 + $0xa0] sm:$0xf]
      %v764 = vld [vmem:[%s420 + $0xa4] sm:$0xf]
      %v765 = vld [vmem:[%s420 + $0xa8] sm:$0xf]
      %v766 = vld [vmem:[%s420 + $0xac] sm:$0xf]
      %v767 = vld [vmem:[%s420 + $0xb0] sm:$0xf]
      %v768 = vld [vmem:[%s420 + $0xb4] sm:$0xf]
      %v769 = vld [vmem:[%s420 + $0xb8] sm:$0xf]
      %v770 = vld [vmem:[%s420 + $0xbc] sm:$0xf]
      %v771 = vld [vmem:[%s420 + $0xc0] sm:$0xf]
      %v772 = vld [vmem:[%s420 + $0xc4] sm:$0xf]
      %v773 = vld [vmem:[%s420 + $0xc8] sm:$0xf]
      %v774 = vld [vmem:[%s420 + $0xcc] sm:$0xf]
      %v775 = vld [vmem:[%s420 + $0xd0] sm:$0xf]
      %v776 = vld [vmem:[%s420 + $0xd4] sm:$0xf]
      %v777 = vld [vmem:[%s420 + $0xd8] sm:$0xf]
      %v778 = vld [vmem:[%s420 + $0xdc] sm:$0xf]
      %v779 = vld [vmem:[%s420 + $0xe0] sm:$0xf]
      %v780 = vld [vmem:[%s420 + $0xe4] sm:$0xf]
      %v781 = vld [vmem:[%s420 + $0xe8] sm:$0xf]
      %v782 = vld [vmem:[%s420 + $0xec] sm:$0xf]
      %v783 = vld [vmem:[%s420 + $0xf0] sm:$0xf]
      %v784 = vld [vmem:[%s420 + $0xf4] sm:$0xf]
      %v785 = vld [vmem:[%s420 + $0xf8] sm:$0xf]
      %v786 = vld [vmem:[%s420 + $0xfc] sm:$0xf]
      %v787 = vld [vmem:[%s420 + $0x100] sm:$0xf]
      %v788 = vld [vmem:[%s420 + $0x104] sm:$0xf]
      %v789 = vld [vmem:[%s420 + $0x108] sm:$0xf]
      %v790 = vld [vmem:[%s420 + $0x10c] sm:$0xf]
      %v791 = vld [vmem:[%s420 + $0x110] sm:$0xf]
      %v792 = vld [vmem:[%s420 + $0x114] sm:$0xf]
      %v793 = vld [vmem:[%s420 + $0x118] sm:$0xf]
      %v794 = vld [vmem:[%s420 + $0x11c] sm:$0xf]
      %v795 = vld [vmem:[%s420 + $0x120] sm:$0xf]
      %v796 = vld [vmem:[%s420 + $0x124] sm:$0xf]
      %v797 = vld [vmem:[%s420 + $0x128] sm:$0xf]
      %v798 = vld [vmem:[%s420 + $0x12c] sm:$0xf]
      %v799 = vld [vmem:[%s420 + $0x130] sm:$0xf]
      %v800 = vld [vmem:[%s420 + $0x134] sm:$0xf]
      %v801 = vld [vmem:[%s420 + $0x138] sm:$0xf]
      %v802 = vld [vmem:[%s420 + $0x13c] sm:$0xf]
      %v803 = vld [vmem:[%s420 + $0x140] sm:$0xf]
      %v804 = vld [vmem:[%s420 + $0x144] sm:$0xf]
      %v805 = vld [vmem:[%s420 + $0x148] sm:$0xf]
      %v806 = vld [vmem:[%s420 + $0x14c] sm:$0xf]
      %v807 = vld [vmem:[%s420 + $0x150] sm:$0xf]
      %v808 = vld [vmem:[%s420 + $0x154] sm:$0xf]
      %v809 = vld [vmem:[%s420 + $0x158] sm:$0xf]
      %v810 = vld [vmem:[%s420 + $0x15c] sm:$0xf]
      %v811 = vld [vmem:[%s420 + $0x160] sm:$0xf]
      %v812 = vld [vmem:[%s420 + $0x164] sm:$0xf]
      %v813 = vld [vmem:[%s420 + $0x168] sm:$0xf]
      %v814 = vld [vmem:[%s420 + $0x16c] sm:$0xf]
      %v815 = vld [vmem:[%s420 + $0x170] sm:$0xf]
      %v816 = vld [vmem:[%s420 + $0x174] sm:$0xf]
      %v817 = vld [vmem:[%s420 + $0x178] sm:$0xf]
      %v818 = vld [vmem:[%s420 + $0x17c] sm:$0xf]
      %v819 = vld [vmem:[%s420 + $0x180] sm:$0xf]
      %v820 = vld [vmem:[%s420 + $0x184] sm:$0xf]
      %v821 = vld [vmem:[%s420 + $0x188] sm:$0xf]
      %v822 = vld [vmem:[%s420 + $0x18c] sm:$0xf]
      %v823 = vld [vmem:[%s420 + $0x190] sm:$0xf]
      %v824 = vld [vmem:[%s420 + $0x194] sm:$0xf]
      %v825 = vld [vmem:[%s420 + $0x198] sm:$0xf]
      %v826 = vld [vmem:[%s420 + $0x19c] sm:$0xf]
      %v827 = vld [vmem:[%s420 + $0x1a0] sm:$0xf]
      %v828 = vld [vmem:[%s420 + $0x1a4] sm:$0xf]
      %v829 = vld [vmem:[%s420 + $0x1a8] sm:$0xf]
      %v830 = vld [vmem:[%s420 + $0x1ac] sm:$0xf]
      %v831 = vld [vmem:[%s420 + $0x1b0] sm:$0xf]
      %v832 = vld [vmem:[%s420 + $0x1b4] sm:$0xf]
      %v833 = vld [vmem:[%s420 + $0x1b8] sm:$0xf]
      %v834 = vld [vmem:[%s420 + $0x1bc] sm:$0xf]
      %v835 = vld [vmem:[%s420 + $0x1c0] sm:$0xf]
      %v836 = vld [vmem:[%s420 + $0x1c4] sm:$0xf]
      %v837 = vld [vmem:[%s420 + $0x1c8] sm:$0xf]
      %v838 = vld [vmem:[%s420 + $0x1cc] sm:$0xf]
      %v839 = vld [vmem:[%s420 + $0x1d0] sm:$0xf]
      %v840 = vld [vmem:[%s420 + $0x1d4] sm:$0xf]
      %v841 = vld [vmem:[%s420 + $0x1d8] sm:$0xf]
      %v842 = vld [vmem:[%s420 + $0x1dc] sm:$0xf]
      %v843 = vld [vmem:[%s420 + $0x1e0] sm:$0xf]
      %v844 = vld [vmem:[%s420 + $0x1e4] sm:$0xf]
      %v845 = vld [vmem:[%s420 + $0x1e8] sm:$0xf]
      %v846 = vld [vmem:[%s420 + $0x1ec] sm:$0xf]
      %v847 = vld [vmem:[%s420 + $0x1f0] sm:$0xf]
      %v848 = vld [vmem:[%s420 + $0x1f4] sm:$0xf]
      %v849 = vld [vmem:[%s420 + $0x1f8] sm:$0xf]
      %v850 = vld [vmem:[%s420 + $0x1fc] sm:$0xf]
      %v851 = vld [vmem:[%s420 + $0x200] sm:$0xf]
      %v852 = vld [vmem:[%s420 + $0x204] sm:$0xf]
      %v853 = vld [vmem:[%s420 + $0x208] sm:$0xf]
      %v854 = vld [vmem:[%s420 + $0x20c] sm:$0xf]
      %v855 = vld [vmem:[%s420 + $0x210] sm:$0xf]
      %v856 = vld [vmem:[%s420 + $0x214] sm:$0xf]
      %v857 = vld [vmem:[%s420 + $0x218] sm:$0xf]
      %v858 = vld [vmem:[%s420 + $0x21c] sm:$0xf]
      %v859 = vld [vmem:[%s420 + $0x220] sm:$0xf]
      %v860 = vld [vmem:[%s420 + $0x224] sm:$0xf]
      %v861 = vld [vmem:[%s420 + $0x228] sm:$0xf]
      %v862 = vld [vmem:[%s420 + $0x22c] sm:$0xf]
      %v863 = vld [vmem:[%s420 + $0x230] sm:$0xf]
      %v864 = vld [vmem:[%s420 + $0x234] sm:$0xf]
      %v865 = vld [vmem:[%s420 + $0x238] sm:$0xf]
      %v866 = vld [vmem:[%s420 + $0x23c] sm:$0xf]
      %v867 = vunpack.c.l.bf16 %v723
      %v868 = vunpack.c.l.bf16 %v724
      %v869 = vunpack.c.l.bf16 %v725
      %v870 = vunpack.c.l.bf16 %v726
      %v871 = vunpack.c.l.bf16 %v727
      %v872 = vunpack.c.l.bf16 %v728
      %v873 = vunpack.c.l.bf16 %v729
      %v874 = vunpack.c.l.bf16 %v730
      %v875 = vunpack.c.l.bf16 %v731
      %v876 = vunpack.c.l.bf16 %v732
      %v877 = vunpack.c.l.bf16 %v733
      %v878 = vunpack.c.l.bf16 %v734
      %v879 = vunpack.c.l.bf16 %v735
      %v880 = vunpack.c.l.bf16 %v736
      %v881 = vunpack.c.l.bf16 %v737
      %v882 = vunpack.c.l.bf16 %v738
      %v883 = vunpack.c.l.bf16 %v739
      %v884 = vunpack.c.l.bf16 %v740
      %v885 = vunpack.c.l.bf16 %v741
      %v886 = vunpack.c.l.bf16 %v742
      %v887 = vunpack.c.l.bf16 %v743
      %v888 = vunpack.c.l.bf16 %v744
      %v889 = vunpack.c.l.bf16 %v745
      %v890 = vunpack.c.l.bf16 %v746
      %v891 = vunpack.c.l.bf16 %v747
      %v892 = vunpack.c.l.bf16 %v748
      %v893 = vunpack.c.l.bf16 %v749
      %v894 = vunpack.c.l.bf16 %v750
      %v895 = vunpack.c.l.bf16 %v751
      %v896 = vunpack.c.l.bf16 %v752
      %v897 = vunpack.c.l.bf16 %v753
      %v898 = vunpack.c.l.bf16 %v754
      %v899 = vunpack.c.l.bf16 %v755
      %v900 = vunpack.c.l.bf16 %v756
      %v901 = vunpack.c.l.bf16 %v757
      %v902 = vunpack.c.l.bf16 %v758
      %v903 = vunpack.c.l.bf16 %v759
      %v904 = vunpack.c.l.bf16 %v760
      %v905 = vunpack.c.l.bf16 %v761
      %v906 = vunpack.c.l.bf16 %v762
      %v907 = vunpack.c.l.bf16 %v763
      %v908 = vunpack.c.l.bf16 %v764
      %v909 = vunpack.c.l.bf16 %v765
      %v910 = vunpack.c.l.bf16 %v766
      %v911 = vunpack.c.l.bf16 %v767
      %v912 = vunpack.c.l.bf16 %v768
      %v913 = vunpack.c.l.bf16 %v769
      %v914 = vunpack.c.l.bf16 %v770
      %v915 = vunpack.c.l.bf16 %v771
      %v916 = vunpack.c.l.bf16 %v772
      %v917 = vunpack.c.l.bf16 %v773
      %v918 = vunpack.c.l.bf16 %v774
      %v919 = vunpack.c.l.bf16 %v775
      %v920 = vunpack.c.l.bf16 %v776
      %v921 = vunpack.c.l.bf16 %v777
      %v922 = vunpack.c.l.bf16 %v778
      %v923 = vunpack.c.l.bf16 %v779
      %v924 = vunpack.c.l.bf16 %v780
      %v925 = vunpack.c.l.bf16 %v781
      %v926 = vunpack.c.l.bf16 %v782
      %v927 = vunpack.c.l.bf16 %v783
      %v928 = vunpack.c.l.bf16 %v784
      %v929 = vunpack.c.l.bf16 %v785
      %v930 = vunpack.c.l.bf16 %v786
      %v931 = vunpack.c.l.bf16 %v787
      %v932 = vunpack.c.l.bf16 %v788
      %v933 = vunpack.c.l.bf16 %v789
      %v934 = vunpack.c.l.bf16 %v790
      %v935 = vunpack.c.l.bf16 %v791
      %v936 = vunpack.c.l.bf16 %v792
      %v937 = vunpack.c.l.bf16 %v793
      %v938 = vunpack.c.l.bf16 %v794
      %v939 = vunpack.c.l.bf16 %v795
      %v940 = vunpack.c.l.bf16 %v796
      %v941 = vunpack.c.l.bf16 %v797
      %v942 = vunpack.c.l.bf16 %v798
      %v943 = vunpack.c.l.bf16 %v799
      %v944 = vunpack.c.l.bf16 %v800
      %v945 = vunpack.c.l.bf16 %v801
      %v946 = vunpack.c.l.bf16 %v802
      %v947 = vunpack.c.l.bf16 %v803
      %v948 = vunpack.c.l.bf16 %v804
      %v949 = vunpack.c.l.bf16 %v805
      %v950 = vunpack.c.l.bf16 %v806
      %v951 = vunpack.c.l.bf16 %v807
      %v952 = vunpack.c.l.bf16 %v808
      %v953 = vunpack.c.l.bf16 %v809
      %v954 = vunpack.c.l.bf16 %v810
      %v955 = vunpack.c.l.bf16 %v811
      %v956 = vunpack.c.l.bf16 %v812
      %v957 = vunpack.c.l.bf16 %v813
      %v958 = vunpack.c.l.bf16 %v814
      %v959 = vunpack.c.l.bf16 %v815
      %v960 = vunpack.c.l.bf16 %v816
      %v961 = vunpack.c.l.bf16 %v817
      %v962 = vunpack.c.l.bf16 %v818
      %v963 = vunpack.c.l.bf16 %v819
      %v964 = vunpack.c.l.bf16 %v820
      %v965 = vunpack.c.l.bf16 %v821
      %v966 = vunpack.c.l.bf16 %v822
      %v967 = vunpack.c.l.bf16 %v823
      %v968 = vunpack.c.l.bf16 %v824
      %v969 = vunpack.c.l.bf16 %v825
      %v970 = vunpack.c.l.bf16 %v826
      %v971 = vunpack.c.l.bf16 %v827
      %v972 = vunpack.c.l.bf16 %v828
      %v973 = vunpack.c.l.bf16 %v829
      %v974 = vunpack.c.l.bf16 %v830
      %v975 = vunpack.c.l.bf16 %v831
      %v976 = vunpack.c.l.bf16 %v832
      %v977 = vunpack.c.l.bf16 %v833
      %v978 = vunpack.c.l.bf16 %v834
      %v979 = vunpack.c.l.bf16 %v835
      %v980 = vunpack.c.l.bf16 %v836
      %v981 = vunpack.c.l.bf16 %v837
      %v982 = vunpack.c.l.bf16 %v838
      %v983 = vunpack.c.l.bf16 %v839
      %v984 = vunpack.c.l.bf16 %v840
      %v985 = vunpack.c.l.bf16 %v841
      %v986 = vunpack.c.l.bf16 %v842
      %v987 = vunpack.c.l.bf16 %v843
      %v988 = vunpack.c.l.bf16 %v844
      %v989 = vunpack.c.l.bf16 %v845
      %v990 = vunpack.c.l.bf16 %v846
      %v991 = vunpack.c.l.bf16 %v847
      %v992 = vunpack.c.l.bf16 %v848
      %v993 = vunpack.c.l.bf16 %v849
      %v994 = vunpack.c.l.bf16 %v850
      %v995 = vunpack.c.l.bf16 %v851
      %v996 = vunpack.c.l.bf16 %v852
      %v997 = vunpack.c.l.bf16 %v853
      %v998 = vunpack.c.l.bf16 %v854
      %v999 = vunpack.c.l.bf16 %v855
      %v1000 = vunpack.c.l.bf16 %v856
      %v1001 = vunpack.c.l.bf16 %v857
      %v1002 = vunpack.c.l.bf16 %v858
      %v1003 = vunpack.c.l.bf16 %v859
      %v1004 = vunpack.c.l.bf16 %v860
      %v1005 = vunpack.c.l.bf16 %v861
      %v1006 = vunpack.c.l.bf16 %v862
      %v1007 = vunpack.c.l.bf16 %v863
      %v1008 = vunpack.c.l.bf16 %v864
      %v1009 = vunpack.c.l.bf16 %v865
      %v1010 = vunpack.c.l.bf16 %v866
      %v1011 = vadd.f32 %v579, %v867
      %v1012 = vadd.f32 %v580, %v868
      %v1013 = vadd.f32 %v581, %v869
      %v1014 = vadd.f32 %v582, %v870
      %v1015 = vadd.f32 %v583, %v871
      %v1016 = vadd.f32 %v584, %v872
      %v1017 = vadd.f32 %v585, %v873
      %v1018 = vadd.f32 %v586, %v874
      %v1019 = vadd.f32 %v587, %v875
      %v1020 = vadd.f32 %v588, %v876
      %v1021 = vadd.f32 %v589, %v877
      %v1022 = vadd.f32 %v590, %v878
      %v1023 = vadd.f32 %v591, %v879
      %v1024 = vadd.f32 %v592, %v880
      %v1025 = vadd.f32 %v593, %v881
      %v1026 = vadd.f32 %v594, %v882
      %v1027 = vadd.f32 %v595, %v883
      %v1028 = vadd.f32 %v596, %v884
      %v1029 = vadd.f32 %v597, %v885
      %v1030 = vadd.f32 %v598, %v886
      %v1031 = vadd.f32 %v599, %v887
      %v1032 = vadd.f32 %v600, %v888
      %v1033 = vadd.f32 %v601, %v889
      %v1034 = vadd.f32 %v602, %v890
      %v1035 = vadd.f32 %v603, %v891
      %v1036 = vadd.f32 %v604, %v892
      %v1037 = vadd.f32 %v605, %v893
      %v1038 = vadd.f32 %v606, %v894
      %v1039 = vadd.f32 %v607, %v895
      %v1040 = vadd.f32 %v608, %v896
      %v1041 = vadd.f32 %v609, %v897
      %v1042 = vadd.f32 %v610, %v898
      %v1043 = vadd.f32 %v611, %v899
      %v1044 = vadd.f32 %v612, %v900
      %v1045 = vadd.f32 %v613, %v901
      %v1046 = vadd.f32 %v614, %v902
      %v1047 = vadd.f32 %v615, %v903
      %v1048 = vadd.f32 %v616, %v904
      %v1049 = vadd.f32 %v617, %v905
      %v1050 = vadd.f32 %v618, %v906
      %v1051 = vadd.f32 %v619, %v907
      %v1052 = vadd.f32 %v620, %v908
      %v1053 = vadd.f32 %v621, %v909
      %v1054 = vadd.f32 %v622, %v910
      %v1055 = vadd.f32 %v623, %v911
      %v1056 = vadd.f32 %v624, %v912
      %v1057 = vadd.f32 %v625, %v913
      %v1058 = vadd.f32 %v626, %v914
      %v1059 = vadd.f32 %v627, %v915
      %v1060 = vadd.f32 %v628, %v916
      %v1061 = vadd.f32 %v629, %v917
      %v1062 = vadd.f32 %v630, %v918
      %v1063 = vadd.f32 %v631, %v919
      %v1064 = vadd.f32 %v632, %v920
      %v1065 = vadd.f32 %v633, %v921
      %v1066 = vadd.f32 %v634, %v922
      %v1067 = vadd.f32 %v635, %v923
      %v1068 = vadd.f32 %v636, %v924
      %v1069 = vadd.f32 %v637, %v925
      %v1070 = vadd.f32 %v638, %v926
      %v1071 = vadd.f32 %v639, %v927
      %v1072 = vadd.f32 %v640, %v928
      %v1073 = vadd.f32 %v641, %v929
      %v1074 = vadd.f32 %v642, %v930
      %v1075 = vadd.f32 %v643, %v931
      %v1076 = vadd.f32 %v644, %v932
      %v1077 = vadd.f32 %v645, %v933
      %v1078 = vadd.f32 %v646, %v934
      %v1079 = vadd.f32 %v647, %v935
      %v1080 = vadd.f32 %v648, %v936
      %v1081 = vadd.f32 %v649, %v937
      %v1082 = vadd.f32 %v650, %v938
      %v1083 = vadd.f32 %v651, %v939
      %v1084 = vadd.f32 %v652, %v940
      %v1085 = vadd.f32 %v653, %v941
      %v1086 = vadd.f32 %v654, %v942
      %v1087 = vadd.f32 %v655, %v943
      %v1088 = vadd.f32 %v656, %v944
      %v1089 = vadd.f32 %v657, %v945
      %v1090 = vadd.f32 %v658, %v946
      %v1091 = vadd.f32 %v659, %v947
      %v1092 = vadd.f32 %v660, %v948
      %v1093 = vadd.f32 %v661, %v949
      %v1094 = vadd.f32 %v662, %v950
      %v1095 = vadd.f32 %v663, %v951
      %v1096 = vadd.f32 %v664, %v952
      %v1097 = vadd.f32 %v665, %v953
      %v1098 = vadd.f32 %v666, %v954
      %v1099 = vadd.f32 %v667, %v955
      %v1100 = vadd.f32 %v668, %v956
      %v1101 = vadd.f32 %v669, %v957
      %v1102 = vadd.f32 %v670, %v958
      %v1103 = vadd.f32 %v671, %v959
      %v1104 = vadd.f32 %v672, %v960
      %v1105 = vadd.f32 %v673, %v961
      %v1106 = vadd.f32 %v674, %v962
      %v1107 = vadd.f32 %v675, %v963
      %v1108 = vadd.f32 %v676, %v964
      %v1109 = vadd.f32 %v677, %v965
      %v1110 = vadd.f32 %v678, %v966
      %v1111 = vadd.f32 %v679, %v967
      %v1112 = vadd.f32 %v680, %v968
      %v1113 = vadd.f32 %v681, %v969
      %v1114 = vadd.f32 %v682, %v970
      %v1115 = vadd.f32 %v683, %v971
      %v1116 = vadd.f32 %v684, %v972
      %v1117 = vadd.f32 %v685, %v973
      %v1118 = vadd.f32 %v686, %v974
      %v1119 = vadd.f32 %v687, %v975
      %v1120 = vadd.f32 %v688, %v976
      %v1121 = vadd.f32 %v689, %v977
      %v1122 = vadd.f32 %v690, %v978
      %v1123 = vadd.f32 %v691, %v979
      %v1124 = vadd.f32 %v692, %v980
      %v1125 = vadd.f32 %v693, %v981
      %v1126 = vadd.f32 %v694, %v982
      %v1127 = vadd.f32 %v695, %v983
      %v1128 = vadd.f32 %v696, %v984
      %v1129 = vadd.f32 %v697, %v985
      %v1130 = vadd.f32 %v698, %v986
      %v1131 = vadd.f32 %v699, %v987
      %v1132 = vadd.f32 %v700, %v988
      %v1133 = vadd.f32 %v701, %v989
      %v1134 = vadd.f32 %v702, %v990
      %v1135 = vadd.f32 %v703, %v991
      %v1136 = vadd.f32 %v704, %v992
      %v1137 = vadd.f32 %v705, %v993
      %v1138 = vadd.f32 %v706, %v994
      %v1139 = vadd.f32 %v707, %v995
      %v1140 = vadd.f32 %v708, %v996
      %v1141 = vadd.f32 %v709, %v997
      %v1142 = vadd.f32 %v710, %v998
      %v1143 = vadd.f32 %v711, %v999
      %v1144 = vadd.f32 %v712, %v1000
      %v1145 = vadd.f32 %v713, %v1001
      %v1146 = vadd.f32 %v714, %v1002
      %v1147 = vadd.f32 %v715, %v1003
      %v1148 = vadd.f32 %v716, %v1004
      %v1149 = vadd.f32 %v717, %v1005
      %v1150 = vadd.f32 %v718, %v1006
      %v1151 = vadd.f32 %v719, %v1007
      %v1152 = vadd.f32 %v720, %v1008
      %v1153 = vadd.f32 %v721, %v1009
      %v1154 = vadd.f32 %v722, %v1010
      %v1155 = vld [vmem:[%s3] sm:$0x1]
      %v1156 = vld [vmem:[%s4] sm:$0x1]
      %1157 = vadd.xlane.f32.xlu0 %v1011
      %v1158 = vpop.xlane.xlu0 %1157
      %1159 = vadd.xlane.f32.xlu0 %v1012
      %v1160 = vpop.xlane.xlu0 %1159
      %1161 = vadd.xlane.f32.xlu0 %v1013
      %v1162 = vpop.xlane.xlu0 %1161
      %1163 = vadd.xlane.f32.xlu0 %v1014
      %v1164 = vpop.xlane.xlu0 %1163
      %1165 = vadd.xlane.f32.xlu0 %v1015
      %v1166 = vpop.xlane.xlu0 %1165
      %1167 = vadd.xlane.f32.xlu0 %v1016
      %v1168 = vpop.xlane.xlu0 %1167
      %1169 = vadd.xlane.f32.xlu0 %v1017
      %v1170 = vpop.xlane.xlu0 %1169
      %1171 = vadd.xlane.f32.xlu0 %v1018
      %v1172 = vpop.xlane.xlu0 %1171
      %1173 = vadd.xlane.f32.xlu0 %v1019
      %v1174 = vpop.xlane.xlu0 %1173
      %1175 = vadd.xlane.f32.xlu0 %v1020
      %v1176 = vpop.xlane.xlu0 %1175
      %1177 = vadd.xlane.f32.xlu0 %v1021
      %v1178 = vpop.xlane.xlu0 %1177
      %1179 = vadd.xlane.f32.xlu0 %v1022
      %v1180 = vpop.xlane.xlu0 %1179
      %1181 = vadd.xlane.f32.xlu0 %v1023
      %v1182 = vpop.xlane.xlu0 %1181
      %1183 = vadd.xlane.f32.xlu0 %v1024
      %v1184 = vpop.xlane.xlu0 %1183
      %1185 = vadd.xlane.f32.xlu0 %v1025
      %v1186 = vpop.xlane.xlu0 %1185
      %1187 = vadd.xlane.f32.xlu0 %v1026
      %v1188 = vpop.xlane.xlu0 %1187
      %1189 = vadd.xlane.f32.xlu0 %v1027
      %v1190 = vpop.xlane.xlu0 %1189
      %1191 = vadd.xlane.f32.xlu0 %v1028
      %v1192 = vpop.xlane.xlu0 %1191
      %1193 = vadd.xlane.f32.xlu0 %v1029
      %v1194 = vpop.xlane.xlu0 %1193
      %1195 = vadd.xlane.f32.xlu0 %v1030
      %v1196 = vpop.xlane.xlu0 %1195
      %1197 = vadd.xlane.f32.xlu0 %v1031
      %v1198 = vpop.xlane.xlu0 %1197
      %1199 = vadd.xlane.f32.xlu0 %v1032
      %v1200 = vpop.xlane.xlu0 %1199
      %1201 = vadd.xlane.f32.xlu0 %v1033
      %v1202 = vpop.xlane.xlu0 %1201
      %1203 = vadd.xlane.f32.xlu0 %v1034
      %v1204 = vpop.xlane.xlu0 %1203
      %1205 = vadd.xlane.f32.xlu0 %v1035
      %v1206 = vpop.xlane.xlu0 %1205
      %1207 = vadd.xlane.f32.xlu0 %v1036
      %v1208 = vpop.xlane.xlu0 %1207
      %1209 = vadd.xlane.f32.xlu0 %v1037
      %v1210 = vpop.xlane.xlu0 %1209
      %1211 = vadd.xlane.f32.xlu0 %v1038
      %v1212 = vpop.xlane.xlu0 %1211
      %1213 = vadd.xlane.f32.xlu0 %v1039
      %v1214 = vpop.xlane.xlu0 %1213
      %1215 = vadd.xlane.f32.xlu0 %v1040
      %v1216 = vpop.xlane.xlu0 %1215
      %1217 = vadd.xlane.f32.xlu0 %v1041
      %v1218 = vpop.xlane.xlu0 %1217
      %1219 = vadd.xlane.f32.xlu0 %v1042
      %v1220 = vpop.xlane.xlu0 %1219
      %1221 = vadd.xlane.f32.xlu0 %v1043
      %v1222 = vpop.xlane.xlu0 %1221
      %1223 = vadd.xlane.f32.xlu0 %v1044
      %v1224 = vpop.xlane.xlu0 %1223
      %1225 = vadd.xlane.f32.xlu0 %v1045
      %v1226 = vpop.xlane.xlu0 %1225
      %1227 = vadd.xlane.f32.xlu0 %v1046
      %v1228 = vpop.xlane.xlu0 %1227
      %1229 = vadd.xlane.f32.xlu0 %v1047
      %v1230 = vpop.xlane.xlu0 %1229
      %1231 = vadd.xlane.f32.xlu0 %v1048
      %v1232 = vpop.xlane.xlu0 %1231
      %1233 = vadd.xlane.f32.xlu0 %v1049
      %v1234 = vpop.xlane.xlu0 %1233
      %1235 = vadd.xlane.f32.xlu0 %v1050
      %v1236 = vpop.xlane.xlu0 %1235
      %1237 = vadd.xlane.f32.xlu0 %v1051
      %v1238 = vpop.xlane.xlu0 %1237
      %1239 = vadd.xlane.f32.xlu0 %v1052
      %v1240 = vpop.xlane.xlu0 %1239
      %1241 = vadd.xlane.f32.xlu0 %v1053
      %v1242 = vpop.xlane.xlu0 %1241
      %1243 = vadd.xlane.f32.xlu0 %v1054
      %v1244 = vpop.xlane.xlu0 %1243
      %1245 = vadd.xlane.f32.xlu0 %v1055
      %v1246 = vpop.xlane.xlu0 %1245
      %1247 = vadd.xlane.f32.xlu0 %v1056
      %v1248 = vpop.xlane.xlu0 %1247
      %1249 = vadd.xlane.f32.xlu0 %v1057
      %v1250 = vpop.xlane.xlu0 %1249
      %1251 = vadd.xlane.f32.xlu0 %v1058
      %v1252 = vpop.xlane.xlu0 %1251
      %1253 = vadd.xlane.f32.xlu0 %v1059
      %v1254 = vpop.xlane.xlu0 %1253
      %1255 = vadd.xlane.f32.xlu0 %v1060
      %v1256 = vpop.xlane.xlu0 %1255
      %1257 = vadd.xlane.f32.xlu0 %v1061
      %v1258 = vpop.xlane.xlu0 %1257
      %1259 = vadd.xlane.f32.xlu0 %v1062
      %v1260 = vpop.xlane.xlu0 %1259
      %1261 = vadd.xlane.f32.xlu0 %v1063
      %v1262 = vpop.xlane.xlu0 %1261
      %1263 = vadd.xlane.f32.xlu0 %v1064
      %v1264 = vpop.xlane.xlu0 %1263
      %1265 = vadd.xlane.f32.xlu0 %v1065
      %v1266 = vpop.xlane.xlu0 %1265
      %1267 = vadd.xlane.f32.xlu0 %v1066
      %v1268 = vpop.xlane.xlu0 %1267
      %1269 = vadd.xlane.f32.xlu0 %v1067
      %v1270 = vpop.xlane.xlu0 %1269
      %1271 = vadd.xlane.f32.xlu0 %v1068
      %v1272 = vpop.xlane.xlu0 %1271
      %1273 = vadd.xlane.f32.xlu0 %v1069
      %v1274 = vpop.xlane.xlu0 %1273
      %1275 = vadd.xlane.f32.xlu0 %v1070
      %v1276 = vpop.xlane.xlu0 %1275
      %1277 = vadd.xlane.f32.xlu0 %v1071
      %v1278 = vpop.xlane.xlu0 %1277
      %1279 = vadd.xlane.f32.xlu0 %v1072
      %v1280 = vpop.xlane.xlu0 %1279
      %1281 = vadd.xlane.f32.xlu0 %v1073
      %v1282 = vpop.xlane.xlu0 %1281
      %1283 = vadd.xlane.f32.xlu0 %v1074
      %v1284 = vpop.xlane.xlu0 %1283
      %1285 = vadd.xlane.f32.xlu0 %v1075
      %v1286 = vpop.xlane.xlu0 %1285
      %1287 = vadd.xlane.f32.xlu0 %v1076
      %v1288 = vpop.xlane.xlu0 %1287
      %1289 = vadd.xlane.f32.xlu0 %v1077
      %v1290 = vpop.xlane.xlu0 %1289
      %1291 = vadd.xlane.f32.xlu0 %v1078
      %v1292 = vpop.xlane.xlu0 %1291
      %1293 = vadd.xlane.f32.xlu0 %v1079
      %v1294 = vpop.xlane.xlu0 %1293
      %1295 = vadd.xlane.f32.xlu0 %v1080
      %v1296 = vpop.xlane.xlu0 %1295
      %1297 = vadd.xlane.f32.xlu0 %v1081
      %v1298 = vpop.xlane.xlu0 %1297
      %1299 = vadd.xlane.f32.xlu0 %v1082
      %v1300 = vpop.xlane.xlu0 %1299
      %1301 = vadd.xlane.f32.xlu0 %v1083
      %v1302 = vpop.xlane.xlu0 %1301
      %1303 = vadd.xlane.f32.xlu0 %v1084
      %v1304 = vpop.xlane.xlu0 %1303
      %1305 = vadd.xlane.f32.xlu0 %v1085
      %v1306 = vpop.xlane.xlu0 %1305
      %1307 = vadd.xlane.f32.xlu0 %v1086
      %v1308 = vpop.xlane.xlu0 %1307
      %1309 = vadd.xlane.f32.xlu0 %v1087
      %v1310 = vpop.xlane.xlu0 %1309
      %1311 = vadd.xlane.f32.xlu0 %v1088
      %v1312 = vpop.xlane.xlu0 %1311
      %1313 = vadd.xlane.f32.xlu0 %v1089
      %v1314 = vpop.xlane.xlu0 %1313
      %1315 = vadd.xlane.f32.xlu0 %v1090
      %v1316 = vpop.xlane.xlu0 %1315
      %1317 = vadd.xlane.f32.xlu0 %v1091
      %v1318 = vpop.xlane.xlu0 %1317
      %1319 = vadd.xlane.f32.xlu0 %v1092
      %v1320 = vpop.xlane.xlu0 %1319
      %1321 = vadd.xlane.f32.xlu0 %v1093
      %v1322 = vpop.xlane.xlu0 %1321
      %1323 = vadd.xlane.f32.xlu0 %v1094
      %v1324 = vpop.xlane.xlu0 %1323
      %1325 = vadd.xlane.f32.xlu0 %v1095
      %v1326 = vpop.xlane.xlu0 %1325
      %1327 = vadd.xlane.f32.xlu0 %v1096
      %v1328 = vpop.xlane.xlu0 %1327
      %1329 = vadd.xlane.f32.xlu0 %v1097
      %v1330 = vpop.xlane.xlu0 %1329
      %1331 = vadd.xlane.f32.xlu0 %v1098
      %v1332 = vpop.xlane.xlu0 %1331
      %1333 = vadd.xlane.f32.xlu0 %v1099
      %v1334 = vpop.xlane.xlu0 %1333
      %1335 = vadd.xlane.f32.xlu0 %v1100
      %v1336 = vpop.xlane.xlu0 %1335
      %1337 = vadd.xlane.f32.xlu0 %v1101
      %v1338 = vpop.xlane.xlu0 %1337
      %1339 = vadd.xlane.f32.xlu0 %v1102
      %v1340 = vpop.xlane.xlu0 %1339
      %1341 = vadd.xlane.f32.xlu0 %v1103
      %v1342 = vpop.xlane.xlu0 %1341
      %1343 = vadd.xlane.f32.xlu0 %v1104
      %v1344 = vpop.xlane.xlu0 %1343
      %1345 = vadd.xlane.f32.xlu0 %v1105
      %v1346 = vpop.xlane.xlu0 %1345
      %1347 = vadd.xlane.f32.xlu0 %v1106
      %v1348 = vpop.xlane.xlu0 %1347
      %1349 = vadd.xlane.f32.xlu0 %v1107
      %v1350 = vpop.xlane.xlu0 %1349
      %1351 = vadd.xlane.f32.xlu0 %v1108
      %v1352 = vpop.xlane.xlu0 %1351
      %1353 = vadd.xlane.f32.xlu0 %v1109
      %v1354 = vpop.xlane.xlu0 %1353
      %1355 = vadd.xlane.f32.xlu0 %v1110
      %v1356 = vpop.xlane.xlu0 %1355
      %1357 = vadd.xlane.f32.xlu0 %v1111
      %v1358 = vpop.xlane.xlu0 %1357
      %1359 = vadd.xlane.f32.xlu0 %v1112
      %v1360 = vpop.xlane.xlu0 %1359
      %1361 = vadd.xlane.f32.xlu0 %v1113
      %v1362 = vpop.xlane.xlu0 %1361
      %1363 = vadd.xlane.f32.xlu0 %v1114
      %v1364 = vpop.xlane.xlu0 %1363
      %1365 = vadd.xlane.f32.xlu0 %v1115
      %v1366 = vpop.xlane.xlu0 %1365
      %1367 = vadd.xlane.f32.xlu0 %v1116
      %v1368 = vpop.xlane.xlu0 %1367
      %1369 = vadd.xlane.f32.xlu0 %v1117
      %v1370 = vpop.xlane.xlu0 %1369
      %1371 = vadd.xlane.f32.xlu0 %v1118
      %v1372 = vpop.xlane.xlu0 %1371
      %1373 = vadd.xlane.f32.xlu0 %v1119
      %v1374 = vpop.xlane.xlu0 %1373
      %1375 = vadd.xlane.f32.xlu0 %v1120
      %v1376 = vpop.xlane.xlu0 %1375
      %1377 = vadd.xlane.f32.xlu0 %v1121
      %v1378 = vpop.xlane.xlu0 %1377
      %1379 = vadd.xlane.f32.xlu0 %v1122
      %v1380 = vpop.xlane.xlu0 %1379
      %1381 = vadd.xlane.f32.xlu0 %v1123
      %v1382 = vpop.xlane.xlu0 %1381
      %1383 = vadd.xlane.f32.xlu0 %v1124
      %v1384 = vpop.xlane.xlu0 %1383
      %1385 = vadd.xlane.f32.xlu0 %v1125
      %v1386 = vpop.xlane.xlu0 %1385
      %1387 = vadd.xlane.f32.xlu0 %v1126
      %v1388 = vpop.xlane.xlu0 %1387
      %1389 = vadd.xlane.f32.xlu0 %v1127
      %v1390 = vpop.xlane.xlu0 %1389
      %1391 = vadd.xlane.f32.xlu0 %v1128
      %v1392 = vpop.xlane.xlu0 %1391
      %1393 = vadd.xlane.f32.xlu0 %v1129
      %v1394 = vpop.xlane.xlu0 %1393
      %1395 = vadd.xlane.f32.xlu0 %v1130
      %v1396 = vpop.xlane.xlu0 %1395
      %1397 = vadd.xlane.f32.xlu0 %v1131
      %v1398 = vpop.xlane.xlu0 %1397
      %1399 = vadd.xlane.f32.xlu0 %v1132
      %v1400 = vpop.xlane.xlu0 %1399
      %1401 = vadd.xlane.f32.xlu0 %v1133
      %v1402 = vpop.xlane.xlu0 %1401
      %1403 = vadd.xlane.f32.xlu0 %v1134
      %v1404 = vpop.xlane.xlu0 %1403
      %1405 = vadd.xlane.f32.xlu0 %v1135
      %v1406 = vpop.xlane.xlu0 %1405
      %1407 = vadd.xlane.f32.xlu0 %v1136
      %v1408 = vpop.xlane.xlu0 %1407
      %1409 = vadd.xlane.f32.xlu0 %v1137
      %v1410 = vpop.xlane.xlu0 %1409
      %1411 = vadd.xlane.f32.xlu0 %v1138
      %v1412 = vpop.xlane.xlu0 %1411
      %1413 = vadd.xlane.f32.xlu0 %v1139
      %v1414 = vpop.xlane.xlu0 %1413
      %1415 = vadd.xlane.f32.xlu0 %v1140
      %v1416 = vpop.xlane.xlu0 %1415
      %1417 = vadd.xlane.f32.xlu0 %v1141
      %v1418 = vpop.xlane.xlu0 %1417
      %1419 = vadd.xlane.f32.xlu0 %v1142
      %v1420 = vpop.xlane.xlu0 %1419
      %1421 = vadd.xlane.f32.xlu0 %v1143
      %v1422 = vpop.xlane.xlu0 %1421
      %1423 = vadd.xlane.f32.xlu0 %v1144
      %v1424 = vpop.xlane.xlu0 %1423
      %1425 = vadd.xlane.f32.xlu0 %v1145
      %v1426 = vpop.xlane.xlu0 %1425
      %1427 = vadd.xlane.f32.xlu0 %v1146
      %v1428 = vpop.xlane.xlu0 %1427
      %1429 = vadd.xlane.f32.xlu0 %v1147
      %v1430 = vpop.xlane.xlu0 %1429
      %1431 = vadd.xlane.f32.xlu0 %v1148
      %v1432 = vpop.xlane.xlu0 %1431
      %1433 = vadd.xlane.f32.xlu0 %v1149
      %v1434 = vpop.xlane.xlu0 %1433
      %1435 = vadd.xlane.f32.xlu0 %v1150
      %v1436 = vpop.xlane.xlu0 %1435
      %1437 = vadd.xlane.f32.xlu0 %v1151
      %v1438 = vpop.xlane.xlu0 %1437
      %1439 = vadd.xlane.f32.xlu0 %v1152
      %v1440 = vpop.xlane.xlu0 %1439
      %1441 = vadd.xlane.f32.xlu0 %v1153
      %v1442 = vpop.xlane.xlu0 %1441
      %1443 = vadd.xlane.f32.xlu0 %v1154
      %v1444 = vpop.xlane.xlu0 %1443
      %v1445 = vrcp.pop 128.0
      %v1446 = vmul.f32 %v1158, %v1445
      %v1447 = vmul.f32 %v1160, %v1445
      %v1448 = vmul.f32 %v1162, %v1445
      %v1449 = vmul.f32 %v1164, %v1445
      %v1450 = vmul.f32 %v1166, %v1445
      %v1451 = vmul.f32 %v1168, %v1445
      %v1452 = vmul.f32 %v1170, %v1445
      %v1453 = vmul.f32 %v1172, %v1445
      %v1454 = vmul.f32 %v1174, %v1445
      %v1455 = vmul.f32 %v1176, %v1445
      %v1456 = vmul.f32 %v1178, %v1445
      %v1457 = vmul.f32 %v1180, %v1445
      %v1458 = vmul.f32 %v1182, %v1445
      %v1459 = vmul.f32 %v1184, %v1445
      %v1460 = vmul.f32 %v1186, %v1445
      %v1461 = vmul.f32 %v1188, %v1445
      %v1462 = vmul.f32 %v1190, %v1445
      %v1463 = vmul.f32 %v1192, %v1445
      %v1464 = vmul.f32 %v1194, %v1445
      %v1465 = vmul.f32 %v1196, %v1445
      %v1466 = vmul.f32 %v1198, %v1445
      %v1467 = vmul.f32 %v1200, %v1445
      %v1468 = vmul.f32 %v1202, %v1445
      %v1469 = vmul.f32 %v1204, %v1445
      %v1470 = vmul.f32 %v1206, %v1445
      %v1471 = vmul.f32 %v1208, %v1445
      %v1472 = vmul.f32 %v1210, %v1445
      %v1473 = vmul.f32 %v1212, %v1445
      %v1474 = vmul.f32 %v1214, %v1445
      %v1475 = vmul.f32 %v1216, %v1445
      %v1476 = vmul.f32 %v1218, %v1445
      %v1477 = vmul.f32 %v1220, %v1445
      %v1478 = vmul.f32 %v1222, %v1445
      %v1479 = vmul.f32 %v1224, %v1445
      %v1480 = vmul.f32 %v1226, %v1445
      %v1481 = vmul.f32 %v1228, %v1445
      %v1482 = vmul.f32 %v1230, %v1445
      %v1483 = vmul.f32 %v1232, %v1445
      %v1484 = vmul.f32 %v1234, %v1445
      %v1485 = vmul.f32 %v1236, %v1445
      %v1486 = vmul.f32 %v1238, %v1445
      %v1487 = vmul.f32 %v1240, %v1445
      %v1488 = vmul.f32 %v1242, %v1445
      %v1489 = vmul.f32 %v1244, %v1445
      %v1490 = vmul.f32 %v1246, %v1445
      %v1491 = vmul.f32 %v1248, %v1445
      %v1492 = vmul.f32 %v1250, %v1445
      %v1493 = vmul.f32 %v1252, %v1445
      %v1494 = vmul.f32 %v1254, %v1445
      %v1495 = vmul.f32 %v1256, %v1445
      %v1496 = vmul.f32 %v1258, %v1445
      %v1497 = vmul.f32 %v1260, %v1445
      %v1498 = vmul.f32 %v1262, %v1445
      %v1499 = vmul.f32 %v1264, %v1445
      %v1500 = vmul.f32 %v1266, %v1445
      %v1501 = vmul.f32 %v1268, %v1445
      %v1502 = vmul.f32 %v1270, %v1445
      %v1503 = vmul.f32 %v1272, %v1445
      %v1504 = vmul.f32 %v1274, %v1445
      %v1505 = vmul.f32 %v1276, %v1445
      %v1506 = vmul.f32 %v1278, %v1445
      %v1507 = vmul.f32 %v1280, %v1445
      %v1508 = vmul.f32 %v1282, %v1445
      %v1509 = vmul.f32 %v1284, %v1445
      %v1510 = vmul.f32 %v1286, %v1445
      %v1511 = vmul.f32 %v1288, %v1445
      %v1512 = vmul.f32 %v1290, %v1445
      %v1513 = vmul.f32 %v1292, %v1445
      %v1514 = vmul.f32 %v1294, %v1445
      %v1515 = vmul.f32 %v1296, %v1445
      %v1516 = vmul.f32 %v1298, %v1445
      %v1517 = vmul.f32 %v1300, %v1445
      %v1518 = vmul.f32 %v1302, %v1445
      %v1519 = vmul.f32 %v1304, %v1445
      %v1520 = vmul.f32 %v1306, %v1445
      %v1521 = vmul.f32 %v1308, %v1445
      %v1522 = vmul.f32 %v1310, %v1445
      %v1523 = vmul.f32 %v1312, %v1445
      %v1524 = vmul.f32 %v1314, %v1445
      %v1525 = vmul.f32 %v1316, %v1445
      %v1526 = vmul.f32 %v1318, %v1445
      %v1527 = vmul.f32 %v1320, %v1445
      %v1528 = vmul.f32 %v1322, %v1445
      %v1529 = vmul.f32 %v1324, %v1445
      %v1530 = vmul.f32 %v1326, %v1445
      %v1531 = vmul.f32 %v1328, %v1445
      %v1532 = vmul.f32 %v1330, %v1445
      %v1533 = vmul.f32 %v1332, %v1445
      %v1534 = vmul.f32 %v1334, %v1445
      %v1535 = vmul.f32 %v1336, %v1445
      %v1536 = vmul.f32 %v1338, %v1445
      %v1537 = vmul.f32 %v1340, %v1445
      %v1538 = vmul.f32 %v1342, %v1445
      %v1539 = vmul.f32 %v1344, %v1445
      %v1540 = vmul.f32 %v1346, %v1445
      %v1541 = vmul.f32 %v1348, %v1445
      %v1542 = vmul.f32 %v1350, %v1445
      %v1543 = vmul.f32 %v1352, %v1445
      %v1544 = vmul.f32 %v1354, %v1445
      %v1545 = vmul.f32 %v1356, %v1445
      %v1546 = vmul.f32 %v1358, %v1445
      %v1547 = vmul.f32 %v1360, %v1445
      %v1548 = vmul.f32 %v1362, %v1445
      %v1549 = vmul.f32 %v1364, %v1445
      %v1550 = vmul.f32 %v1366, %v1445
      %v1551 = vmul.f32 %v1368, %v1445
      %v1552 = vmul.f32 %v1370, %v1445
      %v1553 = vmul.f32 %v1372, %v1445
      %v1554 = vmul.f32 %v1374, %v1445
      %v1555 = vmul.f32 %v1376, %v1445
      %v1556 = vmul.f32 %v1378, %v1445
      %v1557 = vmul.f32 %v1380, %v1445
      %v1558 = vmul.f32 %v1382, %v1445
      %v1559 = vmul.f32 %v1384, %v1445
      %v1560 = vmul.f32 %v1386, %v1445
      %v1561 = vmul.f32 %v1388, %v1445
      %v1562 = vmul.f32 %v1390, %v1445
      %v1563 = vmul.f32 %v1392, %v1445
      %v1564 = vmul.f32 %v1394, %v1445
      %v1565 = vmul.f32 %v1396, %v1445
      %v1566 = vmul.f32 %v1398, %v1445
      %v1567 = vmul.f32 %v1400, %v1445
      %v1568 = vmul.f32 %v1402, %v1445
      %v1569 = vmul.f32 %v1404, %v1445
      %v1570 = vmul.f32 %v1406, %v1445
      %v1571 = vmul.f32 %v1408, %v1445
      %v1572 = vmul.f32 %v1410, %v1445
      %v1573 = vmul.f32 %v1412, %v1445
      %v1574 = vmul.f32 %v1414, %v1445
      %v1575 = vmul.f32 %v1416, %v1445
      %v1576 = vmul.f32 %v1418, %v1445
      %v1577 = vmul.f32 %v1420, %v1445
      %v1578 = vmul.f32 %v1422, %v1445
      %v1579 = vmul.f32 %v1424, %v1445
      %v1580 = vmul.f32 %v1426, %v1445
      %v1581 = vmul.f32 %v1428, %v1445
      %v1582 = vmul.f32 %v1430, %v1445
      %v1583 = vmul.f32 %v1432, %v1445
      %v1584 = vmul.f32 %v1434, %v1445
      %v1585 = vmul.f32 %v1436, %v1445
      %v1586 = vmul.f32 %v1438, %v1445
      %v1587 = vmul.f32 %v1440, %v1445
      %v1588 = vmul.f32 %v1442, %v1445
      %v1589 = vmul.f32 %v1444, %v1445
      %v1590 = vmul.f32 %v1011, %v1011
      %v1591 = vmul.f32 %v1012, %v1012
      %v1592 = vmul.f32 %v1013, %v1013
      %v1593 = vmul.f32 %v1014, %v1014
      %v1594 = vmul.f32 %v1015, %v1015
      %v1595 = vmul.f32 %v1016, %v1016
      %v1596 = vmul.f32 %v1017, %v1017
      %v1597 = vmul.f32 %v1018, %v1018
      %v1598 = vmul.f32 %v1019, %v1019
      %v1599 = vmul.f32 %v1020, %v1020
      %v1600 = vmul.f32 %v1021, %v1021
      %v1601 = vmul.f32 %v1022, %v1022
      %v1602 = vmul.f32 %v1023, %v1023
      %v1603 = vmul.f32 %v1024, %v1024
      %v1604 = vmul.f32 %v1025, %v1025
      %v1605 = vmul.f32 %v1026, %v1026
      %v1606 = vmul.f32 %v1027, %v1027
      %v1607 = vmul.f32 %v1028, %v1028
      %v1608 = vmul.f32 %v1029, %v1029
      %v1609 = vmul.f32 %v1030, %v1030
      %v1610 = vmul.f32 %v1031, %v1031
      %v1611 = vmul.f32 %v1032, %v1032
      %v1612 = vmul.f32 %v1033, %v1033
      %v1613 = vmul.f32 %v1034, %v1034
      %v1614 = vmul.f32 %v1035, %v1035
      %v1615 = vmul.f32 %v1036, %v1036
      %v1616 = vmul.f32 %v1037, %v1037
      %v1617 = vmul.f32 %v1038, %v1038
      %v1618 = vmul.f32 %v1039, %v1039
      %v1619 = vmul.f32 %v1040, %v1040
      %v1620 = vmul.f32 %v1041, %v1041
      %v1621 = vmul.f32 %v1042, %v1042
      %v1622 = vmul.f32 %v1043, %v1043
      %v1623 = vmul.f32 %v1044, %v1044
      %v1624 = vmul.f32 %v1045, %v1045
      %v1625 = vmul.f32 %v1046, %v1046
      %v1626 = vmul.f32 %v1047, %v1047
      %v1627 = vmul.f32 %v1048, %v1048
      %v1628 = vmul.f32 %v1049, %v1049
      %v1629 = vmul.f32 %v1050, %v1050
      %v1630 = vmul.f32 %v1051, %v1051
      %v1631 = vmul.f32 %v1052, %v1052
      %v1632 = vmul.f32 %v1053, %v1053
      %v1633 = vmul.f32 %v1054, %v1054
      %v1634 = vmul.f32 %v1055, %v1055
      %v1635 = vmul.f32 %v1056, %v1056
      %v1636 = vmul.f32 %v1057, %v1057
      %v1637 = vmul.f32 %v1058, %v1058
      %v1638 = vmul.f32 %v1059, %v1059
      %v1639 = vmul.f32 %v1060, %v1060
      %v1640 = vmul.f32 %v1061, %v1061
      %v1641 = vmul.f32 %v1062, %v1062
      %v1642 = vmul.f32 %v1063, %v1063
      %v1643 = vmul.f32 %v1064, %v1064
      %v1644 = vmul.f32 %v1065, %v1065
      %v1645 = vmul.f32 %v1066, %v1066
      %v1646 = vmul.f32 %v1067, %v1067
      %v1647 = vmul.f32 %v1068, %v1068
      %v1648 = vmul.f32 %v1069, %v1069
      %v1649 = vmul.f32 %v1070, %v1070
      %v1650 = vmul.f32 %v1071, %v1071
      %v1651 = vmul.f32 %v1072, %v1072
      %v1652 = vmul.f32 %v1073, %v1073
      %v1653 = vmul.f32 %v1074, %v1074
      %v1654 = vmul.f32 %v1075, %v1075
      %v1655 = vmul.f32 %v1076, %v1076
      %v1656 = vmul.f32 %v1077, %v1077
      %v1657 = vmul.f32 %v1078, %v1078
      %v1658 = vmul.f32 %v1079, %v1079
      %v1659 = vmul.f32 %v1080, %v1080
      %v1660 = vmul.f32 %v1081, %v1081
      %v1661 = vmul.f32 %v1082, %v1082
      %v1662 = vmul.f32 %v1083, %v1083
      %v1663 = vmul.f32 %v1084, %v1084
      %v1664 = vmul.f32 %v1085, %v1085
      %v1665 = vmul.f32 %v1086, %v1086
      %v1666 = vmul.f32 %v1087, %v1087
      %v1667 = vmul.f32 %v1088, %v1088
      %v1668 = vmul.f32 %v1089, %v1089
      %v1669 = vmul.f32 %v1090, %v1090
      %v1670 = vmul.f32 %v1091, %v1091
      %v1671 = vmul.f32 %v1092, %v1092
      %v1672 = vmul.f32 %v1093, %v1093
      %v1673 = vmul.f32 %v1094, %v1094
      %v1674 = vmul.f32 %v1095, %v1095
      %v1675 = vmul.f32 %v1096, %v1096
      %v1676 = vmul.f32 %v1097, %v1097
      %v1677 = vmul.f32 %v1098, %v1098
      %v1678 = vmul.f32 %v1099, %v1099
      %v1679 = vmul.f32 %v1100, %v1100
      %v1680 = vmul.f32 %v1101, %v1101
      %v1681 = vmul.f32 %v1102, %v1102
      %v1682 = vmul.f32 %v1103, %v1103
      %v1683 = vmul.f32 %v1104, %v1104
      %v1684 = vmul.f32 %v1105, %v1105
      %v1685 = vmul.f32 %v1106, %v1106
      %v1686 = vmul.f32 %v1107, %v1107
      %v1687 = vmul.f32 %v1108, %v1108
      %v1688 = vmul.f32 %v1109, %v1109
      %v1689 = vmul.f32 %v1110, %v1110
      %v1690 = vmul.f32 %v1111, %v1111
      %v1691 = vmul.f32 %v1112, %v1112
      %v1692 = vmul.f32 %v1113, %v1113
      %v1693 = vmul.f32 %v1114, %v1114
      %v1694 = vmul.f32 %v1115, %v1115
      %v1695 = vmul.f32 %v1116, %v1116
      %v1696 = vmul.f32 %v1117, %v1117
      %v1697 = vmul.f32 %v1118, %v1118
      %v1698 = vmul.f32 %v1119, %v1119
      %v1699 = vmul.f32 %v1120, %v1120
      %v1700 = vmul.f32 %v1121, %v1121
      %v1701 = vmul.f32 %v1122, %v1122
      %v1702 = vmul.f32 %v1123, %v1123
      %v1703 = vmul.f32 %v1124, %v1124
      %v1704 = vmul.f32 %v1125, %v1125
      %v1705 = vmul.f32 %v1126, %v1126
      %v1706 = vmul.f32 %v1127, %v1127
      %v1707 = vmul.f32 %v1128, %v1128
      %v1708 = vmul.f32 %v1129, %v1129
      %v1709 = vmul.f32 %v1130, %v1130
      %v1710 = vmul.f32 %v1131, %v1131
      %v1711 = vmul.f32 %v1132, %v1132
      %v1712 = vmul.f32 %v1133, %v1133
      %v1713 = vmul.f32 %v1134, %v1134
      %v1714 = vmul.f32 %v1135, %v1135
      %v1715 = vmul.f32 %v1136, %v1136
      %v1716 = vmul.f32 %v1137, %v1137
      %v1717 = vmul.f32 %v1138, %v1138
      %v1718 = vmul.f32 %v1139, %v1139
      %v1719 = vmul.f32 %v1140, %v1140
      %v1720 = vmul.f32 %v1141, %v1141
      %v1721 = vmul.f32 %v1142, %v1142
      %v1722 = vmul.f32 %v1143, %v1143
      %v1723 = vmul.f32 %v1144, %v1144
      %v1724 = vmul.f32 %v1145, %v1145
      %v1725 = vmul.f32 %v1146, %v1146
      %v1726 = vmul.f32 %v1147, %v1147
      %v1727 = vmul.f32 %v1148, %v1148
      %v1728 = vmul.f32 %v1149, %v1149
      %v1729 = vmul.f32 %v1150, %v1150
      %v1730 = vmul.f32 %v1151, %v1151
      %v1731 = vmul.f32 %v1152, %v1152
      %v1732 = vmul.f32 %v1153, %v1153
      %v1733 = vmul.f32 %v1154, %v1154
      %1734 = vadd.xlane.f32.xlu0 %v1590
      %v1735 = vpop.xlane.xlu0 %1734
      %1736 = vadd.xlane.f32.xlu0 %v1591
      %v1737 = vpop.xlane.xlu0 %1736
      %1738 = vadd.xlane.f32.xlu0 %v1592
      %v1739 = vpop.xlane.xlu0 %1738
      %1740 = vadd.xlane.f32.xlu0 %v1593
      %v1741 = vpop.xlane.xlu0 %1740
      %1742 = vadd.xlane.f32.xlu0 %v1594
      %v1743 = vpop.xlane.xlu0 %1742
      %1744 = vadd.xlane.f32.xlu0 %v1595
      %v1745 = vpop.xlane.xlu0 %1744
      %1746 = vadd.xlane.f32.xlu0 %v1596
      %v1747 = vpop.xlane.xlu0 %1746
      %1748 = vadd.xlane.f32.xlu0 %v1597
      %v1749 = vpop.xlane.xlu0 %1748
      %1750 = vadd.xlane.f32.xlu0 %v1598
      %v1751 = vpop.xlane.xlu0 %1750
      %1752 = vadd.xlane.f32.xlu0 %v1599
      %v1753 = vpop.xlane.xlu0 %1752
      %1754 = vadd.xlane.f32.xlu0 %v1600
      %v1755 = vpop.xlane.xlu0 %1754
      %1756 = vadd.xlane.f32.xlu0 %v1601
      %v1757 = vpop.xlane.xlu0 %1756
      %1758 = vadd.xlane.f32.xlu0 %v1602
      %v1759 = vpop.xlane.xlu0 %1758
      %1760 = vadd.xlane.f32.xlu0 %v1603
      %v1761 = vpop.xlane.xlu0 %1760
      %1762 = vadd.xlane.f32.xlu0 %v1604
      %v1763 = vpop.xlane.xlu0 %1762
      %1764 = vadd.xlane.f32.xlu0 %v1605
      %v1765 = vpop.xlane.xlu0 %1764
      %1766 = vadd.xlane.f32.xlu0 %v1606
      %v1767 = vpop.xlane.xlu0 %1766
      %1768 = vadd.xlane.f32.xlu0 %v1607
      %v1769 = vpop.xlane.xlu0 %1768
      %1770 = vadd.xlane.f32.xlu0 %v1608
      %v1771 = vpop.xlane.xlu0 %1770
      %1772 = vadd.xlane.f32.xlu0 %v1609
      %v1773 = vpop.xlane.xlu0 %1772
      %1774 = vadd.xlane.f32.xlu0 %v1610
      %v1775 = vpop.xlane.xlu0 %1774
      %1776 = vadd.xlane.f32.xlu0 %v1611
      %v1777 = vpop.xlane.xlu0 %1776
      %1778 = vadd.xlane.f32.xlu0 %v1612
      %v1779 = vpop.xlane.xlu0 %1778
      %1780 = vadd.xlane.f32.xlu0 %v1613
      %v1781 = vpop.xlane.xlu0 %1780
      %1782 = vadd.xlane.f32.xlu0 %v1614
      %v1783 = vpop.xlane.xlu0 %1782
      %1784 = vadd.xlane.f32.xlu0 %v1615
      %v1785 = vpop.xlane.xlu0 %1784
      %1786 = vadd.xlane.f32.xlu0 %v1616
      %v1787 = vpop.xlane.xlu0 %1786
      %1788 = vadd.xlane.f32.xlu0 %v1617
      %v1789 = vpop.xlane.xlu0 %1788
      %1790 = vadd.xlane.f32.xlu0 %v1618
      %v1791 = vpop.xlane.xlu0 %1790
      %1792 = vadd.xlane.f32.xlu0 %v1619
      %v1793 = vpop.xlane.xlu0 %1792
      %1794 = vadd.xlane.f32.xlu0 %v1620
      %v1795 = vpop.xlane.xlu0 %1794
      %1796 = vadd.xlane.f32.xlu0 %v1621
      %v1797 = vpop.xlane.xlu0 %1796
      %1798 = vadd.xlane.f32.xlu0 %v1622
      %v1799 = vpop.xlane.xlu0 %1798
      %1800 = vadd.xlane.f32.xlu0 %v1623
      %v1801 = vpop.xlane.xlu0 %1800
      %1802 = vadd.xlane.f32.xlu0 %v1624
      %v1803 = vpop.xlane.xlu0 %1802
      %1804 = vadd.xlane.f32.xlu0 %v1625
      %v1805 = vpop.xlane.xlu0 %1804
      %1806 = vadd.xlane.f32.xlu0 %v1626
      %v1807 = vpop.xlane.xlu0 %1806
      %1808 = vadd.xlane.f32.xlu0 %v1627
      %v1809 = vpop.xlane.xlu0 %1808
      %1810 = vadd.xlane.f32.xlu0 %v1628
      %v1811 = vpop.xlane.xlu0 %1810
      %1812 = vadd.xlane.f32.xlu0 %v1629
      %v1813 = vpop.xlane.xlu0 %1812
      %1814 = vadd.xlane.f32.xlu0 %v1630
      %v1815 = vpop.xlane.xlu0 %1814
      %1816 = vadd.xlane.f32.xlu0 %v1631
      %v1817 = vpop.xlane.xlu0 %1816
      %1818 = vadd.xlane.f32.xlu0 %v1632
      %v1819 = vpop.xlane.xlu0 %1818
      %1820 = vadd.xlane.f32.xlu0 %v1633
      %v1821 = vpop.xlane.xlu0 %1820
      %1822 = vadd.xlane.f32.xlu0 %v1634
      %v1823 = vpop.xlane.xlu0 %1822
      %1824 = vadd.xlane.f32.xlu0 %v1635
      %v1825 = vpop.xlane.xlu0 %1824
      %1826 = vadd.xlane.f32.xlu0 %v1636
      %v1827 = vpop.xlane.xlu0 %1826
      %1828 = vadd.xlane.f32.xlu0 %v1637
      %v1829 = vpop.xlane.xlu0 %1828
      %1830 = vadd.xlane.f32.xlu0 %v1638
      %v1831 = vpop.xlane.xlu0 %1830
      %1832 = vadd.xlane.f32.xlu0 %v1639
      %v1833 = vpop.xlane.xlu0 %1832
      %1834 = vadd.xlane.f32.xlu0 %v1640
      %v1835 = vpop.xlane.xlu0 %1834
      %1836 = vadd.xlane.f32.xlu0 %v1641
      %v1837 = vpop.xlane.xlu0 %1836
      %1838 = vadd.xlane.f32.xlu0 %v1642
      %v1839 = vpop.xlane.xlu0 %1838
      %1840 = vadd.xlane.f32.xlu0 %v1643
      %v1841 = vpop.xlane.xlu0 %1840
      %1842 = vadd.xlane.f32.xlu0 %v1644
      %v1843 = vpop.xlane.xlu0 %1842
      %1844 = vadd.xlane.f32.xlu0 %v1645
      %v1845 = vpop.xlane.xlu0 %1844
      %1846 = vadd.xlane.f32.xlu0 %v1646
      %v1847 = vpop.xlane.xlu0 %1846
      %1848 = vadd.xlane.f32.xlu0 %v1647
      %v1849 = vpop.xlane.xlu0 %1848
      %1850 = vadd.xlane.f32.xlu0 %v1648
      %v1851 = vpop.xlane.xlu0 %1850
      %1852 = vadd.xlane.f32.xlu0 %v1649
      %v1853 = vpop.xlane.xlu0 %1852
      %1854 = vadd.xlane.f32.xlu0 %v1650
      %v1855 = vpop.xlane.xlu0 %1854
      %1856 = vadd.xlane.f32.xlu0 %v1651
      %v1857 = vpop.xlane.xlu0 %1856
      %1858 = vadd.xlane.f32.xlu0 %v1652
      %v1859 = vpop.xlane.xlu0 %1858
      %1860 = vadd.xlane.f32.xlu0 %v1653
      %v1861 = vpop.xlane.xlu0 %1860
      %1862 = vadd.xlane.f32.xlu0 %v1654
      %v1863 = vpop.xlane.xlu0 %1862
      %1864 = vadd.xlane.f32.xlu0 %v1655
      %v1865 = vpop.xlane.xlu0 %1864
      %1866 = vadd.xlane.f32.xlu0 %v1656
      %v1867 = vpop.xlane.xlu0 %1866
      %1868 = vadd.xlane.f32.xlu0 %v1657
      %v1869 = vpop.xlane.xlu0 %1868
      %1870 = vadd.xlane.f32.xlu0 %v1658
      %v1871 = vpop.xlane.xlu0 %1870
      %1872 = vadd.xlane.f32.xlu0 %v1659
      %v1873 = vpop.xlane.xlu0 %1872
      %1874 = vadd.xlane.f32.xlu0 %v1660
      %v1875 = vpop.xlane.xlu0 %1874
      %1876 = vadd.xlane.f32.xlu0 %v1661
      %v1877 = vpop.xlane.xlu0 %1876
      %1878 = vadd.xlane.f32.xlu0 %v1662
      %v1879 = vpop.xlane.xlu0 %1878
      %1880 = vadd.xlane.f32.xlu0 %v1663
      %v1881 = vpop.xlane.xlu0 %1880
      %1882 = vadd.xlane.f32.xlu0 %v1664
      %v1883 = vpop.xlane.xlu0 %1882
      %1884 = vadd.xlane.f32.xlu0 %v1665
      %v1885 = vpop.xlane.xlu0 %1884
      %1886 = vadd.xlane.f32.xlu0 %v1666
      %v1887 = vpop.xlane.xlu0 %1886
      %1888 = vadd.xlane.f32.xlu0 %v1667
      %v1889 = vpop.xlane.xlu0 %1888
      %1890 = vadd.xlane.f32.xlu0 %v1668
      %v1891 = vpop.xlane.xlu0 %1890
      %1892 = vadd.xlane.f32.xlu0 %v1669
      %v1893 = vpop.xlane.xlu0 %1892
      %1894 = vadd.xlane.f32.xlu0 %v1670
      %v1895 = vpop.xlane.xlu0 %1894
      %1896 = vadd.xlane.f32.xlu0 %v1671
      %v1897 = vpop.xlane.xlu0 %1896
      %1898 = vadd.xlane.f32.xlu0 %v1672
      %v1899 = vpop.xlane.xlu0 %1898
      %1900 = vadd.xlane.f32.xlu0 %v1673
      %v1901 = vpop.xlane.xlu0 %1900
      %1902 = vadd.xlane.f32.xlu0 %v1674
      %v1903 = vpop.xlane.xlu0 %1902
      %1904 = vadd.xlane.f32.xlu0 %v1675
      %v1905 = vpop.xlane.xlu0 %1904
      %1906 = vadd.xlane.f32.xlu0 %v1676
      %v1907 = vpop.xlane.xlu0 %1906
      %1908 = vadd.xlane.f32.xlu0 %v1677
      %v1909 = vpop.xlane.xlu0 %1908
      %1910 = vadd.xlane.f32.xlu0 %v1678
      %v1911 = vpop.xlane.xlu0 %1910
      %1912 = vadd.xlane.f32.xlu0 %v1679
      %v1913 = vpop.xlane.xlu0 %1912
      %1914 = vadd.xlane.f32.xlu0 %v1680
      %v1915 = vpop.xlane.xlu0 %1914
      %1916 = vadd.xlane.f32.xlu0 %v1681
      %v1917 = vpop.xlane.xlu0 %1916
      %1918 = vadd.xlane.f32.xlu0 %v1682
      %v1919 = vpop.xlane.xlu0 %1918
      %1920 = vadd.xlane.f32.xlu0 %v1683
      %v1921 = vpop.xlane.xlu0 %1920
      %1922 = vadd.xlane.f32.xlu0 %v1684
      %v1923 = vpop.xlane.xlu0 %1922
      %1924 = vadd.xlane.f32.xlu0 %v1685
      %v1925 = vpop.xlane.xlu0 %1924
      %1926 = vadd.xlane.f32.xlu0 %v1686
      %v1927 = vpop.xlane.xlu0 %1926
      %1928 = vadd.xlane.f32.xlu0 %v1687
      %v1929 = vpop.xlane.xlu0 %1928
      %1930 = vadd.xlane.f32.xlu0 %v1688
      %v1931 = vpop.xlane.xlu0 %1930
      %1932 = vadd.xlane.f32.xlu0 %v1689
      %v1933 = vpop.xlane.xlu0 %1932
      %1934 = vadd.xlane.f32.xlu0 %v1690
      %v1935 = vpop.xlane.xlu0 %1934
      %1936 = vadd.xlane.f32.xlu0 %v1691
      %v1937 = vpop.xlane.xlu0 %1936
      %1938 = vadd.xlane.f32.xlu0 %v1692
      %v1939 = vpop.xlane.xlu0 %1938
      %1940 = vadd.xlane.f32.xlu0 %v1693
      %v1941 = vpop.xlane.xlu0 %1940
      %1942 = vadd.xlane.f32.xlu0 %v1694
      %v1943 = vpop.xlane.xlu0 %1942
      %1944 = vadd.xlane.f32.xlu0 %v1695
      %v1945 = vpop.xlane.xlu0 %1944
      %1946 = vadd.xlane.f32.xlu0 %v1696
      %v1947 = vpop.xlane.xlu0 %1946
      %1948 = vadd.xlane.f32.xlu0 %v1697
      %v1949 = vpop.xlane.xlu0 %1948
      %1950 = vadd.xlane.f32.xlu0 %v1698
      %v1951 = vpop.xlane.xlu0 %1950
      %1952 = vadd.xlane.f32.xlu0 %v1699
      %v1953 = vpop.xlane.xlu0 %1952
      %1954 = vadd.xlane.f32.xlu0 %v1700
      %v1955 = vpop.xlane.xlu0 %1954
      %1956 = vadd.xlane.f32.xlu0 %v1701
      %v1957 = vpop.xlane.xlu0 %1956
      %1958 = vadd.xlane.f32.xlu0 %v1702
      %v1959 = vpop.xlane.xlu0 %1958
      %1960 = vadd.xlane.f32.xlu0 %v1703
      %v1961 = vpop.xlane.xlu0 %1960
      %1962 = vadd.xlane.f32.xlu0 %v1704
      %v1963 = vpop.xlane.xlu0 %1962
      %1964 = vadd.xlane.f32.xlu0 %v1705
      %v1965 = vpop.xlane.xlu0 %1964
      %1966 = vadd.xlane.f32.xlu0 %v1706
      %v1967 = vpop.xlane.xlu0 %1966
      %1968 = vadd.xlane.f32.xlu0 %v1707
      %v1969 = vpop.xlane.xlu0 %1968
      %1970 = vadd.xlane.f32.xlu0 %v1708
      %v1971 = vpop.xlane.xlu0 %1970
      %1972 = vadd.xlane.f32.xlu0 %v1709
      %v1973 = vpop.xlane.xlu0 %1972
      %1974 = vadd.xlane.f32.xlu0 %v1710
      %v1975 = vpop.xlane.xlu0 %1974
      %1976 = vadd.xlane.f32.xlu0 %v1711
      %v1977 = vpop.xlane.xlu0 %1976
      %1978 = vadd.xlane.f32.xlu0 %v1712
      %v1979 = vpop.xlane.xlu0 %1978
      %1980 = vadd.xlane.f32.xlu0 %v1713
      %v1981 = vpop.xlane.xlu0 %1980
      %1982 = vadd.xlane.f32.xlu0 %v1714
      %v1983 = vpop.xlane.xlu0 %1982
      %1984 = vadd.xlane.f32.xlu0 %v1715
      %v1985 = vpop.xlane.xlu0 %1984
      %1986 = vadd.xlane.f32.xlu0 %v1716
      %v1987 = vpop.xlane.xlu0 %1986
      %1988 = vadd.xlane.f32.xlu0 %v1717
      %v1989 = vpop.xlane.xlu0 %1988
      %1990 = vadd.xlane.f32.xlu0 %v1718
      %v1991 = vpop.xlane.xlu0 %1990
      %1992 = vadd.xlane.f32.xlu0 %v1719
      %v1993 = vpop.xlane.xlu0 %1992
      %1994 = vadd.xlane.f32.xlu0 %v1720
      %v1995 = vpop.xlane.xlu0 %1994
      %1996 = vadd.xlane.f32.xlu0 %v1721
      %v1997 = vpop.xlane.xlu0 %1996
      %1998 = vadd.xlane.f32.xlu0 %v1722
      %v1999 = vpop.xlane.xlu0 %1998
      %2000 = vadd.xlane.f32.xlu0 %v1723
      %v2001 = vpop.xlane.xlu0 %2000
      %2002 = vadd.xlane.f32.xlu0 %v1724
      %v2003 = vpop.xlane.xlu0 %2002
      %2004 = vadd.xlane.f32.xlu0 %v1725
      %v2005 = vpop.xlane.xlu0 %2004
      %2006 = vadd.xlane.f32.xlu0 %v1726
      %v2007 = vpop.xlane.xlu0 %2006
      %2008 = vadd.xlane.f32.xlu0 %v1727
      %v2009 = vpop.xlane.xlu0 %2008
      %2010 = vadd.xlane.f32.xlu0 %v1728
      %v2011 = vpop.xlane.xlu0 %2010
      %2012 = vadd.xlane.f32.xlu0 %v1729
      %v2013 = vpop.xlane.xlu0 %2012
      %2014 = vadd.xlane.f32.xlu0 %v1730
      %v2015 = vpop.xlane.xlu0 %2014
      %2016 = vadd.xlane.f32.xlu0 %v1731
      %v2017 = vpop.xlane.xlu0 %2016
      %2018 = vadd.xlane.f32.xlu0 %v1732
      %v2019 = vpop.xlane.xlu0 %2018
      %2020 = vadd.xlane.f32.xlu0 %v1733
      %v2021 = vpop.xlane.xlu0 %2020
      %v2022 = vmul.f32 %v1735, %v1445
      %v2023 = vmul.f32 %v1737, %v1445
      %v2024 = vmul.f32 %v1739, %v1445
      %v2025 = vmul.f32 %v1741, %v1445
      %v2026 = vmul.f32 %v1743, %v1445
      %v2027 = vmul.f32 %v1745, %v1445
      %v2028 = vmul.f32 %v1747, %v1445
      %v2029 = vmul.f32 %v1749, %v1445
      %v2030 = vmul.f32 %v1751, %v1445
      %v2031 = vmul.f32 %v1753, %v1445
      %v2032 = vmul.f32 %v1755, %v1445
      %v2033 = vmul.f32 %v1757, %v1445
      %v2034 = vmul.f32 %v1759, %v1445
      %v2035 = vmul.f32 %v1761, %v1445
      %v2036 = vmul.f32 %v1763, %v1445
      %v2037 = vmul.f32 %v1765, %v1445
      %v2038 = vmul.f32 %v1767, %v1445
      %v2039 = vmul.f32 %v1769, %v1445
      %v2040 = vmul.f32 %v1771, %v1445
      %v2041 = vmul.f32 %v1773, %v1445
      %v2042 = vmul.f32 %v1775, %v1445
      %v2043 = vmul.f32 %v1777, %v1445
      %v2044 = vmul.f32 %v1779, %v1445
      %v2045 = vmul.f32 %v1781, %v1445
      %v2046 = vmul.f32 %v1783, %v1445
      %v2047 = vmul.f32 %v1785, %v1445
      %v2048 = vmul.f32 %v1787, %v1445
      %v2049 = vmul.f32 %v1789, %v1445
      %v2050 = vmul.f32 %v1791, %v1445
      %v2051 = vmul.f32 %v1793, %v1445
      %v2052 = vmul.f32 %v1795, %v1445
      %v2053 = vmul.f32 %v1797, %v1445
      %v2054 = vmul.f32 %v1799, %v1445
      %v2055 = vmul.f32 %v1801, %v1445
      %v2056 = vmul.f32 %v1803, %v1445
      %v2057 = vmul.f32 %v1805, %v1445
      %v2058 = vmul.f32 %v1807, %v1445
      %v2059 = vmul.f32 %v1809, %v1445
      %v2060 = vmul.f32 %v1811, %v1445
      %v2061 = vmul.f32 %v1813, %v1445
      %v2062 = vmul.f32 %v1815, %v1445
      %v2063 = vmul.f32 %v1817, %v1445
      %v2064 = vmul.f32 %v1819, %v1445
      %v2065 = vmul.f32 %v1821, %v1445
      %v2066 = vmul.f32 %v1823, %v1445
      %v2067 = vmul.f32 %v1825, %v1445
      %v2068 = vmul.f32 %v1827, %v1445
      %v2069 = vmul.f32 %v1829, %v1445
      %v2070 = vmul.f32 %v1831, %v1445
      %v2071 = vmul.f32 %v1833, %v1445
      %v2072 = vmul.f32 %v1835, %v1445
      %v2073 = vmul.f32 %v1837, %v1445
      %v2074 = vmul.f32 %v1839, %v1445
      %v2075 = vmul.f32 %v1841, %v1445
      %v2076 = vmul.f32 %v1843, %v1445
      %v2077 = vmul.f32 %v1845, %v1445
      %v2078 = vmul.f32 %v1847, %v1445
      %v2079 = vmul.f32 %v1849, %v1445
      %v2080 = vmul.f32 %v1851, %v1445
      %v2081 = vmul.f32 %v1853, %v1445
      %v2082 = vmul.f32 %v1855, %v1445
      %v2083 = vmul.f32 %v1857, %v1445
      %v2084 = vmul.f32 %v1859, %v1445
      %v2085 = vmul.f32 %v1861, %v1445
      %v2086 = vmul.f32 %v1863, %v1445
      %v2087 = vmul.f32 %v1865, %v1445
      %v2088 = vmul.f32 %v1867, %v1445
      %v2089 = vmul.f32 %v1869, %v1445
      %v2090 = vmul.f32 %v1871, %v1445
      %v2091 = vmul.f32 %v1873, %v1445
      %v2092 = vmul.f32 %v1875, %v1445
      %v2093 = vmul.f32 %v1877, %v1445
      %v2094 = vmul.f32 %v1879, %v1445
      %v2095 = vmul.f32 %v1881, %v1445
      %v2096 = vmul.f32 %v1883, %v1445
      %v2097 = vmul.f32 %v1885, %v1445
      %v2098 = vmul.f32 %v1887, %v1445
      %v2099 = vmul.f32 %v1889, %v1445
      %v2100 = vmul.f32 %v1891, %v1445
      %v2101 = vmul.f32 %v1893, %v1445
      %v2102 = vmul.f32 %v1895, %v1445
      %v2103 = vmul.f32 %v1897, %v1445
      %v2104 = vmul.f32 %v1899, %v1445
      %v2105 = vmul.f32 %v1901, %v1445
      %v2106 = vmul.f32 %v1903, %v1445
      %v2107 = vmul.f32 %v1905, %v1445
      %v2108 = vmul.f32 %v1907, %v1445
      %v2109 = vmul.f32 %v1909, %v1445
      %v2110 = vmul.f32 %v1911, %v1445
      %v2111 = vmul.f32 %v1913, %v1445
      %v2112 = vmul.f32 %v1915, %v1445
      %v2113 = vmul.f32 %v1917, %v1445
      %v2114 = vmul.f32 %v1919, %v1445
      %v2115 = vmul.f32 %v1921, %v1445
      %v2116 = vmul.f32 %v1923, %v1445
      %v2117 = vmul.f32 %v1925, %v1445
      %v2118 = vmul.f32 %v1927, %v1445
      %v2119 = vmul.f32 %v1929, %v1445
      %v2120 = vmul.f32 %v1931, %v1445
      %v2121 = vmul.f32 %v1933, %v1445
      %v2122 = vmul.f32 %v1935, %v1445
      %v2123 = vmul.f32 %v1937, %v1445
      %v2124 = vmul.f32 %v1939, %v1445
      %v2125 = vmul.f32 %v1941, %v1445
      %v2126 = vmul.f32 %v1943, %v1445
      %v2127 = vmul.f32 %v1945, %v1445
      %v2128 = vmul.f32 %v1947, %v1445
      %v2129 = vmul.f32 %v1949, %v1445
      %v2130 = vmul.f32 %v1951, %v1445
      %v2131 = vmul.f32 %v1953, %v1445
      %v2132 = vmul.f32 %v1955, %v1445
      %v2133 = vmul.f32 %v1957, %v1445
      %v2134 = vmul.f32 %v1959, %v1445
      %v2135 = vmul.f32 %v1961, %v1445
      %v2136 = vmul.f32 %v1963, %v1445
      %v2137 = vmul.f32 %v1965, %v1445
      %v2138 = vmul.f32 %v1967, %v1445
      %v2139 = vmul.f32 %v1969, %v1445
      %v2140 = vmul.f32 %v1971, %v1445
      %v2141 = vmul.f32 %v1973, %v1445
      %v2142 = vmul.f32 %v1975, %v1445
      %v2143 = vmul.f32 %v1977, %v1445
      %v2144 = vmul.f32 %v1979, %v1445
      %v2145 = vmul.f32 %v1981, %v1445
      %v2146 = vmul.f32 %v1983, %v1445
      %v2147 = vmul.f32 %v1985, %v1445
      %v2148 = vmul.f32 %v1987, %v1445
      %v2149 = vmul.f32 %v1989, %v1445
      %v2150 = vmul.f32 %v1991, %v1445
      %v2151 = vmul.f32 %v1993, %v1445
      %v2152 = vmul.f32 %v1995, %v1445
      %v2153 = vmul.f32 %v1997, %v1445
      %v2154 = vmul.f32 %v1999, %v1445
      %v2155 = vmul.f32 %v2001, %v1445
      %v2156 = vmul.f32 %v2003, %v1445
      %v2157 = vmul.f32 %v2005, %v1445
      %v2158 = vmul.f32 %v2007, %v1445
      %v2159 = vmul.f32 %v2009, %v1445
      %v2160 = vmul.f32 %v2011, %v1445
      %v2161 = vmul.f32 %v2013, %v1445
      %v2162 = vmul.f32 %v2015, %v1445
      %v2163 = vmul.f32 %v2017, %v1445
      %v2164 = vmul.f32 %v2019, %v1445
      %v2165 = vmul.f32 %v2021, %v1445
      %v2166 = vmul.f32 %v1446, %v1446
      %v2167 = vmul.f32 %v1447, %v1447
      %v2168 = vmul.f32 %v1448, %v1448
      %v2169 = vmul.f32 %v1449, %v1449
      %v2170 = vmul.f32 %v1450, %v1450
      %v2171 = vmul.f32 %v1451, %v1451
      %v2172 = vmul.f32 %v1452, %v1452
      %v2173 = vmul.f32 %v1453, %v1453
      %v2174 = vmul.f32 %v1454, %v1454
      %v2175 = vmul.f32 %v1455, %v1455
      %v2176 = vmul.f32 %v1456, %v1456
      %v2177 = vmul.f32 %v1457, %v1457
      %v2178 = vmul.f32 %v1458, %v1458
      %v2179 = vmul.f32 %v1459, %v1459
      %v2180 = vmul.f32 %v1460, %v1460
      %v2181 = vmul.f32 %v1461, %v1461
      %v2182 = vmul.f32 %v1462, %v1462
      %v2183 = vmul.f32 %v1463, %v1463
      %v2184 = vmul.f32 %v1464, %v1464
      %v2185 = vmul.f32 %v1465, %v1465
      %v2186 = vmul.f32 %v1466, %v1466
      %v2187 = vmul.f32 %v1467, %v1467
      %v2188 = vmul.f32 %v1468, %v1468
      %v2189 = vmul.f32 %v1469, %v1469
      %v2190 = vmul.f32 %v1470, %v1470
      %v2191 = vmul.f32 %v1471, %v1471
      %v2192 = vmul.f32 %v1472, %v1472
      %v2193 = vmul.f32 %v1473, %v1473
      %v2194 = vmul.f32 %v1474, %v1474
      %v2195 = vmul.f32 %v1475, %v1475
      %v2196 = vmul.f32 %v1476, %v1476
      %v2197 = vmul.f32 %v1477, %v1477
      %v2198 = vmul.f32 %v1478, %v1478
      %v2199 = vmul.f32 %v1479, %v1479
      %v2200 = vmul.f32 %v1480, %v1480
      %v2201 = vmul.f32 %v1481, %v1481
      %v2202 = vmul.f32 %v1482, %v1482
      %v2203 = vmul.f32 %v1483, %v1483
      %v2204 = vmul.f32 %v1484, %v1484
      %v2205 = vmul.f32 %v1485, %v1485
      %v2206 = vmul.f32 %v1486, %v1486
      %v2207 = vmul.f32 %v1487, %v1487
      %v2208 = vmul.f32 %v1488, %v1488
      %v2209 = vmul.f32 %v1489, %v1489
      %v2210 = vmul.f32 %v1490, %v1490
      %v2211 = vmul.f32 %v1491, %v1491
      %v2212 = vmul.f32 %v1492, %v1492
      %v2213 = vmul.f32 %v1493, %v1493
      %v2214 = vmul.f32 %v1494, %v1494
      %v2215 = vmul.f32 %v1495, %v1495
      %v2216 = vmul.f32 %v1496, %v1496
      %v2217 = vmul.f32 %v1497, %v1497
      %v2218 = vmul.f32 %v1498, %v1498
      %v2219 = vmul.f32 %v1499, %v1499
      %v2220 = vmul.f32 %v1500, %v1500
      %v2221 = vmul.f32 %v1501, %v1501
      %v2222 = vmul.f32 %v1502, %v1502
      %v2223 = vmul.f32 %v1503, %v1503
      %v2224 = vmul.f32 %v1504, %v1504
      %v2225 = vmul.f32 %v1505, %v1505
      %v2226 = vmul.f32 %v1506, %v1506
      %v2227 = vmul.f32 %v1507, %v1507
      %v2228 = vmul.f32 %v1508, %v1508
      %v2229 = vmul.f32 %v1509, %v1509
      %v2230 = vmul.f32 %v1510, %v1510
      %v2231 = vmul.f32 %v1511, %v1511
      %v2232 = vmul.f32 %v1512, %v1512
      %v2233 = vmul.f32 %v1513, %v1513
      %v2234 = vmul.f32 %v1514, %v1514
      %v2235 = vmul.f32 %v1515, %v1515
      %v2236 = vmul.f32 %v1516, %v1516
      %v2237 = vmul.f32 %v1517, %v1517
      %v2238 = vmul.f32 %v1518, %v1518
      %v2239 = vmul.f32 %v1519, %v1519
      %v2240 = vmul.f32 %v1520, %v1520
      %v2241 = vmul.f32 %v1521, %v1521
      %v2242 = vmul.f32 %v1522, %v1522
      %v2243 = vmul.f32 %v1523, %v1523
      %v2244 = vmul.f32 %v1524, %v1524
      %v2245 = vmul.f32 %v1525, %v1525
      %v2246 = vmul.f32 %v1526, %v1526
      %v2247 = vmul.f32 %v1527, %v1527
      %v2248 = vmul.f32 %v1528, %v1528
      %v2249 = vmul.f32 %v1529, %v1529
      %v2250 = vmul.f32 %v1530, %v1530
      %v2251 = vmul.f32 %v1531, %v1531
      %v2252 = vmul.f32 %v1532, %v1532
      %v2253 = vmul.f32 %v1533, %v1533
      %v2254 = vmul.f32 %v1534, %v1534
      %v2255 = vmul.f32 %v1535, %v1535
      %v2256 = vmul.f32 %v1536, %v1536
      %v2257 = vmul.f32 %v1537, %v1537
      %v2258 = vmul.f32 %v1538, %v1538
      %v2259 = vmul.f32 %v1539, %v1539
      %v2260 = vmul.f32 %v1540, %v1540
      %v2261 = vmul.f32 %v1541, %v1541
      %v2262 = vmul.f32 %v1542, %v1542
      %v2263 = vmul.f32 %v1543, %v1543
      %v2264 = vmul.f32 %v1544, %v1544
      %v2265 = vmul.f32 %v1545, %v1545
      %v2266 = vmul.f32 %v1546, %v1546
      %v2267 = vmul.f32 %v1547, %v1547
      %v2268 = vmul.f32 %v1548, %v1548
      %v2269 = vmul.f32 %v1549, %v1549
      %v2270 = vmul.f32 %v1550, %v1550
      %v2271 = vmul.f32 %v1551, %v1551
      %v2272 = vmul.f32 %v1552, %v1552
      %v2273 = vmul.f32 %v1553, %v1553
      %v2274 = vmul.f32 %v1554, %v1554
      %v2275 = vmul.f32 %v1555, %v1555
      %v2276 = vmul.f32 %v1556, %v1556
      %v2277 = vmul.f32 %v1557, %v1557
      %v2278 = vmul.f32 %v1558, %v1558
      %v2279 = vmul.f32 %v1559, %v1559
      %v2280 = vmul.f32 %v1560, %v1560
      %v2281 = vmul.f32 %v1561, %v1561
      %v2282 = vmul.f32 %v1562, %v1562
      %v2283 = vmul.f32 %v1563, %v1563
      %v2284 = vmul.f32 %v1564, %v1564
      %v2285 = vmul.f32 %v1565, %v1565
      %v2286 = vmul.f32 %v1566, %v1566
      %v2287 = vmul.f32 %v1567, %v1567
      %v2288 = vmul.f32 %v1568, %v1568
      %v2289 = vmul.f32 %v1569, %v1569
      %v2290 = vmul.f32 %v1570, %v1570
      %v2291 = vmul.f32 %v1571, %v1571
      %v2292 = vmul.f32 %v1572, %v1572
      %v2293 = vmul.f32 %v1573, %v1573
      %v2294 = vmul.f32 %v1574, %v1574
      %v2295 = vmul.f32 %v1575, %v1575
      %v2296 = vmul.f32 %v1576, %v1576
      %v2297 = vmul.f32 %v1577, %v1577
      %v2298 = vmul.f32 %v1578, %v1578
      %v2299 = vmul.f32 %v1579, %v1579
      %v2300 = vmul.f32 %v1580, %v1580
      %v2301 = vmul.f32 %v1581, %v1581
      %v2302 = vmul.f32 %v1582, %v1582
      %v2303 = vmul.f32 %v1583, %v1583
      %v2304 = vmul.f32 %v1584, %v1584
      %v2305 = vmul.f32 %v1585, %v1585
      %v2306 = vmul.f32 %v1586, %v1586
      %v2307 = vmul.f32 %v1587, %v1587
      %v2308 = vmul.f32 %v1588, %v1588
      %v2309 = vmul.f32 %v1589, %v1589
      %v2310 = vsub.f32 %v2022, %v2166
      %v2311 = vsub.f32 %v2023, %v2167
      %v2312 = vsub.f32 %v2024, %v2168
      %v2313 = vsub.f32 %v2025, %v2169
      %v2314 = vsub.f32 %v2026, %v2170
      %v2315 = vsub.f32 %v2027, %v2171
      %v2316 = vsub.f32 %v2028, %v2172
      %v2317 = vsub.f32 %v2029, %v2173
      %v2318 = vsub.f32 %v2030, %v2174
      %v2319 = vsub.f32 %v2031, %v2175
      %v2320 = vsub.f32 %v2032, %v2176
      %v2321 = vsub.f32 %v2033, %v2177
      %v2322 = vsub.f32 %v2034, %v2178
      %v2323 = vsub.f32 %v2035, %v2179
      %v2324 = vsub.f32 %v2036, %v2180
      %v2325 = vsub.f32 %v2037, %v2181
      %v2326 = vsub.f32 %v2038, %v2182
      %v2327 = vsub.f32 %v2039, %v2183
      %v2328 = vsub.f32 %v2040, %v2184
      %v2329 = vsub.f32 %v2041, %v2185
      %v2330 = vsub.f32 %v2042, %v2186
      %v2331 = vsub.f32 %v2043, %v2187
      %v2332 = vsub.f32 %v2044, %v2188
      %v2333 = vsub.f32 %v2045, %v2189
      %v2334 = vsub.f32 %v2046, %v2190
      %v2335 = vsub.f32 %v2047, %v2191
      %v2336 = vsub.f32 %v2048, %v2192
      %v2337 = vsub.f32 %v2049, %v2193
      %v2338 = vsub.f32 %v2050, %v2194
      %v2339 = vsub.f32 %v2051, %v2195
      %v2340 = vsub.f32 %v2052, %v2196
      %v2341 = vsub.f32 %v2053, %v2197
      %v2342 = vsub.f32 %v2054, %v2198
      %v2343 = vsub.f32 %v2055, %v2199
      %v2344 = vsub.f32 %v2056, %v2200
      %v2345 = vsub.f32 %v2057, %v2201
      %v2346 = vsub.f32 %v2058, %v2202
      %v2347 = vsub.f32 %v2059, %v2203
      %v2348 = vsub.f32 %v2060, %v2204
      %v2349 = vsub.f32 %v2061, %v2205
      %v2350 = vsub.f32 %v2062, %v2206
      %v2351 = vsub.f32 %v2063, %v2207
      %v2352 = vsub.f32 %v2064, %v2208
      %v2353 = vsub.f32 %v2065, %v2209
      %v2354 = vsub.f32 %v2066, %v2210
      %v2355 = vsub.f32 %v2067, %v2211
      %v2356 = vsub.f32 %v2068, %v2212
      %v2357 = vsub.f32 %v2069, %v2213
      %v2358 = vsub.f32 %v2070, %v2214
      %v2359 = vsub.f32 %v2071, %v2215
      %v2360 = vsub.f32 %v2072, %v2216
      %v2361 = vsub.f32 %v2073, %v2217
      %v2362 = vsub.f32 %v2074, %v2218
      %v2363 = vsub.f32 %v2075, %v2219
      %v2364 = vsub.f32 %v2076, %v2220
      %v2365 = vsub.f32 %v2077, %v2221
      %v2366 = vsub.f32 %v2078, %v2222
      %v2367 = vsub.f32 %v2079, %v2223
      %v2368 = vsub.f32 %v2080, %v2224
      %v2369 = vsub.f32 %v2081, %v2225
      %v2370 = vsub.f32 %v2082, %v2226
      %v2371 = vsub.f32 %v2083, %v2227
      %v2372 = vsub.f32 %v2084, %v2228
      %v2373 = vsub.f32 %v2085, %v2229
      %v2374 = vsub.f32 %v2086, %v2230
      %v2375 = vsub.f32 %v2087, %v2231
      %v2376 = vsub.f32 %v2088, %v2232
      %v2377 = vsub.f32 %v2089, %v2233
      %v2378 = vsub.f32 %v2090, %v2234
      %v2379 = vsub.f32 %v2091, %v2235
      %v2380 = vsub.f32 %v2092, %v2236
      %v2381 = vsub.f32 %v2093, %v2237
      %v2382 = vsub.f32 %v2094, %v2238
      %v2383 = vsub.f32 %v2095, %v2239
      %v2384 = vsub.f32 %v2096, %v2240
      %v2385 = vsub.f32 %v2097, %v2241
      %v2386 = vsub.f32 %v2098, %v2242
      %v2387 = vsub.f32 %v2099, %v2243
      %v2388 = vsub.f32 %v2100, %v2244
      %v2389 = vsub.f32 %v2101, %v2245
      %v2390 = vsub.f32 %v2102, %v2246
      %v2391 = vsub.f32 %v2103, %v2247
      %v2392 = vsub.f32 %v2104, %v2248
      %v2393 = vsub.f32 %v2105, %v2249
      %v2394 = vsub.f32 %v2106, %v2250
      %v2395 = vsub.f32 %v2107, %v2251
      %v2396 = vsub.f32 %v2108, %v2252
      %v2397 = vsub.f32 %v2109, %v2253
      %v2398 = vsub.f32 %v2110, %v2254
      %v2399 = vsub.f32 %v2111, %v2255
      %v2400 = vsub.f32 %v2112, %v2256
      %v2401 = vsub.f32 %v2113, %v2257
      %v2402 = vsub.f32 %v2114, %v2258
      %v2403 = vsub.f32 %v2115, %v2259
      %v2404 = vsub.f32 %v2116, %v2260
      %v2405 = vsub.f32 %v2117, %v2261
      %v2406 = vsub.f32 %v2118, %v2262
      %v2407 = vsub.f32 %v2119, %v2263
      %v2408 = vsub.f32 %v2120, %v2264
      %v2409 = vsub.f32 %v2121, %v2265
      %v2410 = vsub.f32 %v2122, %v2266
      %v2411 = vsub.f32 %v2123, %v2267
      %v2412 = vsub.f32 %v2124, %v2268
      %v2413 = vsub.f32 %v2125, %v2269
      %v2414 = vsub.f32 %v2126, %v2270
      %v2415 = vsub.f32 %v2127, %v2271
      %v2416 = vsub.f32 %v2128, %v2272
      %v2417 = vsub.f32 %v2129, %v2273
      %v2418 = vsub.f32 %v2130, %v2274
      %v2419 = vsub.f32 %v2131, %v2275
      %v2420 = vsub.f32 %v2132, %v2276
      %v2421 = vsub.f32 %v2133, %v2277
      %v2422 = vsub.f32 %v2134, %v2278
      %v2423 = vsub.f32 %v2135, %v2279
      %v2424 = vsub.f32 %v2136, %v2280
      %v2425 = vsub.f32 %v2137, %v2281
      %v2426 = vsub.f32 %v2138, %v2282
      %v2427 = vsub.f32 %v2139, %v2283
      %v2428 = vsub.f32 %v2140, %v2284
      %v2429 = vsub.f32 %v2141, %v2285
      %v2430 = vsub.f32 %v2142, %v2286
      %v2431 = vsub.f32 %v2143, %v2287
      %v2432 = vsub.f32 %v2144, %v2288
      %v2433 = vsub.f32 %v2145, %v2289
      %v2434 = vsub.f32 %v2146, %v2290
      %v2435 = vsub.f32 %v2147, %v2291
      %v2436 = vsub.f32 %v2148, %v2292
      %v2437 = vsub.f32 %v2149, %v2293
      %v2438 = vsub.f32 %v2150, %v2294
      %v2439 = vsub.f32 %v2151, %v2295
      %v2440 = vsub.f32 %v2152, %v2296
      %v2441 = vsub.f32 %v2153, %v2297
      %v2442 = vsub.f32 %v2154, %v2298
      %v2443 = vsub.f32 %v2155, %v2299
      %v2444 = vsub.f32 %v2156, %v2300
      %v2445 = vsub.f32 %v2157, %v2301
      %v2446 = vsub.f32 %v2158, %v2302
      %v2447 = vsub.f32 %v2159, %v2303
      %v2448 = vsub.f32 %v2160, %v2304
      %v2449 = vsub.f32 %v2161, %v2305
      %v2450 = vsub.f32 %v2162, %v2306
      %v2451 = vsub.f32 %v2163, %v2307
      %v2452 = vsub.f32 %v2164, %v2308
      %v2453 = vsub.f32 %v2165, %v2309
      %v2454 = vsub.f32 %v1011, %v1446
      %v2455 = vsub.f32 %v1012, %v1447
      %v2456 = vsub.f32 %v1013, %v1448
      %v2457 = vsub.f32 %v1014, %v1449
      %v2458 = vsub.f32 %v1015, %v1450
      %v2459 = vsub.f32 %v1016, %v1451
      %v2460 = vsub.f32 %v1017, %v1452
      %v2461 = vsub.f32 %v1018, %v1453
      %v2462 = vsub.f32 %v1019, %v1454
      %v2463 = vsub.f32 %v1020, %v1455
      %v2464 = vsub.f32 %v1021, %v1456
      %v2465 = vsub.f32 %v1022, %v1457
      %v2466 = vsub.f32 %v1023, %v1458
      %v2467 = vsub.f32 %v1024, %v1459
      %v2468 = vsub.f32 %v1025, %v1460
      %v2469 = vsub.f32 %v1026, %v1461
      %v2470 = vsub.f32 %v1027, %v1462
      %v2471 = vsub.f32 %v1028, %v1463
      %v2472 = vsub.f32 %v1029, %v1464
      %v2473 = vsub.f32 %v1030, %v1465
      %v2474 = vsub.f32 %v1031, %v1466
      %v2475 = vsub.f32 %v1032, %v1467
      %v2476 = vsub.f32 %v1033, %v1468
      %v2477 = vsub.f32 %v1034, %v1469
      %v2478 = vsub.f32 %v1035, %v1470
      %v2479 = vsub.f32 %v1036, %v1471
      %v2480 = vsub.f32 %v1037, %v1472
      %v2481 = vsub.f32 %v1038, %v1473
      %v2482 = vsub.f32 %v1039, %v1474
      %v2483 = vsub.f32 %v1040, %v1475
      %v2484 = vsub.f32 %v1041, %v1476
      %v2485 = vsub.f32 %v1042, %v1477
      %v2486 = vsub.f32 %v1043, %v1478
      %v2487 = vsub.f32 %v1044, %v1479
      %v2488 = vsub.f32 %v1045, %v1480
      %v2489 = vsub.f32 %v1046, %v1481
      %v2490 = vsub.f32 %v1047, %v1482
      %v2491 = vsub.f32 %v1048, %v1483
      %v2492 = vsub.f32 %v1049, %v1484
      %v2493 = vsub.f32 %v1050, %v1485
      %v2494 = vsub.f32 %v1051, %v1486
      %v2495 = vsub.f32 %v1052, %v1487
      %v2496 = vsub.f32 %v1053, %v1488
      %v2497 = vsub.f32 %v1054, %v1489
      %v2498 = vsub.f32 %v1055, %v1490
      %v2499 = vsub.f32 %v1056, %v1491
      %v2500 = vsub.f32 %v1057, %v1492
      %v2501 = vsub.f32 %v1058, %v1493
      %v2502 = vsub.f32 %v1059, %v1494
      %v2503 = vsub.f32 %v1060, %v1495
      %v2504 = vsub.f32 %v1061, %v1496
      %v2505 = vsub.f32 %v1062, %v1497
      %v2506 = vsub.f32 %v1063, %v1498
      %v2507 = vsub.f32 %v1064, %v1499
      %v2508 = vsub.f32 %v1065, %v1500
      %v2509 = vsub.f32 %v1066, %v1501
      %v2510 = vsub.f32 %v1067, %v1502
      %v2511 = vsub.f32 %v1068, %v1503
      %v2512 = vsub.f32 %v1069, %v1504
      %v2513 = vsub.f32 %v1070, %v1505
      %v2514 = vsub.f32 %v1071, %v1506
      %v2515 = vsub.f32 %v1072, %v1507
      %v2516 = vsub.f32 %v1073, %v1508
      %v2517 = vsub.f32 %v1074, %v1509
      %v2518 = vsub.f32 %v1075, %v1510
      %v2519 = vsub.f32 %v1076, %v1511
      %v2520 = vsub.f32 %v1077, %v1512
      %v2521 = vsub.f32 %v1078, %v1513
      %v2522 = vsub.f32 %v1079, %v1514
      %v2523 = vsub.f32 %v1080, %v1515
      %v2524 = vsub.f32 %v1081, %v1516
      %v2525 = vsub.f32 %v1082, %v1517
      %v2526 = vsub.f32 %v1083, %v1518
      %v2527 = vsub.f32 %v1084, %v1519
      %v2528 = vsub.f32 %v1085, %v1520
      %v2529 = vsub.f32 %v1086, %v1521
      %v2530 = vsub.f32 %v1087, %v1522
      %v2531 = vsub.f32 %v1088, %v1523
      %v2532 = vsub.f32 %v1089, %v1524
      %v2533 = vsub.f32 %v1090, %v1525
      %v2534 = vsub.f32 %v1091, %v1526
      %v2535 = vsub.f32 %v1092, %v1527
      %v2536 = vsub.f32 %v1093, %v1528
      %v2537 = vsub.f32 %v1094, %v1529
      %v2538 = vsub.f32 %v1095, %v1530
      %v2539 = vsub.f32 %v1096, %v1531
      %v2540 = vsub.f32 %v1097, %v1532
      %v2541 = vsub.f32 %v1098, %v1533
      %v2542 = vsub.f32 %v1099, %v1534
      %v2543 = vsub.f32 %v1100, %v1535
      %v2544 = vsub.f32 %v1101, %v1536
      %v2545 = vsub.f32 %v1102, %v1537
      %v2546 = vsub.f32 %v1103, %v1538
      %v2547 = vsub.f32 %v1104, %v1539
      %v2548 = vsub.f32 %v1105, %v1540
      %v2549 = vsub.f32 %v1106, %v1541
      %v2550 = vsub.f32 %v1107, %v1542
      %v2551 = vsub.f32 %v1108, %v1543
      %v2552 = vsub.f32 %v1109, %v1544
      %v2553 = vsub.f32 %v1110, %v1545
      %v2554 = vsub.f32 %v1111, %v1546
      %v2555 = vsub.f32 %v1112, %v1547
      %v2556 = vsub.f32 %v1113, %v1548
      %v2557 = vsub.f32 %v1114, %v1549
      %v2558 = vsub.f32 %v1115, %v1550
      %v2559 = vsub.f32 %v1116, %v1551
      %v2560 = vsub.f32 %v1117, %v1552
      %v2561 = vsub.f32 %v1118, %v1553
      %v2562 = vsub.f32 %v1119, %v1554
      %v2563 = vsub.f32 %v1120, %v1555
      %v2564 = vsub.f32 %v1121, %v1556
      %v2565 = vsub.f32 %v1122, %v1557
      %v2566 = vsub.f32 %v1123, %v1558
      %v2567 = vsub.f32 %v1124, %v1559
      %v2568 = vsub.f32 %v1125, %v1560
      %v2569 = vsub.f32 %v1126, %v1561
      %v2570 = vsub.f32 %v1127, %v1562
      %v2571 = vsub.f32 %v1128, %v1563
      %v2572 = vsub.f32 %v1129, %v1564
      %v2573 = vsub.f32 %v1130, %v1565
      %v2574 = vsub.f32 %v1131, %v1566
      %v2575 = vsub.f32 %v1132, %v1567
      %v2576 = vsub.f32 %v1133, %v1568
      %v2577 = vsub.f32 %v1134, %v1569
      %v2578 = vsub.f32 %v1135, %v1570
      %v2579 = vsub.f32 %v1136, %v1571
      %v2580 = vsub.f32 %v1137, %v1572
      %v2581 = vsub.f32 %v1138, %v1573
      %v2582 = vsub.f32 %v1139, %v1574
      %v2583 = vsub.f32 %v1140, %v1575
      %v2584 = vsub.f32 %v1141, %v1576
      %v2585 = vsub.f32 %v1142, %v1577
      %v2586 = vsub.f32 %v1143, %v1578
      %v2587 = vsub.f32 %v1144, %v1579
      %v2588 = vsub.f32 %v1145, %v1580
      %v2589 = vsub.f32 %v1146, %v1581
      %v2590 = vsub.f32 %v1147, %v1582
      %v2591 = vsub.f32 %v1148, %v1583
      %v2592 = vsub.f32 %v1149, %v1584
      %v2593 = vsub.f32 %v1150, %v1585
      %v2594 = vsub.f32 %v1151, %v1586
      %v2595 = vsub.f32 %v1152, %v1587
      %v2596 = vsub.f32 %v1153, %v1588
      %v2597 = vsub.f32 %v1154, %v1589
      %v2598 = vadd.f32 %v2310, 1e-05
      %v2599 = vadd.f32 %v2311, 1e-05
      %v2600 = vadd.f32 %v2312, 1e-05
      %v2601 = vadd.f32 %v2313, 1e-05
      %v2602 = vadd.f32 %v2314, 1e-05
      %v2603 = vadd.f32 %v2315, 1e-05
      %v2604 = vadd.f32 %v2316, 1e-05
      %v2605 = vadd.f32 %v2317, 1e-05
      %v2606 = vadd.f32 %v2318, 1e-05
      %v2607 = vadd.f32 %v2319, 1e-05
      %v2608 = vadd.f32 %v2320, 1e-05
      %v2609 = vadd.f32 %v2321, 1e-05
      %v2610 = vadd.f32 %v2322, 1e-05
      %v2611 = vadd.f32 %v2323, 1e-05
      %v2612 = vadd.f32 %v2324, 1e-05
      %v2613 = vadd.f32 %v2325, 1e-05
      %v2614 = vadd.f32 %v2326, 1e-05
      %v2615 = vadd.f32 %v2327, 1e-05
      %v2616 = vadd.f32 %v2328, 1e-05
      %v2617 = vadd.f32 %v2329, 1e-05
      %v2618 = vadd.f32 %v2330, 1e-05
      %v2619 = vadd.f32 %v2331, 1e-05
      %v2620 = vadd.f32 %v2332, 1e-05
      %v2621 = vadd.f32 %v2333, 1e-05
      %v2622 = vadd.f32 %v2334, 1e-05
      %v2623 = vadd.f32 %v2335, 1e-05
      %v2624 = vadd.f32 %v2336, 1e-05
      %v2625 = vadd.f32 %v2337, 1e-05
      %v2626 = vadd.f32 %v2338, 1e-05
      %v2627 = vadd.f32 %v2339, 1e-05
      %v2628 = vadd.f32 %v2340, 1e-05
      %v2629 = vadd.f32 %v2341, 1e-05
      %v2630 = vadd.f32 %v2342, 1e-05
      %v2631 = vadd.f32 %v2343, 1e-05
      %v2632 = vadd.f32 %v2344, 1e-05
      %v2633 = vadd.f32 %v2345, 1e-05
      %v2634 = vadd.f32 %v2346, 1e-05
      %v2635 = vadd.f32 %v2347, 1e-05
      %v2636 = vadd.f32 %v2348, 1e-05
      %v2637 = vadd.f32 %v2349, 1e-05
      %v2638 = vadd.f32 %v2350, 1e-05
      %v2639 = vadd.f32 %v2351, 1e-05
      %v2640 = vadd.f32 %v2352, 1e-05
      %v2641 = vadd.f32 %v2353, 1e-05
      %v2642 = vadd.f32 %v2354, 1e-05
      %v2643 = vadd.f32 %v2355, 1e-05
      %v2644 = vadd.f32 %v2356, 1e-05
      %v2645 = vadd.f32 %v2357, 1e-05
      %v2646 = vadd.f32 %v2358, 1e-05
      %v2647 = vadd.f32 %v2359, 1e-05
      %v2648 = vadd.f32 %v2360, 1e-05
      %v2649 = vadd.f32 %v2361, 1e-05
      %v2650 = vadd.f32 %v2362, 1e-05
      %v2651 = vadd.f32 %v2363, 1e-05
      %v2652 = vadd.f32 %v2364, 1e-05
      %v2653 = vadd.f32 %v2365, 1e-05
      %v2654 = vadd.f32 %v2366, 1e-05
      %v2655 = vadd.f32 %v2367, 1e-05
      %v2656 = vadd.f32 %v2368, 1e-05
      %v2657 = vadd.f32 %v2369, 1e-05
      %v2658 = vadd.f32 %v2370, 1e-05
      %v2659 = vadd.f32 %v2371, 1e-05
      %v2660 = vadd.f32 %v2372, 1e-05
      %v2661 = vadd.f32 %v2373, 1e-05
      %v2662 = vadd.f32 %v2374, 1e-05
      %v2663 = vadd.f32 %v2375, 1e-05
      %v2664 = vadd.f32 %v2376, 1e-05
      %v2665 = vadd.f32 %v2377, 1e-05
      %v2666 = vadd.f32 %v2378, 1e-05
      %v2667 = vadd.f32 %v2379, 1e-05
      %v2668 = vadd.f32 %v2380, 1e-05
      %v2669 = vadd.f32 %v2381, 1e-05
      %v2670 = vadd.f32 %v2382, 1e-05
      %v2671 = vadd.f32 %v2383, 1e-05
      %v2672 = vadd.f32 %v2384, 1e-05
      %v2673 = vadd.f32 %v2385, 1e-05
      %v2674 = vadd.f32 %v2386, 1e-05
      %v2675 = vadd.f32 %v2387, 1e-05
      %v2676 = vadd.f32 %v2388, 1e-05
      %v2677 = vadd.f32 %v2389, 1e-05
      %v2678 = vadd.f32 %v2390, 1e-05
      %v2679 = vadd.f32 %v2391, 1e-05
      %v2680 = vadd.f32 %v2392, 1e-05
      %v2681 = vadd.f32 %v2393, 1e-05
      %v2682 = vadd.f32 %v2394, 1e-05
      %v2683 = vadd.f32 %v2395, 1e-05
      %v2684 = vadd.f32 %v2396, 1e-05
      %v2685 = vadd.f32 %v2397, 1e-05
      %v2686 = vadd.f32 %v2398, 1e-05
      %v2687 = vadd.f32 %v2399, 1e-05
      %v2688 = vadd.f32 %v2400, 1e-05
      %v2689 = vadd.f32 %v2401, 1e-05
      %v2690 = vadd.f32 %v2402, 1e-05
      %v2691 = vadd.f32 %v2403, 1e-05
      %v2692 = vadd.f32 %v2404, 1e-05
      %v2693 = vadd.f32 %v2405, 1e-05
      %v2694 = vadd.f32 %v2406, 1e-05
      %v2695 = vadd.f32 %v2407, 1e-05
      %v2696 = vadd.f32 %v2408, 1e-05
      %v2697 = vadd.f32 %v2409, 1e-05
      %v2698 = vadd.f32 %v2410, 1e-05
      %v2699 = vadd.f32 %v2411, 1e-05
      %v2700 = vadd.f32 %v2412, 1e-05
      %v2701 = vadd.f32 %v2413, 1e-05
      %v2702 = vadd.f32 %v2414, 1e-05
      %v2703 = vadd.f32 %v2415, 1e-05
      %v2704 = vadd.f32 %v2416, 1e-05
      %v2705 = vadd.f32 %v2417, 1e-05
      %v2706 = vadd.f32 %v2418, 1e-05
      %v2707 = vadd.f32 %v2419, 1e-05
      %v2708 = vadd.f32 %v2420, 1e-05
      %v2709 = vadd.f32 %v2421, 1e-05
      %v2710 = vadd.f32 %v2422, 1e-05
      %v2711 = vadd.f32 %v2423, 1e-05
      %v2712 = vadd.f32 %v2424, 1e-05
      %v2713 = vadd.f32 %v2425, 1e-05
      %v2714 = vadd.f32 %v2426, 1e-05
      %v2715 = vadd.f32 %v2427, 1e-05
      %v2716 = vadd.f32 %v2428, 1e-05
      %v2717 = vadd.f32 %v2429, 1e-05
      %v2718 = vadd.f32 %v2430, 1e-05
      %v2719 = vadd.f32 %v2431, 1e-05
      %v2720 = vadd.f32 %v2432, 1e-05
      %v2721 = vadd.f32 %v2433, 1e-05
      %v2722 = vadd.f32 %v2434, 1e-05
      %v2723 = vadd.f32 %v2435, 1e-05
      %v2724 = vadd.f32 %v2436, 1e-05
      %v2725 = vadd.f32 %v2437, 1e-05
      %v2726 = vadd.f32 %v2438, 1e-05
      %v2727 = vadd.f32 %v2439, 1e-05
      %v2728 = vadd.f32 %v2440, 1e-05
      %v2729 = vadd.f32 %v2441, 1e-05
      %v2730 = vadd.f32 %v2442, 1e-05
      %v2731 = vadd.f32 %v2443, 1e-05
      %v2732 = vadd.f32 %v2444, 1e-05
      %v2733 = vadd.f32 %v2445, 1e-05
      %v2734 = vadd.f32 %v2446, 1e-05
      %v2735 = vadd.f32 %v2447, 1e-05
      %v2736 = vadd.f32 %v2448, 1e-05
      %v2737 = vadd.f32 %v2449, 1e-05
      %v2738 = vadd.f32 %v2450, 1e-05
      %v2739 = vadd.f32 %v2451, 1e-05
      %v2740 = vadd.f32 %v2452, 1e-05
      %v2741 = vadd.f32 %v2453, 1e-05
      %v2742 = vrsqrt.pop %v2598
      %v2743 = vrsqrt.pop %v2599
      %v2744 = vrsqrt.pop %v2600
      %v2745 = vrsqrt.pop %v2601
      %v2746 = vrsqrt.pop %v2602
      %v2747 = vrsqrt.pop %v2603
      %v2748 = vrsqrt.pop %v2604
      %v2749 = vrsqrt.pop %v2605
      %v2750 = vrsqrt.pop %v2606
      %v2751 = vrsqrt.pop %v2607
      %v2752 = vrsqrt.pop %v2608
      %v2753 = vrsqrt.pop %v2609
      %v2754 = vrsqrt.pop %v2610
      %v2755 = vrsqrt.pop %v2611
      %v2756 = vrsqrt.pop %v2612
      %v2757 = vrsqrt.pop %v2613
      %v2758 = vrsqrt.pop %v2614
      %v2759 = vrsqrt.pop %v2615
      %v2760 = vrsqrt.pop %v2616
      %v2761 = vrsqrt.pop %v2617
      %v2762 = vrsqrt.pop %v2618
      %v2763 = vrsqrt.pop %v2619
      %v2764 = vrsqrt.pop %v2620
      %v2765 = vrsqrt.pop %v2621
      %v2766 = vrsqrt.pop %v2622
      %v2767 = vrsqrt.pop %v2623
      %v2768 = vrsqrt.pop %v2624
      %v2769 = vrsqrt.pop %v2625
      %v2770 = vrsqrt.pop %v2626
      %v2771 = vrsqrt.pop %v2627
      %v2772 = vrsqrt.pop %v2628
      %v2773 = vrsqrt.pop %v2629
      %v2774 = vrsqrt.pop %v2630
      %v2775 = vrsqrt.pop %v2631
      %v2776 = vrsqrt.pop %v2632
      %v2777 = vrsqrt.pop %v2633
      %v2778 = vrsqrt.pop %v2634
      %v2779 = vrsqrt.pop %v2635
      %v2780 = vrsqrt.pop %v2636
      %v2781 = vrsqrt.pop %v2637
      %v2782 = vrsqrt.pop %v2638
      %v2783 = vrsqrt.pop %v2639
      %v2784 = vrsqrt.pop %v2640
      %v2785 = vrsqrt.pop %v2641
      %v2786 = vrsqrt.pop %v2642
      %v2787 = vrsqrt.pop %v2643
      %v2788 = vrsqrt.pop %v2644
      %v2789 = vrsqrt.pop %v2645
      %v2790 = vrsqrt.pop %v2646
      %v2791 = vrsqrt.pop %v2647
      %v2792 = vrsqrt.pop %v2648
      %v2793 = vrsqrt.pop %v2649
      %v2794 = vrsqrt.pop %v2650
      %v2795 = vrsqrt.pop %v2651
      %v2796 = vrsqrt.pop %v2652
      %v2797 = vrsqrt.pop %v2653
      %v2798 = vrsqrt.pop %v2654
      %v2799 = vrsqrt.pop %v2655
      %v2800 = vrsqrt.pop %v2656
      %v2801 = vrsqrt.pop %v2657
      %v2802 = vrsqrt.pop %v2658
      %v2803 = vrsqrt.pop %v2659
      %v2804 = vrsqrt.pop %v2660
      %v2805 = vrsqrt.pop %v2661
      %v2806 = vrsqrt.pop %v2662
      %v2807 = vrsqrt.pop %v2663
      %v2808 = vrsqrt.pop %v2664
      %v2809 = vrsqrt.pop %v2665
      %v2810 = vrsqrt.pop %v2666
      %v2811 = vrsqrt.pop %v2667
      %v2812 = vrsqrt.pop %v2668
      %v2813 = vrsqrt.pop %v2669
      %v2814 = vrsqrt.pop %v2670
      %v2815 = vrsqrt.pop %v2671
      %v2816 = vrsqrt.pop %v2672
      %v2817 = vrsqrt.pop %v2673
      %v2818 = vrsqrt.pop %v2674
      %v2819 = vrsqrt.pop %v2675
      %v2820 = vrsqrt.pop %v2676
      %v2821 = vrsqrt.pop %v2677
      %v2822 = vrsqrt.pop %v2678
      %v2823 = vrsqrt.pop %v2679
      %v2824 = vrsqrt.pop %v2680
      %v2825 = vrsqrt.pop %v2681
      %v2826 = vrsqrt.pop %v2682
      %v2827 = vrsqrt.pop %v2683
      %v2828 = vrsqrt.pop %v2684
      %v2829 = vrsqrt.pop %v2685
      %v2830 = vrsqrt.pop %v2686
      %v2831 = vrsqrt.pop %v2687
      %v2832 = vrsqrt.pop %v2688
      %v2833 = vrsqrt.pop %v2689
      %v2834 = vrsqrt.pop %v2690
      %v2835 = vrsqrt.pop %v2691
      %v2836 = vrsqrt.pop %v2692
      %v2837 = vrsqrt.pop %v2693
      %v2838 = vrsqrt.pop %v2694
      %v2839 = vrsqrt.pop %v2695
      %v2840 = vrsqrt.pop %v2696
      %v2841 = vrsqrt.pop %v2697
      %v2842 = vrsqrt.pop %v2698
      %v2843 = vrsqrt.pop %v2699
      %v2844 = vrsqrt.pop %v2700
      %v2845 = vrsqrt.pop %v2701
      %v2846 = vrsqrt.pop %v2702
      %v2847 = vrsqrt.pop %v2703
      %v2848 = vrsqrt.pop %v2704
      %v2849 = vrsqrt.pop %v2705
      %v2850 = vrsqrt.pop %v2706
      %v2851 = vrsqrt.pop %v2707
      %v2852 = vrsqrt.pop %v2708
      %v2853 = vrsqrt.pop %v2709
      %v2854 = vrsqrt.pop %v2710
      %v2855 = vrsqrt.pop %v2711
      %v2856 = vrsqrt.pop %v2712
      %v2857 = vrsqrt.pop %v2713
      %v2858 = vrsqrt.pop %v2714
      %v2859 = vrsqrt.pop %v2715
      %v2860 = vrsqrt.pop %v2716
      %v2861 = vrsqrt.pop %v2717
      %v2862 = vrsqrt.pop %v2718
      %v2863 = vrsqrt.pop %v2719
      %v2864 = vrsqrt.pop %v2720
      %v2865 = vrsqrt.pop %v2721
      %v2866 = vrsqrt.pop %v2722
      %v2867 = vrsqrt.pop %v2723
      %v2868 = vrsqrt.pop %v2724
      %v2869 = vrsqrt.pop %v2725
      %v2870 = vrsqrt.pop %v2726
      %v2871 = vrsqrt.pop %v2727
      %v2872 = vrsqrt.pop %v2728
      %v2873 = vrsqrt.pop %v2729
      %v2874 = vrsqrt.pop %v2730
      %v2875 = vrsqrt.pop %v2731
      %v2876 = vrsqrt.pop %v2732
      %v2877 = vrsqrt.pop %v2733
      %v2878 = vrsqrt.pop %v2734
      %v2879 = vrsqrt.pop %v2735
      %v2880 = vrsqrt.pop %v2736
      %v2881 = vrsqrt.pop %v2737
      %v2882 = vrsqrt.pop %v2738
      %v2883 = vrsqrt.pop %v2739
      %v2884 = vrsqrt.pop %v2740
      %v2885 = vrsqrt.pop %v2741
      %v2886 = vmul.f32 %v2454, %v2742
      %v2887 = vmul.f32 %v2455, %v2743
      %v2888 = vmul.f32 %v2456, %v2744
      %v2889 = vmul.f32 %v2457, %v2745
      %v2890 = vmul.f32 %v2458, %v2746
      %v2891 = vmul.f32 %v2459, %v2747
      %v2892 = vmul.f32 %v2460, %v2748
      %v2893 = vmul.f32 %v2461, %v2749
      %v2894 = vmul.f32 %v2462, %v2750
      %v2895 = vmul.f32 %v2463, %v2751
      %v2896 = vmul.f32 %v2464, %v2752
      %v2897 = vmul.f32 %v2465, %v2753
      %v2898 = vmul.f32 %v2466, %v2754
      %v2899 = vmul.f32 %v2467, %v2755
      %v2900 = vmul.f32 %v2468, %v2756
      %v2901 = vmul.f32 %v2469, %v2757
      %v2902 = vmul.f32 %v2470, %v2758
      %v2903 = vmul.f32 %v2471, %v2759
      %v2904 = vmul.f32 %v2472, %v2760
      %v2905 = vmul.f32 %v2473, %v2761
      %v2906 = vmul.f32 %v2474, %v2762
      %v2907 = vmul.f32 %v2475, %v2763
      %v2908 = vmul.f32 %v2476, %v2764
      %v2909 = vmul.f32 %v2477, %v2765
      %v2910 = vmul.f32 %v2478, %v2766
      %v2911 = vmul.f32 %v2479, %v2767
      %v2912 = vmul.f32 %v2480, %v2768
      %v2913 = vmul.f32 %v2481, %v2769
      %v2914 = vmul.f32 %v2482, %v2770
      %v2915 = vmul.f32 %v2483, %v2771
      %v2916 = vmul.f32 %v2484, %v2772
      %v2917 = vmul.f32 %v2485, %v2773
      %v2918 = vmul.f32 %v2486, %v2774
      %v2919 = vmul.f32 %v2487, %v2775
      %v2920 = vmul.f32 %v2488, %v2776
      %v2921 = vmul.f32 %v2489, %v2777
      %v2922 = vmul.f32 %v2490, %v2778
      %v2923 = vmul.f32 %v2491, %v2779
      %v2924 = vmul.f32 %v2492, %v2780
      %v2925 = vmul.f32 %v2493, %v2781
      %v2926 = vmul.f32 %v2494, %v2782
      %v2927 = vmul.f32 %v2495, %v2783
      %v2928 = vmul.f32 %v2496, %v2784
      %v2929 = vmul.f32 %v2497, %v2785
      %v2930 = vmul.f32 %v2498, %v2786
      %v2931 = vmul.f32 %v2499, %v2787
      %v2932 = vmul.f32 %v2500, %v2788
      %v2933 = vmul.f32 %v2501, %v2789
      %v2934 = vmul.f32 %v2502, %v2790
      %v2935 = vmul.f32 %v2503, %v2791
      %v2936 = vmul.f32 %v2504, %v2792
      %v2937 = vmul.f32 %v2505, %v2793
      %v2938 = vmul.f32 %v2506, %v2794
      %v2939 = vmul.f32 %v2507, %v2795
      %v2940 = vmul.f32 %v2508, %v2796
      %v2941 = vmul.f32 %v2509, %v2797
      %v2942 = vmul.f32 %v2510, %v2798
      %v2943 = vmul.f32 %v2511, %v2799
      %v2944 = vmul.f32 %v2512, %v2800
      %v2945 = vmul.f32 %v2513, %v2801
      %v2946 = vmul.f32 %v2514, %v2802
      %v2947 = vmul.f32 %v2515, %v2803
      %v2948 = vmul.f32 %v2516, %v2804
      %v2949 = vmul.f32 %v2517, %v2805
      %v2950 = vmul.f32 %v2518, %v2806
      %v2951 = vmul.f32 %v2519, %v2807
      %v2952 = vmul.f32 %v2520, %v2808
      %v2953 = vmul.f32 %v2521, %v2809
      %v2954 = vmul.f32 %v2522, %v2810
      %v2955 = vmul.f32 %v2523, %v2811
      %v2956 = vmul.f32 %v2524, %v2812
      %v2957 = vmul.f32 %v2525, %v2813
      %v2958 = vmul.f32 %v2526, %v2814
      %v2959 = vmul.f32 %v2527, %v2815
      %v2960 = vmul.f32 %v2528, %v2816
      %v2961 = vmul.f32 %v2529, %v2817
      %v2962 = vmul.f32 %v2530, %v2818
      %v2963 = vmul.f32 %v2531, %v2819
      %v2964 = vmul.f32 %v2532, %v2820
      %v2965 = vmul.f32 %v2533, %v2821
      %v2966 = vmul.f32 %v2534, %v2822
      %v2967 = vmul.f32 %v2535, %v2823
      %v2968 = vmul.f32 %v2536, %v2824
      %v2969 = vmul.f32 %v2537, %v2825
      %v2970 = vmul.f32 %v2538, %v2826
      %v2971 = vmul.f32 %v2539, %v2827
      %v2972 = vmul.f32 %v2540, %v2828
      %v2973 = vmul.f32 %v2541, %v2829
      %v2974 = vmul.f32 %v2542, %v2830
      %v2975 = vmul.f32 %v2543, %v2831
      %v2976 = vmul.f32 %v2544, %v2832
      %v2977 = vmul.f32 %v2545, %v2833
      %v2978 = vmul.f32 %v2546, %v2834
      %v2979 = vmul.f32 %v2547, %v2835
      %v2980 = vmul.f32 %v2548, %v2836
      %v2981 = vmul.f32 %v2549, %v2837
      %v2982 = vmul.f32 %v2550, %v2838
      %v2983 = vmul.f32 %v2551, %v2839
      %v2984 = vmul.f32 %v2552, %v2840
      %v2985 = vmul.f32 %v2553, %v2841
      %v2986 = vmul.f32 %v2554, %v2842
      %v2987 = vmul.f32 %v2555, %v2843
      %v2988 = vmul.f32 %v2556, %v2844
      %v2989 = vmul.f32 %v2557, %v2845
      %v2990 = vmul.f32 %v2558, %v2846
      %v2991 = vmul.f32 %v2559, %v2847
      %v2992 = vmul.f32 %v2560, %v2848
      %v2993 = vmul.f32 %v2561, %v2849
      %v2994 = vmul.f32 %v2562, %v2850
      %v2995 = vmul.f32 %v2563, %v2851
      %v2996 = vmul.f32 %v2564, %v2852
      %v2997 = vmul.f32 %v2565, %v2853
      %v2998 = vmul.f32 %v2566, %v2854
      %v2999 = vmul.f32 %v2567, %v2855
      %v3000 = vmul.f32 %v2568, %v2856
      %v3001 = vmul.f32 %v2569, %v2857
      %v3002 = vmul.f32 %v2570, %v2858
      %v3003 = vmul.f32 %v2571, %v2859
      %v3004 = vmul.f32 %v2572, %v2860
      %v3005 = vmul.f32 %v2573, %v2861
      %v3006 = vmul.f32 %v2574, %v2862
      %v3007 = vmul.f32 %v2575, %v2863
      %v3008 = vmul.f32 %v2576, %v2864
      %v3009 = vmul.f32 %v2577, %v2865
      %v3010 = vmul.f32 %v2578, %v2866
      %v3011 = vmul.f32 %v2579, %v2867
      %v3012 = vmul.f32 %v2580, %v2868
      %v3013 = vmul.f32 %v2581, %v2869
      %v3014 = vmul.f32 %v2582, %v2870
      %v3015 = vmul.f32 %v2583, %v2871
      %v3016 = vmul.f32 %v2584, %v2872
      %v3017 = vmul.f32 %v2585, %v2873
      %v3018 = vmul.f32 %v2586, %v2874
      %v3019 = vmul.f32 %v2587, %v2875
      %v3020 = vmul.f32 %v2588, %v2876
      %v3021 = vmul.f32 %v2589, %v2877
      %v3022 = vmul.f32 %v2590, %v2878
      %v3023 = vmul.f32 %v2591, %v2879
      %v3024 = vmul.f32 %v2592, %v2880
      %v3025 = vmul.f32 %v2593, %v2881
      %v3026 = vmul.f32 %v2594, %v2882
      %v3027 = vmul.f32 %v2595, %v2883
      %v3028 = vmul.f32 %v2596, %v2884
      %v3029 = vmul.f32 %v2597, %v2885
      %v3031 = vlaneseq
      %v3032 = vshrl.u32 %v3031, 7
      %v3033 = vsub.s32 0, %v3032
      %v3034 = vrot.slane %v1155, %v3033
      %v3036 = vmul.f32 %v2886, %v3034
      %v3037 = vmul.f32 %v2887, %v3034
      %v3038 = vmul.f32 %v2888, %v3034
      %v3039 = vmul.f32 %v2889, %v3034
      %v3040 = vmul.f32 %v2890, %v3034
      %v3041 = vmul.f32 %v2891, %v3034
      %v3042 = vmul.f32 %v2892, %v3034
      %v3043 = vmul.f32 %v2893, %v3034
      %v3044 = vmul.f32 %v2894, %v3034
      %v3045 = vmul.f32 %v2895, %v3034
      %v3046 = vmul.f32 %v2896, %v3034
      %v3047 = vmul.f32 %v2897, %v3034
      %v3048 = vmul.f32 %v2898, %v3034
      %v3049 = vmul.f32 %v2899, %v3034
      %v3050 = vmul.f32 %v2900, %v3034
      %v3051 = vmul.f32 %v2901, %v3034
      %v3052 = vmul.f32 %v2902, %v3034
      %v3053 = vmul.f32 %v2903, %v3034
      %v3054 = vmul.f32 %v2904, %v3034
      %v3055 = vmul.f32 %v2905, %v3034
      %v3056 = vmul.f32 %v2906, %v3034
      %v3057 = vmul.f32 %v2907, %v3034
      %v3058 = vmul.f32 %v2908, %v3034
      %v3059 = vmul.f32 %v2909, %v3034
      %v3060 = vmul.f32 %v2910, %v3034
      %v3061 = vmul.f32 %v2911, %v3034
      %v3062 = vmul.f32 %v2912, %v3034
      %v3063 = vmul.f32 %v2913, %v3034
      %v3064 = vmul.f32 %v2914, %v3034
      %v3065 = vmul.f32 %v2915, %v3034
      %v3066 = vmul.f32 %v2916, %v3034
      %v3067 = vmul.f32 %v2917, %v3034
      %v3068 = vmul.f32 %v2918, %v3034
      %v3069 = vmul.f32 %v2919, %v3034
      %v3070 = vmul.f32 %v2920, %v3034
      %v3071 = vmul.f32 %v2921, %v3034
      %v3072 = vmul.f32 %v2922, %v3034
      %v3073 = vmul.f32 %v2923, %v3034
      %v3074 = vmul.f32 %v2924, %v3034
      %v3075 = vmul.f32 %v2925, %v3034
      %v3076 = vmul.f32 %v2926, %v3034
      %v3077 = vmul.f32 %v2927, %v3034
      %v3078 = vmul.f32 %v2928, %v3034
      %v3079 = vmul.f32 %v2929, %v3034
      %v3080 = vmul.f32 %v2930, %v3034
      %v3081 = vmul.f32 %v2931, %v3034
      %v3082 = vmul.f32 %v2932, %v3034
      %v3083 = vmul.f32 %v2933, %v3034
      %v3084 = vmul.f32 %v2934, %v3034
      %v3085 = vmul.f32 %v2935, %v3034
      %v3086 = vmul.f32 %v2936, %v3034
      %v3087 = vmul.f32 %v2937, %v3034
      %v3088 = vmul.f32 %v2938, %v3034
      %v3089 = vmul.f32 %v2939, %v3034
      %v3090 = vmul.f32 %v2940, %v3034
      %v3091 = vmul.f32 %v2941, %v3034
      %v3092 = vmul.f32 %v2942, %v3034
      %v3093 = vmul.f32 %v2943, %v3034
      %v3094 = vmul.f32 %v2944, %v3034
      %v3095 = vmul.f32 %v2945, %v3034
      %v3096 = vmul.f32 %v2946, %v3034
      %v3097 = vmul.f32 %v2947, %v3034
      %v3098 = vmul.f32 %v2948, %v3034
      %v3099 = vmul.f32 %v2949, %v3034
      %v3100 = vmul.f32 %v2950, %v3034
      %v3101 = vmul.f32 %v2951, %v3034
      %v3102 = vmul.f32 %v2952, %v3034
      %v3103 = vmul.f32 %v2953, %v3034
      %v3104 = vmul.f32 %v2954, %v3034
      %v3105 = vmul.f32 %v2955, %v3034
      %v3106 = vmul.f32 %v2956, %v3034
      %v3107 = vmul.f32 %v2957, %v3034
      %v3108 = vmul.f32 %v2958, %v3034
      %v3109 = vmul.f32 %v2959, %v3034
      %v3110 = vmul.f32 %v2960, %v3034
      %v3111 = vmul.f32 %v2961, %v3034
      %v3112 = vmul.f32 %v2962, %v3034
      %v3113 = vmul.f32 %v2963, %v3034
      %v3114 = vmul.f32 %v2964, %v3034
      %v3115 = vmul.f32 %v2965, %v3034
      %v3116 = vmul.f32 %v2966, %v3034
      %v3117 = vmul.f32 %v2967, %v3034
      %v3118 = vmul.f32 %v2968, %v3034
      %v3119 = vmul.f32 %v2969, %v3034
      %v3120 = vmul.f32 %v2970, %v3034
      %v3121 = vmul.f32 %v2971, %v3034
      %v3122 = vmul.f32 %v2972, %v3034
      %v3123 = vmul.f32 %v2973, %v3034
      %v3124 = vmul.f32 %v2974, %v3034
      %v3125 = vmul.f32 %v2975, %v3034
      %v3126 = vmul.f32 %v2976, %v3034
      %v3127 = vmul.f32 %v2977, %v3034
      %v3128 = vmul.f32 %v2978, %v3034
      %v3129 = vmul.f32 %v2979, %v3034
      %v3130 = vmul.f32 %v2980, %v3034
      %v3131 = vmul.f32 %v2981, %v3034
      %v3132 = vmul.f32 %v2982, %v3034
      %v3133 = vmul.f32 %v2983, %v3034
      %v3134 = vmul.f32 %v2984, %v3034
      %v3135 = vmul.f32 %v2985, %v3034
      %v3136 = vmul.f32 %v2986, %v3034
      %v3137 = vmul.f32 %v2987, %v3034
      %v3138 = vmul.f32 %v2988, %v3034
      %v3139 = vmul.f32 %v2989, %v3034
      %v3140 = vmul.f32 %v2990, %v3034
      %v3141 = vmul.f32 %v2991, %v3034
      %v3142 = vmul.f32 %v2992, %v3034
      %v3143 = vmul.f32 %v2993, %v3034
      %v3144 = vmul.f32 %v2994, %v3034
      %v3145 = vmul.f32 %v2995, %v3034
      %v3146 = vmul.f32 %v2996, %v3034
      %v3147 = vmul.f32 %v2997, %v3034
      %v3148 = vmul.f32 %v2998, %v3034
      %v3149 = vmul.f32 %v2999, %v3034
      %v3150 = vmul.f32 %v3000, %v3034
      %v3151 = vmul.f32 %v3001, %v3034
      %v3152 = vmul.f32 %v3002, %v3034
      %v3153 = vmul.f32 %v3003, %v3034
      %v3154 = vmul.f32 %v3004, %v3034
      %v3155 = vmul.f32 %v3005, %v3034
      %v3156 = vmul.f32 %v3006, %v3034
      %v3157 = vmul.f32 %v3007, %v3034
      %v3158 = vmul.f32 %v3008, %v3034
      %v3159 = vmul.f32 %v3009, %v3034
      %v3160 = vmul.f32 %v3010, %v3034
      %v3161 = vmul.f32 %v3011, %v3034
      %v3162 = vmul.f32 %v3012, %v3034
      %v3163 = vmul.f32 %v3013, %v3034
      %v3164 = vmul.f32 %v3014, %v3034
      %v3165 = vmul.f32 %v3015, %v3034
      %v3166 = vmul.f32 %v3016, %v3034
      %v3167 = vmul.f32 %v3017, %v3034
      %v3168 = vmul.f32 %v3018, %v3034
      %v3169 = vmul.f32 %v3019, %v3034
      %v3170 = vmul.f32 %v3020, %v3034
      %v3171 = vmul.f32 %v3021, %v3034
      %v3172 = vmul.f32 %v3022, %v3034
      %v3173 = vmul.f32 %v3023, %v3034
      %v3174 = vmul.f32 %v3024, %v3034
      %v3175 = vmul.f32 %v3025, %v3034
      %v3176 = vmul.f32 %v3026, %v3034
      %v3177 = vmul.f32 %v3027, %v3034
      %v3178 = vmul.f32 %v3028, %v3034
      %v3179 = vmul.f32 %v3029, %v3034
      %v3181 = vlaneseq
      %v3182 = vshrl.u32 %v3181, 7
      %v3183 = vsub.s32 0, %v3182
      %v3184 = vrot.slane %v1156, %v3183
      %v3186 = vadd.f32 %v3036, %v3184
      %v3187 = vadd.f32 %v3037, %v3184
      %v3188 = vadd.f32 %v3038, %v3184
      %v3189 = vadd.f32 %v3039, %v3184
      %v3190 = vadd.f32 %v3040, %v3184
      %v3191 = vadd.f32 %v3041, %v3184
      %v3192 = vadd.f32 %v3042, %v3184
      %v3193 = vadd.f32 %v3043, %v3184
      %v3194 = vadd.f32 %v3044, %v3184
      %v3195 = vadd.f32 %v3045, %v3184
      %v3196 = vadd.f32 %v3046, %v3184
      %v3197 = vadd.f32 %v3047, %v3184
      %v3198 = vadd.f32 %v3048, %v3184
      %v3199 = vadd.f32 %v3049, %v3184
      %v3200 = vadd.f32 %v3050, %v3184
      %v3201 = vadd.f32 %v3051, %v3184
      %v3202 = vadd.f32 %v3052, %v3184
      %v3203 = vadd.f32 %v3053, %v3184
      %v3204 = vadd.f32 %v3054, %v3184
      %v3205 = vadd.f32 %v3055, %v3184
      %v3206 = vadd.f32 %v3056, %v3184
      %v3207 = vadd.f32 %v3057, %v3184
      %v3208 = vadd.f32 %v3058, %v3184
      %v3209 = vadd.f32 %v3059, %v3184
      %v3210 = vadd.f32 %v3060, %v3184
      %v3211 = vadd.f32 %v3061, %v3184
      %v3212 = vadd.f32 %v3062, %v3184
      %v3213 = vadd.f32 %v3063, %v3184
      %v3214 = vadd.f32 %v3064, %v3184
      %v3215 = vadd.f32 %v3065, %v3184
      %v3216 = vadd.f32 %v3066, %v3184
      %v3217 = vadd.f32 %v3067, %v3184
      %v3218 = vadd.f32 %v3068, %v3184
      %v3219 = vadd.f32 %v3069, %v3184
      %v3220 = vadd.f32 %v3070, %v3184
      %v3221 = vadd.f32 %v3071, %v3184
      %v3222 = vadd.f32 %v3072, %v3184
      %v3223 = vadd.f32 %v3073, %v3184
      %v3224 = vadd.f32 %v3074, %v3184
      %v3225 = vadd.f32 %v3075, %v3184
      %v3226 = vadd.f32 %v3076, %v3184
      %v3227 = vadd.f32 %v3077, %v3184
      %v3228 = vadd.f32 %v3078, %v3184
      %v3229 = vadd.f32 %v3079, %v3184
      %v3230 = vadd.f32 %v3080, %v3184
      %v3231 = vadd.f32 %v3081, %v3184
      %v3232 = vadd.f32 %v3082, %v3184
      %v3233 = vadd.f32 %v3083, %v3184
      %v3234 = vadd.f32 %v3084, %v3184
      %v3235 = vadd.f32 %v3085, %v3184
      %v3236 = vadd.f32 %v3086, %v3184
      %v3237 = vadd.f32 %v3087, %v3184
      %v3238 = vadd.f32 %v3088, %v3184
      %v3239 = vadd.f32 %v3089, %v3184
      %v3240 = vadd.f32 %v3090, %v3184
      %v3241 = vadd.f32 %v3091, %v3184
      %v3242 = vadd.f32 %v3092, %v3184
      %v3243 = vadd.f32 %v3093, %v3184
      %v3244 = vadd.f32 %v3094, %v3184
      %v3245 = vadd.f32 %v3095, %v3184
      %v3246 = vadd.f32 %v3096, %v3184
      %v3247 = vadd.f32 %v3097, %v3184
      %v3248 = vadd.f32 %v3098, %v3184
      %v3249 = vadd.f32 %v3099, %v3184
      %v3250 = vadd.f32 %v3100, %v3184
      %v3251 = vadd.f32 %v3101, %v3184
      %v3252 = vadd.f32 %v3102, %v3184
      %v3253 = vadd.f32 %v3103, %v3184
      %v3254 = vadd.f32 %v3104, %v3184
      %v3255 = vadd.f32 %v3105, %v3184
      %v3256 = vadd.f32 %v3106, %v3184
      %v3257 = vadd.f32 %v3107, %v3184
      %v3258 = vadd.f32 %v3108, %v3184
      %v3259 = vadd.f32 %v3109, %v3184
      %v3260 = vadd.f32 %v3110, %v3184
      %v3261 = vadd.f32 %v3111, %v3184
      %v3262 = vadd.f32 %v3112, %v3184
      %v3263 = vadd.f32 %v3113, %v3184
      %v3264 = vadd.f32 %v3114, %v3184
      %v3265 = vadd.f32 %v3115, %v3184
      %v3266 = vadd.f32 %v3116, %v3184
      %v3267 = vadd.f32 %v3117, %v3184
      %v3268 = vadd.f32 %v3118, %v3184
      %v3269 = vadd.f32 %v3119, %v3184
      %v3270 = vadd.f32 %v3120, %v3184
      %v3271 = vadd.f32 %v3121, %v3184
      %v3272 = vadd.f32 %v3122, %v3184
      %v3273 = vadd.f32 %v3123, %v3184
      %v3274 = vadd.f32 %v3124, %v3184
      %v3275 = vadd.f32 %v3125, %v3184
      %v3276 = vadd.f32 %v3126, %v3184
      %v3277 = vadd.f32 %v3127, %v3184
      %v3278 = vadd.f32 %v3128, %v3184
      %v3279 = vadd.f32 %v3129, %v3184
      %v3280 = vadd.f32 %v3130, %v3184
      %v3281 = vadd.f32 %v3131, %v3184
      %v3282 = vadd.f32 %v3132, %v3184
      %v3283 = vadd.f32 %v3133, %v3184
      %v3284 = vadd.f32 %v3134, %v3184
      %v3285 = vadd.f32 %v3135, %v3184
      %v3286 = vadd.f32 %v3136, %v3184
      %v3287 = vadd.f32 %v3137, %v3184
      %v3288 = vadd.f32 %v3138, %v3184
      %v3289 = vadd.f32 %v3139, %v3184
      %v3290 = vadd.f32 %v3140, %v3184
      %v3291 = vadd.f32 %v3141, %v3184
      %v3292 = vadd.f32 %v3142, %v3184
      %v3293 = vadd.f32 %v3143, %v3184
      %v3294 = vadd.f32 %v3144, %v3184
      %v3295 = vadd.f32 %v3145, %v3184
      %v3296 = vadd.f32 %v3146, %v3184
      %v3297 = vadd.f32 %v3147, %v3184
      %v3298 = vadd.f32 %v3148, %v3184
      %v3299 = vadd.f32 %v3149, %v3184
      %v3300 = vadd.f32 %v3150, %v3184
      %v3301 = vadd.f32 %v3151, %v3184
      %v3302 = vadd.f32 %v3152, %v3184
      %v3303 = vadd.f32 %v3153, %v3184
      %v3304 = vadd.f32 %v3154, %v3184
      %v3305 = vadd.f32 %v3155, %v3184
      %v3306 = vadd.f32 %v3156, %v3184
      %v3307 = vadd.f32 %v3157, %v3184
      %v3308 = vadd.f32 %v3158, %v3184
      %v3309 = vadd.f32 %v3159, %v3184
      %v3310 = vadd.f32 %v3160, %v3184
      %v3311 = vadd.f32 %v3161, %v3184
      %v3312 = vadd.f32 %v3162, %v3184
      %v3313 = vadd.f32 %v3163, %v3184
      %v3314 = vadd.f32 %v3164, %v3184
      %v3315 = vadd.f32 %v3165, %v3184
      %v3316 = vadd.f32 %v3166, %v3184
      %v3317 = vadd.f32 %v3167, %v3184
      %v3318 = vadd.f32 %v3168, %v3184
      %v3319 = vadd.f32 %v3169, %v3184
      %v3320 = vadd.f32 %v3170, %v3184
      %v3321 = vadd.f32 %v3171, %v3184
      %v3322 = vadd.f32 %v3172, %v3184
      %v3323 = vadd.f32 %v3173, %v3184
      %v3324 = vadd.f32 %v3174, %v3184
      %v3325 = vadd.f32 %v3175, %v3184
      %v3326 = vadd.f32 %v3176, %v3184
      %v3327 = vadd.f32 %v3177, %v3184
      %v3328 = vadd.f32 %v3178, %v3184
      %v3329 = vadd.f32 %v3179, %v3184
      %v3330 = vld [vmem:[%s426] sm:$0xff]
      %v3331 = vld [vmem:[%s426 + $0x8] sm:$0xff]
      %v3332 = vld [vmem:[%s426 + $0x10] sm:$0xff]
      %v3333 = vld [vmem:[%s426 + $0x18] sm:$0xff]
      %v3334 = vld [vmem:[%s426 + $0x20] sm:$0xff]
      %v3335 = vld [vmem:[%s426 + $0x28] sm:$0xff]
      %v3336 = vld [vmem:[%s426 + $0x30] sm:$0xff]
      %v3337 = vld [vmem:[%s426 + $0x38] sm:$0xff]
      %v3338 = vld [vmem:[%s426 + $0x40] sm:$0xff]
      %v3339 = vld [vmem:[%s426 + $0x48] sm:$0xff]
      %v3340 = vld [vmem:[%s426 + $0x50] sm:$0xff]
      %v3341 = vld [vmem:[%s426 + $0x58] sm:$0xff]
      %v3342 = vld [vmem:[%s426 + $0x60] sm:$0xff]
      %v3343 = vld [vmem:[%s426 + $0x68] sm:$0xff]
      %v3344 = vld [vmem:[%s426 + $0x70] sm:$0xff]
      %v3345 = vld [vmem:[%s426 + $0x78] sm:$0xff]
      %v3346 = vld [vmem:[%s426 + $0x80] sm:$0xff]
      %v3347 = vld [vmem:[%s426 + $0x88] sm:$0xff]
      %v3348 = vld [vmem:[%s426 + $0x90] sm:$0xff]
      %v3349 = vld [vmem:[%s426 + $0x98] sm:$0xff]
      %v3350 = vld [vmem:[%s426 + $0xa0] sm:$0xff]
      %v3351 = vld [vmem:[%s426 + $0xa8] sm:$0xff]
      %v3352 = vld [vmem:[%s426 + $0xb0] sm:$0xff]
      %v3353 = vld [vmem:[%s426 + $0xb8] sm:$0xff]
      %v3354 = vld [vmem:[%s426 + $0xc0] sm:$0xff]
      %v3355 = vld [vmem:[%s426 + $0xc8] sm:$0xff]
      %v3356 = vld [vmem:[%s426 + $0xd0] sm:$0xff]
      %v3357 = vld [vmem:[%s426 + $0xd8] sm:$0xff]
      %v3358 = vld [vmem:[%s426 + $0xe0] sm:$0xff]
      %v3359 = vld [vmem:[%s426 + $0xe8] sm:$0xff]
      %v3360 = vld [vmem:[%s426 + $0xf0] sm:$0xff]
      %v3361 = vld [vmem:[%s426 + $0xf8] sm:$0xff]
      %v3362 = vld [vmem:[%s426 + $0x100] sm:$0xff]
      %v3363 = vld [vmem:[%s426 + $0x108] sm:$0xff]
      %v3364 = vld [vmem:[%s426 + $0x110] sm:$0xff]
      %v3365 = vld [vmem:[%s426 + $0x118] sm:$0xff]
      %v3366 = vld [vmem:[%s426 + $0x120] sm:$0xff]
      %v3367 = vld [vmem:[%s426 + $0x128] sm:$0xff]
      %v3368 = vld [vmem:[%s426 + $0x130] sm:$0xff]
      %v3369 = vld [vmem:[%s426 + $0x138] sm:$0xff]
      %v3370 = vld [vmem:[%s426 + $0x140] sm:$0xff]
      %v3371 = vld [vmem:[%s426 + $0x148] sm:$0xff]
      %v3372 = vld [vmem:[%s426 + $0x150] sm:$0xff]
      %v3373 = vld [vmem:[%s426 + $0x158] sm:$0xff]
      %v3374 = vld [vmem:[%s426 + $0x160] sm:$0xff]
      %v3375 = vld [vmem:[%s426 + $0x168] sm:$0xff]
      %v3376 = vld [vmem:[%s426 + $0x170] sm:$0xff]
      %v3377 = vld [vmem:[%s426 + $0x178] sm:$0xff]
      %v3378 = vld [vmem:[%s426 + $0x180] sm:$0xff]
      %v3379 = vld [vmem:[%s426 + $0x188] sm:$0xff]
      %v3380 = vld [vmem:[%s426 + $0x190] sm:$0xff]
      %v3381 = vld [vmem:[%s426 + $0x198] sm:$0xff]
      %v3382 = vld [vmem:[%s426 + $0x1a0] sm:$0xff]
      %v3383 = vld [vmem:[%s426 + $0x1a8] sm:$0xff]
      %v3384 = vld [vmem:[%s426 + $0x1b0] sm:$0xff]
      %v3385 = vld [vmem:[%s426 + $0x1b8] sm:$0xff]
      %v3386 = vld [vmem:[%s426 + $0x1c0] sm:$0xff]
      %v3387 = vld [vmem:[%s426 + $0x1c8] sm:$0xff]
      %v3388 = vld [vmem:[%s426 + $0x1d0] sm:$0xff]
      %v3389 = vld [vmem:[%s426 + $0x1d8] sm:$0xff]
      %v3390 = vld [vmem:[%s426 + $0x1e0] sm:$0xff]
      %v3391 = vld [vmem:[%s426 + $0x1e8] sm:$0xff]
      %v3392 = vld [vmem:[%s426 + $0x1f0] sm:$0xff]
      %v3393 = vld [vmem:[%s426 + $0x1f8] sm:$0xff]
      %v3394 = vld [vmem:[%s426 + $0x200] sm:$0xff]
      %v3395 = vld [vmem:[%s426 + $0x208] sm:$0xff]
      %v3396 = vld [vmem:[%s426 + $0x210] sm:$0xff]
      %v3397 = vld [vmem:[%s426 + $0x218] sm:$0xff]
      %v3398 = vld [vmem:[%s426 + $0x220] sm:$0xff]
      %v3399 = vld [vmem:[%s426 + $0x228] sm:$0xff]
      %v3400 = vld [vmem:[%s426 + $0x230] sm:$0xff]
      %v3401 = vld [vmem:[%s426 + $0x238] sm:$0xff]
      %v3402 = vld [vmem:[%s426 + $0x240] sm:$0xff]
      %v3403 = vld [vmem:[%s426 + $0x248] sm:$0xff]
      %v3404 = vld [vmem:[%s426 + $0x250] sm:$0xff]
      %v3405 = vld [vmem:[%s426 + $0x258] sm:$0xff]
      %v3406 = vld [vmem:[%s426 + $0x260] sm:$0xff]
      %v3407 = vld [vmem:[%s426 + $0x268] sm:$0xff]
      %v3408 = vld [vmem:[%s426 + $0x270] sm:$0xff]
      %v3409 = vld [vmem:[%s426 + $0x278] sm:$0xff]
      %v3410 = vld [vmem:[%s426 + $0x280] sm:$0xff]
      %v3411 = vld [vmem:[%s426 + $0x288] sm:$0xff]
      %v3412 = vld [vmem:[%s426 + $0x290] sm:$0xff]
      %v3413 = vld [vmem:[%s426 + $0x298] sm:$0xff]
      %v3414 = vld [vmem:[%s426 + $0x2a0] sm:$0xff]
      %v3415 = vld [vmem:[%s426 + $0x2a8] sm:$0xff]
      %v3416 = vld [vmem:[%s426 + $0x2b0] sm:$0xff]
      %v3417 = vld [vmem:[%s426 + $0x2b8] sm:$0xff]
      %v3418 = vld [vmem:[%s426 + $0x2c0] sm:$0xff]
      %v3419 = vld [vmem:[%s426 + $0x2c8] sm:$0xff]
      %v3420 = vld [vmem:[%s426 + $0x2d0] sm:$0xff]
      %v3421 = vld [vmem:[%s426 + $0x2d8] sm:$0xff]
      %v3422 = vld [vmem:[%s426 + $0x2e0] sm:$0xff]
      %v3423 = vld [vmem:[%s426 + $0x2e8] sm:$0xff]
      %v3424 = vld [vmem:[%s426 + $0x2f0] sm:$0xff]
      %v3425 = vld [vmem:[%s426 + $0x2f8] sm:$0xff]
      %v3426 = vld [vmem:[%s426 + $0x300] sm:$0xff]
      %v3427 = vld [vmem:[%s426 + $0x308] sm:$0xff]
      %v3428 = vld [vmem:[%s426 + $0x310] sm:$0xff]
      %v3429 = vld [vmem:[%s426 + $0x318] sm:$0xff]
      %v3430 = vld [vmem:[%s426 + $0x320] sm:$0xff]
      %v3431 = vld [vmem:[%s426 + $0x328] sm:$0xff]
      %v3432 = vld [vmem:[%s426 + $0x330] sm:$0xff]
      %v3433 = vld [vmem:[%s426 + $0x338] sm:$0xff]
      %v3434 = vld [vmem:[%s426 + $0x340] sm:$0xff]
      %v3435 = vld [vmem:[%s426 + $0x348] sm:$0xff]
      %v3436 = vld [vmem:[%s426 + $0x350] sm:$0xff]
      %v3437 = vld [vmem:[%s426 + $0x358] sm:$0xff]
      %v3438 = vld [vmem:[%s426 + $0x360] sm:$0xff]
      %v3439 = vld [vmem:[%s426 + $0x368] sm:$0xff]
      %v3440 = vld [vmem:[%s426 + $0x370] sm:$0xff]
      %v3441 = vld [vmem:[%s426 + $0x378] sm:$0xff]
      %v3442 = vld [vmem:[%s426 + $0x380] sm:$0xff]
      %v3443 = vld [vmem:[%s426 + $0x388] sm:$0xff]
      %v3444 = vld [vmem:[%s426 + $0x390] sm:$0xff]
      %v3445 = vld [vmem:[%s426 + $0x398] sm:$0xff]
      %v3446 = vld [vmem:[%s426 + $0x3a0] sm:$0xff]
      %v3447 = vld [vmem:[%s426 + $0x3a8] sm:$0xff]
      %v3448 = vld [vmem:[%s426 + $0x3b0] sm:$0xff]
      %v3449 = vld [vmem:[%s426 + $0x3b8] sm:$0xff]
      %v3450 = vld [vmem:[%s426 + $0x3c0] sm:$0xff]
      %v3451 = vld [vmem:[%s426 + $0x3c8] sm:$0xff]
      %v3452 = vld [vmem:[%s426 + $0x3d0] sm:$0xff]
      %v3453 = vld [vmem:[%s426 + $0x3d8] sm:$0xff]
      %v3454 = vld [vmem:[%s426 + $0x3e0] sm:$0xff]
      %v3455 = vld [vmem:[%s426 + $0x3e8] sm:$0xff]
      %v3456 = vld [vmem:[%s426 + $0x3f0] sm:$0xff]
      %v3457 = vld [vmem:[%s426 + $0x3f8] sm:$0xff]
      %v3458 = vld [vmem:[%s426 + $0x400] sm:$0xff]
      %v3459 = vld [vmem:[%s426 + $0x408] sm:$0xff]
      %v3460 = vld [vmem:[%s426 + $0x410] sm:$0xff]
      %v3461 = vld [vmem:[%s426 + $0x418] sm:$0xff]
      %v3462 = vld [vmem:[%s426 + $0x420] sm:$0xff]
      %v3463 = vld [vmem:[%s426 + $0x428] sm:$0xff]
      %v3464 = vld [vmem:[%s426 + $0x430] sm:$0xff]
      %v3465 = vld [vmem:[%s426 + $0x438] sm:$0xff]
      %v3466 = vld [vmem:[%s426 + $0x440] sm:$0xff]
      %v3467 = vld [vmem:[%s426 + $0x448] sm:$0xff]
      %v3468 = vld [vmem:[%s426 + $0x450] sm:$0xff]
      %v3469 = vld [vmem:[%s426 + $0x458] sm:$0xff]
      %v3470 = vld [vmem:[%s426 + $0x460] sm:$0xff]
      %v3471 = vld [vmem:[%s426 + $0x468] sm:$0xff]
      %v3472 = vld [vmem:[%s426 + $0x470] sm:$0xff]
      %v3473 = vld [vmem:[%s426 + $0x478] sm:$0xff]
      %3475 = vset.pattern.permute.xlu0 0
      %3476 = vperm.xlu0 %3475, %v3330
      %v3477 = vpop.permute.xlu0 %3476
      %3480 = vset.pattern.permute.xlu0 0
      %3481 = vperm.xlu0 %3480, %v3331
      %v3482 = vpop.permute.xlu0 %3481
      %3485 = vset.pattern.permute.xlu0 0
      %3486 = vperm.xlu0 %3485, %v3332
      %v3487 = vpop.permute.xlu0 %3486
      %3490 = vset.pattern.permute.xlu0 0
      %3491 = vperm.xlu0 %3490, %v3333
      %v3492 = vpop.permute.xlu0 %3491
      %3495 = vset.pattern.permute.xlu0 0
      %3496 = vperm.xlu0 %3495, %v3334
      %v3497 = vpop.permute.xlu0 %3496
      %3500 = vset.pattern.permute.xlu0 0
      %3501 = vperm.xlu0 %3500, %v3335
      %v3502 = vpop.permute.xlu0 %3501
      %3505 = vset.pattern.permute.xlu0 0
      %3506 = vperm.xlu0 %3505, %v3336
      %v3507 = vpop.permute.xlu0 %3506
      %3510 = vset.pattern.permute.xlu0 0
      %3511 = vperm.xlu0 %3510, %v3337
      %v3512 = vpop.permute.xlu0 %3511
      %3515 = vset.pattern.permute.xlu0 0
      %3516 = vperm.xlu0 %3515, %v3338
      %v3517 = vpop.permute.xlu0 %3516
      %3520 = vset.pattern.permute.xlu0 0
      %3521 = vperm.xlu0 %3520, %v3339
      %v3522 = vpop.permute.xlu0 %3521
      %3525 = vset.pattern.permute.xlu0 0
      %3526 = vperm.xlu0 %3525, %v3340
      %v3527 = vpop.permute.xlu0 %3526
      %3530 = vset.pattern.permute.xlu0 0
      %3531 = vperm.xlu0 %3530, %v3341
      %v3532 = vpop.permute.xlu0 %3531
      %3535 = vset.pattern.permute.xlu0 0
      %3536 = vperm.xlu0 %3535, %v3342
      %v3537 = vpop.permute.xlu0 %3536
      %3540 = vset.pattern.permute.xlu0 0
      %3541 = vperm.xlu0 %3540, %v3343
      %v3542 = vpop.permute.xlu0 %3541
      %3545 = vset.pattern.permute.xlu0 0
      %3546 = vperm.xlu0 %3545, %v3344
      %v3547 = vpop.permute.xlu0 %3546
      %3550 = vset.pattern.permute.xlu0 0
      %3551 = vperm.xlu0 %3550, %v3345
      %v3552 = vpop.permute.xlu0 %3551
      %3555 = vset.pattern.permute.xlu0 0
      %3556 = vperm.xlu0 %3555, %v3346
      %v3557 = vpop.permute.xlu0 %3556
      %3560 = vset.pattern.permute.xlu0 0
      %3561 = vperm.xlu0 %3560, %v3347
      %v3562 = vpop.permute.xlu0 %3561
      %3565 = vset.pattern.permute.xlu0 0
      %3566 = vperm.xlu0 %3565, %v3348
      %v3567 = vpop.permute.xlu0 %3566
      %3570 = vset.pattern.permute.xlu0 0
      %3571 = vperm.xlu0 %3570, %v3349
      %v3572 = vpop.permute.xlu0 %3571
      %3575 = vset.pattern.permute.xlu0 0
      %3576 = vperm.xlu0 %3575, %v3350
      %v3577 = vpop.permute.xlu0 %3576
      %3580 = vset.pattern.permute.xlu0 0
      %3581 = vperm.xlu0 %3580, %v3351
      %v3582 = vpop.permute.xlu0 %3581
      %3585 = vset.pattern.permute.xlu0 0
      %3586 = vperm.xlu0 %3585, %v3352
      %v3587 = vpop.permute.xlu0 %3586
      %3590 = vset.pattern.permute.xlu0 0
      %3591 = vperm.xlu0 %3590, %v3353
      %v3592 = vpop.permute.xlu0 %3591
      %3595 = vset.pattern.permute.xlu0 0
      %3596 = vperm.xlu0 %3595, %v3354
      %v3597 = vpop.permute.xlu0 %3596
      %3600 = vset.pattern.permute.xlu0 0
      %3601 = vperm.xlu0 %3600, %v3355
      %v3602 = vpop.permute.xlu0 %3601
      %3605 = vset.pattern.permute.xlu0 0
      %3606 = vperm.xlu0 %3605, %v3356
      %v3607 = vpop.permute.xlu0 %3606
      %3610 = vset.pattern.permute.xlu0 0
      %3611 = vperm.xlu0 %3610, %v3357
      %v3612 = vpop.permute.xlu0 %3611
      %3615 = vset.pattern.permute.xlu0 0
      %3616 = vperm.xlu0 %3615, %v3358
      %v3617 = vpop.permute.xlu0 %3616
      %3620 = vset.pattern.permute.xlu0 0
      %3621 = vperm.xlu0 %3620, %v3359
      %v3622 = vpop.permute.xlu0 %3621
      %3625 = vset.pattern.permute.xlu0 0
      %3626 = vperm.xlu0 %3625, %v3360
      %v3627 = vpop.permute.xlu0 %3626
      %3630 = vset.pattern.permute.xlu0 0
      %3631 = vperm.xlu0 %3630, %v3361
      %v3632 = vpop.permute.xlu0 %3631
      %3635 = vset.pattern.permute.xlu0 0
      %3636 = vperm.xlu0 %3635, %v3362
      %v3637 = vpop.permute.xlu0 %3636
      %3640 = vset.pattern.permute.xlu0 0
      %3641 = vperm.xlu0 %3640, %v3363
      %v3642 = vpop.permute.xlu0 %3641
      %3645 = vset.pattern.permute.xlu0 0
      %3646 = vperm.xlu0 %3645, %v3364
      %v3647 = vpop.permute.xlu0 %3646
      %3650 = vset.pattern.permute.xlu0 0
      %3651 = vperm.xlu0 %3650, %v3365
      %v3652 = vpop.permute.xlu0 %3651
      %3655 = vset.pattern.permute.xlu0 0
      %3656 = vperm.xlu0 %3655, %v3366
      %v3657 = vpop.permute.xlu0 %3656
      %3660 = vset.pattern.permute.xlu0 0
      %3661 = vperm.xlu0 %3660, %v3367
      %v3662 = vpop.permute.xlu0 %3661
      %3665 = vset.pattern.permute.xlu0 0
      %3666 = vperm.xlu0 %3665, %v3368
      %v3667 = vpop.permute.xlu0 %3666
      %3670 = vset.pattern.permute.xlu0 0
      %3671 = vperm.xlu0 %3670, %v3369
      %v3672 = vpop.permute.xlu0 %3671
      %3675 = vset.pattern.permute.xlu0 0
      %3676 = vperm.xlu0 %3675, %v3370
      %v3677 = vpop.permute.xlu0 %3676
      %3680 = vset.pattern.permute.xlu0 0
      %3681 = vperm.xlu0 %3680, %v3371
      %v3682 = vpop.permute.xlu0 %3681
      %3685 = vset.pattern.permute.xlu0 0
      %3686 = vperm.xlu0 %3685, %v3372
      %v3687 = vpop.permute.xlu0 %3686
      %3690 = vset.pattern.permute.xlu0 0
      %3691 = vperm.xlu0 %3690, %v3373
      %v3692 = vpop.permute.xlu0 %3691
      %3695 = vset.pattern.permute.xlu0 0
      %3696 = vperm.xlu0 %3695, %v3374
      %v3697 = vpop.permute.xlu0 %3696
      %3700 = vset.pattern.permute.xlu0 0
      %3701 = vperm.xlu0 %3700, %v3375
      %v3702 = vpop.permute.xlu0 %3701
      %3705 = vset.pattern.permute.xlu0 0
      %3706 = vperm.xlu0 %3705, %v3376
      %v3707 = vpop.permute.xlu0 %3706
      %3710 = vset.pattern.permute.xlu0 0
      %3711 = vperm.xlu0 %3710, %v3377
      %v3712 = vpop.permute.xlu0 %3711
      %3715 = vset.pattern.permute.xlu0 0
      %3716 = vperm.xlu0 %3715, %v3378
      %v3717 = vpop.permute.xlu0 %3716
      %3720 = vset.pattern.permute.xlu0 0
      %3721 = vperm.xlu0 %3720, %v3379
      %v3722 = vpop.permute.xlu0 %3721
      %3725 = vset.pattern.permute.xlu0 0
      %3726 = vperm.xlu0 %3725, %v3380
      %v3727 = vpop.permute.xlu0 %3726
      %3730 = vset.pattern.permute.xlu0 0
      %3731 = vperm.xlu0 %3730, %v3381
      %v3732 = vpop.permute.xlu0 %3731
      %3735 = vset.pattern.permute.xlu0 0
      %3736 = vperm.xlu0 %3735, %v3382
      %v3737 = vpop.permute.xlu0 %3736
      %3740 = vset.pattern.permute.xlu0 0
      %3741 = vperm.xlu0 %3740, %v3383
      %v3742 = vpop.permute.xlu0 %3741
      %3745 = vset.pattern.permute.xlu0 0
      %3746 = vperm.xlu0 %3745, %v3384
      %v3747 = vpop.permute.xlu0 %3746
      %3750 = vset.pattern.permute.xlu0 0
      %3751 = vperm.xlu0 %3750, %v3385
      %v3752 = vpop.permute.xlu0 %3751
      %3755 = vset.pattern.permute.xlu0 0
      %3756 = vperm.xlu0 %3755, %v3386
      %v3757 = vpop.permute.xlu0 %3756
      %3760 = vset.pattern.permute.xlu0 0
      %3761 = vperm.xlu0 %3760, %v3387
      %v3762 = vpop.permute.xlu0 %3761
      %3765 = vset.pattern.permute.xlu0 0
      %3766 = vperm.xlu0 %3765, %v3388
      %v3767 = vpop.permute.xlu0 %3766
      %3770 = vset.pattern.permute.xlu0 0
      %3771 = vperm.xlu0 %3770, %v3389
      %v3772 = vpop.permute.xlu0 %3771
      %3775 = vset.pattern.permute.xlu0 0
      %3776 = vperm.xlu0 %3775, %v3390
      %v3777 = vpop.permute.xlu0 %3776
      %3780 = vset.pattern.permute.xlu0 0
      %3781 = vperm.xlu0 %3780, %v3391
      %v3782 = vpop.permute.xlu0 %3781
      %3785 = vset.pattern.permute.xlu0 0
      %3786 = vperm.xlu0 %3785, %v3392
      %v3787 = vpop.permute.xlu0 %3786
      %3790 = vset.pattern.permute.xlu0 0
      %3791 = vperm.xlu0 %3790, %v3393
      %v3792 = vpop.permute.xlu0 %3791
      %3795 = vset.pattern.permute.xlu0 0
      %3796 = vperm.xlu0 %3795, %v3394
      %v3797 = vpop.permute.xlu0 %3796
      %3800 = vset.pattern.permute.xlu0 0
      %3801 = vperm.xlu0 %3800, %v3395
      %v3802 = vpop.permute.xlu0 %3801
      %3805 = vset.pattern.permute.xlu0 0
      %3806 = vperm.xlu0 %3805, %v3396
      %v3807 = vpop.permute.xlu0 %3806
      %3810 = vset.pattern.permute.xlu0 0
      %3811 = vperm.xlu0 %3810, %v3397
      %v3812 = vpop.permute.xlu0 %3811
      %3815 = vset.pattern.permute.xlu0 0
      %3816 = vperm.xlu0 %3815, %v3398
      %v3817 = vpop.permute.xlu0 %3816
      %3820 = vset.pattern.permute.xlu0 0
      %3821 = vperm.xlu0 %3820, %v3399
      %v3822 = vpop.permute.xlu0 %3821
      %3825 = vset.pattern.permute.xlu0 0
      %3826 = vperm.xlu0 %3825, %v3400
      %v3827 = vpop.permute.xlu0 %3826
      %3830 = vset.pattern.permute.xlu0 0
      %3831 = vperm.xlu0 %3830, %v3401
      %v3832 = vpop.permute.xlu0 %3831
      %3835 = vset.pattern.permute.xlu0 0
      %3836 = vperm.xlu0 %3835, %v3402
      %v3837 = vpop.permute.xlu0 %3836
      %3840 = vset.pattern.permute.xlu0 0
      %3841 = vperm.xlu0 %3840, %v3403
      %v3842 = vpop.permute.xlu0 %3841
      %3845 = vset.pattern.permute.xlu0 0
      %3846 = vperm.xlu0 %3845, %v3404
      %v3847 = vpop.permute.xlu0 %3846
      %3850 = vset.pattern.permute.xlu0 0
      %3851 = vperm.xlu0 %3850, %v3405
      %v3852 = vpop.permute.xlu0 %3851
      %3855 = vset.pattern.permute.xlu0 0
      %3856 = vperm.xlu0 %3855, %v3406
      %v3857 = vpop.permute.xlu0 %3856
      %3860 = vset.pattern.permute.xlu0 0
      %3861 = vperm.xlu0 %3860, %v3407
      %v3862 = vpop.permute.xlu0 %3861
      %3865 = vset.pattern.permute.xlu0 0
      %3866 = vperm.xlu0 %3865, %v3408
      %v3867 = vpop.permute.xlu0 %3866
      %3870 = vset.pattern.permute.xlu0 0
      %3871 = vperm.xlu0 %3870, %v3409
      %v3872 = vpop.permute.xlu0 %3871
      %3875 = vset.pattern.permute.xlu0 0
      %3876 = vperm.xlu0 %3875, %v3410
      %v3877 = vpop.permute.xlu0 %3876
      %3880 = vset.pattern.permute.xlu0 0
      %3881 = vperm.xlu0 %3880, %v3411
      %v3882 = vpop.permute.xlu0 %3881
      %3885 = vset.pattern.permute.xlu0 0
      %3886 = vperm.xlu0 %3885, %v3412
      %v3887 = vpop.permute.xlu0 %3886
      %3890 = vset.pattern.permute.xlu0 0
      %3891 = vperm.xlu0 %3890, %v3413
      %v3892 = vpop.permute.xlu0 %3891
      %3895 = vset.pattern.permute.xlu0 0
      %3896 = vperm.xlu0 %3895, %v3414
      %v3897 = vpop.permute.xlu0 %3896
      %3900 = vset.pattern.permute.xlu0 0
      %3901 = vperm.xlu0 %3900, %v3415
      %v3902 = vpop.permute.xlu0 %3901
      %3905 = vset.pattern.permute.xlu0 0
      %3906 = vperm.xlu0 %3905, %v3416
      %v3907 = vpop.permute.xlu0 %3906
      %3910 = vset.pattern.permute.xlu0 0
      %3911 = vperm.xlu0 %3910, %v3417
      %v3912 = vpop.permute.xlu0 %3911
      %3915 = vset.pattern.permute.xlu0 0
      %3916 = vperm.xlu0 %3915, %v3418
      %v3917 = vpop.permute.xlu0 %3916
      %3920 = vset.pattern.permute.xlu0 0
      %3921 = vperm.xlu0 %3920, %v3419
      %v3922 = vpop.permute.xlu0 %3921
      %3925 = vset.pattern.permute.xlu0 0
      %3926 = vperm.xlu0 %3925, %v3420
      %v3927 = vpop.permute.xlu0 %3926
      %3930 = vset.pattern.permute.xlu0 0
      %3931 = vperm.xlu0 %3930, %v3421
      %v3932 = vpop.permute.xlu0 %3931
      %3935 = vset.pattern.permute.xlu0 0
      %3936 = vperm.xlu0 %3935, %v3422
      %v3937 = vpop.permute.xlu0 %3936
      %3940 = vset.pattern.permute.xlu0 0
      %3941 = vperm.xlu0 %3940, %v3423
      %v3942 = vpop.permute.xlu0 %3941
      %3945 = vset.pattern.permute.xlu0 0
      %3946 = vperm.xlu0 %3945, %v3424
      %v3947 = vpop.permute.xlu0 %3946
      %3950 = vset.pattern.permute.xlu0 0
      %3951 = vperm.xlu0 %3950, %v3425
      %v3952 = vpop.permute.xlu0 %3951
      %3955 = vset.pattern.permute.xlu0 0
      %3956 = vperm.xlu0 %3955, %v3426
      %v3957 = vpop.permute.xlu0 %3956
      %3960 = vset.pattern.permute.xlu0 0
      %3961 = vperm.xlu0 %3960, %v3427
      %v3962 = vpop.permute.xlu0 %3961
      %3965 = vset.pattern.permute.xlu0 0
      %3966 = vperm.xlu0 %3965, %v3428
      %v3967 = vpop.permute.xlu0 %3966
      %3970 = vset.pattern.permute.xlu0 0
      %3971 = vperm.xlu0 %3970, %v3429
      %v3972 = vpop.permute.xlu0 %3971
      %3975 = vset.pattern.permute.xlu0 0
      %3976 = vperm.xlu0 %3975, %v3430
      %v3977 = vpop.permute.xlu0 %3976
      %3980 = vset.pattern.permute.xlu0 0
      %3981 = vperm.xlu0 %3980, %v3431
      %v3982 = vpop.permute.xlu0 %3981
      %3985 = vset.pattern.permute.xlu0 0
      %3986 = vperm.xlu0 %3985, %v3432
      %v3987 = vpop.permute.xlu0 %3986
      %3990 = vset.pattern.permute.xlu0 0
      %3991 = vperm.xlu0 %3990, %v3433
      %v3992 = vpop.permute.xlu0 %3991
      %3995 = vset.pattern.permute.xlu0 0
      %3996 = vperm.xlu0 %3995, %v3434
      %v3997 = vpop.permute.xlu0 %3996
      %4000 = vset.pattern.permute.xlu0 0
      %4001 = vperm.xlu0 %4000, %v3435
      %v4002 = vpop.permute.xlu0 %4001
      %4005 = vset.pattern.permute.xlu0 0
      %4006 = vperm.xlu0 %4005, %v3436
      %v4007 = vpop.permute.xlu0 %4006
      %4010 = vset.pattern.permute.xlu0 0
      %4011 = vperm.xlu0 %4010, %v3437
      %v4012 = vpop.permute.xlu0 %4011
      %4015 = vset.pattern.permute.xlu0 0
      %4016 = vperm.xlu0 %4015, %v3438
      %v4017 = vpop.permute.xlu0 %4016
      %4020 = vset.pattern.permute.xlu0 0
      %4021 = vperm.xlu0 %4020, %v3439
      %v4022 = vpop.permute.xlu0 %4021
      %4025 = vset.pattern.permute.xlu0 0
      %4026 = vperm.xlu0 %4025, %v3440
      %v4027 = vpop.permute.xlu0 %4026
      %4030 = vset.pattern.permute.xlu0 0
      %4031 = vperm.xlu0 %4030, %v3441
      %v4032 = vpop.permute.xlu0 %4031
      %4035 = vset.pattern.permute.xlu0 0
      %4036 = vperm.xlu0 %4035, %v3442
      %v4037 = vpop.permute.xlu0 %4036
      %4040 = vset.pattern.permute.xlu0 0
      %4041 = vperm.xlu0 %4040, %v3443
      %v4042 = vpop.permute.xlu0 %4041
      %4045 = vset.pattern.permute.xlu0 0
      %4046 = vperm.xlu0 %4045, %v3444
      %v4047 = vpop.permute.xlu0 %4046
      %4050 = vset.pattern.permute.xlu0 0
      %4051 = vperm.xlu0 %4050, %v3445
      %v4052 = vpop.permute.xlu0 %4051
      %4055 = vset.pattern.permute.xlu0 0
      %4056 = vperm.xlu0 %4055, %v3446
      %v4057 = vpop.permute.xlu0 %4056
      %4060 = vset.pattern.permute.xlu0 0
      %4061 = vperm.xlu0 %4060, %v3447
      %v4062 = vpop.permute.xlu0 %4061
      %4065 = vset.pattern.permute.xlu0 0
      %4066 = vperm.xlu0 %4065, %v3448
      %v4067 = vpop.permute.xlu0 %4066
      %4070 = vset.pattern.permute.xlu0 0
      %4071 = vperm.xlu0 %4070, %v3449
      %v4072 = vpop.permute.xlu0 %4071
      %4075 = vset.pattern.permute.xlu0 0
      %4076 = vperm.xlu0 %4075, %v3450
      %v4077 = vpop.permute.xlu0 %4076
      %4080 = vset.pattern.permute.xlu0 0
      %4081 = vperm.xlu0 %4080, %v3451
      %v4082 = vpop.permute.xlu0 %4081
      %4085 = vset.pattern.permute.xlu0 0
      %4086 = vperm.xlu0 %4085, %v3452
      %v4087 = vpop.permute.xlu0 %4086
      %4090 = vset.pattern.permute.xlu0 0
      %4091 = vperm.xlu0 %4090, %v3453
      %v4092 = vpop.permute.xlu0 %4091
      %4095 = vset.pattern.permute.xlu0 0
      %4096 = vperm.xlu0 %4095, %v3454
      %v4097 = vpop.permute.xlu0 %4096
      %4100 = vset.pattern.permute.xlu0 0
      %4101 = vperm.xlu0 %4100, %v3455
      %v4102 = vpop.permute.xlu0 %4101
      %4105 = vset.pattern.permute.xlu0 0
      %4106 = vperm.xlu0 %4105, %v3456
      %v4107 = vpop.permute.xlu0 %4106
      %4110 = vset.pattern.permute.xlu0 0
      %4111 = vperm.xlu0 %4110, %v3457
      %v4112 = vpop.permute.xlu0 %4111
      %4115 = vset.pattern.permute.xlu0 0
      %4116 = vperm.xlu0 %4115, %v3458
      %v4117 = vpop.permute.xlu0 %4116
      %4120 = vset.pattern.permute.xlu0 0
      %4121 = vperm.xlu0 %4120, %v3459
      %v4122 = vpop.permute.xlu0 %4121
      %4125 = vset.pattern.permute.xlu0 0
      %4126 = vperm.xlu0 %4125, %v3460
      %v4127 = vpop.permute.xlu0 %4126
      %4130 = vset.pattern.permute.xlu0 0
      %4131 = vperm.xlu0 %4130, %v3461
      %v4132 = vpop.permute.xlu0 %4131
      %4135 = vset.pattern.permute.xlu0 0
      %4136 = vperm.xlu0 %4135, %v3462
      %v4137 = vpop.permute.xlu0 %4136
      %4140 = vset.pattern.permute.xlu0 0
      %4141 = vperm.xlu0 %4140, %v3463
      %v4142 = vpop.permute.xlu0 %4141
      %4145 = vset.pattern.permute.xlu0 0
      %4146 = vperm.xlu0 %4145, %v3464
      %v4147 = vpop.permute.xlu0 %4146
      %4150 = vset.pattern.permute.xlu0 0
      %4151 = vperm.xlu0 %4150, %v3465
      %v4152 = vpop.permute.xlu0 %4151
      %4155 = vset.pattern.permute.xlu0 0
      %4156 = vperm.xlu0 %4155, %v3466
      %v4157 = vpop.permute.xlu0 %4156
      %4160 = vset.pattern.permute.xlu0 0
      %4161 = vperm.xlu0 %4160, %v3467
      %v4162 = vpop.permute.xlu0 %4161
      %4165 = vset.pattern.permute.xlu0 0
      %4166 = vperm.xlu0 %4165, %v3468
      %v4167 = vpop.permute.xlu0 %4166
      %4170 = vset.pattern.permute.xlu0 0
      %4171 = vperm.xlu0 %4170, %v3469
      %v4172 = vpop.permute.xlu0 %4171
      %4175 = vset.pattern.permute.xlu0 0
      %4176 = vperm.xlu0 %4175, %v3470
      %v4177 = vpop.permute.xlu0 %4176
      %4180 = vset.pattern.permute.xlu0 0
      %4181 = vperm.xlu0 %4180, %v3471
      %v4182 = vpop.permute.xlu0 %4181
      %4185 = vset.pattern.permute.xlu0 0
      %4186 = vperm.xlu0 %4185, %v3472
      %v4187 = vpop.permute.xlu0 %4186
      %4190 = vset.pattern.permute.xlu0 0
      %4191 = vperm.xlu0 %4190, %v3473
      %v4192 = vpop.permute.xlu0 %4191
      %v4194 = vmul.f32 %v3477, %v3186
      %v4195 = vmul.f32 %v3482, %v3187
      %v4196 = vmul.f32 %v3487, %v3188
      %v4197 = vmul.f32 %v3492, %v3189
      %v4198 = vmul.f32 %v3497, %v3190
      %v4199 = vmul.f32 %v3502, %v3191
      %v4200 = vmul.f32 %v3507, %v3192
      %v4201 = vmul.f32 %v3512, %v3193
      %v4202 = vmul.f32 %v3517, %v3194
      %v4203 = vmul.f32 %v3522, %v3195
      %v4204 = vmul.f32 %v3527, %v3196
      %v4205 = vmul.f32 %v3532, %v3197
      %v4206 = vmul.f32 %v3537, %v3198
      %v4207 = vmul.f32 %v3542, %v3199
      %v4208 = vmul.f32 %v3547, %v3200
      %v4209 = vmul.f32 %v3552, %v3201
      %v4210 = vmul.f32 %v3557, %v3202
      %v4211 = vmul.f32 %v3562, %v3203
      %v4212 = vmul.f32 %v3567, %v3204
      %v4213 = vmul.f32 %v3572, %v3205
      %v4214 = vmul.f32 %v3577, %v3206
      %v4215 = vmul.f32 %v3582, %v3207
      %v4216 = vmul.f32 %v3587, %v3208
      %v4217 = vmul.f32 %v3592, %v3209
      %v4218 = vmul.f32 %v3597, %v3210
      %v4219 = vmul.f32 %v3602, %v3211
      %v4220 = vmul.f32 %v3607, %v3212
      %v4221 = vmul.f32 %v3612, %v3213
      %v4222 = vmul.f32 %v3617, %v3214
      %v4223 = vmul.f32 %v3622, %v3215
      %v4224 = vmul.f32 %v3627, %v3216
      %v4225 = vmul.f32 %v3632, %v3217
      %v4226 = vmul.f32 %v3637, %v3218
      %v4227 = vmul.f32 %v3642, %v3219
      %v4228 = vmul.f32 %v3647, %v3220
      %v4229 = vmul.f32 %v3652, %v3221
      %v4230 = vmul.f32 %v3657, %v3222
      %v4231 = vmul.f32 %v3662, %v3223
      %v4232 = vmul.f32 %v3667, %v3224
      %v4233 = vmul.f32 %v3672, %v3225
      %v4234 = vmul.f32 %v3677, %v3226
      %v4235 = vmul.f32 %v3682, %v3227
      %v4236 = vmul.f32 %v3687, %v3228
      %v4237 = vmul.f32 %v3692, %v3229
      %v4238 = vmul.f32 %v3697, %v3230
      %v4239 = vmul.f32 %v3702, %v3231
      %v4240 = vmul.f32 %v3707, %v3232
      %v4241 = vmul.f32 %v3712, %v3233
      %v4242 = vmul.f32 %v3717, %v3234
      %v4243 = vmul.f32 %v3722, %v3235
      %v4244 = vmul.f32 %v3727, %v3236
      %v4245 = vmul.f32 %v3732, %v3237
      %v4246 = vmul.f32 %v3737, %v3238
      %v4247 = vmul.f32 %v3742, %v3239
      %v4248 = vmul.f32 %v3747, %v3240
      %v4249 = vmul.f32 %v3752, %v3241
      %v4250 = vmul.f32 %v3757, %v3242
      %v4251 = vmul.f32 %v3762, %v3243
      %v4252 = vmul.f32 %v3767, %v3244
      %v4253 = vmul.f32 %v3772, %v3245
      %v4254 = vmul.f32 %v3777, %v3246
      %v4255 = vmul.f32 %v3782, %v3247
      %v4256 = vmul.f32 %v3787, %v3248
      %v4257 = vmul.f32 %v3792, %v3249
      %v4258 = vmul.f32 %v3797, %v3250
      %v4259 = vmul.f32 %v3802, %v3251
      %v4260 = vmul.f32 %v3807, %v3252
      %v4261 = vmul.f32 %v3812, %v3253
      %v4262 = vmul.f32 %v3817, %v3254
      %v4263 = vmul.f32 %v3822, %v3255
      %v4264 = vmul.f32 %v3827, %v3256
      %v4265 = vmul.f32 %v3832, %v3257
      %v4266 = vmul.f32 %v3837, %v3258
      %v4267 = vmul.f32 %v3842, %v3259
      %v4268 = vmul.f32 %v3847, %v3260
      %v4269 = vmul.f32 %v3852, %v3261
      %v4270 = vmul.f32 %v3857, %v3262
      %v4271 = vmul.f32 %v3862, %v3263
      %v4272 = vmul.f32 %v3867, %v3264
      %v4273 = vmul.f32 %v3872, %v3265
      %v4274 = vmul.f32 %v3877, %v3266
      %v4275 = vmul.f32 %v3882, %v3267
      %v4276 = vmul.f32 %v3887, %v3268
      %v4277 = vmul.f32 %v3892, %v3269
      %v4278 = vmul.f32 %v3897, %v3270
      %v4279 = vmul.f32 %v3902, %v3271
      %v4280 = vmul.f32 %v3907, %v3272
      %v4281 = vmul.f32 %v3912, %v3273
      %v4282 = vmul.f32 %v3917, %v3274
      %v4283 = vmul.f32 %v3922, %v3275
      %v4284 = vmul.f32 %v3927, %v3276
      %v4285 = vmul.f32 %v3932, %v3277
      %v4286 = vmul.f32 %v3937, %v3278
      %v4287 = vmul.f32 %v3942, %v3279
      %v4288 = vmul.f32 %v3947, %v3280
      %v4289 = vmul.f32 %v3952, %v3281
      %v4290 = vmul.f32 %v3957, %v3282
      %v4291 = vmul.f32 %v3962, %v3283
      %v4292 = vmul.f32 %v3967, %v3284
      %v4293 = vmul.f32 %v3972, %v3285
      %v4294 = vmul.f32 %v3977, %v3286
      %v4295 = vmul.f32 %v3982, %v3287
      %v4296 = vmul.f32 %v3987, %v3288
      %v4297 = vmul.f32 %v3992, %v3289
      %v4298 = vmul.f32 %v3997, %v3290
      %v4299 = vmul.f32 %v4002, %v3291
      %v4300 = vmul.f32 %v4007, %v3292
      %v4301 = vmul.f32 %v4012, %v3293
      %v4302 = vmul.f32 %v4017, %v3294
      %v4303 = vmul.f32 %v4022, %v3295
      %v4304 = vmul.f32 %v4027, %v3296
      %v4305 = vmul.f32 %v4032, %v3297
      %v4306 = vmul.f32 %v4037, %v3298
      %v4307 = vmul.f32 %v4042, %v3299
      %v4308 = vmul.f32 %v4047, %v3300
      %v4309 = vmul.f32 %v4052, %v3301
      %v4310 = vmul.f32 %v4057, %v3302
      %v4311 = vmul.f32 %v4062, %v3303
      %v4312 = vmul.f32 %v4067, %v3304
      %v4313 = vmul.f32 %v4072, %v3305
      %v4314 = vmul.f32 %v4077, %v3306
      %v4315 = vmul.f32 %v4082, %v3307
      %v4316 = vmul.f32 %v4087, %v3308
      %v4317 = vmul.f32 %v4092, %v3309
      %v4318 = vmul.f32 %v4097, %v3310
      %v4319 = vmul.f32 %v4102, %v3311
      %v4320 = vmul.f32 %v4107, %v3312
      %v4321 = vmul.f32 %v4112, %v3313
      %v4322 = vmul.f32 %v4117, %v3314
      %v4323 = vmul.f32 %v4122, %v3315
      %v4324 = vmul.f32 %v4127, %v3316
      %v4325 = vmul.f32 %v4132, %v3317
      %v4326 = vmul.f32 %v4137, %v3318
      %v4327 = vmul.f32 %v4142, %v3319
      %v4328 = vmul.f32 %v4147, %v3320
      %v4329 = vmul.f32 %v4152, %v3321
      %v4330 = vmul.f32 %v4157, %v3322
      %v4331 = vmul.f32 %v4162, %v3323
      %v4332 = vmul.f32 %v4167, %v3324
      %v4333 = vmul.f32 %v4172, %v3325
      %v4334 = vmul.f32 %v4177, %v3326
      %v4335 = vmul.f32 %v4182, %v3327
      %v4336 = vmul.f32 %v4187, %v3328
      %v4337 = vmul.f32 %v4192, %v3329
      %v4338 = vpack.c.bf16 %v4195, %v4194
      %v4339 = vpack.c.bf16 %v4197, %v4196
      %v4340 = vpack.c.bf16 %v4199, %v4198
      %v4341 = vpack.c.bf16 %v4201, %v4200
      %v4342 = vpack.c.bf16 %v4203, %v4202
      %v4343 = vpack.c.bf16 %v4205, %v4204
      %v4344 = vpack.c.bf16 %v4207, %v4206
      %v4345 = vpack.c.bf16 %v4209, %v4208
      %v4346 = vpack.c.bf16 %v4211, %v4210
      %v4347 = vpack.c.bf16 %v4213, %v4212
      %v4348 = vpack.c.bf16 %v4215, %v4214
      %v4349 = vpack.c.bf16 %v4217, %v4216
      %v4350 = vpack.c.bf16 %v4219, %v4218
      %v4351 = vpack.c.bf16 %v4221, %v4220
      %v4352 = vpack.c.bf16 %v4223, %v4222
      %v4353 = vpack.c.bf16 %v4225, %v4224
      %v4354 = vpack.c.bf16 %v4227, %v4226
      %v4355 = vpack.c.bf16 %v4229, %v4228
      %v4356 = vpack.c.bf16 %v4231, %v4230
      %v4357 = vpack.c.bf16 %v4233, %v4232
      %v4358 = vpack.c.bf16 %v4235, %v4234
      %v4359 = vpack.c.bf16 %v4237, %v4236
      %v4360 = vpack.c.bf16 %v4239, %v4238
      %v4361 = vpack.c.bf16 %v4241, %v4240
      %v4362 = vpack.c.bf16 %v4243, %v4242
      %v4363 = vpack.c.bf16 %v4245, %v4244
      %v4364 = vpack.c.bf16 %v4247, %v4246
      %v4365 = vpack.c.bf16 %v4249, %v4248
      %v4366 = vpack.c.bf16 %v4251, %v4250
      %v4367 = vpack.c.bf16 %v4253, %v4252
      %v4368 = vpack.c.bf16 %v4255, %v4254
      %v4369 = vpack.c.bf16 %v4257, %v4256
      %v4370 = vpack.c.bf16 %v4259, %v4258
      %v4371 = vpack.c.bf16 %v4261, %v4260
      %v4372 = vpack.c.bf16 %v4263, %v4262
      %v4373 = vpack.c.bf16 %v4265, %v4264
      %v4374 = vpack.c.bf16 %v4267, %v4266
      %v4375 = vpack.c.bf16 %v4269, %v4268
      %v4376 = vpack.c.bf16 %v4271, %v4270
      %v4377 = vpack.c.bf16 %v4273, %v4272
      %v4378 = vpack.c.bf16 %v4275, %v4274
      %v4379 = vpack.c.bf16 %v4277, %v4276
      %v4380 = vpack.c.bf16 %v4279, %v4278
      %v4381 = vpack.c.bf16 %v4281, %v4280
      %v4382 = vpack.c.bf16 %v4283, %v4282
      %v4383 = vpack.c.bf16 %v4285, %v4284
      %v4384 = vpack.c.bf16 %v4287, %v4286
      %v4385 = vpack.c.bf16 %v4289, %v4288
      %v4386 = vpack.c.bf16 %v4291, %v4290
      %v4387 = vpack.c.bf16 %v4293, %v4292
      %v4388 = vpack.c.bf16 %v4295, %v4294
      %v4389 = vpack.c.bf16 %v4297, %v4296
      %v4390 = vpack.c.bf16 %v4299, %v4298
      %v4391 = vpack.c.bf16 %v4301, %v4300
      %v4392 = vpack.c.bf16 %v4303, %v4302
      %v4393 = vpack.c.bf16 %v4305, %v4304
      %v4394 = vpack.c.bf16 %v4307, %v4306
      %v4395 = vpack.c.bf16 %v4309, %v4308
      %v4396 = vpack.c.bf16 %v4311, %v4310
      %v4397 = vpack.c.bf16 %v4313, %v4312
      %v4398 = vpack.c.bf16 %v4315, %v4314
      %v4399 = vpack.c.bf16 %v4317, %v4316
      %v4400 = vpack.c.bf16 %v4319, %v4318
      %v4401 = vpack.c.bf16 %v4321, %v4320
      %v4402 = vpack.c.bf16 %v4323, %v4322
      %v4403 = vpack.c.bf16 %v4325, %v4324
      %v4404 = vpack.c.bf16 %v4327, %v4326
      %v4405 = vpack.c.bf16 %v4329, %v4328
      %v4406 = vpack.c.bf16 %v4331, %v4330
      %v4407 = vpack.c.bf16 %v4333, %v4332
      %v4408 = vpack.c.bf16 %v4335, %v4334
      %v4409 = vpack.c.bf16 %v4337, %v4336
      %v4410 = vld [vmem:[%s7] sm:$0xf]
      %v4411 = vld [vmem:[%s7 + $0x4] sm:$0xf]
      %v4412 = vld [vmem:[%s7 + $0x8] sm:$0xf]
      %v4413 = vld [vmem:[%s7 + $0xc] sm:$0xf]
      %v4414 = vld [vmem:[%s7 + $0x10] sm:$0xf]
      %v4415 = vld [vmem:[%s7 + $0x14] sm:$0xf]
      %v4416 = vld [vmem:[%s7 + $0x18] sm:$0xf]
      %v4417 = vld [vmem:[%s7 + $0x1c] sm:$0xf]
      %v4418 = vld [vmem:[%s7 + $0x20] sm:$0xf]
      %v4419 = vld [vmem:[%s7 + $0x24] sm:$0xf]
      %v4420 = vld [vmem:[%s7 + $0x28] sm:$0xf]
      %v4421 = vld [vmem:[%s7 + $0x2c] sm:$0xf]
      %v4422 = vld [vmem:[%s7 + $0x30] sm:$0xf]
      %v4423 = vld [vmem:[%s7 + $0x34] sm:$0xf]
      %v4424 = vld [vmem:[%s7 + $0x38] sm:$0xf]
      %v4425 = vld [vmem:[%s7 + $0x3c] sm:$0xf]
      %v4426 = vld [vmem:[%s8] sm:$0x1]
      %v4428 = vlaneseq
      %v4429 = vshrl.u32 %v4428, 7
      %v4430 = vsub.s32 0, %v4429
      %v4431 = vrot.slane %v4426, %v4430
      %v4449 = vunpack.c.l.b16 %v4410
      %v4450 = vunpack.c.l.b16 %v4411
      %v4451 = vunpack.c.l.b16 %v4412
      %v4452 = vunpack.c.l.b16 %v4413
      %v4453 = vunpack.c.l.b16 %v4414
      %v4454 = vunpack.c.l.b16 %v4415
      %v4455 = vunpack.c.l.b16 %v4416
      %v4456 = vunpack.c.l.b16 %v4417
      %v4457 = vunpack.c.l.b16 %v4418
      %v4458 = vunpack.c.l.b16 %v4419
      %v4459 = vunpack.c.l.b16 %v4420
      %v4460 = vunpack.c.l.b16 %v4421
      %v4461 = vunpack.c.l.b16 %v4422
      %v4462 = vunpack.c.l.b16 %v4423
      %v4463 = vunpack.c.l.b16 %v4424
      %v4464 = vunpack.c.l.b16 %v4425
      %v4465 = vpack.c.b16 %v4450, %v4449
      %v4466 = vpack.c.b16 %v4452, %v4451
      %v4467 = vpack.c.b16 %v4454, %v4453
      %v4468 = vpack.c.b16 %v4456, %v4455
      %v4469 = vpack.c.b16 %v4458, %v4457
      %v4470 = vpack.c.b16 %v4460, %v4459
      %v4471 = vpack.c.b16 %v4462, %v4461
      %v4472 = vpack.c.b16 %v4464, %v4463
      %4481 = vmatprep.subr.bf16.mxu0 0
      %4482 = vmatpush1.bf16.msra.mxu0 %v4465
      %4483 = vmatprep.subr.bf16.mxu0 0
      %4484 = vmatpush1.bf16.msra.mxu0 %v4466
      %4485 = vmatprep.subr.bf16.mxu0 0
      %4486 = vmatpush1.bf16.msra.mxu0 %v4467
      %4487 = vmatprep.subr.bf16.mxu0 0
      %4488 = vmatpush1.bf16.msra.mxu0 %v4468
      %4489 = vmatprep.subr.bf16.mxu0 0
      %4490 = vmatpush1.bf16.msra.mxu0 %v4469
      %4491 = vmatprep.subr.bf16.mxu0 0
      %4492 = vmatpush1.bf16.msra.mxu0 %v4470
      %4493 = vmatprep.subr.bf16.mxu0 0
      %4494 = vmatpush1.bf16.msra.mxu0 %v4471
      %4495 = vmatprep.subr.bf16.mxu0 0
      %4496 = vmatpush1.bf16.msra.mxu0 %v4472
      %4497 = vmatprep.subr.bf16.mxu0 0
      %4498 = vmatpush1.bf16.msra.mxu0 0
      %4499 = vmatprep.subr.bf16.mxu0 0
      %4500 = vmatpush1.bf16.msra.mxu0 0
      %4501 = vmatprep.subr.bf16.mxu0 0
      %4502 = vmatpush1.bf16.msra.mxu0 0
      %4503 = vmatprep.subr.bf16.mxu0 0
      %4504 = vmatpush1.bf16.msra.mxu0 0
      %4505 = vmatprep.subr.bf16.mxu0 0
      %4506 = vmatpush1.bf16.msra.mxu0 0
      %4507 = vmatprep.subr.bf16.mxu0 0
      %4508 = vmatpush1.bf16.msra.mxu0 0
      %4509 = vmatprep.subr.bf16.mxu0 0
      %4510 = vmatpush1.bf16.msra.mxu0 0
      %4511 = vmatprep.subr.bf16.mxu0 0
      %4512 = vmatpush1.bf16.msra.mxu0 0
      %4513 = vmatprep.mubr.bf16.mxu0 0
      %4514 = vmatmul.mubr.bf16.gmra.mrb[0].mxu0 %v4338
      %v4515 = vpop.f32.mrb[0].mxu0
      %v4516 = vadd.f32 %v4431, %v4515
      %v4517 = vpop.f32.mrb[0].mxu0
      %v4518 = vpop.f32.mrb[0].mxu0
      %v4519 = vadd.f32 %v4431, %v4518
      %v4520 = vpop.f32.mrb[0].mxu0
      %4521 = vmatprep.mubr.bf16.mxu0 0
      %4522 = vmatmul.mubr.bf16.gmra.mrb[0].mxu0 %v4339
      %v4523 = vpop.f32.mrb[0].mxu0
      %v4524 = vadd.f32 %v4431, %v4523
      %v4525 = vpop.f32.mrb[0].mxu0
      %v4526 = vpop.f32.mrb[0].mxu0
      %v4527 = vadd.f32 %v4431, %v4526
      %v4528 = vpop.f32.mrb[0].mxu0
      %4529 = vmatprep.mubr.bf16.mxu0 0
      %4530 = vmatmul.mubr.bf16.gmra.mrb[0].mxu0 %v4340
      %v4531 = vpop.f32.mrb[0].mxu0
      %v4532 = vadd.f32 %v4431, %v4531
      %v4533 = vpop.f32.mrb[0].mxu0
      %v4534 = vpop.f32.mrb[0].mxu0
      %v4535 = vadd.f32 %v4431, %v4534
      %v4536 = vpop.f32.mrb[0].mxu0
      %4537 = vmatprep.mubr.bf16.mxu0 0
      %4538 = vmatmul.mubr.bf16.gmra.mrb[0].mxu0 %v4341
      %v4539 = vpop.f32.mrb[0].mxu0
      %v4540 = vadd.f32 %v4431, %v4539
      %v4541 = vpop.f32.mrb[0].mxu0
      %v4542 = vpop.f32.mrb[0].mxu0
      %v4543 = vadd.f32 %v4431, %v4542
      %v4544 = vpop.f32.mrb[0].mxu0
      %4545 = vmatprep.mubr.bf16.mxu0 0
      %4546 = vmatmul.mubr.bf16.gmra.mrb[0].mxu0 %v4342
      %v4547 = vpop.f32.mrb[0].mxu0
      %v4548 = vadd.f32 %v4431, %v4547
      %v4549 = vpop.f32.mrb[0].mxu0
      %v4550 = vpop.f32.mrb[0].mxu0
      %v4551 = vadd.f32 %v4431, %v4550
      %v4552 = vpop.f32.mrb[0].mxu0
      %4553 = vmatprep.mubr.bf16.mxu0 0
      %4554 = vmatmul.mubr.bf16.gmra.mrb[0].mxu0 %v4343
      %v4555 = vpop.f32.mrb[0].mxu0
      %v4556 = vadd.f32 %v4431, %v4555
      %v4557 = vpop.f32.mrb[0].mxu0
      %v4558 = vpop.f32.mrb[0].mxu0
      %v4559 = vadd.f32 %v4431, %v4558
      %v4560 = vpop.f32.mrb[0].mxu0
      %4561 = vmatprep.mubr.bf16.mxu0 0
      %4562 = vmatmul.mubr.bf16.gmra.mrb[0].mxu0 %v4344
      %v4563 = vpop.f32.mrb[0].mxu0
      %v4564 = vadd.f32 %v4431, %v4563
      %v4565 = vpop.f32.mrb[0].mxu0
      %v4566 = vpop.f32.mrb[0].mxu0
      %v4567 = vadd.f32 %v4431, %v4566
      %v4568 = vpop.f32.mrb[0].mxu0
      %4569 = vmatprep.mubr.bf16.mxu0 0
      %4570 = vmatmul.mubr.bf16.gmra.mrb[0].mxu0 %v4345
      %v4571 = vpop.f32.mrb[0].mxu0
      %v4572 = vadd.f32 %v4431, %v4571
      %v4573 = vpop.f32.mrb[0].mxu0
      %v4574 = vpop.f32.mrb[0].mxu0
      %v4575 = vadd.f32 %v4431, %v4574
      %v4576 = vpop.f32.mrb[0].mxu0
      %4577 = vmatprep.mubr.bf16.mxu0 0
      %4578 = vmatmul.mubr.bf16.gmra.mrb[0].mxu0 %v4346
      %v4579 = vpop.f32.mrb[0].mxu0
      %v4580 = vadd.f32 %v4431, %v4579
      %v4581 = vpop.f32.mrb[0].mxu0
      %v4582 = vpop.f32.mrb[0].mxu0
      %v4583 = vadd.f32 %v4431, %v4582
      %v4584 = vpop.f32.mrb[0].mxu0
      %4585 = vmatprep.mubr.bf16.mxu0 0
      %4586 = vmatmul.mubr.bf16.gmra.mrb[0].mxu0 %v4347
      %v4587 = vpop.f32.mrb[0].mxu0
      %v4588 = vadd.f32 %v4431, %v4587
      %v4589 = vpop.f32.mrb[0].mxu0
      %v4590 = vpop.f32.mrb[0].mxu0
      %v4591 = vadd.f32 %v4431, %v4590
      %v4592 = vpop.f32.mrb[0].mxu0
      %4593 = vmatprep.mubr.bf16.mxu0 0
      %4594 = vmatmul.mubr.bf16.gmra.mrb[0].mxu0 %v4348
      %v4595 = vpop.f32.mrb[0].mxu0
      %v4596 = vadd.f32 %v4431, %v4595
      %v4597 = vpop.f32.mrb[0].mxu0
      %v4598 = vpop.f32.mrb[0].mxu0
      %v4599 = vadd.f32 %v4431, %v4598
      %v4600 = vpop.f32.mrb[0].mxu0
      %4601 = vmatprep.mubr.bf16.mxu0 0
      %4602 = vmatmul.mubr.bf16.gmra.mrb[0].mxu0 %v4349
      %v4603 = vpop.f32.mrb[0].mxu0
      %v4604 = vadd.f32 %v4431, %v4603
      %v4605 = vpop.f32.mrb[0].mxu0
      %v4606 = vpop.f32.mrb[0].mxu0
      %v4607 = vadd.f32 %v4431, %v4606
      %v4608 = vpop.f32.mrb[0].mxu0
      %4609 = vmatprep.mubr.bf16.mxu0 0
      %4610 = vmatmul.mubr.bf16.gmra.mrb[0].mxu0 %v4350
      %v4611 = vpop.f32.mrb[0].mxu0
      %v4612 = vadd.f32 %v4431, %v4611
      %v4613 = vpop.f32.mrb[0].mxu0
      %v4614 = vpop.f32.mrb[0].mxu0
      %v4615 = vadd.f32 %v4431, %v4614
      %v4616 = vpop.f32.mrb[0].mxu0
      %4617 = vmatprep.mubr.bf16.mxu0 0
      %4618 = vmatmul.mubr.bf16.gmra.mrb[0].mxu0 %v4351
      %v4619 = vpop.f32.mrb[0].mxu0
      %v4620 = vadd.f32 %v4431, %v4619
      %v4621 = vpop.f32.mrb[0].mxu0
      %v4622 = vpop.f32.mrb[0].mxu0
      %v4623 = vadd.f32 %v4431, %v4622
      %v4624 = vpop.f32.mrb[0].mxu0
      %4625 = vmatprep.mubr.bf16.mxu0 0
      %4626 = vmatmul.mubr.bf16.gmra.mrb[0].mxu0 %v4352
      %v4627 = vpop.f32.mrb[0].mxu0
      %v4628 = vadd.f32 %v4431, %v4627
      %v4629 = vpop.f32.mrb[0].mxu0
      %v4630 = vpop.f32.mrb[0].mxu0
      %v4631 = vadd.f32 %v4431, %v4630
      %v4632 = vpop.f32.mrb[0].mxu0
      %4633 = vmatprep.mubr.bf16.mxu0 0
      %4634 = vmatmul.mubr.bf16.gmra.mrb[0].mxu0 %v4353
      %v4635 = vpop.f32.mrb[0].mxu0
      %v4636 = vadd.f32 %v4431, %v4635
      %v4637 = vpop.f32.mrb[0].mxu0
      %v4638 = vpop.f32.mrb[0].mxu0
      %v4639 = vadd.f32 %v4431, %v4638
      %v4640 = vpop.f32.mrb[0].mxu0
      %4641 = vmatprep.mubr.bf16.mxu0 0
      %4642 = vmatmul.mubr.bf16.gmra.mrb[0].mxu0 %v4354
      %v4643 = vpop.f32.mrb[0].mxu0
      %v4644 = vadd.f32 %v4431, %v4643
      %v4645 = vpop.f32.mrb[0].mxu0
      %v4646 = vpop.f32.mrb[0].mxu0
      %v4647 = vadd.f32 %v4431, %v4646
      %v4648 = vpop.f32.mrb[0].mxu0
      %4649 = vmatprep.mubr.bf16.mxu0 0
      %4650 = vmatmul.mubr.bf16.gmra.mrb[0].mxu0 %v4355
      %v4651 = vpop.f32.mrb[0].mxu0
      %v4652 = vadd.f32 %v4431, %v4651
      %v4653 = vpop.f32.mrb[0].mxu0
      %v4654 = vpop.f32.mrb[0].mxu0
      %v4655 = vadd.f32 %v4431, %v4654
      %v4656 = vpop.f32.mrb[0].mxu0
      %4657 = vmatprep.mubr.bf16.mxu0 0
      %4658 = vmatmul.mubr.bf16.gmra.mrb[0].mxu0 %v4356
      %v4659 = vpop.f32.mrb[0].mxu0
      %v4660 = vadd.f32 %v4431, %v4659
      %v4661 = vpop.f32.mrb[0].mxu0
      %v4662 = vpop.f32.mrb[0].mxu0
      %v4663 = vadd.f32 %v4431, %v4662
      %v4664 = vpop.f32.mrb[0].mxu0
      %4665 = vmatprep.mubr.bf16.mxu0 0
      %4666 = vmatmul.mubr.bf16.gmra.mrb[0].mxu0 %v4357
      %v4667 = vpop.f32.mrb[0].mxu0
      %v4668 = vadd.f32 %v4431, %v4667
      %v4669 = vpop.f32.mrb[0].mxu0
      %v4670 = vpop.f32.mrb[0].mxu0
      %v4671 = vadd.f32 %v4431, %v4670
      %v4672 = vpop.f32.mrb[0].mxu0
      %4673 = vmatprep.mubr.bf16.mxu0 0
      %4674 = vmatmul.mubr.bf16.gmra.mrb[0].mxu0 %v4358
      %v4675 = vpop.f32.mrb[0].mxu0
      %v4676 = vadd.f32 %v4431, %v4675
      %v4677 = vpop.f32.mrb[0].mxu0
      %v4678 = vpop.f32.mrb[0].mxu0
      %v4679 = vadd.f32 %v4431, %v4678
      %v4680 = vpop.f32.mrb[0].mxu0
      %4681 = vmatprep.mubr.bf16.mxu0 0
      %4682 = vmatmul.mubr.bf16.gmra.mrb[0].mxu0 %v4359
      %v4683 = vpop.f32.mrb[0].mxu0
      %v4684 = vadd.f32 %v4431, %v4683
      %v4685 = vpop.f32.mrb[0].mxu0
      %v4686 = vpop.f32.mrb[0].mxu0
      %v4687 = vadd.f32 %v4431, %v4686
      %v4688 = vpop.f32.mrb[0].mxu0
      %4689 = vmatprep.mubr.bf16.mxu0 0
      %4690 = vmatmul.mubr.bf16.gmra.mrb[0].mxu0 %v4360
      %v4691 = vpop.f32.mrb[0].mxu0
      %v4692 = vadd.f32 %v4431, %v4691
      %v4693 = vpop.f32.mrb[0].mxu0
      %v4694 = vpop.f32.mrb[0].mxu0
      %v4695 = vadd.f32 %v4431, %v4694
      %v4696 = vpop.f32.mrb[0].mxu0
      %4697 = vmatprep.mubr.bf16.mxu0 0
      %4698 = vmatmul.mubr.bf16.gmra.mrb[0].mxu0 %v4361
      %v4699 = vpop.f32.mrb[0].mxu0
      %v4700 = vadd.f32 %v4431, %v4699
      %v4701 = vpop.f32.mrb[0].mxu0
      %v4702 = vpop.f32.mrb[0].mxu0
      %v4703 = vadd.f32 %v4431, %v4702
      %v4704 = vpop.f32.mrb[0].mxu0
      %4705 = vmatprep.mubr.bf16.mxu0 0
      %4706 = vmatmul.mubr.bf16.gmra.mrb[0].mxu0 %v4362
      %v4707 = vpop.f32.mrb[0].mxu0
      %v4708 = vadd.f32 %v4431, %v4707
      %v4709 = vpop.f32.mrb[0].mxu0
      %v4710 = vpop.f32.mrb[0].mxu0
      %v4711 = vadd.f32 %v4431, %v4710
      %v4712 = vpop.f32.mrb[0].mxu0
      %4713 = vmatprep.mubr.bf16.mxu0 0
      %4714 = vmatmul.mubr.bf16.gmra.mrb[0].mxu0 %v4363
      %v4715 = vpop.f32.mrb[0].mxu0
      %v4716 = vadd.f32 %v4431, %v4715
      %v4717 = vpop.f32.mrb[0].mxu0
      %v4718 = vpop.f32.mrb[0].mxu0
      %v4719 = vadd.f32 %v4431, %v4718
      %v4720 = vpop.f32.mrb[0].mxu0
      %4721 = vmatprep.mubr.bf16.mxu0 0
      %4722 = vmatmul.mubr.bf16.gmra.mrb[0].mxu0 %v4364
      %v4723 = vpop.f32.mrb[0].mxu0
      %v4724 = vadd.f32 %v4431, %v4723
      %v4725 = vpop.f32.mrb[0].mxu0
      %v4726 = vpop.f32.mrb[0].mxu0
      %v4727 = vadd.f32 %v4431, %v4726
      %v4728 = vpop.f32.mrb[0].mxu0
      %4729 = vmatprep.mubr.bf16.mxu0 0
      %4730 = vmatmul.mubr.bf16.gmra.mrb[0].mxu0 %v4365
      %v4731 = vpop.f32.mrb[0].mxu0
      %v4732 = vadd.f32 %v4431, %v4731
      %v4733 = vpop.f32.mrb[0].mxu0
      %v4734 = vpop.f32.mrb[0].mxu0
      %v4735 = vadd.f32 %v4431, %v4734
      %v4736 = vpop.f32.mrb[0].mxu0
      %4737 = vmatprep.mubr.bf16.mxu0 0
      %4738 = vmatmul.mubr.bf16.gmra.mrb[0].mxu0 %v4366
      %v4739 = vpop.f32.mrb[0].mxu0
      %v4740 = vadd.f32 %v4431, %v4739
      %v4741 = vpop.f32.mrb[0].mxu0
      %v4742 = vpop.f32.mrb[0].mxu0
      %v4743 = vadd.f32 %v4431, %v4742
      %v4744 = vpop.f32.mrb[0].mxu0
      %4745 = vmatprep.mubr.bf16.mxu0 0
      %4746 = vmatmul.mubr.bf16.gmra.mrb[0].mxu0 %v4367
      %v4747 = vpop.f32.mrb[0].mxu0
      %v4748 = vadd.f32 %v4431, %v4747
      %v4749 = vpop.f32.mrb[0].mxu0
      %v4750 = vpop.f32.mrb[0].mxu0
      %v4751 = vadd.f32 %v4431, %v4750
      %v4752 = vpop.f32.mrb[0].mxu0
      %4753 = vmatprep.mubr.bf16.mxu0 0
      %4754 = vmatmul.mubr.bf16.gmra.mrb[0].mxu0 %v4368
      %v4755 = vpop.f32.mrb[0].mxu0
      %v4756 = vadd.f32 %v4431, %v4755
      %v4757 = vpop.f32.mrb[0].mxu0
      %v4758 = vpop.f32.mrb[0].mxu0
      %v4759 = vadd.f32 %v4431, %v4758
      %v4760 = vpop.f32.mrb[0].mxu0
      %4761 = vmatprep.mubr.bf16.mxu0 0
      %4762 = vmatmul.mubr.bf16.gmra.mrb[0].mxu0 %v4369
      %v4763 = vpop.f32.mrb[0].mxu0
      %v4764 = vadd.f32 %v4431, %v4763
      %v4765 = vpop.f32.mrb[0].mxu0
      %v4766 = vpop.f32.mrb[0].mxu0
      %v4767 = vadd.f32 %v4431, %v4766
      %v4768 = vpop.f32.mrb[0].mxu0
      %4769 = vmatprep.mubr.bf16.mxu0 0
      %4770 = vmatmul.mubr.bf16.gmra.mrb[0].mxu0 %v4370
      %v4771 = vpop.f32.mrb[0].mxu0
      %v4772 = vadd.f32 %v4431, %v4771
      %v4773 = vpop.f32.mrb[0].mxu0
      %v4774 = vpop.f32.mrb[0].mxu0
      %v4775 = vadd.f32 %v4431, %v4774
      %v4776 = vpop.f32.mrb[0].mxu0
      %4777 = vmatprep.mubr.bf16.mxu0 0
      %4778 = vmatmul.mubr.bf16.gmra.mrb[0].mxu0 %v4371
      %v4779 = vpop.f32.mrb[0].mxu0
      %v4780 = vadd.f32 %v4431, %v4779
      %v4781 = vpop.f32.mrb[0].mxu0
      %v4782 = vpop.f32.mrb[0].mxu0
      %v4783 = vadd.f32 %v4431, %v4782
      %v4784 = vpop.f32.mrb[0].mxu0
      %4785 = vmatprep.mubr.bf16.mxu0 0
      %4786 = vmatmul.mubr.bf16.gmra.mrb[0].mxu0 %v4372
      %v4787 = vpop.f32.mrb[0].mxu0
      %v4788 = vadd.f32 %v4431, %v4787
      %v4789 = vpop.f32.mrb[0].mxu0
      %v4790 = vpop.f32.mrb[0].mxu0
      %v4791 = vadd.f32 %v4431, %v4790
      %v4792 = vpop.f32.mrb[0].mxu0
      %4793 = vmatprep.mubr.bf16.mxu0 0
      %4794 = vmatmul.mubr.bf16.gmra.mrb[0].mxu0 %v4373
      %v4795 = vpop.f32.mrb[0].mxu0
      %v4796 = vadd.f32 %v4431, %v4795
      %v4797 = vpop.f32.mrb[0].mxu0
      %v4798 = vpop.f32.mrb[0].mxu0
      %v4799 = vadd.f32 %v4431, %v4798
      %v4800 = vpop.f32.mrb[0].mxu0
      %4801 = vmatprep.mubr.bf16.mxu0 0
      %4802 = vmatmul.mubr.bf16.gmra.mrb[0].mxu0 %v4374
      %v4803 = vpop.f32.mrb[0].mxu0
      %v4804 = vadd.f32 %v4431, %v4803
      %v4805 = vpop.f32.mrb[0].mxu0
      %v4806 = vpop.f32.mrb[0].mxu0
      %v4807 = vadd.f32 %v4431, %v4806
      %v4808 = vpop.f32.mrb[0].mxu0
      %4809 = vmatprep.mubr.bf16.mxu0 0
      %4810 = vmatmul.mubr.bf16.gmra.mrb[0].mxu0 %v4375
      %v4811 = vpop.f32.mrb[0].mxu0
      %v4812 = vadd.f32 %v4431, %v4811
      %v4813 = vpop.f32.mrb[0].mxu0
      %v4814 = vpop.f32.mrb[0].mxu0
      %v4815 = vadd.f32 %v4431, %v4814
      %v4816 = vpop.f32.mrb[0].mxu0
      %4817 = vmatprep.mubr.bf16.mxu0 0
      %4818 = vmatmul.mubr.bf16.gmra.mrb[0].mxu0 %v4376
      %v4819 = vpop.f32.mrb[0].mxu0
      %v4820 = vadd.f32 %v4431, %v4819
      %v4821 = vpop.f32.mrb[0].mxu0
      %v4822 = vpop.f32.mrb[0].mxu0
      %v4823 = vadd.f32 %v4431, %v4822
      %v4824 = vpop.f32.mrb[0].mxu0
      %4825 = vmatprep.mubr.bf16.mxu0 0
      %4826 = vmatmul.mubr.bf16.gmra.mrb[0].mxu0 %v4377
      %v4827 = vpop.f32.mrb[0].mxu0
      %v4828 = vadd.f32 %v4431, %v4827
      %v4829 = vpop.f32.mrb[0].mxu0
      %v4830 = vpop.f32.mrb[0].mxu0
      %v4831 = vadd.f32 %v4431, %v4830
      %v4832 = vpop.f32.mrb[0].mxu0
      %4833 = vmatprep.mubr.bf16.mxu0 0
      %4834 = vmatmul.mubr.bf16.gmra.mrb[0].mxu0 %v4378
      %v4835 = vpop.f32.mrb[0].mxu0
      %v4836 = vadd.f32 %v4431, %v4835
      %v4837 = vpop.f32.mrb[0].mxu0
      %v4838 = vpop.f32.mrb[0].mxu0
      %v4839 = vadd.f32 %v4431, %v4838
      %v4840 = vpop.f32.mrb[0].mxu0
      %4841 = vmatprep.mubr.bf16.mxu0 0
      %4842 = vmatmul.mubr.bf16.gmra.mrb[0].mxu0 %v4379
      %v4843 = vpop.f32.mrb[0].mxu0
      %v4844 = vadd.f32 %v4431, %v4843
      %v4845 = vpop.f32.mrb[0].mxu0
      %v4846 = vpop.f32.mrb[0].mxu0
      %v4847 = vadd.f32 %v4431, %v4846
      %v4848 = vpop.f32.mrb[0].mxu0
      %4849 = vmatprep.mubr.bf16.mxu0 0
      %4850 = vmatmul.mubr.bf16.gmra.mrb[0].mxu0 %v4380
      %v4851 = vpop.f32.mrb[0].mxu0
      %v4852 = vadd.f32 %v4431, %v4851
      %v4853 = vpop.f32.mrb[0].mxu0
      %v4854 = vpop.f32.mrb[0].mxu0
      %v4855 = vadd.f32 %v4431, %v4854
      %v4856 = vpop.f32.mrb[0].mxu0
      %4857 = vmatprep.mubr.bf16.mxu0 0
      %4858 = vmatmul.mubr.bf16.gmra.mrb[0].mxu0 %v4381
      %v4859 = vpop.f32.mrb[0].mxu0
      %v4860 = vadd.f32 %v4431, %v4859
      %v4861 = vpop.f32.mrb[0].mxu0
      %v4862 = vpop.f32.mrb[0].mxu0
      %v4863 = vadd.f32 %v4431, %v4862
      %v4864 = vpop.f32.mrb[0].mxu0
      %4865 = vmatprep.mubr.bf16.mxu0 0
      %4866 = vmatmul.mubr.bf16.gmra.mrb[0].mxu0 %v4382
      %v4867 = vpop.f32.mrb[0].mxu0
      %v4868 = vadd.f32 %v4431, %v4867
      %v4869 = vpop.f32.mrb[0].mxu0
      %v4870 = vpop.f32.mrb[0].mxu0
      %v4871 = vadd.f32 %v4431, %v4870
      %v4872 = vpop.f32.mrb[0].mxu0
      %4873 = vmatprep.mubr.bf16.mxu0 0
      %4874 = vmatmul.mubr.bf16.gmra.mrb[0].mxu0 %v4383
      %v4875 = vpop.f32.mrb[0].mxu0
      %v4876 = vadd.f32 %v4431, %v4875
      %v4877 = vpop.f32.mrb[0].mxu0
      %v4878 = vpop.f32.mrb[0].mxu0
      %v4879 = vadd.f32 %v4431, %v4878
      %v4880 = vpop.f32.mrb[0].mxu0
      %4881 = vmatprep.mubr.bf16.mxu0 0
      %4882 = vmatmul.mubr.bf16.gmra.mrb[0].mxu0 %v4384
      %v4883 = vpop.f32.mrb[0].mxu0
      %v4884 = vadd.f32 %v4431, %v4883
      %v4885 = vpop.f32.mrb[0].mxu0
      %v4886 = vpop.f32.mrb[0].mxu0
      %v4887 = vadd.f32 %v4431, %v4886
      %v4888 = vpop.f32.mrb[0].mxu0
      %4889 = vmatprep.mubr.bf16.mxu0 0
      %4890 = vmatmul.mubr.bf16.gmra.mrb[0].mxu0 %v4385
      %v4891 = vpop.f32.mrb[0].mxu0
      %v4892 = vadd.f32 %v4431, %v4891
      %v4893 = vpop.f32.mrb[0].mxu0
      %v4894 = vpop.f32.mrb[0].mxu0
      %v4895 = vadd.f32 %v4431, %v4894
      %v4896 = vpop.f32.mrb[0].mxu0
      %4897 = vmatprep.mubr.bf16.mxu0 0
      %4898 = vmatmul.mubr.bf16.gmra.mrb[0].mxu0 %v4386
      %v4899 = vpop.f32.mrb[0].mxu0
      %v4900 = vadd.f32 %v4431, %v4899
      %v4901 = vpop.f32.mrb[0].mxu0
      %v4902 = vpop.f32.mrb[0].mxu0
      %v4903 = vadd.f32 %v4431, %v4902
      %v4904 = vpop.f32.mrb[0].mxu0
      %4905 = vmatprep.mubr.bf16.mxu0 0
      %4906 = vmatmul.mubr.bf16.gmra.mrb[0].mxu0 %v4387
      %v4907 = vpop.f32.mrb[0].mxu0
      %v4908 = vadd.f32 %v4431, %v4907
      %v4909 = vpop.f32.mrb[0].mxu0
      %v4910 = vpop.f32.mrb[0].mxu0
      %v4911 = vadd.f32 %v4431, %v4910
      %v4912 = vpop.f32.mrb[0].mxu0
      %4913 = vmatprep.mubr.bf16.mxu0 0
      %4914 = vmatmul.mubr.bf16.gmra.mrb[0].mxu0 %v4388
      %v4915 = vpop.f32.mrb[0].mxu0
      %v4916 = vadd.f32 %v4431, %v4915
      %v4917 = vpop.f32.mrb[0].mxu0
      %v4918 = vpop.f32.mrb[0].mxu0
      %v4919 = vadd.f32 %v4431, %v4918
      %v4920 = vpop.f32.mrb[0].mxu0
      %4921 = vmatprep.mubr.bf16.mxu0 0
      %4922 = vmatmul.mubr.bf16.gmra.mrb[0].mxu0 %v4389
      %v4923 = vpop.f32.mrb[0].mxu0
      %v4924 = vadd.f32 %v4431, %v4923
      %v4925 = vpop.f32.mrb[0].mxu0
      %v4926 = vpop.f32.mrb[0].mxu0
      %v4927 = vadd.f32 %v4431, %v4926
      %v4928 = vpop.f32.mrb[0].mxu0
      %4929 = vmatprep.mubr.bf16.mxu0 0
      %4930 = vmatmul.mubr.bf16.gmra.mrb[0].mxu0 %v4390
      %v4931 = vpop.f32.mrb[0].mxu0
      %v4932 = vadd.f32 %v4431, %v4931
      %v4933 = vpop.f32.mrb[0].mxu0
      %v4934 = vpop.f32.mrb[0].mxu0
      %v4935 = vadd.f32 %v4431, %v4934
      %v4936 = vpop.f32.mrb[0].mxu0
      %4937 = vmatprep.mubr.bf16.mxu0 0
      %4938 = vmatmul.mubr.bf16.gmra.mrb[0].mxu0 %v4391
      %v4939 = vpop.f32.mrb[0].mxu0
      %v4940 = vadd.f32 %v4431, %v4939
      %v4941 = vpop.f32.mrb[0].mxu0
      %v4942 = vpop.f32.mrb[0].mxu0
      %v4943 = vadd.f32 %v4431, %v4942
      %v4944 = vpop.f32.mrb[0].mxu0
      %4945 = vmatprep.mubr.bf16.mxu0 0
      %4946 = vmatmul.mubr.bf16.gmra.mrb[0].mxu0 %v4392
      %v4947 = vpop.f32.mrb[0].mxu0
      %v4948 = vadd.f32 %v4431, %v4947
      %v4949 = vpop.f32.mrb[0].mxu0
      %v4950 = vpop.f32.mrb[0].mxu0
      %v4951 = vadd.f32 %v4431, %v4950
      %v4952 = vpop.f32.mrb[0].mxu0
      %4953 = vmatprep.mubr.bf16.mxu0 0
      %4954 = vmatmul.mubr.bf16.gmra.mrb[0].mxu0 %v4393
      %v4955 = vpop.f32.mrb[0].mxu0
      %v4956 = vadd.f32 %v4431, %v4955
      %v4957 = vpop.f32.mrb[0].mxu0
      %v4958 = vpop.f32.mrb[0].mxu0
      %v4959 = vadd.f32 %v4431, %v4958
      %v4960 = vpop.f32.mrb[0].mxu0
      %4961 = vmatprep.mubr.bf16.mxu0 0
      %4962 = vmatmul.mubr.bf16.gmra.mrb[0].mxu0 %v4394
      %v4963 = vpop.f32.mrb[0].mxu0
      %v4964 = vadd.f32 %v4431, %v4963
      %v4965 = vpop.f32.mrb[0].mxu0
      %v4966 = vpop.f32.mrb[0].mxu0
      %v4967 = vadd.f32 %v4431, %v4966
      %v4968 = vpop.f32.mrb[0].mxu0
      %4969 = vmatprep.mubr.bf16.mxu0 0
      %4970 = vmatmul.mubr.bf16.gmra.mrb[0].mxu0 %v4395
      %v4971 = vpop.f32.mrb[0].mxu0
      %v4972 = vadd.f32 %v4431, %v4971
      %v4973 = vpop.f32.mrb[0].mxu0
      %v4974 = vpop.f32.mrb[0].mxu0
      %v4975 = vadd.f32 %v4431, %v4974
      %v4976 = vpop.f32.mrb[0].mxu0
      %4977 = vmatprep.mubr.bf16.mxu0 0
      %4978 = vmatmul.mubr.bf16.gmra.mrb[0].mxu0 %v4396
      %v4979 = vpop.f32.mrb[0].mxu0
      %v4980 = vadd.f32 %v4431, %v4979
      %v4981 = vpop.f32.mrb[0].mxu0
      %v4982 = vpop.f32.mrb[0].mxu0
      %v4983 = vadd.f32 %v4431, %v4982
      %v4984 = vpop.f32.mrb[0].mxu0
      %4985 = vmatprep.mubr.bf16.mxu0 0
      %4986 = vmatmul.mubr.bf16.gmra.mrb[0].mxu0 %v4397
      %v4987 = vpop.f32.mrb[0].mxu0
      %v4988 = vadd.f32 %v4431, %v4987
      %v4989 = vpop.f32.mrb[0].mxu0
      %v4990 = vpop.f32.mrb[0].mxu0
      %v4991 = vadd.f32 %v4431, %v4990
      %v4992 = vpop.f32.mrb[0].mxu0
      %4993 = vmatprep.mubr.bf16.mxu0 0
      %4994 = vmatmul.mubr.bf16.gmra.mrb[0].mxu0 %v4398
      %v4995 = vpop.f32.mrb[0].mxu0
      %v4996 = vadd.f32 %v4431, %v4995
      %v4997 = vpop.f32.mrb[0].mxu0
      %v4998 = vpop.f32.mrb[0].mxu0
      %v4999 = vadd.f32 %v4431, %v4998
      %v5000 = vpop.f32.mrb[0].mxu0
      %5001 = vmatprep.mubr.bf16.mxu0 0
      %5002 = vmatmul.mubr.bf16.gmra.mrb[0].mxu0 %v4399
      %v5003 = vpop.f32.mrb[0].mxu0
      %v5004 = vadd.f32 %v4431, %v5003
      %v5005 = vpop.f32.mrb[0].mxu0
      %v5006 = vpop.f32.mrb[0].mxu0
      %v5007 = vadd.f32 %v4431, %v5006
      %v5008 = vpop.f32.mrb[0].mxu0
      %5009 = vmatprep.mubr.bf16.mxu0 0
      %5010 = vmatmul.mubr.bf16.gmra.mrb[0].mxu0 %v4400
      %v5011 = vpop.f32.mrb[0].mxu0
      %v5012 = vadd.f32 %v4431, %v5011
      %v5013 = vpop.f32.mrb[0].mxu0
      %v5014 = vpop.f32.mrb[0].mxu0
      %v5015 = vadd.f32 %v4431, %v5014
      %v5016 = vpop.f32.mrb[0].mxu0
      %5017 = vmatprep.mubr.bf16.mxu0 0
      %5018 = vmatmul.mubr.bf16.gmra.mrb[0].mxu0 %v4401
      %v5019 = vpop.f32.mrb[0].mxu0
      %v5020 = vadd.f32 %v4431, %v5019
      %v5021 = vpop.f32.mrb[0].mxu0
      %v5022 = vpop.f32.mrb[0].mxu0
      %v5023 = vadd.f32 %v4431, %v5022
      %v5024 = vpop.f32.mrb[0].mxu0
      %5025 = vmatprep.mubr.bf16.mxu0 0
      %5026 = vmatmul.mubr.bf16.gmra.mrb[0].mxu0 %v4402
      %v5027 = vpop.f32.mrb[0].mxu0
      %v5028 = vadd.f32 %v4431, %v5027
      %v5029 = vpop.f32.mrb[0].mxu0
      %v5030 = vpop.f32.mrb[0].mxu0
      %v5031 = vadd.f32 %v4431, %v5030
      %v5032 = vpop.f32.mrb[0].mxu0
      %5033 = vmatprep.mubr.bf16.mxu0 0
      %5034 = vmatmul.mubr.bf16.gmra.mrb[0].mxu0 %v4403
      %v5035 = vpop.f32.mrb[0].mxu0
      %v5036 = vadd.f32 %v4431, %v5035
      %v5037 = vpop.f32.mrb[0].mxu0
      %v5038 = vpop.f32.mrb[0].mxu0
      %v5039 = vadd.f32 %v4431, %v5038
      %v5040 = vpop.f32.mrb[0].mxu0
      %5041 = vmatprep.mubr.bf16.mxu0 0
      %5042 = vmatmul.mubr.bf16.gmra.mrb[0].mxu0 %v4404
      %v5043 = vpop.f32.mrb[0].mxu0
      %v5044 = vadd.f32 %v4431, %v5043
      %v5045 = vpop.f32.mrb[0].mxu0
      %v5046 = vpop.f32.mrb[0].mxu0
      %v5047 = vadd.f32 %v4431, %v5046
      %v5048 = vpop.f32.mrb[0].mxu0
      %5049 = vmatprep.mubr.bf16.mxu0 0
      %5050 = vmatmul.mubr.bf16.gmra.mrb[0].mxu0 %v4405
      %v5051 = vpop.f32.mrb[0].mxu0
      %v5052 = vadd.f32 %v4431, %v5051
      %v5053 = vpop.f32.mrb[0].mxu0
      %v5054 = vpop.f32.mrb[0].mxu0
      %v5055 = vadd.f32 %v4431, %v5054
      %v5056 = vpop.f32.mrb[0].mxu0
      %5057 = vmatprep.mubr.bf16.mxu0 0
      %5058 = vmatmul.mubr.bf16.gmra.mrb[0].mxu0 %v4406
      %v5059 = vpop.f32.mrb[0].mxu0
      %v5060 = vadd.f32 %v4431, %v5059
      %v5061 = vpop.f32.mrb[0].mxu0
      %v5062 = vpop.f32.mrb[0].mxu0
      %v5063 = vadd.f32 %v4431, %v5062
      %v5064 = vpop.f32.mrb[0].mxu0
      %5065 = vmatprep.mubr.bf16.mxu0 0
      %5066 = vmatmul.mubr.bf16.gmra.mrb[0].mxu0 %v4407
      %v5067 = vpop.f32.mrb[0].mxu0
      %v5068 = vadd.f32 %v4431, %v5067
      %v5069 = vpop.f32.mrb[0].mxu0
      %v5070 = vpop.f32.mrb[0].mxu0
      %v5071 = vadd.f32 %v4431, %v5070
      %v5072 = vpop.f32.mrb[0].mxu0
      %5073 = vmatprep.mubr.bf16.mxu0 0
      %5074 = vmatmul.mubr.bf16.gmra.mrb[0].mxu0 %v4408
      %v5075 = vpop.f32.mrb[0].mxu0
      %v5076 = vadd.f32 %v4431, %v5075
      %v5077 = vpop.f32.mrb[0].mxu0
      %v5078 = vpop.f32.mrb[0].mxu0
      %v5079 = vadd.f32 %v4431, %v5078
      %v5080 = vpop.f32.mrb[0].mxu0
      %5081 = vmatprep.mubr.bf16.mxu0 0
      %5082 = vmatmul.mubr.bf16.gmra.mrb[0].mxu0 %v4409
      %v5083 = vpop.f32.mrb[0].mxu0
      %v5084 = vadd.f32 %v4431, %v5083
      %v5085 = vpop.f32.mrb[0].mxu0
      %v5086 = vpop.f32.mrb[0].mxu0
      %v5087 = vadd.f32 %v4431, %v5086
      %v5088 = vpop.f32.mrb[0].mxu0
      %5089 = vdwg.mxu0
      %v5090 = vmax.f32 %v4516, 0.0
      %v5091 = vmax.f32 %v4519, 0.0
      %v5092 = vmax.f32 %v4524, 0.0
      %v5093 = vmax.f32 %v4527, 0.0
      %v5094 = vmax.f32 %v4532, 0.0
      %v5095 = vmax.f32 %v4535, 0.0
      %v5096 = vmax.f32 %v4540, 0.0
      %v5097 = vmax.f32 %v4543, 0.0
      %v5098 = vmax.f32 %v4548, 0.0
      %v5099 = vmax.f32 %v4551, 0.0
      %v5100 = vmax.f32 %v4556, 0.0
      %v5101 = vmax.f32 %v4559, 0.0
      %v5102 = vmax.f32 %v4564, 0.0
      %v5103 = vmax.f32 %v4567, 0.0
      %v5104 = vmax.f32 %v4572, 0.0
      %v5105 = vmax.f32 %v4575, 0.0
      %v5106 = vmax.f32 %v4580, 0.0
      %v5107 = vmax.f32 %v4583, 0.0
      %v5108 = vmax.f32 %v4588, 0.0
      %v5109 = vmax.f32 %v4591, 0.0
      %v5110 = vmax.f32 %v4596, 0.0
      %v5111 = vmax.f32 %v4599, 0.0
      %v5112 = vmax.f32 %v4604, 0.0
      %v5113 = vmax.f32 %v4607, 0.0
      %v5114 = vmax.f32 %v4612, 0.0
      %v5115 = vmax.f32 %v4615, 0.0
      %v5116 = vmax.f32 %v4620, 0.0
      %v5117 = vmax.f32 %v4623, 0.0
      %v5118 = vmax.f32 %v4628, 0.0
      %v5119 = vmax.f32 %v4631, 0.0
      %v5120 = vmax.f32 %v4636, 0.0
      %v5121 = vmax.f32 %v4639, 0.0
      %v5122 = vmax.f32 %v4644, 0.0
      %v5123 = vmax.f32 %v4647, 0.0
      %v5124 = vmax.f32 %v4652, 0.0
      %v5125 = vmax.f32 %v4655, 0.0
      %v5126 = vmax.f32 %v4660, 0.0
      %v5127 = vmax.f32 %v4663, 0.0
      %v5128 = vmax.f32 %v4668, 0.0
      %v5129 = vmax.f32 %v4671, 0.0
      %v5130 = vmax.f32 %v4676, 0.0
      %v5131 = vmax.f32 %v4679, 0.0
      %v5132 = vmax.f32 %v4684, 0.0
      %v5133 = vmax.f32 %v4687, 0.0
      %v5134 = vmax.f32 %v4692, 0.0
      %v5135 = vmax.f32 %v4695, 0.0
      %v5136 = vmax.f32 %v4700, 0.0
      %v5137 = vmax.f32 %v4703, 0.0
      %v5138 = vmax.f32 %v4708, 0.0
      %v5139 = vmax.f32 %v4711, 0.0
      %v5140 = vmax.f32 %v4716, 0.0
      %v5141 = vmax.f32 %v4719, 0.0
      %v5142 = vmax.f32 %v4724, 0.0
      %v5143 = vmax.f32 %v4727, 0.0
      %v5144 = vmax.f32 %v4732, 0.0
      %v5145 = vmax.f32 %v4735, 0.0
      %v5146 = vmax.f32 %v4740, 0.0
      %v5147 = vmax.f32 %v4743, 0.0
      %v5148 = vmax.f32 %v4748, 0.0
      %v5149 = vmax.f32 %v4751, 0.0
      %v5150 = vmax.f32 %v4756, 0.0
      %v5151 = vmax.f32 %v4759, 0.0
      %v5152 = vmax.f32 %v4764, 0.0
      %v5153 = vmax.f32 %v4767, 0.0
      %v5154 = vmax.f32 %v4772, 0.0
      %v5155 = vmax.f32 %v4775, 0.0
      %v5156 = vmax.f32 %v4780, 0.0
      %v5157 = vmax.f32 %v4783, 0.0
      %v5158 = vmax.f32 %v4788, 0.0
      %v5159 = vmax.f32 %v4791, 0.0
      %v5160 = vmax.f32 %v4796, 0.0
      %v5161 = vmax.f32 %v4799, 0.0
      %v5162 = vmax.f32 %v4804, 0.0
      %v5163 = vmax.f32 %v4807, 0.0
      %v5164 = vmax.f32 %v4812, 0.0
      %v5165 = vmax.f32 %v4815, 0.0
      %v5166 = vmax.f32 %v4820, 0.0
      %v5167 = vmax.f32 %v4823, 0.0
      %v5168 = vmax.f32 %v4828, 0.0
      %v5169 = vmax.f32 %v4831, 0.0
      %v5170 = vmax.f32 %v4836, 0.0
      %v5171 = vmax.f32 %v4839, 0.0
      %v5172 = vmax.f32 %v4844, 0.0
      %v5173 = vmax.f32 %v4847, 0.0
      %v5174 = vmax.f32 %v4852, 0.0
      %v5175 = vmax.f32 %v4855, 0.0
      %v5176 = vmax.f32 %v4860, 0.0
      %v5177 = vmax.f32 %v4863, 0.0
      %v5178 = vmax.f32 %v4868, 0.0
      %v5179 = vmax.f32 %v4871, 0.0
      %v5180 = vmax.f32 %v4876, 0.0
      %v5181 = vmax.f32 %v4879, 0.0
      %v5182 = vmax.f32 %v4884, 0.0
      %v5183 = vmax.f32 %v4887, 0.0
      %v5184 = vmax.f32 %v4892, 0.0
      %v5185 = vmax.f32 %v4895, 0.0
      %v5186 = vmax.f32 %v4900, 0.0
      %v5187 = vmax.f32 %v4903, 0.0
      %v5188 = vmax.f32 %v4908, 0.0
      %v5189 = vmax.f32 %v4911, 0.0
      %v5190 = vmax.f32 %v4916, 0.0
      %v5191 = vmax.f32 %v4919, 0.0
      %v5192 = vmax.f32 %v4924, 0.0
      %v5193 = vmax.f32 %v4927, 0.0
      %v5194 = vmax.f32 %v4932, 0.0
      %v5195 = vmax.f32 %v4935, 0.0
      %v5196 = vmax.f32 %v4940, 0.0
      %v5197 = vmax.f32 %v4943, 0.0
      %v5198 = vmax.f32 %v4948, 0.0
      %v5199 = vmax.f32 %v4951, 0.0
      %v5200 = vmax.f32 %v4956, 0.0
      %v5201 = vmax.f32 %v4959, 0.0
      %v5202 = vmax.f32 %v4964, 0.0
      %v5203 = vmax.f32 %v4967, 0.0
      %v5204 = vmax.f32 %v4972, 0.0
      %v5205 = vmax.f32 %v4975, 0.0
      %v5206 = vmax.f32 %v4980, 0.0
      %v5207 = vmax.f32 %v4983, 0.0
      %v5208 = vmax.f32 %v4988, 0.0
      %v5209 = vmax.f32 %v4991, 0.0
      %v5210 = vmax.f32 %v4996, 0.0
      %v5211 = vmax.f32 %v4999, 0.0
      %v5212 = vmax.f32 %v5004, 0.0
      %v5213 = vmax.f32 %v5007, 0.0
      %v5214 = vmax.f32 %v5012, 0.0
      %v5215 = vmax.f32 %v5015, 0.0
      %v5216 = vmax.f32 %v5020, 0.0
      %v5217 = vmax.f32 %v5023, 0.0
      %v5218 = vmax.f32 %v5028, 0.0
      %v5219 = vmax.f32 %v5031, 0.0
      %v5220 = vmax.f32 %v5036, 0.0
      %v5221 = vmax.f32 %v5039, 0.0
      %v5222 = vmax.f32 %v5044, 0.0
      %v5223 = vmax.f32 %v5047, 0.0
      %v5224 = vmax.f32 %v5052, 0.0
      %v5225 = vmax.f32 %v5055, 0.0
      %v5226 = vmax.f32 %v5060, 0.0
      %v5227 = vmax.f32 %v5063, 0.0
      %v5228 = vmax.f32 %v5068, 0.0
      %v5229 = vmax.f32 %v5071, 0.0
      %v5230 = vmax.f32 %v5076, 0.0
      %v5231 = vmax.f32 %v5079, 0.0
      %v5232 = vmax.f32 %v5084, 0.0
      %v5233 = vmax.f32 %v5087, 0.0
      %v5234 = vpack.c.bf16 %v5091, %v5090
      %v5235 = vpack.c.bf16 %v5093, %v5092
      %v5236 = vpack.c.bf16 %v5095, %v5094
      %v5237 = vpack.c.bf16 %v5097, %v5096
      %v5238 = vpack.c.bf16 %v5099, %v5098
      %v5239 = vpack.c.bf16 %v5101, %v5100
      %v5240 = vpack.c.bf16 %v5103, %v5102
      %v5241 = vpack.c.bf16 %v5105, %v5104
      %v5242 = vpack.c.bf16 %v5107, %v5106
      %v5243 = vpack.c.bf16 %v5109, %v5108
      %v5244 = vpack.c.bf16 %v5111, %v5110
      %v5245 = vpack.c.bf16 %v5113, %v5112
      %v5246 = vpack.c.bf16 %v5115, %v5114
      %v5247 = vpack.c.bf16 %v5117, %v5116
      %v5248 = vpack.c.bf16 %v5119, %v5118
      %v5249 = vpack.c.bf16 %v5121, %v5120
      %v5250 = vpack.c.bf16 %v5123, %v5122
      %v5251 = vpack.c.bf16 %v5125, %v5124
      %v5252 = vpack.c.bf16 %v5127, %v5126
      %v5253 = vpack.c.bf16 %v5129, %v5128
      %v5254 = vpack.c.bf16 %v5131, %v5130
      %v5255 = vpack.c.bf16 %v5133, %v5132
      %v5256 = vpack.c.bf16 %v5135, %v5134
      %v5257 = vpack.c.bf16 %v5137, %v5136
      %v5258 = vpack.c.bf16 %v5139, %v5138
      %v5259 = vpack.c.bf16 %v5141, %v5140
      %v5260 = vpack.c.bf16 %v5143, %v5142
      %v5261 = vpack.c.bf16 %v5145, %v5144
      %v5262 = vpack.c.bf16 %v5147, %v5146
      %v5263 = vpack.c.bf16 %v5149, %v5148
      %v5264 = vpack.c.bf16 %v5151, %v5150
      %v5265 = vpack.c.bf16 %v5153, %v5152
      %v5266 = vpack.c.bf16 %v5155, %v5154
      %v5267 = vpack.c.bf16 %v5157, %v5156
      %v5268 = vpack.c.bf16 %v5159, %v5158
      %v5269 = vpack.c.bf16 %v5161, %v5160
      %v5270 = vpack.c.bf16 %v5163, %v5162
      %v5271 = vpack.c.bf16 %v5165, %v5164
      %v5272 = vpack.c.bf16 %v5167, %v5166
      %v5273 = vpack.c.bf16 %v5169, %v5168
      %v5274 = vpack.c.bf16 %v5171, %v5170
      %v5275 = vpack.c.bf16 %v5173, %v5172
      %v5276 = vpack.c.bf16 %v5175, %v5174
      %v5277 = vpack.c.bf16 %v5177, %v5176
      %v5278 = vpack.c.bf16 %v5179, %v5178
      %v5279 = vpack.c.bf16 %v5181, %v5180
      %v5280 = vpack.c.bf16 %v5183, %v5182
      %v5281 = vpack.c.bf16 %v5185, %v5184
      %v5282 = vpack.c.bf16 %v5187, %v5186
      %v5283 = vpack.c.bf16 %v5189, %v5188
      %v5284 = vpack.c.bf16 %v5191, %v5190
      %v5285 = vpack.c.bf16 %v5193, %v5192
      %v5286 = vpack.c.bf16 %v5195, %v5194
      %v5287 = vpack.c.bf16 %v5197, %v5196
      %v5288 = vpack.c.bf16 %v5199, %v5198
      %v5289 = vpack.c.bf16 %v5201, %v5200
      %v5290 = vpack.c.bf16 %v5203, %v5202
      %v5291 = vpack.c.bf16 %v5205, %v5204
      %v5292 = vpack.c.bf16 %v5207, %v5206
      %v5293 = vpack.c.bf16 %v5209, %v5208
      %v5294 = vpack.c.bf16 %v5211, %v5210
      %v5295 = vpack.c.bf16 %v5213, %v5212
      %v5296 = vpack.c.bf16 %v5215, %v5214
      %v5297 = vpack.c.bf16 %v5217, %v5216
      %v5298 = vpack.c.bf16 %v5219, %v5218
      %v5299 = vpack.c.bf16 %v5221, %v5220
      %v5300 = vpack.c.bf16 %v5223, %v5222
      %v5301 = vpack.c.bf16 %v5225, %v5224
      %v5302 = vpack.c.bf16 %v5227, %v5226
      %v5303 = vpack.c.bf16 %v5229, %v5228
      %v5304 = vpack.c.bf16 %v5231, %v5230
      %v5305 = vpack.c.bf16 %v5233, %v5232
      %v5306 = vld [vmem:[%s9] sm:$0xf]
      %v5307 = vld [vmem:[%s9 + $0x4] sm:$0xf]
      %v5308 = vld [vmem:[%s9 + $0x8] sm:$0xf]
      %v5309 = vld [vmem:[%s9 + $0xc] sm:$0xf]
      %v5310 = vld [vmem:[%s9 + $0x10] sm:$0xf]
      %v5311 = vld [vmem:[%s9 + $0x14] sm:$0xf]
      %v5312 = vld [vmem:[%s9 + $0x18] sm:$0xf]
      %v5313 = vld [vmem:[%s9 + $0x1c] sm:$0xf]
      %v5314 = vld [vmem:[%s9 + $0x20] sm:$0xf]
      %v5315 = vld [vmem:[%s9 + $0x24] sm:$0xf]
      %v5316 = vld [vmem:[%s9 + $0x28] sm:$0xf]
      %v5317 = vld [vmem:[%s9 + $0x2c] sm:$0xf]
      %v5318 = vld [vmem:[%s9 + $0x30] sm:$0xf]
      %v5319 = vld [vmem:[%s9 + $0x34] sm:$0xf]
      %v5320 = vld [vmem:[%s9 + $0x38] sm:$0xf]
      %v5321 = vld [vmem:[%s9 + $0x3c] sm:$0xf]
      %v5322 = vld [vmem:[%s10] sm:$0x1]
      %v5324 = vlaneseq
      %v5325 = vshrl.u32 %v5324, 7
      %v5326 = vsub.s32 0, %v5325
      %v5327 = vrot.slane %v5322, %v5326
      %v5345 = vunpack.c.l.b16 %v5306
      %v5346 = vunpack.c.l.b16 %v5307
      %v5347 = vunpack.c.l.b16 %v5308
      %v5348 = vunpack.c.l.b16 %v5309
      %v5349 = vunpack.c.l.b16 %v5310
      %v5350 = vunpack.c.l.b16 %v5311
      %v5351 = vunpack.c.l.b16 %v5312
      %v5352 = vunpack.c.l.b16 %v5313
      %v5353 = vunpack.c.l.b16 %v5314
      %v5354 = vunpack.c.l.b16 %v5315
      %v5355 = vunpack.c.l.b16 %v5316
      %v5356 = vunpack.c.l.b16 %v5317
      %v5357 = vunpack.c.l.b16 %v5318
      %v5358 = vunpack.c.l.b16 %v5319
      %v5359 = vunpack.c.l.b16 %v5320
      %v5360 = vunpack.c.l.b16 %v5321
      %v5361 = vpack.c.b16 %v5346, %v5345
      %v5362 = vpack.c.b16 %v5348, %v5347
      %v5363 = vpack.c.b16 %v5350, %v5349
      %v5364 = vpack.c.b16 %v5352, %v5351
      %v5365 = vpack.c.b16 %v5354, %v5353
      %v5366 = vpack.c.b16 %v5356, %v5355
      %v5367 = vpack.c.b16 %v5358, %v5357
      %v5368 = vpack.c.b16 %v5360, %v5359
      %5377 = vmatprep.subr.bf16.mxu0 0
      %5378 = vmatpush1.bf16.msra.mxu0 %v5361
      %5379 = vmatprep.subr.bf16.mxu0 0
      %5380 = vmatpush1.bf16.msra.mxu0 %v5362
      %5381 = vmatprep.subr.bf16.mxu0 0
      %5382 = vmatpush1.bf16.msra.mxu0 %v5363
      %5383 = vmatprep.subr.bf16.mxu0 0
      %5384 = vmatpush1.bf16.msra.mxu0 %v5364
      %5385 = vmatprep.subr.bf16.mxu0 0
      %5386 = vmatpush1.bf16.msra.mxu0 %v5365
      %5387 = vmatprep.subr.bf16.mxu0 0
      %5388 = vmatpush1.bf16.msra.mxu0 %v5366
      %5389 = vmatprep.subr.bf16.mxu0 0
      %5390 = vmatpush1.bf16.msra.mxu0 %v5367
      %5391 = vmatprep.subr.bf16.mxu0 0
      %5392 = vmatpush1.bf16.msra.mxu0 %v5368
      %5393 = vmatprep.subr.bf16.mxu0 0
      %5394 = vmatpush1.bf16.msra.mxu0 0
      %5395 = vmatprep.subr.bf16.mxu0 0
      %5396 = vmatpush1.bf16.msra.mxu0 0
      %5397 = vmatprep.subr.bf16.mxu0 0
      %5398 = vmatpush1.bf16.msra.mxu0 0
      %5399 = vmatprep.subr.bf16.mxu0 0
      %5400 = vmatpush1.bf16.msra.mxu0 0
      %5401 = vmatprep.subr.bf16.mxu0 0
      %5402 = vmatpush1.bf16.msra.mxu0 0
      %5403 = vmatprep.subr.bf16.mxu0 0
      %5404 = vmatpush1.bf16.msra.mxu0 0
      %5405 = vmatprep.subr.bf16.mxu0 0
      %5406 = vmatpush1.bf16.msra.mxu0 0
      %5407 = vmatprep.subr.bf16.mxu0 0
      %5408 = vmatpush1.bf16.msra.mxu0 0
      %5409 = vmatprep.mubr.bf16.mxu0 0
      %5410 = vmatmul.mubr.bf16.gmra.mrb[0].mxu0 %v5234
      %v5411 = vpop.f32.mrb[0].mxu0
      %v5412 = vadd.f32 %v5327, %v5411
      %v5413 = vpop.f32.mrb[0].mxu0
      %v5414 = vpop.f32.mrb[0].mxu0
      %v5415 = vadd.f32 %v5327, %v5414
      %v5416 = vpop.f32.mrb[0].mxu0
      %5417 = vmatprep.mubr.bf16.mxu0 0
      %5418 = vmatmul.mubr.bf16.gmra.mrb[0].mxu0 %v5235
      %v5419 = vpop.f32.mrb[0].mxu0
      %v5420 = vadd.f32 %v5327, %v5419
      %v5421 = vpop.f32.mrb[0].mxu0
      %v5422 = vpop.f32.mrb[0].mxu0
      %v5423 = vadd.f32 %v5327, %v5422
      %v5424 = vpop.f32.mrb[0].mxu0
      %5425 = vmatprep.mubr.bf16.mxu0 0
      %5426 = vmatmul.mubr.bf16.gmra.mrb[0].mxu0 %v5236
      %v5427 = vpop.f32.mrb[0].mxu0
      %v5428 = vadd.f32 %v5327, %v5427
      %v5429 = vpop.f32.mrb[0].mxu0
      %v5430 = vpop.f32.mrb[0].mxu0
      %v5431 = vadd.f32 %v5327, %v5430
      %v5432 = vpop.f32.mrb[0].mxu0
      %5433 = vmatprep.mubr.bf16.mxu0 0
      %5434 = vmatmul.mubr.bf16.gmra.mrb[0].mxu0 %v5237
      %v5435 = vpop.f32.mrb[0].mxu0
      %v5436 = vadd.f32 %v5327, %v5435
      %v5437 = vpop.f32.mrb[0].mxu0
      %v5438 = vpop.f32.mrb[0].mxu0
      %v5439 = vadd.f32 %v5327, %v5438
      %v5440 = vpop.f32.mrb[0].mxu0
      %5441 = vmatprep.mubr.bf16.mxu0 0
      %5442 = vmatmul.mubr.bf16.gmra.mrb[0].mxu0 %v5238
      %v5443 = vpop.f32.mrb[0].mxu0
      %v5444 = vadd.f32 %v5327, %v5443
      %v5445 = vpop.f32.mrb[0].mxu0
      %v5446 = vpop.f32.mrb[0].mxu0
      %v5447 = vadd.f32 %v5327, %v5446
      %v5448 = vpop.f32.mrb[0].mxu0
      %5449 = vmatprep.mubr.bf16.mxu0 0
      %5450 = vmatmul.mubr.bf16.gmra.mrb[0].mxu0 %v5239
      %v5451 = vpop.f32.mrb[0].mxu0
      %v5452 = vadd.f32 %v5327, %v5451
      %v5453 = vpop.f32.mrb[0].mxu0
      %v5454 = vpop.f32.mrb[0].mxu0
      %v5455 = vadd.f32 %v5327, %v5454
      %v5456 = vpop.f32.mrb[0].mxu0
      %5457 = vmatprep.mubr.bf16.mxu0 0
      %5458 = vmatmul.mubr.bf16.gmra.mrb[0].mxu0 %v5240
      %v5459 = vpop.f32.mrb[0].mxu0
      %v5460 = vadd.f32 %v5327, %v5459
      %v5461 = vpop.f32.mrb[0].mxu0
      %v5462 = vpop.f32.mrb[0].mxu0
      %v5463 = vadd.f32 %v5327, %v5462
      %v5464 = vpop.f32.mrb[0].mxu0
      %5465 = vmatprep.mubr.bf16.mxu0 0
      %5466 = vmatmul.mubr.bf16.gmra.mrb[0].mxu0 %v5241
      %v5467 = vpop.f32.mrb[0].mxu0
      %v5468 = vadd.f32 %v5327, %v5467
      %v5469 = vpop.f32.mrb[0].mxu0
      %v5470 = vpop.f32.mrb[0].mxu0
      %v5471 = vadd.f32 %v5327, %v5470
      %v5472 = vpop.f32.mrb[0].mxu0
      %5473 = vmatprep.mubr.bf16.mxu0 0
      %5474 = vmatmul.mubr.bf16.gmra.mrb[0].mxu0 %v5242
      %v5475 = vpop.f32.mrb[0].mxu0
      %v5476 = vadd.f32 %v5327, %v5475
      %v5477 = vpop.f32.mrb[0].mxu0
      %v5478 = vpop.f32.mrb[0].mxu0
      %v5479 = vadd.f32 %v5327, %v5478
      %v5480 = vpop.f32.mrb[0].mxu0
      %5481 = vmatprep.mubr.bf16.mxu0 0
      %5482 = vmatmul.mubr.bf16.gmra.mrb[0].mxu0 %v5243
      %v5483 = vpop.f32.mrb[0].mxu0
      %v5484 = vadd.f32 %v5327, %v5483
      %v5485 = vpop.f32.mrb[0].mxu0
      %v5486 = vpop.f32.mrb[0].mxu0
      %v5487 = vadd.f32 %v5327, %v5486
      %v5488 = vpop.f32.mrb[0].mxu0
      %5489 = vmatprep.mubr.bf16.mxu0 0
      %5490 = vmatmul.mubr.bf16.gmra.mrb[0].mxu0 %v5244
      %v5491 = vpop.f32.mrb[0].mxu0
      %v5492 = vadd.f32 %v5327, %v5491
      %v5493 = vpop.f32.mrb[0].mxu0
      %v5494 = vpop.f32.mrb[0].mxu0
      %v5495 = vadd.f32 %v5327, %v5494
      %v5496 = vpop.f32.mrb[0].mxu0
      %5497 = vmatprep.mubr.bf16.mxu0 0
      %5498 = vmatmul.mubr.bf16.gmra.mrb[0].mxu0 %v5245
      %v5499 = vpop.f32.mrb[0].mxu0
      %v5500 = vadd.f32 %v5327, %v5499
      %v5501 = vpop.f32.mrb[0].mxu0
      %v5502 = vpop.f32.mrb[0].mxu0
      %v5503 = vadd.f32 %v5327, %v5502
      %v5504 = vpop.f32.mrb[0].mxu0
      %5505 = vmatprep.mubr.bf16.mxu0 0
      %5506 = vmatmul.mubr.bf16.gmra.mrb[0].mxu0 %v5246
      %v5507 = vpop.f32.mrb[0].mxu0
      %v5508 = vadd.f32 %v5327, %v5507
      %v5509 = vpop.f32.mrb[0].mxu0
      %v5510 = vpop.f32.mrb[0].mxu0
      %v5511 = vadd.f32 %v5327, %v5510
      %v5512 = vpop.f32.mrb[0].mxu0
      %5513 = vmatprep.mubr.bf16.mxu0 0
      %5514 = vmatmul.mubr.bf16.gmra.mrb[0].mxu0 %v5247
      %v5515 = vpop.f32.mrb[0].mxu0
      %v5516 = vadd.f32 %v5327, %v5515
      %v5517 = vpop.f32.mrb[0].mxu0
      %v5518 = vpop.f32.mrb[0].mxu0
      %v5519 = vadd.f32 %v5327, %v5518
      %v5520 = vpop.f32.mrb[0].mxu0
      %5521 = vmatprep.mubr.bf16.mxu0 0
      %5522 = vmatmul.mubr.bf16.gmra.mrb[0].mxu0 %v5248
      %v5523 = vpop.f32.mrb[0].mxu0
      %v5524 = vadd.f32 %v5327, %v5523
      %v5525 = vpop.f32.mrb[0].mxu0
      %v5526 = vpop.f32.mrb[0].mxu0
      %v5527 = vadd.f32 %v5327, %v5526
      %v5528 = vpop.f32.mrb[0].mxu0
      %5529 = vmatprep.mubr.bf16.mxu0 0
      %5530 = vmatmul.mubr.bf16.gmra.mrb[0].mxu0 %v5249
      %v5531 = vpop.f32.mrb[0].mxu0
      %v5532 = vadd.f32 %v5327, %v5531
      %v5533 = vpop.f32.mrb[0].mxu0
      %v5534 = vpop.f32.mrb[0].mxu0
      %v5535 = vadd.f32 %v5327, %v5534
      %v5536 = vpop.f32.mrb[0].mxu0
      %5537 = vmatprep.mubr.bf16.mxu0 0
      %5538 = vmatmul.mubr.bf16.gmra.mrb[0].mxu0 %v5250
      %v5539 = vpop.f32.mrb[0].mxu0
      %v5540 = vadd.f32 %v5327, %v5539
      %v5541 = vpop.f32.mrb[0].mxu0
      %v5542 = vpop.f32.mrb[0].mxu0
      %v5543 = vadd.f32 %v5327, %v5542
      %v5544 = vpop.f32.mrb[0].mxu0
      %5545 = vmatprep.mubr.bf16.mxu0 0
      %5546 = vmatmul.mubr.bf16.gmra.mrb[0].mxu0 %v5251
      %v5547 = vpop.f32.mrb[0].mxu0
      %v5548 = vadd.f32 %v5327, %v5547
      %v5549 = vpop.f32.mrb[0].mxu0
      %v5550 = vpop.f32.mrb[0].mxu0
      %v5551 = vadd.f32 %v5327, %v5550
      %v5552 = vpop.f32.mrb[0].mxu0
      %5553 = vmatprep.mubr.bf16.mxu0 0
      %5554 = vmatmul.mubr.bf16.gmra.mrb[0].mxu0 %v5252
      %v5555 = vpop.f32.mrb[0].mxu0
      %v5556 = vadd.f32 %v5327, %v5555
      %v5557 = vpop.f32.mrb[0].mxu0
      %v5558 = vpop.f32.mrb[0].mxu0
      %v5559 = vadd.f32 %v5327, %v5558
      %v5560 = vpop.f32.mrb[0].mxu0
      %5561 = vmatprep.mubr.bf16.mxu0 0
      %5562 = vmatmul.mubr.bf16.gmra.mrb[0].mxu0 %v5253
      %v5563 = vpop.f32.mrb[0].mxu0
      %v5564 = vadd.f32 %v5327, %v5563
      %v5565 = vpop.f32.mrb[0].mxu0
      %v5566 = vpop.f32.mrb[0].mxu0
      %v5567 = vadd.f32 %v5327, %v5566
      %v5568 = vpop.f32.mrb[0].mxu0
      %5569 = vmatprep.mubr.bf16.mxu0 0
      %5570 = vmatmul.mubr.bf16.gmra.mrb[0].mxu0 %v5254
      %v5571 = vpop.f32.mrb[0].mxu0
      %v5572 = vadd.f32 %v5327, %v5571
      %v5573 = vpop.f32.mrb[0].mxu0
      %v5574 = vpop.f32.mrb[0].mxu0
      %v5575 = vadd.f32 %v5327, %v5574
      %v5576 = vpop.f32.mrb[0].mxu0
      %5577 = vmatprep.mubr.bf16.mxu0 0
      %5578 = vmatmul.mubr.bf16.gmra.mrb[0].mxu0 %v5255
      %v5579 = vpop.f32.mrb[0].mxu0
      %v5580 = vadd.f32 %v5327, %v5579
      %v5581 = vpop.f32.mrb[0].mxu0
      %v5582 = vpop.f32.mrb[0].mxu0
      %v5583 = vadd.f32 %v5327, %v5582
      %v5584 = vpop.f32.mrb[0].mxu0
      %5585 = vmatprep.mubr.bf16.mxu0 0
      %5586 = vmatmul.mubr.bf16.gmra.mrb[0].mxu0 %v5256
      %v5587 = vpop.f32.mrb[0].mxu0
      %v5588 = vadd.f32 %v5327, %v5587
      %v5589 = vpop.f32.mrb[0].mxu0
      %v5590 = vpop.f32.mrb[0].mxu0
      %v5591 = vadd.f32 %v5327, %v5590
      %v5592 = vpop.f32.mrb[0].mxu0
      %5593 = vmatprep.mubr.bf16.mxu0 0
      %5594 = vmatmul.mubr.bf16.gmra.mrb[0].mxu0 %v5257
      %v5595 = vpop.f32.mrb[0].mxu0
      %v5596 = vadd.f32 %v5327, %v5595
      %v5597 = vpop.f32.mrb[0].mxu0
      %v5598 = vpop.f32.mrb[0].mxu0
      %v5599 = vadd.f32 %v5327, %v5598
      %v5600 = vpop.f32.mrb[0].mxu0
      %5601 = vmatprep.mubr.bf16.mxu0 0
      %5602 = vmatmul.mubr.bf16.gmra.mrb[0].mxu0 %v5258
      %v5603 = vpop.f32.mrb[0].mxu0
      %v5604 = vadd.f32 %v5327, %v5603
      %v5605 = vpop.f32.mrb[0].mxu0
      %v5606 = vpop.f32.mrb[0].mxu0
      %v5607 = vadd.f32 %v5327, %v5606
      %v5608 = vpop.f32.mrb[0].mxu0
      %5609 = vmatprep.mubr.bf16.mxu0 0
      %5610 = vmatmul.mubr.bf16.gmra.mrb[0].mxu0 %v5259
      %v5611 = vpop.f32.mrb[0].mxu0
      %v5612 = vadd.f32 %v5327, %v5611
      %v5613 = vpop.f32.mrb[0].mxu0
      %v5614 = vpop.f32.mrb[0].mxu0
      %v5615 = vadd.f32 %v5327, %v5614
      %v5616 = vpop.f32.mrb[0].mxu0
      %5617 = vmatprep.mubr.bf16.mxu0 0
      %5618 = vmatmul.mubr.bf16.gmra.mrb[0].mxu0 %v5260
      %v5619 = vpop.f32.mrb[0].mxu0
      %v5620 = vadd.f32 %v5327, %v5619
      %v5621 = vpop.f32.mrb[0].mxu0
      %v5622 = vpop.f32.mrb[0].mxu0
      %v5623 = vadd.f32 %v5327, %v5622
      %v5624 = vpop.f32.mrb[0].mxu0
      %5625 = vmatprep.mubr.bf16.mxu0 0
      %5626 = vmatmul.mubr.bf16.gmra.mrb[0].mxu0 %v5261
      %v5627 = vpop.f32.mrb[0].mxu0
      %v5628 = vadd.f32 %v5327, %v5627
      %v5629 = vpop.f32.mrb[0].mxu0
      %v5630 = vpop.f32.mrb[0].mxu0
      %v5631 = vadd.f32 %v5327, %v5630
      %v5632 = vpop.f32.mrb[0].mxu0
      %5633 = vmatprep.mubr.bf16.mxu0 0
      %5634 = vmatmul.mubr.bf16.gmra.mrb[0].mxu0 %v5262
      %v5635 = vpop.f32.mrb[0].mxu0
      %v5636 = vadd.f32 %v5327, %v5635
      %v5637 = vpop.f32.mrb[0].mxu0
      %v5638 = vpop.f32.mrb[0].mxu0
      %v5639 = vadd.f32 %v5327, %v5638
      %v5640 = vpop.f32.mrb[0].mxu0
      %5641 = vmatprep.mubr.bf16.mxu0 0
      %5642 = vmatmul.mubr.bf16.gmra.mrb[0].mxu0 %v5263
      %v5643 = vpop.f32.mrb[0].mxu0
      %v5644 = vadd.f32 %v5327, %v5643
      %v5645 = vpop.f32.mrb[0].mxu0
      %v5646 = vpop.f32.mrb[0].mxu0
      %v5647 = vadd.f32 %v5327, %v5646
      %v5648 = vpop.f32.mrb[0].mxu0
      %5649 = vmatprep.mubr.bf16.mxu0 0
      %5650 = vmatmul.mubr.bf16.gmra.mrb[0].mxu0 %v5264
      %v5651 = vpop.f32.mrb[0].mxu0
      %v5652 = vadd.f32 %v5327, %v5651
      %v5653 = vpop.f32.mrb[0].mxu0
      %v5654 = vpop.f32.mrb[0].mxu0
      %v5655 = vadd.f32 %v5327, %v5654
      %v5656 = vpop.f32.mrb[0].mxu0
      %5657 = vmatprep.mubr.bf16.mxu0 0
      %5658 = vmatmul.mubr.bf16.gmra.mrb[0].mxu0 %v5265
      %v5659 = vpop.f32.mrb[0].mxu0
      %v5660 = vadd.f32 %v5327, %v5659
      %v5661 = vpop.f32.mrb[0].mxu0
      %v5662 = vpop.f32.mrb[0].mxu0
      %v5663 = vadd.f32 %v5327, %v5662
      %v5664 = vpop.f32.mrb[0].mxu0
      %5665 = vmatprep.mubr.bf16.mxu0 0
      %5666 = vmatmul.mubr.bf16.gmra.mrb[0].mxu0 %v5266
      %v5667 = vpop.f32.mrb[0].mxu0
      %v5668 = vadd.f32 %v5327, %v5667
      %v5669 = vpop.f32.mrb[0].mxu0
      %v5670 = vpop.f32.mrb[0].mxu0
      %v5671 = vadd.f32 %v5327, %v5670
      %v5672 = vpop.f32.mrb[0].mxu0
      %5673 = vmatprep.mubr.bf16.mxu0 0
      %5674 = vmatmul.mubr.bf16.gmra.mrb[0].mxu0 %v5267
      %v5675 = vpop.f32.mrb[0].mxu0
      %v5676 = vadd.f32 %v5327, %v5675
      %v5677 = vpop.f32.mrb[0].mxu0
      %v5678 = vpop.f32.mrb[0].mxu0
      %v5679 = vadd.f32 %v5327, %v5678
      %v5680 = vpop.f32.mrb[0].mxu0
      %5681 = vmatprep.mubr.bf16.mxu0 0
      %5682 = vmatmul.mubr.bf16.gmra.mrb[0].mxu0 %v5268
      %v5683 = vpop.f32.mrb[0].mxu0
      %v5684 = vadd.f32 %v5327, %v5683
      %v5685 = vpop.f32.mrb[0].mxu0
      %v5686 = vpop.f32.mrb[0].mxu0
      %v5687 = vadd.f32 %v5327, %v5686
      %v5688 = vpop.f32.mrb[0].mxu0
      %5689 = vmatprep.mubr.bf16.mxu0 0
      %5690 = vmatmul.mubr.bf16.gmra.mrb[0].mxu0 %v5269
      %v5691 = vpop.f32.mrb[0].mxu0
      %v5692 = vadd.f32 %v5327, %v5691
      %v5693 = vpop.f32.mrb[0].mxu0
      %v5694 = vpop.f32.mrb[0].mxu0
      %v5695 = vadd.f32 %v5327, %v5694
      %v5696 = vpop.f32.mrb[0].mxu0
      %5697 = vmatprep.mubr.bf16.mxu0 0
      %5698 = vmatmul.mubr.bf16.gmra.mrb[0].mxu0 %v5270
      %v5699 = vpop.f32.mrb[0].mxu0
      %v5700 = vadd.f32 %v5327, %v5699
      %v5701 = vpop.f32.mrb[0].mxu0
      %v5702 = vpop.f32.mrb[0].mxu0
      %v5703 = vadd.f32 %v5327, %v5702
      %v5704 = vpop.f32.mrb[0].mxu0
      %5705 = vmatprep.mubr.bf16.mxu0 0
      %5706 = vmatmul.mubr.bf16.gmra.mrb[0].mxu0 %v5271
      %v5707 = vpop.f32.mrb[0].mxu0
      %v5708 = vadd.f32 %v5327, %v5707
      %v5709 = vpop.f32.mrb[0].mxu0
      %v5710 = vpop.f32.mrb[0].mxu0
      %v5711 = vadd.f32 %v5327, %v5710
      %v5712 = vpop.f32.mrb[0].mxu0
      %5713 = vmatprep.mubr.bf16.mxu0 0
      %5714 = vmatmul.mubr.bf16.gmra.mrb[0].mxu0 %v5272
      %v5715 = vpop.f32.mrb[0].mxu0
      %v5716 = vadd.f32 %v5327, %v5715
      %v5717 = vpop.f32.mrb[0].mxu0
      %v5718 = vpop.f32.mrb[0].mxu0
      %v5719 = vadd.f32 %v5327, %v5718
      %v5720 = vpop.f32.mrb[0].mxu0
      %5721 = vmatprep.mubr.bf16.mxu0 0
      %5722 = vmatmul.mubr.bf16.gmra.mrb[0].mxu0 %v5273
      %v5723 = vpop.f32.mrb[0].mxu0
      %v5724 = vadd.f32 %v5327, %v5723
      %v5725 = vpop.f32.mrb[0].mxu0
      %v5726 = vpop.f32.mrb[0].mxu0
      %v5727 = vadd.f32 %v5327, %v5726
      %v5728 = vpop.f32.mrb[0].mxu0
      %5729 = vmatprep.mubr.bf16.mxu0 0
      %5730 = vmatmul.mubr.bf16.gmra.mrb[0].mxu0 %v5274
      %v5731 = vpop.f32.mrb[0].mxu0
      %v5732 = vadd.f32 %v5327, %v5731
      %v5733 = vpop.f32.mrb[0].mxu0
      %v5734 = vpop.f32.mrb[0].mxu0
      %v5735 = vadd.f32 %v5327, %v5734
      %v5736 = vpop.f32.mrb[0].mxu0
      %5737 = vmatprep.mubr.bf16.mxu0 0
      %5738 = vmatmul.mubr.bf16.gmra.mrb[0].mxu0 %v5275
      %v5739 = vpop.f32.mrb[0].mxu0
      %v5740 = vadd.f32 %v5327, %v5739
      %v5741 = vpop.f32.mrb[0].mxu0
      %v5742 = vpop.f32.mrb[0].mxu0
      %v5743 = vadd.f32 %v5327, %v5742
      %v5744 = vpop.f32.mrb[0].mxu0
      %5745 = vmatprep.mubr.bf16.mxu0 0
      %5746 = vmatmul.mubr.bf16.gmra.mrb[0].mxu0 %v5276
      %v5747 = vpop.f32.mrb[0].mxu0
      %v5748 = vadd.f32 %v5327, %v5747
      %v5749 = vpop.f32.mrb[0].mxu0
      %v5750 = vpop.f32.mrb[0].mxu0
      %v5751 = vadd.f32 %v5327, %v5750
      %v5752 = vpop.f32.mrb[0].mxu0
      %5753 = vmatprep.mubr.bf16.mxu0 0
      %5754 = vmatmul.mubr.bf16.gmra.mrb[0].mxu0 %v5277
      %v5755 = vpop.f32.mrb[0].mxu0
      %v5756 = vadd.f32 %v5327, %v5755
      %v5757 = vpop.f32.mrb[0].mxu0
      %v5758 = vpop.f32.mrb[0].mxu0
      %v5759 = vadd.f32 %v5327, %v5758
      %v5760 = vpop.f32.mrb[0].mxu0
      %5761 = vmatprep.mubr.bf16.mxu0 0
      %5762 = vmatmul.mubr.bf16.gmra.mrb[0].mxu0 %v5278
      %v5763 = vpop.f32.mrb[0].mxu0
      %v5764 = vadd.f32 %v5327, %v5763
      %v5765 = vpop.f32.mrb[0].mxu0
      %v5766 = vpop.f32.mrb[0].mxu0
      %v5767 = vadd.f32 %v5327, %v5766
      %v5768 = vpop.f32.mrb[0].mxu0
      %5769 = vmatprep.mubr.bf16.mxu0 0
      %5770 = vmatmul.mubr.bf16.gmra.mrb[0].mxu0 %v5279
      %v5771 = vpop.f32.mrb[0].mxu0
      %v5772 = vadd.f32 %v5327, %v5771
      %v5773 = vpop.f32.mrb[0].mxu0
      %v5774 = vpop.f32.mrb[0].mxu0
      %v5775 = vadd.f32 %v5327, %v5774
      %v5776 = vpop.f32.mrb[0].mxu0
      %5777 = vmatprep.mubr.bf16.mxu0 0
      %5778 = vmatmul.mubr.bf16.gmra.mrb[0].mxu0 %v5280
      %v5779 = vpop.f32.mrb[0].mxu0
      %v5780 = vadd.f32 %v5327, %v5779
      %v5781 = vpop.f32.mrb[0].mxu0
      %v5782 = vpop.f32.mrb[0].mxu0
      %v5783 = vadd.f32 %v5327, %v5782
      %v5784 = vpop.f32.mrb[0].mxu0
      %5785 = vmatprep.mubr.bf16.mxu0 0
      %5786 = vmatmul.mubr.bf16.gmra.mrb[0].mxu0 %v5281
      %v5787 = vpop.f32.mrb[0].mxu0
      %v5788 = vadd.f32 %v5327, %v5787
      %v5789 = vpop.f32.mrb[0].mxu0
      %v5790 = vpop.f32.mrb[0].mxu0
      %v5791 = vadd.f32 %v5327, %v5790
      %v5792 = vpop.f32.mrb[0].mxu0
      %5793 = vmatprep.mubr.bf16.mxu0 0
      %5794 = vmatmul.mubr.bf16.gmra.mrb[0].mxu0 %v5282
      %v5795 = vpop.f32.mrb[0].mxu0
      %v5796 = vadd.f32 %v5327, %v5795
      %v5797 = vpop.f32.mrb[0].mxu0
      %v5798 = vpop.f32.mrb[0].mxu0
      %v5799 = vadd.f32 %v5327, %v5798
      %v5800 = vpop.f32.mrb[0].mxu0
      %5801 = vmatprep.mubr.bf16.mxu0 0
      %5802 = vmatmul.mubr.bf16.gmra.mrb[0].mxu0 %v5283
      %v5803 = vpop.f32.mrb[0].mxu0
      %v5804 = vadd.f32 %v5327, %v5803
      %v5805 = vpop.f32.mrb[0].mxu0
      %v5806 = vpop.f32.mrb[0].mxu0
      %v5807 = vadd.f32 %v5327, %v5806
      %v5808 = vpop.f32.mrb[0].mxu0
      %5809 = vmatprep.mubr.bf16.mxu0 0
      %5810 = vmatmul.mubr.bf16.gmra.mrb[0].mxu0 %v5284
      %v5811 = vpop.f32.mrb[0].mxu0
      %v5812 = vadd.f32 %v5327, %v5811
      %v5813 = vpop.f32.mrb[0].mxu0
      %v5814 = vpop.f32.mrb[0].mxu0
      %v5815 = vadd.f32 %v5327, %v5814
      %v5816 = vpop.f32.mrb[0].mxu0
      %5817 = vmatprep.mubr.bf16.mxu0 0
      %5818 = vmatmul.mubr.bf16.gmra.mrb[0].mxu0 %v5285
      %v5819 = vpop.f32.mrb[0].mxu0
      %v5820 = vadd.f32 %v5327, %v5819
      %v5821 = vpop.f32.mrb[0].mxu0
      %v5822 = vpop.f32.mrb[0].mxu0
      %v5823 = vadd.f32 %v5327, %v5822
      %v5824 = vpop.f32.mrb[0].mxu0
      %5825 = vmatprep.mubr.bf16.mxu0 0
      %5826 = vmatmul.mubr.bf16.gmra.mrb[0].mxu0 %v5286
      %v5827 = vpop.f32.mrb[0].mxu0
      %v5828 = vadd.f32 %v5327, %v5827
      %v5829 = vpop.f32.mrb[0].mxu0
      %v5830 = vpop.f32.mrb[0].mxu0
      %v5831 = vadd.f32 %v5327, %v5830
      %v5832 = vpop.f32.mrb[0].mxu0
      %5833 = vmatprep.mubr.bf16.mxu0 0
      %5834 = vmatmul.mubr.bf16.gmra.mrb[0].mxu0 %v5287
      %v5835 = vpop.f32.mrb[0].mxu0
      %v5836 = vadd.f32 %v5327, %v5835
      %v5837 = vpop.f32.mrb[0].mxu0
      %v5838 = vpop.f32.mrb[0].mxu0
      %v5839 = vadd.f32 %v5327, %v5838
      %v5840 = vpop.f32.mrb[0].mxu0
      %5841 = vmatprep.mubr.bf16.mxu0 0
      %5842 = vmatmul.mubr.bf16.gmra.mrb[0].mxu0 %v5288
      %v5843 = vpop.f32.mrb[0].mxu0
      %v5844 = vadd.f32 %v5327, %v5843
      %v5845 = vpop.f32.mrb[0].mxu0
      %v5846 = vpop.f32.mrb[0].mxu0
      %v5847 = vadd.f32 %v5327, %v5846
      %v5848 = vpop.f32.mrb[0].mxu0
      %5849 = vmatprep.mubr.bf16.mxu0 0
      %5850 = vmatmul.mubr.bf16.gmra.mrb[0].mxu0 %v5289
      %v5851 = vpop.f32.mrb[0].mxu0
      %v5852 = vadd.f32 %v5327, %v5851
      %v5853 = vpop.f32.mrb[0].mxu0
      %v5854 = vpop.f32.mrb[0].mxu0
      %v5855 = vadd.f32 %v5327, %v5854
      %v5856 = vpop.f32.mrb[0].mxu0
      %5857 = vmatprep.mubr.bf16.mxu0 0
      %5858 = vmatmul.mubr.bf16.gmra.mrb[0].mxu0 %v5290
      %v5859 = vpop.f32.mrb[0].mxu0
      %v5860 = vadd.f32 %v5327, %v5859
      %v5861 = vpop.f32.mrb[0].mxu0
      %v5862 = vpop.f32.mrb[0].mxu0
      %v5863 = vadd.f32 %v5327, %v5862
      %v5864 = vpop.f32.mrb[0].mxu0
      %5865 = vmatprep.mubr.bf16.mxu0 0
      %5866 = vmatmul.mubr.bf16.gmra.mrb[0].mxu0 %v5291
      %v5867 = vpop.f32.mrb[0].mxu0
      %v5868 = vadd.f32 %v5327, %v5867
      %v5869 = vpop.f32.mrb[0].mxu0
      %v5870 = vpop.f32.mrb[0].mxu0
      %v5871 = vadd.f32 %v5327, %v5870
      %v5872 = vpop.f32.mrb[0].mxu0
      %5873 = vmatprep.mubr.bf16.mxu0 0
      %5874 = vmatmul.mubr.bf16.gmra.mrb[0].mxu0 %v5292
      %v5875 = vpop.f32.mrb[0].mxu0
      %v5876 = vadd.f32 %v5327, %v5875
      %v5877 = vpop.f32.mrb[0].mxu0
      %v5878 = vpop.f32.mrb[0].mxu0
      %v5879 = vadd.f32 %v5327, %v5878
      %v5880 = vpop.f32.mrb[0].mxu0
      %5881 = vmatprep.mubr.bf16.mxu0 0
      %5882 = vmatmul.mubr.bf16.gmra.mrb[0].mxu0 %v5293
      %v5883 = vpop.f32.mrb[0].mxu0
      %v5884 = vadd.f32 %v5327, %v5883
      %v5885 = vpop.f32.mrb[0].mxu0
      %v5886 = vpop.f32.mrb[0].mxu0
      %v5887 = vadd.f32 %v5327, %v5886
      %v5888 = vpop.f32.mrb[0].mxu0
      %5889 = vmatprep.mubr.bf16.mxu0 0
      %5890 = vmatmul.mubr.bf16.gmra.mrb[0].mxu0 %v5294
      %v5891 = vpop.f32.mrb[0].mxu0
      %v5892 = vadd.f32 %v5327, %v5891
      %v5893 = vpop.f32.mrb[0].mxu0
      %v5894 = vpop.f32.mrb[0].mxu0
      %v5895 = vadd.f32 %v5327, %v5894
      %v5896 = vpop.f32.mrb[0].mxu0
      %5897 = vmatprep.mubr.bf16.mxu0 0
      %5898 = vmatmul.mubr.bf16.gmra.mrb[0].mxu0 %v5295
      %v5899 = vpop.f32.mrb[0].mxu0
      %v5900 = vadd.f32 %v5327, %v5899
      %v5901 = vpop.f32.mrb[0].mxu0
      %v5902 = vpop.f32.mrb[0].mxu0
      %v5903 = vadd.f32 %v5327, %v5902
      %v5904 = vpop.f32.mrb[0].mxu0
      %5905 = vmatprep.mubr.bf16.mxu0 0
      %5906 = vmatmul.mubr.bf16.gmra.mrb[0].mxu0 %v5296
      %v5907 = vpop.f32.mrb[0].mxu0
      %v5908 = vadd.f32 %v5327, %v5907
      %v5909 = vpop.f32.mrb[0].mxu0
      %v5910 = vpop.f32.mrb[0].mxu0
      %v5911 = vadd.f32 %v5327, %v5910
      %v5912 = vpop.f32.mrb[0].mxu0
      %5913 = vmatprep.mubr.bf16.mxu0 0
      %5914 = vmatmul.mubr.bf16.gmra.mrb[0].mxu0 %v5297
      %v5915 = vpop.f32.mrb[0].mxu0
      %v5916 = vadd.f32 %v5327, %v5915
      %v5917 = vpop.f32.mrb[0].mxu0
      %v5918 = vpop.f32.mrb[0].mxu0
      %v5919 = vadd.f32 %v5327, %v5918
      %v5920 = vpop.f32.mrb[0].mxu0
      %5921 = vmatprep.mubr.bf16.mxu0 0
      %5922 = vmatmul.mubr.bf16.gmra.mrb[0].mxu0 %v5298
      %v5923 = vpop.f32.mrb[0].mxu0
      %v5924 = vadd.f32 %v5327, %v5923
      %v5925 = vpop.f32.mrb[0].mxu0
      %v5926 = vpop.f32.mrb[0].mxu0
      %v5927 = vadd.f32 %v5327, %v5926
      %v5928 = vpop.f32.mrb[0].mxu0
      %5929 = vmatprep.mubr.bf16.mxu0 0
      %5930 = vmatmul.mubr.bf16.gmra.mrb[0].mxu0 %v5299
      %v5931 = vpop.f32.mrb[0].mxu0
      %v5932 = vadd.f32 %v5327, %v5931
      %v5933 = vpop.f32.mrb[0].mxu0
      %v5934 = vpop.f32.mrb[0].mxu0
      %v5935 = vadd.f32 %v5327, %v5934
      %v5936 = vpop.f32.mrb[0].mxu0
      %5937 = vmatprep.mubr.bf16.mxu0 0
      %5938 = vmatmul.mubr.bf16.gmra.mrb[0].mxu0 %v5300
      %v5939 = vpop.f32.mrb[0].mxu0
      %v5940 = vadd.f32 %v5327, %v5939
      %v5941 = vpop.f32.mrb[0].mxu0
      %v5942 = vpop.f32.mrb[0].mxu0
      %v5943 = vadd.f32 %v5327, %v5942
      %v5944 = vpop.f32.mrb[0].mxu0
      %5945 = vmatprep.mubr.bf16.mxu0 0
      %5946 = vmatmul.mubr.bf16.gmra.mrb[0].mxu0 %v5301
      %v5947 = vpop.f32.mrb[0].mxu0
      %v5948 = vadd.f32 %v5327, %v5947
      %v5949 = vpop.f32.mrb[0].mxu0
      %v5950 = vpop.f32.mrb[0].mxu0
      %v5951 = vadd.f32 %v5327, %v5950
      %v5952 = vpop.f32.mrb[0].mxu0
      %5953 = vmatprep.mubr.bf16.mxu0 0
      %5954 = vmatmul.mubr.bf16.gmra.mrb[0].mxu0 %v5302
      %v5955 = vpop.f32.mrb[0].mxu0
      %v5956 = vadd.f32 %v5327, %v5955
      %v5957 = vpop.f32.mrb[0].mxu0
      %v5958 = vpop.f32.mrb[0].mxu0
      %v5959 = vadd.f32 %v5327, %v5958
      %v5960 = vpop.f32.mrb[0].mxu0
      %5961 = vmatprep.mubr.bf16.mxu0 0
      %5962 = vmatmul.mubr.bf16.gmra.mrb[0].mxu0 %v5303
      %v5963 = vpop.f32.mrb[0].mxu0
      %v5964 = vadd.f32 %v5327, %v5963
      %v5965 = vpop.f32.mrb[0].mxu0
      %v5966 = vpop.f32.mrb[0].mxu0
      %v5967 = vadd.f32 %v5327, %v5966
      %v5968 = vpop.f32.mrb[0].mxu0
      %5969 = vmatprep.mubr.bf16.mxu0 0
      %5970 = vmatmul.mubr.bf16.gmra.mrb[0].mxu0 %v5304
      %v5971 = vpop.f32.mrb[0].mxu0
      %v5972 = vadd.f32 %v5327, %v5971
      %v5973 = vpop.f32.mrb[0].mxu0
      %v5974 = vpop.f32.mrb[0].mxu0
      %v5975 = vadd.f32 %v5327, %v5974
      %v5976 = vpop.f32.mrb[0].mxu0
      %5977 = vmatprep.mubr.bf16.mxu0 0
      %5978 = vmatmul.mubr.bf16.gmra.mrb[0].mxu0 %v5305
      %v5979 = vpop.f32.mrb[0].mxu0
      %v5980 = vadd.f32 %v5327, %v5979
      %v5981 = vpop.f32.mrb[0].mxu0
      %v5982 = vpop.f32.mrb[0].mxu0
      %v5983 = vadd.f32 %v5327, %v5982
      %v5984 = vpop.f32.mrb[0].mxu0
      %5985 = vdwg.mxu0
      %v5986 = vadd.f32 %v4194, %v5412
      %v5987 = vadd.f32 %v4195, %v5415
      %v5988 = vadd.f32 %v4196, %v5420
      %v5989 = vadd.f32 %v4197, %v5423
      %v5990 = vadd.f32 %v4198, %v5428
      %v5991 = vadd.f32 %v4199, %v5431
      %v5992 = vadd.f32 %v4200, %v5436
      %v5993 = vadd.f32 %v4201, %v5439
      %v5994 = vadd.f32 %v4202, %v5444
      %v5995 = vadd.f32 %v4203, %v5447
      %v5996 = vadd.f32 %v4204, %v5452
      %v5997 = vadd.f32 %v4205, %v5455
      %v5998 = vadd.f32 %v4206, %v5460
      %v5999 = vadd.f32 %v4207, %v5463
      %v6000 = vadd.f32 %v4208, %v5468
      %v6001 = vadd.f32 %v4209, %v5471
      %v6002 = vadd.f32 %v4210, %v5476
      %v6003 = vadd.f32 %v4211, %v5479
      %v6004 = vadd.f32 %v4212, %v5484
      %v6005 = vadd.f32 %v4213, %v5487
      %v6006 = vadd.f32 %v4214, %v5492
      %v6007 = vadd.f32 %v4215, %v5495
      %v6008 = vadd.f32 %v4216, %v5500
      %v6009 = vadd.f32 %v4217, %v5503
      %v6010 = vadd.f32 %v4218, %v5508
      %v6011 = vadd.f32 %v4219, %v5511
      %v6012 = vadd.f32 %v4220, %v5516
      %v6013 = vadd.f32 %v4221, %v5519
      %v6014 = vadd.f32 %v4222, %v5524
      %v6015 = vadd.f32 %v4223, %v5527
      %v6016 = vadd.f32 %v4224, %v5532
      %v6017 = vadd.f32 %v4225, %v5535
      %v6018 = vadd.f32 %v4226, %v5540
      %v6019 = vadd.f32 %v4227, %v5543
      %v6020 = vadd.f32 %v4228, %v5548
      %v6021 = vadd.f32 %v4229, %v5551
      %v6022 = vadd.f32 %v4230, %v5556
      %v6023 = vadd.f32 %v4231, %v5559
      %v6024 = vadd.f32 %v4232, %v5564
      %v6025 = vadd.f32 %v4233, %v5567
      %v6026 = vadd.f32 %v4234, %v5572
      %v6027 = vadd.f32 %v4235, %v5575
      %v6028 = vadd.f32 %v4236, %v5580
      %v6029 = vadd.f32 %v4237, %v5583
      %v6030 = vadd.f32 %v4238, %v5588
      %v6031 = vadd.f32 %v4239, %v5591
      %v6032 = vadd.f32 %v4240, %v5596
      %v6033 = vadd.f32 %v4241, %v5599
      %v6034 = vadd.f32 %v4242, %v5604
      %v6035 = vadd.f32 %v4243, %v5607
      %v6036 = vadd.f32 %v4244, %v5612
      %v6037 = vadd.f32 %v4245, %v5615
      %v6038 = vadd.f32 %v4246, %v5620
      %v6039 = vadd.f32 %v4247, %v5623
      %v6040 = vadd.f32 %v4248, %v5628
      %v6041 = vadd.f32 %v4249, %v5631
      %v6042 = vadd.f32 %v4250, %v5636
      %v6043 = vadd.f32 %v4251, %v5639
      %v6044 = vadd.f32 %v4252, %v5644
      %v6045 = vadd.f32 %v4253, %v5647
      %v6046 = vadd.f32 %v4254, %v5652
      %v6047 = vadd.f32 %v4255, %v5655
      %v6048 = vadd.f32 %v4256, %v5660
      %v6049 = vadd.f32 %v4257, %v5663
      %v6050 = vadd.f32 %v4258, %v5668
      %v6051 = vadd.f32 %v4259, %v5671
      %v6052 = vadd.f32 %v4260, %v5676
      %v6053 = vadd.f32 %v4261, %v5679
      %v6054 = vadd.f32 %v4262, %v5684
      %v6055 = vadd.f32 %v4263, %v5687
      %v6056 = vadd.f32 %v4264, %v5692
      %v6057 = vadd.f32 %v4265, %v5695
      %v6058 = vadd.f32 %v4266, %v5700
      %v6059 = vadd.f32 %v4267, %v5703
      %v6060 = vadd.f32 %v4268, %v5708
      %v6061 = vadd.f32 %v4269, %v5711
      %v6062 = vadd.f32 %v4270, %v5716
      %v6063 = vadd.f32 %v4271, %v5719
      %v6064 = vadd.f32 %v4272, %v5724
      %v6065 = vadd.f32 %v4273, %v5727
      %v6066 = vadd.f32 %v4274, %v5732
      %v6067 = vadd.f32 %v4275, %v5735
      %v6068 = vadd.f32 %v4276, %v5740
      %v6069 = vadd.f32 %v4277, %v5743
      %v6070 = vadd.f32 %v4278, %v5748
      %v6071 = vadd.f32 %v4279, %v5751
      %v6072 = vadd.f32 %v4280, %v5756
      %v6073 = vadd.f32 %v4281, %v5759
      %v6074 = vadd.f32 %v4282, %v5764
      %v6075 = vadd.f32 %v4283, %v5767
      %v6076 = vadd.f32 %v4284, %v5772
      %v6077 = vadd.f32 %v4285, %v5775
      %v6078 = vadd.f32 %v4286, %v5780
      %v6079 = vadd.f32 %v4287, %v5783
      %v6080 = vadd.f32 %v4288, %v5788
      %v6081 = vadd.f32 %v4289, %v5791
      %v6082 = vadd.f32 %v4290, %v5796
      %v6083 = vadd.f32 %v4291, %v5799
      %v6084 = vadd.f32 %v4292, %v5804
      %v6085 = vadd.f32 %v4293, %v5807
      %v6086 = vadd.f32 %v4294, %v5812
      %v6087 = vadd.f32 %v4295, %v5815
      %v6088 = vadd.f32 %v4296, %v5820
      %v6089 = vadd.f32 %v4297, %v5823
      %v6090 = vadd.f32 %v4298, %v5828
      %v6091 = vadd.f32 %v4299, %v5831
      %v6092 = vadd.f32 %v4300, %v5836
      %v6093 = vadd.f32 %v4301, %v5839
      %v6094 = vadd.f32 %v4302, %v5844
      %v6095 = vadd.f32 %v4303, %v5847
      %v6096 = vadd.f32 %v4304, %v5852
      %v6097 = vadd.f32 %v4305, %v5855
      %v6098 = vadd.f32 %v4306, %v5860
      %v6099 = vadd.f32 %v4307, %v5863
      %v6100 = vadd.f32 %v4308, %v5868
      %v6101 = vadd.f32 %v4309, %v5871
      %v6102 = vadd.f32 %v4310, %v5876
      %v6103 = vadd.f32 %v4311, %v5879
      %v6104 = vadd.f32 %v4312, %v5884
      %v6105 = vadd.f32 %v4313, %v5887
      %v6106 = vadd.f32 %v4314, %v5892
      %v6107 = vadd.f32 %v4315, %v5895
      %v6108 = vadd.f32 %v4316, %v5900
      %v6109 = vadd.f32 %v4317, %v5903
      %v6110 = vadd.f32 %v4318, %v5908
      %v6111 = vadd.f32 %v4319, %v5911
      %v6112 = vadd.f32 %v4320, %v5916
      %v6113 = vadd.f32 %v4321, %v5919
      %v6114 = vadd.f32 %v4322, %v5924
      %v6115 = vadd.f32 %v4323, %v5927
      %v6116 = vadd.f32 %v4324, %v5932
      %v6117 = vadd.f32 %v4325, %v5935
      %v6118 = vadd.f32 %v4326, %v5940
      %v6119 = vadd.f32 %v4327, %v5943
      %v6120 = vadd.f32 %v4328, %v5948
      %v6121 = vadd.f32 %v4329, %v5951
      %v6122 = vadd.f32 %v4330, %v5956
      %v6123 = vadd.f32 %v4331, %v5959
      %v6124 = vadd.f32 %v4332, %v5964
      %v6125 = vadd.f32 %v4333, %v5967
      %v6126 = vadd.f32 %v4334, %v5972
      %v6127 = vadd.f32 %v4335, %v5975
      %v6128 = vadd.f32 %v4336, %v5980
      %v6129 = vadd.f32 %v4337, %v5983
      %v6130 = vld [vmem:[%s5] sm:$0x1]
      %v6131 = vld [vmem:[%s6] sm:$0x1]
      %6132 = vadd.xlane.f32.xlu0 %v5986
      %v6133 = vpop.xlane.xlu0 %6132
      %6134 = vadd.xlane.f32.xlu0 %v5987
      %v6135 = vpop.xlane.xlu0 %6134
      %6136 = vadd.xlane.f32.xlu0 %v5988
      %v6137 = vpop.xlane.xlu0 %6136
      %6138 = vadd.xlane.f32.xlu0 %v5989
      %v6139 = vpop.xlane.xlu0 %6138
      %6140 = vadd.xlane.f32.xlu0 %v5990
      %v6141 = vpop.xlane.xlu0 %6140
      %6142 = vadd.xlane.f32.xlu0 %v5991
      %v6143 = vpop.xlane.xlu0 %6142
      %6144 = vadd.xlane.f32.xlu0 %v5992
      %v6145 = vpop.xlane.xlu0 %6144
      %6146 = vadd.xlane.f32.xlu0 %v5993
      %v6147 = vpop.xlane.xlu0 %6146
      %6148 = vadd.xlane.f32.xlu0 %v5994
      %v6149 = vpop.xlane.xlu0 %6148
      %6150 = vadd.xlane.f32.xlu0 %v5995
      %v6151 = vpop.xlane.xlu0 %6150
      %6152 = vadd.xlane.f32.xlu0 %v5996
      %v6153 = vpop.xlane.xlu0 %6152
      %6154 = vadd.xlane.f32.xlu0 %v5997
      %v6155 = vpop.xlane.xlu0 %6154
      %6156 = vadd.xlane.f32.xlu0 %v5998
      %v6157 = vpop.xlane.xlu0 %6156
      %6158 = vadd.xlane.f32.xlu0 %v5999
      %v6159 = vpop.xlane.xlu0 %6158
      %6160 = vadd.xlane.f32.xlu0 %v6000
      %v6161 = vpop.xlane.xlu0 %6160
      %6162 = vadd.xlane.f32.xlu0 %v6001
      %v6163 = vpop.xlane.xlu0 %6162
      %6164 = vadd.xlane.f32.xlu0 %v6002
      %v6165 = vpop.xlane.xlu0 %6164
      %6166 = vadd.xlane.f32.xlu0 %v6003
      %v6167 = vpop.xlane.xlu0 %6166
      %6168 = vadd.xlane.f32.xlu0 %v6004
      %v6169 = vpop.xlane.xlu0 %6168
      %6170 = vadd.xlane.f32.xlu0 %v6005
      %v6171 = vpop.xlane.xlu0 %6170
      %6172 = vadd.xlane.f32.xlu0 %v6006
      %v6173 = vpop.xlane.xlu0 %6172
      %6174 = vadd.xlane.f32.xlu0 %v6007
      %v6175 = vpop.xlane.xlu0 %6174
      %6176 = vadd.xlane.f32.xlu0 %v6008
      %v6177 = vpop.xlane.xlu0 %6176
      %6178 = vadd.xlane.f32.xlu0 %v6009
      %v6179 = vpop.xlane.xlu0 %6178
      %6180 = vadd.xlane.f32.xlu0 %v6010
      %v6181 = vpop.xlane.xlu0 %6180
      %6182 = vadd.xlane.f32.xlu0 %v6011
      %v6183 = vpop.xlane.xlu0 %6182
      %6184 = vadd.xlane.f32.xlu0 %v6012
      %v6185 = vpop.xlane.xlu0 %6184
      %6186 = vadd.xlane.f32.xlu0 %v6013
      %v6187 = vpop.xlane.xlu0 %6186
      %6188 = vadd.xlane.f32.xlu0 %v6014
      %v6189 = vpop.xlane.xlu0 %6188
      %6190 = vadd.xlane.f32.xlu0 %v6015
      %v6191 = vpop.xlane.xlu0 %6190
      %6192 = vadd.xlane.f32.xlu0 %v6016
      %v6193 = vpop.xlane.xlu0 %6192
      %6194 = vadd.xlane.f32.xlu0 %v6017
      %v6195 = vpop.xlane.xlu0 %6194
      %6196 = vadd.xlane.f32.xlu0 %v6018
      %v6197 = vpop.xlane.xlu0 %6196
      %6198 = vadd.xlane.f32.xlu0 %v6019
      %v6199 = vpop.xlane.xlu0 %6198
      %6200 = vadd.xlane.f32.xlu0 %v6020
      %v6201 = vpop.xlane.xlu0 %6200
      %6202 = vadd.xlane.f32.xlu0 %v6021
      %v6203 = vpop.xlane.xlu0 %6202
      %6204 = vadd.xlane.f32.xlu0 %v6022
      %v6205 = vpop.xlane.xlu0 %6204
      %6206 = vadd.xlane.f32.xlu0 %v6023
      %v6207 = vpop.xlane.xlu0 %6206
      %6208 = vadd.xlane.f32.xlu0 %v6024
      %v6209 = vpop.xlane.xlu0 %6208
      %6210 = vadd.xlane.f32.xlu0 %v6025
      %v6211 = vpop.xlane.xlu0 %6210
      %6212 = vadd.xlane.f32.xlu0 %v6026
      %v6213 = vpop.xlane.xlu0 %6212
      %6214 = vadd.xlane.f32.xlu0 %v6027
      %v6215 = vpop.xlane.xlu0 %6214
      %6216 = vadd.xlane.f32.xlu0 %v6028
      %v6217 = vpop.xlane.xlu0 %6216
      %6218 = vadd.xlane.f32.xlu0 %v6029
      %v6219 = vpop.xlane.xlu0 %6218
      %6220 = vadd.xlane.f32.xlu0 %v6030
      %v6221 = vpop.xlane.xlu0 %6220
      %6222 = vadd.xlane.f32.xlu0 %v6031
      %v6223 = vpop.xlane.xlu0 %6222
      %6224 = vadd.xlane.f32.xlu0 %v6032
      %v6225 = vpop.xlane.xlu0 %6224
      %6226 = vadd.xlane.f32.xlu0 %v6033
      %v6227 = vpop.xlane.xlu0 %6226
      %6228 = vadd.xlane.f32.xlu0 %v6034
      %v6229 = vpop.xlane.xlu0 %6228
      %6230 = vadd.xlane.f32.xlu0 %v6035
      %v6231 = vpop.xlane.xlu0 %6230
      %6232 = vadd.xlane.f32.xlu0 %v6036
      %v6233 = vpop.xlane.xlu0 %6232
      %6234 = vadd.xlane.f32.xlu0 %v6037
      %v6235 = vpop.xlane.xlu0 %6234
      %6236 = vadd.xlane.f32.xlu0 %v6038
      %v6237 = vpop.xlane.xlu0 %6236
      %6238 = vadd.xlane.f32.xlu0 %v6039
      %v6239 = vpop.xlane.xlu0 %6238
      %6240 = vadd.xlane.f32.xlu0 %v6040
      %v6241 = vpop.xlane.xlu0 %6240
      %6242 = vadd.xlane.f32.xlu0 %v6041
      %v6243 = vpop.xlane.xlu0 %6242
      %6244 = vadd.xlane.f32.xlu0 %v6042
      %v6245 = vpop.xlane.xlu0 %6244
      %6246 = vadd.xlane.f32.xlu0 %v6043
      %v6247 = vpop.xlane.xlu0 %6246
      %6248 = vadd.xlane.f32.xlu0 %v6044
      %v6249 = vpop.xlane.xlu0 %6248
      %6250 = vadd.xlane.f32.xlu0 %v6045
      %v6251 = vpop.xlane.xlu0 %6250
      %6252 = vadd.xlane.f32.xlu0 %v6046
      %v6253 = vpop.xlane.xlu0 %6252
      %6254 = vadd.xlane.f32.xlu0 %v6047
      %v6255 = vpop.xlane.xlu0 %6254
      %6256 = vadd.xlane.f32.xlu0 %v6048
      %v6257 = vpop.xlane.xlu0 %6256
      %6258 = vadd.xlane.f32.xlu0 %v6049
      %v6259 = vpop.xlane.xlu0 %6258
      %6260 = vadd.xlane.f32.xlu0 %v6050
      %v6261 = vpop.xlane.xlu0 %6260
      %6262 = vadd.xlane.f32.xlu0 %v6051
      %v6263 = vpop.xlane.xlu0 %6262
      %6264 = vadd.xlane.f32.xlu0 %v6052
      %v6265 = vpop.xlane.xlu0 %6264
      %6266 = vadd.xlane.f32.xlu0 %v6053
      %v6267 = vpop.xlane.xlu0 %6266
      %6268 = vadd.xlane.f32.xlu0 %v6054
      %v6269 = vpop.xlane.xlu0 %6268
      %6270 = vadd.xlane.f32.xlu0 %v6055
      %v6271 = vpop.xlane.xlu0 %6270
      %6272 = vadd.xlane.f32.xlu0 %v6056
      %v6273 = vpop.xlane.xlu0 %6272
      %6274 = vadd.xlane.f32.xlu0 %v6057
      %v6275 = vpop.xlane.xlu0 %6274
      %6276 = vadd.xlane.f32.xlu0 %v6058
      %v6277 = vpop.xlane.xlu0 %6276
      %6278 = vadd.xlane.f32.xlu0 %v6059
      %v6279 = vpop.xlane.xlu0 %6278
      %6280 = vadd.xlane.f32.xlu0 %v6060
      %v6281 = vpop.xlane.xlu0 %6280
      %6282 = vadd.xlane.f32.xlu0 %v6061
      %v6283 = vpop.xlane.xlu0 %6282
      %6284 = vadd.xlane.f32.xlu0 %v6062
      %v6285 = vpop.xlane.xlu0 %6284
      %6286 = vadd.xlane.f32.xlu0 %v6063
      %v6287 = vpop.xlane.xlu0 %6286
      %6288 = vadd.xlane.f32.xlu0 %v6064
      %v6289 = vpop.xlane.xlu0 %6288
      %6290 = vadd.xlane.f32.xlu0 %v6065
      %v6291 = vpop.xlane.xlu0 %6290
      %6292 = vadd.xlane.f32.xlu0 %v6066
      %v6293 = vpop.xlane.xlu0 %6292
      %6294 = vadd.xlane.f32.xlu0 %v6067
      %v6295 = vpop.xlane.xlu0 %6294
      %6296 = vadd.xlane.f32.xlu0 %v6068
      %v6297 = vpop.xlane.xlu0 %6296
      %6298 = vadd.xlane.f32.xlu0 %v6069
      %v6299 = vpop.xlane.xlu0 %6298
      %6300 = vadd.xlane.f32.xlu0 %v6070
      %v6301 = vpop.xlane.xlu0 %6300
      %6302 = vadd.xlane.f32.xlu0 %v6071
      %v6303 = vpop.xlane.xlu0 %6302
      %6304 = vadd.xlane.f32.xlu0 %v6072
      %v6305 = vpop.xlane.xlu0 %6304
      %6306 = vadd.xlane.f32.xlu0 %v6073
      %v6307 = vpop.xlane.xlu0 %6306
      %6308 = vadd.xlane.f32.xlu0 %v6074
      %v6309 = vpop.xlane.xlu0 %6308
      %6310 = vadd.xlane.f32.xlu0 %v6075
      %v6311 = vpop.xlane.xlu0 %6310
      %6312 = vadd.xlane.f32.xlu0 %v6076
      %v6313 = vpop.xlane.xlu0 %6312
      %6314 = vadd.xlane.f32.xlu0 %v6077
      %v6315 = vpop.xlane.xlu0 %6314
      %6316 = vadd.xlane.f32.xlu0 %v6078
      %v6317 = vpop.xlane.xlu0 %6316
      %6318 = vadd.xlane.f32.xlu0 %v6079
      %v6319 = vpop.xlane.xlu0 %6318
      %6320 = vadd.xlane.f32.xlu0 %v6080
      %v6321 = vpop.xlane.xlu0 %6320
      %6322 = vadd.xlane.f32.xlu0 %v6081
      %v6323 = vpop.xlane.xlu0 %6322
      %6324 = vadd.xlane.f32.xlu0 %v6082
      %v6325 = vpop.xlane.xlu0 %6324
      %6326 = vadd.xlane.f32.xlu0 %v6083
      %v6327 = vpop.xlane.xlu0 %6326
      %6328 = vadd.xlane.f32.xlu0 %v6084
      %v6329 = vpop.xlane.xlu0 %6328
      %6330 = vadd.xlane.f32.xlu0 %v6085
      %v6331 = vpop.xlane.xlu0 %6330
      %6332 = vadd.xlane.f32.xlu0 %v6086
      %v6333 = vpop.xlane.xlu0 %6332
      %6334 = vadd.xlane.f32.xlu0 %v6087
      %v6335 = vpop.xlane.xlu0 %6334
      %6336 = vadd.xlane.f32.xlu0 %v6088
      %v6337 = vpop.xlane.xlu0 %6336
      %6338 = vadd.xlane.f32.xlu0 %v6089
      %v6339 = vpop.xlane.xlu0 %6338
      %6340 = vadd.xlane.f32.xlu0 %v6090
      %v6341 = vpop.xlane.xlu0 %6340
      %6342 = vadd.xlane.f32.xlu0 %v6091
      %v6343 = vpop.xlane.xlu0 %6342
      %6344 = vadd.xlane.f32.xlu0 %v6092
      %v6345 = vpop.xlane.xlu0 %6344
      %6346 = vadd.xlane.f32.xlu0 %v6093
      %v6347 = vpop.xlane.xlu0 %6346
      %6348 = vadd.xlane.f32.xlu0 %v6094
      %v6349 = vpop.xlane.xlu0 %6348
      %6350 = vadd.xlane.f32.xlu0 %v6095
      %v6351 = vpop.xlane.xlu0 %6350
      %6352 = vadd.xlane.f32.xlu0 %v6096
      %v6353 = vpop.xlane.xlu0 %6352
      %6354 = vadd.xlane.f32.xlu0 %v6097
      %v6355 = vpop.xlane.xlu0 %6354
      %6356 = vadd.xlane.f32.xlu0 %v6098
      %v6357 = vpop.xlane.xlu0 %6356
      %6358 = vadd.xlane.f32.xlu0 %v6099
      %v6359 = vpop.xlane.xlu0 %6358
      %6360 = vadd.xlane.f32.xlu0 %v6100
      %v6361 = vpop.xlane.xlu0 %6360
      %6362 = vadd.xlane.f32.xlu0 %v6101
      %v6363 = vpop.xlane.xlu0 %6362
      %6364 = vadd.xlane.f32.xlu0 %v6102
      %v6365 = vpop.xlane.xlu0 %6364
      %6366 = vadd.xlane.f32.xlu0 %v6103
      %v6367 = vpop.xlane.xlu0 %6366
      %6368 = vadd.xlane.f32.xlu0 %v6104
      %v6369 = vpop.xlane.xlu0 %6368
      %6370 = vadd.xlane.f32.xlu0 %v6105
      %v6371 = vpop.xlane.xlu0 %6370
      %6372 = vadd.xlane.f32.xlu0 %v6106
      %v6373 = vpop.xlane.xlu0 %6372
      %6374 = vadd.xlane.f32.xlu0 %v6107
      %v6375 = vpop.xlane.xlu0 %6374
      %6376 = vadd.xlane.f32.xlu0 %v6108
      %v6377 = vpop.xlane.xlu0 %6376
      %6378 = vadd.xlane.f32.xlu0 %v6109
      %v6379 = vpop.xlane.xlu0 %6378
      %6380 = vadd.xlane.f32.xlu0 %v6110
      %v6381 = vpop.xlane.xlu0 %6380
      %6382 = vadd.xlane.f32.xlu0 %v6111
      %v6383 = vpop.xlane.xlu0 %6382
      %6384 = vadd.xlane.f32.xlu0 %v6112
      %v6385 = vpop.xlane.xlu0 %6384
      %6386 = vadd.xlane.f32.xlu0 %v6113
      %v6387 = vpop.xlane.xlu0 %6386
      %6388 = vadd.xlane.f32.xlu0 %v6114
      %v6389 = vpop.xlane.xlu0 %6388
      %6390 = vadd.xlane.f32.xlu0 %v6115
      %v6391 = vpop.xlane.xlu0 %6390
      %6392 = vadd.xlane.f32.xlu0 %v6116
      %v6393 = vpop.xlane.xlu0 %6392
      %6394 = vadd.xlane.f32.xlu0 %v6117
      %v6395 = vpop.xlane.xlu0 %6394
      %6396 = vadd.xlane.f32.xlu0 %v6118
      %v6397 = vpop.xlane.xlu0 %6396
      %6398 = vadd.xlane.f32.xlu0 %v6119
      %v6399 = vpop.xlane.xlu0 %6398
      %6400 = vadd.xlane.f32.xlu0 %v6120
      %v6401 = vpop.xlane.xlu0 %6400
      %6402 = vadd.xlane.f32.xlu0 %v6121
      %v6403 = vpop.xlane.xlu0 %6402
      %6404 = vadd.xlane.f32.xlu0 %v6122
      %v6405 = vpop.xlane.xlu0 %6404
      %6406 = vadd.xlane.f32.xlu0 %v6123
      %v6407 = vpop.xlane.xlu0 %6406
      %6408 = vadd.xlane.f32.xlu0 %v6124
      %v6409 = vpop.xlane.xlu0 %6408
      %6410 = vadd.xlane.f32.xlu0 %v6125
      %v6411 = vpop.xlane.xlu0 %6410
      %6412 = vadd.xlane.f32.xlu0 %v6126
      %v6413 = vpop.xlane.xlu0 %6412
      %6414 = vadd.xlane.f32.xlu0 %v6127
      %v6415 = vpop.xlane.xlu0 %6414
      %6416 = vadd.xlane.f32.xlu0 %v6128
      %v6417 = vpop.xlane.xlu0 %6416
      %6418 = vadd.xlane.f32.xlu0 %v6129
      %v6419 = vpop.xlane.xlu0 %6418
      %v6420 = vmul.f32 %v6133, %v1445
      %v6421 = vmul.f32 %v6135, %v1445
      %v6422 = vmul.f32 %v6137, %v1445
      %v6423 = vmul.f32 %v6139, %v1445
      %v6424 = vmul.f32 %v6141, %v1445
      %v6425 = vmul.f32 %v6143, %v1445
      %v6426 = vmul.f32 %v6145, %v1445
      %v6427 = vmul.f32 %v6147, %v1445
      %v6428 = vmul.f32 %v6149, %v1445
      %v6429 = vmul.f32 %v6151, %v1445
      %v6430 = vmul.f32 %v6153, %v1445
      %v6431 = vmul.f32 %v6155, %v1445
      %v6432 = vmul.f32 %v6157, %v1445
      %v6433 = vmul.f32 %v6159, %v1445
      %v6434 = vmul.f32 %v6161, %v1445
      %v6435 = vmul.f32 %v6163, %v1445
      %v6436 = vmul.f32 %v6165, %v1445
      %v6437 = vmul.f32 %v6167, %v1445
      %v6438 = vmul.f32 %v6169, %v1445
      %v6439 = vmul.f32 %v6171, %v1445
      %v6440 = vmul.f32 %v6173, %v1445
      %v6441 = vmul.f32 %v6175, %v1445
      %v6442 = vmul.f32 %v6177, %v1445
      %v6443 = vmul.f32 %v6179, %v1445
      %v6444 = vmul.f32 %v6181, %v1445
      %v6445 = vmul.f32 %v6183, %v1445
      %v6446 = vmul.f32 %v6185, %v1445
      %v6447 = vmul.f32 %v6187, %v1445
      %v6448 = vmul.f32 %v6189, %v1445
      %v6449 = vmul.f32 %v6191, %v1445
      %v6450 = vmul.f32 %v6193, %v1445
      %v6451 = vmul.f32 %v6195, %v1445
      %v6452 = vmul.f32 %v6197, %v1445
      %v6453 = vmul.f32 %v6199, %v1445
      %v6454 = vmul.f32 %v6201, %v1445
      %v6455 = vmul.f32 %v6203, %v1445
      %v6456 = vmul.f32 %v6205, %v1445
      %v6457 = vmul.f32 %v6207, %v1445
      %v6458 = vmul.f32 %v6209, %v1445
      %v6459 = vmul.f32 %v6211, %v1445
      %v6460 = vmul.f32 %v6213, %v1445
      %v6461 = vmul.f32 %v6215, %v1445
      %v6462 = vmul.f32 %v6217, %v1445
      %v6463 = vmul.f32 %v6219, %v1445
      %v6464 = vmul.f32 %v6221, %v1445
      %v6465 = vmul.f32 %v6223, %v1445
      %v6466 = vmul.f32 %v6225, %v1445
      %v6467 = vmul.f32 %v6227, %v1445
      %v6468 = vmul.f32 %v6229, %v1445
      %v6469 = vmul.f32 %v6231, %v1445
      %v6470 = vmul.f32 %v6233, %v1445
      %v6471 = vmul.f32 %v6235, %v1445
      %v6472 = vmul.f32 %v6237, %v1445
      %v6473 = vmul.f32 %v6239, %v1445
      %v6474 = vmul.f32 %v6241, %v1445
      %v6475 = vmul.f32 %v6243, %v1445
      %v6476 = vmul.f32 %v6245, %v1445
      %v6477 = vmul.f32 %v6247, %v1445
      %v6478 = vmul.f32 %v6249, %v1445
      %v6479 = vmul.f32 %v6251, %v1445
      %v6480 = vmul.f32 %v6253, %v1445
      %v6481 = vmul.f32 %v6255, %v1445
      %v6482 = vmul.f32 %v6257, %v1445
      %v6483 = vmul.f32 %v6259, %v1445
      %v6484 = vmul.f32 %v6261, %v1445
      %v6485 = vmul.f32 %v6263, %v1445
      %v6486 = vmul.f32 %v6265, %v1445
      %v6487 = vmul.f32 %v6267, %v1445
      %v6488 = vmul.f32 %v6269, %v1445
      %v6489 = vmul.f32 %v6271, %v1445
      %v6490 = vmul.f32 %v6273, %v1445
      %v6491 = vmul.f32 %v6275, %v1445
      %v6492 = vmul.f32 %v6277, %v1445
      %v6493 = vmul.f32 %v6279, %v1445
      %v6494 = vmul.f32 %v6281, %v1445
      %v6495 = vmul.f32 %v6283, %v1445
      %v6496 = vmul.f32 %v6285, %v1445
      %v6497 = vmul.f32 %v6287, %v1445
      %v6498 = vmul.f32 %v6289, %v1445
      %v6499 = vmul.f32 %v6291, %v1445
      %v6500 = vmul.f32 %v6293, %v1445
      %v6501 = vmul.f32 %v6295, %v1445
      %v6502 = vmul.f32 %v6297, %v1445
      %v6503 = vmul.f32 %v6299, %v1445
      %v6504 = vmul.f32 %v6301, %v1445
      %v6505 = vmul.f32 %v6303, %v1445
      %v6506 = vmul.f32 %v6305, %v1445
      %v6507 = vmul.f32 %v6307, %v1445
      %v6508 = vmul.f32 %v6309, %v1445
      %v6509 = vmul.f32 %v6311, %v1445
      %v6510 = vmul.f32 %v6313, %v1445
      %v6511 = vmul.f32 %v6315, %v1445
      %v6512 = vmul.f32 %v6317, %v1445
      %v6513 = vmul.f32 %v6319, %v1445
      %v6514 = vmul.f32 %v6321, %v1445
      %v6515 = vmul.f32 %v6323, %v1445
      %v6516 = vmul.f32 %v6325, %v1445
      %v6517 = vmul.f32 %v6327, %v1445
      %v6518 = vmul.f32 %v6329, %v1445
      %v6519 = vmul.f32 %v6331, %v1445
      %v6520 = vmul.f32 %v6333, %v1445
      %v6521 = vmul.f32 %v6335, %v1445
      %v6522 = vmul.f32 %v6337, %v1445
      %v6523 = vmul.f32 %v6339, %v1445
      %v6524 = vmul.f32 %v6341, %v1445
      %v6525 = vmul.f32 %v6343, %v1445
      %v6526 = vmul.f32 %v6345, %v1445
      %v6527 = vmul.f32 %v6347, %v1445
      %v6528 = vmul.f32 %v6349, %v1445
      %v6529 = vmul.f32 %v6351, %v1445
      %v6530 = vmul.f32 %v6353, %v1445
      %v6531 = vmul.f32 %v6355, %v1445
      %v6532 = vmul.f32 %v6357, %v1445
      %v6533 = vmul.f32 %v6359, %v1445
      %v6534 = vmul.f32 %v6361, %v1445
      %v6535 = vmul.f32 %v6363, %v1445
      %v6536 = vmul.f32 %v6365, %v1445
      %v6537 = vmul.f32 %v6367, %v1445
      %v6538 = vmul.f32 %v6369, %v1445
      %v6539 = vmul.f32 %v6371, %v1445
      %v6540 = vmul.f32 %v6373, %v1445
      %v6541 = vmul.f32 %v6375, %v1445
      %v6542 = vmul.f32 %v6377, %v1445
      %v6543 = vmul.f32 %v6379, %v1445
      %v6544 = vmul.f32 %v6381, %v1445
      %v6545 = vmul.f32 %v6383, %v1445
      %v6546 = vmul.f32 %v6385, %v1445
      %v6547 = vmul.f32 %v6387, %v1445
      %v6548 = vmul.f32 %v6389, %v1445
      %v6549 = vmul.f32 %v6391, %v1445
      %v6550 = vmul.f32 %v6393, %v1445
      %v6551 = vmul.f32 %v6395, %v1445
      %v6552 = vmul.f32 %v6397, %v1445
      %v6553 = vmul.f32 %v6399, %v1445
      %v6554 = vmul.f32 %v6401, %v1445
      %v6555 = vmul.f32 %v6403, %v1445
      %v6556 = vmul.f32 %v6405, %v1445
      %v6557 = vmul.f32 %v6407, %v1445
      %v6558 = vmul.f32 %v6409, %v1445
      %v6559 = vmul.f32 %v6411, %v1445
      %v6560 = vmul.f32 %v6413, %v1445
      %v6561 = vmul.f32 %v6415, %v1445
      %v6562 = vmul.f32 %v6417, %v1445
      %v6563 = vmul.f32 %v6419, %v1445
      %v6564 = vmul.f32 %v5986, %v5986
      %v6565 = vmul.f32 %v5987, %v5987
      %v6566 = vmul.f32 %v5988, %v5988
      %v6567 = vmul.f32 %v5989, %v5989
      %v6568 = vmul.f32 %v5990, %v5990
      %v6569 = vmul.f32 %v5991, %v5991
      %v6570 = vmul.f32 %v5992, %v5992
      %v6571 = vmul.f32 %v5993, %v5993
      %v6572 = vmul.f32 %v5994, %v5994
      %v6573 = vmul.f32 %v5995, %v5995
      %v6574 = vmul.f32 %v5996, %v5996
      %v6575 = vmul.f32 %v5997, %v5997
      %v6576 = vmul.f32 %v5998, %v5998
      %v6577 = vmul.f32 %v5999, %v5999
      %v6578 = vmul.f32 %v6000, %v6000
      %v6579 = vmul.f32 %v6001, %v6001
      %v6580 = vmul.f32 %v6002, %v6002
      %v6581 = vmul.f32 %v6003, %v6003
      %v6582 = vmul.f32 %v6004, %v6004
      %v6583 = vmul.f32 %v6005, %v6005
      %v6584 = vmul.f32 %v6006, %v6006
      %v6585 = vmul.f32 %v6007, %v6007
      %v6586 = vmul.f32 %v6008, %v6008
      %v6587 = vmul.f32 %v6009, %v6009
      %v6588 = vmul.f32 %v6010, %v6010
      %v6589 = vmul.f32 %v6011, %v6011
      %v6590 = vmul.f32 %v6012, %v6012
      %v6591 = vmul.f32 %v6013, %v6013
      %v6592 = vmul.f32 %v6014, %v6014
      %v6593 = vmul.f32 %v6015, %v6015
      %v6594 = vmul.f32 %v6016, %v6016
      %v6595 = vmul.f32 %v6017, %v6017
      %v6596 = vmul.f32 %v6018, %v6018
      %v6597 = vmul.f32 %v6019, %v6019
      %v6598 = vmul.f32 %v6020, %v6020
      %v6599 = vmul.f32 %v6021, %v6021
      %v6600 = vmul.f32 %v6022, %v6022
      %v6601 = vmul.f32 %v6023, %v6023
      %v6602 = vmul.f32 %v6024, %v6024
      %v6603 = vmul.f32 %v6025, %v6025
      %v6604 = vmul.f32 %v6026, %v6026
      %v6605 = vmul.f32 %v6027, %v6027
      %v6606 = vmul.f32 %v6028, %v6028
      %v6607 = vmul.f32 %v6029, %v6029
      %v6608 = vmul.f32 %v6030, %v6030
      %v6609 = vmul.f32 %v6031, %v6031
      %v6610 = vmul.f32 %v6032, %v6032
      %v6611 = vmul.f32 %v6033, %v6033
      %v6612 = vmul.f32 %v6034, %v6034
      %v6613 = vmul.f32 %v6035, %v6035
      %v6614 = vmul.f32 %v6036, %v6036
      %v6615 = vmul.f32 %v6037, %v6037
      %v6616 = vmul.f32 %v6038, %v6038
      %v6617 = vmul.f32 %v6039, %v6039
      %v6618 = vmul.f32 %v6040, %v6040
      %v6619 = vmul.f32 %v6041, %v6041
      %v6620 = vmul.f32 %v6042, %v6042
      %v6621 = vmul.f32 %v6043, %v6043
      %v6622 = vmul.f32 %v6044, %v6044
      %v6623 = vmul.f32 %v6045, %v6045
      %v6624 = vmul.f32 %v6046, %v6046
      %v6625 = vmul.f32 %v6047, %v6047
      %v6626 = vmul.f32 %v6048, %v6048
      %v6627 = vmul.f32 %v6049, %v6049
      %v6628 = vmul.f32 %v6050, %v6050
      %v6629 = vmul.f32 %v6051, %v6051
      %v6630 = vmul.f32 %v6052, %v6052
      %v6631 = vmul.f32 %v6053, %v6053
      %v6632 = vmul.f32 %v6054, %v6054
      %v6633 = vmul.f32 %v6055, %v6055
      %v6634 = vmul.f32 %v6056, %v6056
      %v6635 = vmul.f32 %v6057, %v6057
      %v6636 = vmul.f32 %v6058, %v6058
      %v6637 = vmul.f32 %v6059, %v6059
      %v6638 = vmul.f32 %v6060, %v6060
      %v6639 = vmul.f32 %v6061, %v6061
      %v6640 = vmul.f32 %v6062, %v6062
      %v6641 = vmul.f32 %v6063, %v6063
      %v6642 = vmul.f32 %v6064, %v6064
      %v6643 = vmul.f32 %v6065, %v6065
      %v6644 = vmul.f32 %v6066, %v6066
      %v6645 = vmul.f32 %v6067, %v6067
      %v6646 = vmul.f32 %v6068, %v6068
      %v6647 = vmul.f32 %v6069, %v6069
      %v6648 = vmul.f32 %v6070, %v6070
      %v6649 = vmul.f32 %v6071, %v6071
      %v6650 = vmul.f32 %v6072, %v6072
      %v6651 = vmul.f32 %v6073, %v6073
      %v6652 = vmul.f32 %v6074, %v6074
      %v6653 = vmul.f32 %v6075, %v6075
      %v6654 = vmul.f32 %v6076, %v6076
      %v6655 = vmul.f32 %v6077, %v6077
      %v6656 = vmul.f32 %v6078, %v6078
      %v6657 = vmul.f32 %v6079, %v6079
      %v6658 = vmul.f32 %v6080, %v6080
      %v6659 = vmul.f32 %v6081, %v6081
      %v6660 = vmul.f32 %v6082, %v6082
      %v6661 = vmul.f32 %v6083, %v6083
      %v6662 = vmul.f32 %v6084, %v6084
      %v6663 = vmul.f32 %v6085, %v6085
      %v6664 = vmul.f32 %v6086, %v6086
      %v6665 = vmul.f32 %v6087, %v6087
      %v6666 = vmul.f32 %v6088, %v6088
      %v6667 = vmul.f32 %v6089, %v6089
      %v6668 = vmul.f32 %v6090, %v6090
      %v6669 = vmul.f32 %v6091, %v6091
      %v6670 = vmul.f32 %v6092, %v6092
      %v6671 = vmul.f32 %v6093, %v6093
      %v6672 = vmul.f32 %v6094, %v6094
      %v6673 = vmul.f32 %v6095, %v6095
      %v6674 = vmul.f32 %v6096, %v6096
      %v6675 = vmul.f32 %v6097, %v6097
      %v6676 = vmul.f32 %v6098, %v6098
      %v6677 = vmul.f32 %v6099, %v6099
      %v6678 = vmul.f32 %v6100, %v6100
      %v6679 = vmul.f32 %v6101, %v6101
      %v6680 = vmul.f32 %v6102, %v6102
      %v6681 = vmul.f32 %v6103, %v6103
      %v6682 = vmul.f32 %v6104, %v6104
      %v6683 = vmul.f32 %v6105, %v6105
      %v6684 = vmul.f32 %v6106, %v6106
      %v6685 = vmul.f32 %v6107, %v6107
      %v6686 = vmul.f32 %v6108, %v6108
      %v6687 = vmul.f32 %v6109, %v6109
      %v6688 = vmul.f32 %v6110, %v6110
      %v6689 = vmul.f32 %v6111, %v6111
      %v6690 = vmul.f32 %v6112, %v6112
      %v6691 = vmul.f32 %v6113, %v6113
      %v6692 = vmul.f32 %v6114, %v6114
      %v6693 = vmul.f32 %v6115, %v6115
      %v6694 = vmul.f32 %v6116, %v6116
      %v6695 = vmul.f32 %v6117, %v6117
      %v6696 = vmul.f32 %v6118, %v6118
      %v6697 = vmul.f32 %v6119, %v6119
      %v6698 = vmul.f32 %v6120, %v6120
      %v6699 = vmul.f32 %v6121, %v6121
      %v6700 = vmul.f32 %v6122, %v6122
      %v6701 = vmul.f32 %v6123, %v6123
      %v6702 = vmul.f32 %v6124, %v6124
      %v6703 = vmul.f32 %v6125, %v6125
      %v6704 = vmul.f32 %v6126, %v6126
      %v6705 = vmul.f32 %v6127, %v6127
      %v6706 = vmul.f32 %v6128, %v6128
      %v6707 = vmul.f32 %v6129, %v6129
      %6708 = vadd.xlane.f32.xlu0 %v6564
      %v6709 = vpop.xlane.xlu0 %6708
      %6710 = vadd.xlane.f32.xlu0 %v6565
      %v6711 = vpop.xlane.xlu0 %6710
      %6712 = vadd.xlane.f32.xlu0 %v6566
      %v6713 = vpop.xlane.xlu0 %6712
      %6714 = vadd.xlane.f32.xlu0 %v6567
      %v6715 = vpop.xlane.xlu0 %6714
      %6716 = vadd.xlane.f32.xlu0 %v6568
      %v6717 = vpop.xlane.xlu0 %6716
      %6718 = vadd.xlane.f32.xlu0 %v6569
      %v6719 = vpop.xlane.xlu0 %6718
      %6720 = vadd.xlane.f32.xlu0 %v6570
      %v6721 = vpop.xlane.xlu0 %6720
      %6722 = vadd.xlane.f32.xlu0 %v6571
      %v6723 = vpop.xlane.xlu0 %6722
      %6724 = vadd.xlane.f32.xlu0 %v6572
      %v6725 = vpop.xlane.xlu0 %6724
      %6726 = vadd.xlane.f32.xlu0 %v6573
      %v6727 = vpop.xlane.xlu0 %6726
      %6728 = vadd.xlane.f32.xlu0 %v6574
      %v6729 = vpop.xlane.xlu0 %6728
      %6730 = vadd.xlane.f32.xlu0 %v6575
      %v6731 = vpop.xlane.xlu0 %6730
      %6732 = vadd.xlane.f32.xlu0 %v6576
      %v6733 = vpop.xlane.xlu0 %6732
      %6734 = vadd.xlane.f32.xlu0 %v6577
      %v6735 = vpop.xlane.xlu0 %6734
      %6736 = vadd.xlane.f32.xlu0 %v6578
      %v6737 = vpop.xlane.xlu0 %6736
      %6738 = vadd.xlane.f32.xlu0 %v6579
      %v6739 = vpop.xlane.xlu0 %6738
      %6740 = vadd.xlane.f32.xlu0 %v6580
      %v6741 = vpop.xlane.xlu0 %6740
      %6742 = vadd.xlane.f32.xlu0 %v6581
      %v6743 = vpop.xlane.xlu0 %6742
      %6744 = vadd.xlane.f32.xlu0 %v6582
      %v6745 = vpop.xlane.xlu0 %6744
      %6746 = vadd.xlane.f32.xlu0 %v6583
      %v6747 = vpop.xlane.xlu0 %6746
      %6748 = vadd.xlane.f32.xlu0 %v6584
      %v6749 = vpop.xlane.xlu0 %6748
      %6750 = vadd.xlane.f32.xlu0 %v6585
      %v6751 = vpop.xlane.xlu0 %6750
      %6752 = vadd.xlane.f32.xlu0 %v6586
      %v6753 = vpop.xlane.xlu0 %6752
      %6754 = vadd.xlane.f32.xlu0 %v6587
      %v6755 = vpop.xlane.xlu0 %6754
      %6756 = vadd.xlane.f32.xlu0 %v6588
      %v6757 = vpop.xlane.xlu0 %6756
      %6758 = vadd.xlane.f32.xlu0 %v6589
      %v6759 = vpop.xlane.xlu0 %6758
      %6760 = vadd.xlane.f32.xlu0 %v6590
      %v6761 = vpop.xlane.xlu0 %6760
      %6762 = vadd.xlane.f32.xlu0 %v6591
      %v6763 = vpop.xlane.xlu0 %6762
      %6764 = vadd.xlane.f32.xlu0 %v6592
      %v6765 = vpop.xlane.xlu0 %6764
      %6766 = vadd.xlane.f32.xlu0 %v6593
      %v6767 = vpop.xlane.xlu0 %6766
      %6768 = vadd.xlane.f32.xlu0 %v6594
      %v6769 = vpop.xlane.xlu0 %6768
      %6770 = vadd.xlane.f32.xlu0 %v6595
      %v6771 = vpop.xlane.xlu0 %6770
      %6772 = vadd.xlane.f32.xlu0 %v6596
      %v6773 = vpop.xlane.xlu0 %6772
      %6774 = vadd.xlane.f32.xlu0 %v6597
      %v6775 = vpop.xlane.xlu0 %6774
      %6776 = vadd.xlane.f32.xlu0 %v6598
      %v6777 = vpop.xlane.xlu0 %6776
      %6778 = vadd.xlane.f32.xlu0 %v6599
      %v6779 = vpop.xlane.xlu0 %6778
      %6780 = vadd.xlane.f32.xlu0 %v6600
      %v6781 = vpop.xlane.xlu0 %6780
      %6782 = vadd.xlane.f32.xlu0 %v6601
      %v6783 = vpop.xlane.xlu0 %6782
      %6784 = vadd.xlane.f32.xlu0 %v6602
      %v6785 = vpop.xlane.xlu0 %6784
      %6786 = vadd.xlane.f32.xlu0 %v6603
      %v6787 = vpop.xlane.xlu0 %6786
      %6788 = vadd.xlane.f32.xlu0 %v6604
      %v6789 = vpop.xlane.xlu0 %6788
      %6790 = vadd.xlane.f32.xlu0 %v6605
      %v6791 = vpop.xlane.xlu0 %6790
      %6792 = vadd.xlane.f32.xlu0 %v6606
      %v6793 = vpop.xlane.xlu0 %6792
      %6794 = vadd.xlane.f32.xlu0 %v6607
      %v6795 = vpop.xlane.xlu0 %6794
      %6796 = vadd.xlane.f32.xlu0 %v6608
      %v6797 = vpop.xlane.xlu0 %6796
      %6798 = vadd.xlane.f32.xlu0 %v6609
      %v6799 = vpop.xlane.xlu0 %6798
      %6800 = vadd.xlane.f32.xlu0 %v6610
      %v6801 = vpop.xlane.xlu0 %6800
      %6802 = vadd.xlane.f32.xlu0 %v6611
      %v6803 = vpop.xlane.xlu0 %6802
      %6804 = vadd.xlane.f32.xlu0 %v6612
      %v6805 = vpop.xlane.xlu0 %6804
      %6806 = vadd.xlane.f32.xlu0 %v6613
      %v6807 = vpop.xlane.xlu0 %6806
      %6808 = vadd.xlane.f32.xlu0 %v6614
      %v6809 = vpop.xlane.xlu0 %6808
      %6810 = vadd.xlane.f32.xlu0 %v6615
      %v6811 = vpop.xlane.xlu0 %6810
      %6812 = vadd.xlane.f32.xlu0 %v6616
      %v6813 = vpop.xlane.xlu0 %6812
      %6814 = vadd.xlane.f32.xlu0 %v6617
      %v6815 = vpop.xlane.xlu0 %6814
      %6816 = vadd.xlane.f32.xlu0 %v6618
      %v6817 = vpop.xlane.xlu0 %6816
      %6818 = vadd.xlane.f32.xlu0 %v6619
      %v6819 = vpop.xlane.xlu0 %6818
      %6820 = vadd.xlane.f32.xlu0 %v6620
      %v6821 = vpop.xlane.xlu0 %6820
      %6822 = vadd.xlane.f32.xlu0 %v6621
      %v6823 = vpop.xlane.xlu0 %6822
      %6824 = vadd.xlane.f32.xlu0 %v6622
      %v6825 = vpop.xlane.xlu0 %6824
      %6826 = vadd.xlane.f32.xlu0 %v6623
      %v6827 = vpop.xlane.xlu0 %6826
      %6828 = vadd.xlane.f32.xlu0 %v6624
      %v6829 = vpop.xlane.xlu0 %6828
      %6830 = vadd.xlane.f32.xlu0 %v6625
      %v6831 = vpop.xlane.xlu0 %6830
      %6832 = vadd.xlane.f32.xlu0 %v6626
      %v6833 = vpop.xlane.xlu0 %6832
      %6834 = vadd.xlane.f32.xlu0 %v6627
      %v6835 = vpop.xlane.xlu0 %6834
      %6836 = vadd.xlane.f32.xlu0 %v6628
      %v6837 = vpop.xlane.xlu0 %6836
      %6838 = vadd.xlane.f32.xlu0 %v6629
      %v6839 = vpop.xlane.xlu0 %6838
      %6840 = vadd.xlane.f32.xlu0 %v6630
      %v6841 = vpop.xlane.xlu0 %6840
      %6842 = vadd.xlane.f32.xlu0 %v6631
      %v6843 = vpop.xlane.xlu0 %6842
      %6844 = vadd.xlane.f32.xlu0 %v6632
      %v6845 = vpop.xlane.xlu0 %6844
      %6846 = vadd.xlane.f32.xlu0 %v6633
      %v6847 = vpop.xlane.xlu0 %6846
      %6848 = vadd.xlane.f32.xlu0 %v6634
      %v6849 = vpop.xlane.xlu0 %6848
      %6850 = vadd.xlane.f32.xlu0 %v6635
      %v6851 = vpop.xlane.xlu0 %6850
      %6852 = vadd.xlane.f32.xlu0 %v6636
      %v6853 = vpop.xlane.xlu0 %6852
      %6854 = vadd.xlane.f32.xlu0 %v6637
      %v6855 = vpop.xlane.xlu0 %6854
      %6856 = vadd.xlane.f32.xlu0 %v6638
      %v6857 = vpop.xlane.xlu0 %6856
      %6858 = vadd.xlane.f32.xlu0 %v6639
      %v6859 = vpop.xlane.xlu0 %6858
      %6860 = vadd.xlane.f32.xlu0 %v6640
      %v6861 = vpop.xlane.xlu0 %6860
      %6862 = vadd.xlane.f32.xlu0 %v6641
      %v6863 = vpop.xlane.xlu0 %6862
      %6864 = vadd.xlane.f32.xlu0 %v6642
      %v6865 = vpop.xlane.xlu0 %6864
      %6866 = vadd.xlane.f32.xlu0 %v6643
      %v6867 = vpop.xlane.xlu0 %6866
      %6868 = vadd.xlane.f32.xlu0 %v6644
      %v6869 = vpop.xlane.xlu0 %6868
      %6870 = vadd.xlane.f32.xlu0 %v6645
      %v6871 = vpop.xlane.xlu0 %6870
      %6872 = vadd.xlane.f32.xlu0 %v6646
      %v6873 = vpop.xlane.xlu0 %6872
      %6874 = vadd.xlane.f32.xlu0 %v6647
      %v6875 = vpop.xlane.xlu0 %6874
      %6876 = vadd.xlane.f32.xlu0 %v6648
      %v6877 = vpop.xlane.xlu0 %6876
      %6878 = vadd.xlane.f32.xlu0 %v6649
      %v6879 = vpop.xlane.xlu0 %6878
      %6880 = vadd.xlane.f32.xlu0 %v6650
      %v6881 = vpop.xlane.xlu0 %6880
      %6882 = vadd.xlane.f32.xlu0 %v6651
      %v6883 = vpop.xlane.xlu0 %6882
      %6884 = vadd.xlane.f32.xlu0 %v6652
      %v6885 = vpop.xlane.xlu0 %6884
      %6886 = vadd.xlane.f32.xlu0 %v6653
      %v6887 = vpop.xlane.xlu0 %6886
      %6888 = vadd.xlane.f32.xlu0 %v6654
      %v6889 = vpop.xlane.xlu0 %6888
      %6890 = vadd.xlane.f32.xlu0 %v6655
      %v6891 = vpop.xlane.xlu0 %6890
      %6892 = vadd.xlane.f32.xlu0 %v6656
      %v6893 = vpop.xlane.xlu0 %6892
      %6894 = vadd.xlane.f32.xlu0 %v6657
      %v6895 = vpop.xlane.xlu0 %6894
      %6896 = vadd.xlane.f32.xlu0 %v6658
      %v6897 = vpop.xlane.xlu0 %6896
      %6898 = vadd.xlane.f32.xlu0 %v6659
      %v6899 = vpop.xlane.xlu0 %6898
      %6900 = vadd.xlane.f32.xlu0 %v6660
      %v6901 = vpop.xlane.xlu0 %6900
      %6902 = vadd.xlane.f32.xlu0 %v6661
      %v6903 = vpop.xlane.xlu0 %6902
      %6904 = vadd.xlane.f32.xlu0 %v6662
      %v6905 = vpop.xlane.xlu0 %6904
      %6906 = vadd.xlane.f32.xlu0 %v6663
      %v6907 = vpop.xlane.xlu0 %6906
      %6908 = vadd.xlane.f32.xlu0 %v6664
      %v6909 = vpop.xlane.xlu0 %6908
      %6910 = vadd.xlane.f32.xlu0 %v6665
      %v6911 = vpop.xlane.xlu0 %6910
      %6912 = vadd.xlane.f32.xlu0 %v6666
      %v6913 = vpop.xlane.xlu0 %6912
      %6914 = vadd.xlane.f32.xlu0 %v6667
      %v6915 = vpop.xlane.xlu0 %6914
      %6916 = vadd.xlane.f32.xlu0 %v6668
      %v6917 = vpop.xlane.xlu0 %6916
      %6918 = vadd.xlane.f32.xlu0 %v6669
      %v6919 = vpop.xlane.xlu0 %6918
      %6920 = vadd.xlane.f32.xlu0 %v6670
      %v6921 = vpop.xlane.xlu0 %6920
      %6922 = vadd.xlane.f32.xlu0 %v6671
      %v6923 = vpop.xlane.xlu0 %6922
      %6924 = vadd.xlane.f32.xlu0 %v6672
      %v6925 = vpop.xlane.xlu0 %6924
      %6926 = vadd.xlane.f32.xlu0 %v6673
      %v6927 = vpop.xlane.xlu0 %6926
      %6928 = vadd.xlane.f32.xlu0 %v6674
      %v6929 = vpop.xlane.xlu0 %6928
      %6930 = vadd.xlane.f32.xlu0 %v6675
      %v6931 = vpop.xlane.xlu0 %6930
      %6932 = vadd.xlane.f32.xlu0 %v6676
      %v6933 = vpop.xlane.xlu0 %6932
      %6934 = vadd.xlane.f32.xlu0 %v6677
      %v6935 = vpop.xlane.xlu0 %6934
      %6936 = vadd.xlane.f32.xlu0 %v6678
      %v6937 = vpop.xlane.xlu0 %6936
      %6938 = vadd.xlane.f32.xlu0 %v6679
      %v6939 = vpop.xlane.xlu0 %6938
      %6940 = vadd.xlane.f32.xlu0 %v6680
      %v6941 = vpop.xlane.xlu0 %6940
      %6942 = vadd.xlane.f32.xlu0 %v6681
      %v6943 = vpop.xlane.xlu0 %6942
      %6944 = vadd.xlane.f32.xlu0 %v6682
      %v6945 = vpop.xlane.xlu0 %6944
      %6946 = vadd.xlane.f32.xlu0 %v6683
      %v6947 = vpop.xlane.xlu0 %6946
      %6948 = vadd.xlane.f32.xlu0 %v6684
      %v6949 = vpop.xlane.xlu0 %6948
      %6950 = vadd.xlane.f32.xlu0 %v6685
      %v6951 = vpop.xlane.xlu0 %6950
      %6952 = vadd.xlane.f32.xlu0 %v6686
      %v6953 = vpop.xlane.xlu0 %6952
      %6954 = vadd.xlane.f32.xlu0 %v6687
      %v6955 = vpop.xlane.xlu0 %6954
      %6956 = vadd.xlane.f32.xlu0 %v6688
      %v6957 = vpop.xlane.xlu0 %6956
      %6958 = vadd.xlane.f32.xlu0 %v6689
      %v6959 = vpop.xlane.xlu0 %6958
      %6960 = vadd.xlane.f32.xlu0 %v6690
      %v6961 = vpop.xlane.xlu0 %6960
      %6962 = vadd.xlane.f32.xlu0 %v6691
      %v6963 = vpop.xlane.xlu0 %6962
      %6964 = vadd.xlane.f32.xlu0 %v6692
      %v6965 = vpop.xlane.xlu0 %6964
      %6966 = vadd.xlane.f32.xlu0 %v6693
      %v6967 = vpop.xlane.xlu0 %6966
      %6968 = vadd.xlane.f32.xlu0 %v6694
      %v6969 = vpop.xlane.xlu0 %6968
      %6970 = vadd.xlane.f32.xlu0 %v6695
      %v6971 = vpop.xlane.xlu0 %6970
      %6972 = vadd.xlane.f32.xlu0 %v6696
      %v6973 = vpop.xlane.xlu0 %6972
      %6974 = vadd.xlane.f32.xlu0 %v6697
      %v6975 = vpop.xlane.xlu0 %6974
      %6976 = vadd.xlane.f32.xlu0 %v6698
      %v6977 = vpop.xlane.xlu0 %6976
      %6978 = vadd.xlane.f32.xlu0 %v6699
      %v6979 = vpop.xlane.xlu0 %6978
      %6980 = vadd.xlane.f32.xlu0 %v6700
      %v6981 = vpop.xlane.xlu0 %6980
      %6982 = vadd.xlane.f32.xlu0 %v6701
      %v6983 = vpop.xlane.xlu0 %6982
      %6984 = vadd.xlane.f32.xlu0 %v6702
      %v6985 = vpop.xlane.xlu0 %6984
      %6986 = vadd.xlane.f32.xlu0 %v6703
      %v6987 = vpop.xlane.xlu0 %6986
      %6988 = vadd.xlane.f32.xlu0 %v6704
      %v6989 = vpop.xlane.xlu0 %6988
      %6990 = vadd.xlane.f32.xlu0 %v6705
      %v6991 = vpop.xlane.xlu0 %6990
      %6992 = vadd.xlane.f32.xlu0 %v6706
      %v6993 = vpop.xlane.xlu0 %6992
      %6994 = vadd.xlane.f32.xlu0 %v6707
      %v6995 = vpop.xlane.xlu0 %6994
      %v6996 = vmul.f32 %v6709, %v1445
      %v6997 = vmul.f32 %v6711, %v1445
      %v6998 = vmul.f32 %v6713, %v1445
      %v6999 = vmul.f32 %v6715, %v1445
      %v7000 = vmul.f32 %v6717, %v1445
      %v7001 = vmul.f32 %v6719, %v1445
      %v7002 = vmul.f32 %v6721, %v1445
      %v7003 = vmul.f32 %v6723, %v1445
      %v7004 = vmul.f32 %v6725, %v1445
      %v7005 = vmul.f32 %v6727, %v1445
      %v7006 = vmul.f32 %v6729, %v1445
      %v7007 = vmul.f32 %v6731, %v1445
      %v7008 = vmul.f32 %v6733, %v1445
      %v7009 = vmul.f32 %v6735, %v1445
      %v7010 = vmul.f32 %v6737, %v1445
      %v7011 = vmul.f32 %v6739, %v1445
      %v7012 = vmul.f32 %v6741, %v1445
      %v7013 = vmul.f32 %v6743, %v1445
      %v7014 = vmul.f32 %v6745, %v1445
      %v7015 = vmul.f32 %v6747, %v1445
      %v7016 = vmul.f32 %v6749, %v1445
      %v7017 = vmul.f32 %v6751, %v1445
      %v7018 = vmul.f32 %v6753, %v1445
      %v7019 = vmul.f32 %v6755, %v1445
      %v7020 = vmul.f32 %v6757, %v1445
      %v7021 = vmul.f32 %v6759, %v1445
      %v7022 = vmul.f32 %v6761, %v1445
      %v7023 = vmul.f32 %v6763, %v1445
      %v7024 = vmul.f32 %v6765, %v1445
      %v7025 = vmul.f32 %v6767, %v1445
      %v7026 = vmul.f32 %v6769, %v1445
      %v7027 = vmul.f32 %v6771, %v1445
      %v7028 = vmul.f32 %v6773, %v1445
      %v7029 = vmul.f32 %v6775, %v1445
      %v7030 = vmul.f32 %v6777, %v1445
      %v7031 = vmul.f32 %v6779, %v1445
      %v7032 = vmul.f32 %v6781, %v1445
      %v7033 = vmul.f32 %v6783, %v1445
      %v7034 = vmul.f32 %v6785, %v1445
      %v7035 = vmul.f32 %v6787, %v1445
      %v7036 = vmul.f32 %v6789, %v1445
      %v7037 = vmul.f32 %v6791, %v1445
      %v7038 = vmul.f32 %v6793, %v1445
      %v7039 = vmul.f32 %v6795, %v1445
      %v7040 = vmul.f32 %v6797, %v1445
      %v7041 = vmul.f32 %v6799, %v1445
      %v7042 = vmul.f32 %v6801, %v1445
      %v7043 = vmul.f32 %v6803, %v1445
      %v7044 = vmul.f32 %v6805, %v1445
      %v7045 = vmul.f32 %v6807, %v1445
      %v7046 = vmul.f32 %v6809, %v1445
      %v7047 = vmul.f32 %v6811, %v1445
      %v7048 = vmul.f32 %v6813, %v1445
      %v7049 = vmul.f32 %v6815, %v1445
      %v7050 = vmul.f32 %v6817, %v1445
      %v7051 = vmul.f32 %v6819, %v1445
      %v7052 = vmul.f32 %v6821, %v1445
      %v7053 = vmul.f32 %v6823, %v1445
      %v7054 = vmul.f32 %v6825, %v1445
      %v7055 = vmul.f32 %v6827, %v1445
      %v7056 = vmul.f32 %v6829, %v1445
      %v7057 = vmul.f32 %v6831, %v1445
      %v7058 = vmul.f32 %v6833, %v1445
      %v7059 = vmul.f32 %v6835, %v1445
      %v7060 = vmul.f32 %v6837, %v1445
      %v7061 = vmul.f32 %v6839, %v1445
      %v7062 = vmul.f32 %v6841, %v1445
      %v7063 = vmul.f32 %v6843, %v1445
      %v7064 = vmul.f32 %v6845, %v1445
      %v7065 = vmul.f32 %v6847, %v1445
      %v7066 = vmul.f32 %v6849, %v1445
      %v7067 = vmul.f32 %v6851, %v1445
      %v7068 = vmul.f32 %v6853, %v1445
      %v7069 = vmul.f32 %v6855, %v1445
      %v7070 = vmul.f32 %v6857, %v1445
      %v7071 = vmul.f32 %v6859, %v1445
      %v7072 = vmul.f32 %v6861, %v1445
      %v7073 = vmul.f32 %v6863, %v1445
      %v7074 = vmul.f32 %v6865, %v1445
      %v7075 = vmul.f32 %v6867, %v1445
      %v7076 = vmul.f32 %v6869, %v1445
      %v7077 = vmul.f32 %v6871, %v1445
      %v7078 = vmul.f32 %v6873, %v1445
      %v7079 = vmul.f32 %v6875, %v1445
      %v7080 = vmul.f32 %v6877, %v1445
      %v7081 = vmul.f32 %v6879, %v1445
      %v7082 = vmul.f32 %v6881, %v1445
      %v7083 = vmul.f32 %v6883, %v1445
      %v7084 = vmul.f32 %v6885, %v1445
      %v7085 = vmul.f32 %v6887, %v1445
      %v7086 = vmul.f32 %v6889, %v1445
      %v7087 = vmul.f32 %v6891, %v1445
      %v7088 = vmul.f32 %v6893, %v1445
      %v7089 = vmul.f32 %v6895, %v1445
      %v7090 = vmul.f32 %v6897, %v1445
      %v7091 = vmul.f32 %v6899, %v1445
      %v7092 = vmul.f32 %v6901, %v1445
      %v7093 = vmul.f32 %v6903, %v1445
      %v7094 = vmul.f32 %v6905, %v1445
      %v7095 = vmul.f32 %v6907, %v1445
      %v7096 = vmul.f32 %v6909, %v1445
      %v7097 = vmul.f32 %v6911, %v1445
      %v7098 = vmul.f32 %v6913, %v1445
      %v7099 = vmul.f32 %v6915, %v1445
      %v7100 = vmul.f32 %v6917, %v1445
      %v7101 = vmul.f32 %v6919, %v1445
      %v7102 = vmul.f32 %v6921, %v1445
      %v7103 = vmul.f32 %v6923, %v1445
      %v7104 = vmul.f32 %v6925, %v1445
      %v7105 = vmul.f32 %v6927, %v1445
      %v7106 = vmul.f32 %v6929, %v1445
      %v7107 = vmul.f32 %v6931, %v1445
      %v7108 = vmul.f32 %v6933, %v1445
      %v7109 = vmul.f32 %v6935, %v1445
      %v7110 = vmul.f32 %v6937, %v1445
      %v7111 = vmul.f32 %v6939, %v1445
      %v7112 = vmul.f32 %v6941, %v1445
      %v7113 = vmul.f32 %v6943, %v1445
      %v7114 = vmul.f32 %v6945, %v1445
      %v7115 = vmul.f32 %v6947, %v1445
      %v7116 = vmul.f32 %v6949, %v1445
      %v7117 = vmul.f32 %v6951, %v1445
      %v7118 = vmul.f32 %v6953, %v1445
      %v7119 = vmul.f32 %v6955, %v1445
      %v7120 = vmul.f32 %v6957, %v1445
      %v7121 = vmul.f32 %v6959, %v1445
      %v7122 = vmul.f32 %v6961, %v1445
      %v7123 = vmul.f32 %v6963, %v1445
      %v7124 = vmul.f32 %v6965, %v1445
      %v7125 = vmul.f32 %v6967, %v1445
      %v7126 = vmul.f32 %v6969, %v1445
      %v7127 = vmul.f32 %v6971, %v1445
      %v7128 = vmul.f32 %v6973, %v1445
      %v7129 = vmul.f32 %v6975, %v1445
      %v7130 = vmul.f32 %v6977, %v1445
      %v7131 = vmul.f32 %v6979, %v1445
      %v7132 = vmul.f32 %v6981, %v1445
      %v7133 = vmul.f32 %v6983, %v1445
      %v7134 = vmul.f32 %v6985, %v1445
      %v7135 = vmul.f32 %v6987, %v1445
      %v7136 = vmul.f32 %v6989, %v1445
      %v7137 = vmul.f32 %v6991, %v1445
      %v7138 = vmul.f32 %v6993, %v1445
      %v7139 = vmul.f32 %v6995, %v1445
      %v7140 = vmul.f32 %v6420, %v6420
      %v7141 = vmul.f32 %v6421, %v6421
      %v7142 = vmul.f32 %v6422, %v6422
      %v7143 = vmul.f32 %v6423, %v6423
      %v7144 = vmul.f32 %v6424, %v6424
      %v7145 = vmul.f32 %v6425, %v6425
      %v7146 = vmul.f32 %v6426, %v6426
      %v7147 = vmul.f32 %v6427, %v6427
      %v7148 = vmul.f32 %v6428, %v6428
      %v7149 = vmul.f32 %v6429, %v6429
      %v7150 = vmul.f32 %v6430, %v6430
      %v7151 = vmul.f32 %v6431, %v6431
      %v7152 = vmul.f32 %v6432, %v6432
      %v7153 = vmul.f32 %v6433, %v6433
      %v7154 = vmul.f32 %v6434, %v6434
      %v7155 = vmul.f32 %v6435, %v6435
      %v7156 = vmul.f32 %v6436, %v6436
      %v7157 = vmul.f32 %v6437, %v6437
      %v7158 = vmul.f32 %v6438, %v6438
      %v7159 = vmul.f32 %v6439, %v6439
      %v7160 = vmul.f32 %v6440, %v6440
      %v7161 = vmul.f32 %v6441, %v6441
      %v7162 = vmul.f32 %v6442, %v6442
      %v7163 = vmul.f32 %v6443, %v6443
      %v7164 = vmul.f32 %v6444, %v6444
      %v7165 = vmul.f32 %v6445, %v6445
      %v7166 = vmul.f32 %v6446, %v6446
      %v7167 = vmul.f32 %v6447, %v6447
      %v7168 = vmul.f32 %v6448, %v6448
      %v7169 = vmul.f32 %v6449, %v6449
      %v7170 = vmul.f32 %v6450, %v6450
      %v7171 = vmul.f32 %v6451, %v6451
      %v7172 = vmul.f32 %v6452, %v6452
      %v7173 = vmul.f32 %v6453, %v6453
      %v7174 = vmul.f32 %v6454, %v6454
      %v7175 = vmul.f32 %v6455, %v6455
      %v7176 = vmul.f32 %v6456, %v6456
      %v7177 = vmul.f32 %v6457, %v6457
      %v7178 = vmul.f32 %v6458, %v6458
      %v7179 = vmul.f32 %v6459, %v6459
      %v7180 = vmul.f32 %v6460, %v6460
      %v7181 = vmul.f32 %v6461, %v6461
      %v7182 = vmul.f32 %v6462, %v6462
      %v7183 = vmul.f32 %v6463, %v6463
      %v7184 = vmul.f32 %v6464, %v6464
      %v7185 = vmul.f32 %v6465, %v6465
      %v7186 = vmul.f32 %v6466, %v6466
      %v7187 = vmul.f32 %v6467, %v6467
      %v7188 = vmul.f32 %v6468, %v6468
      %v7189 = vmul.f32 %v6469, %v6469
      %v7190 = vmul.f32 %v6470, %v6470
      %v7191 = vmul.f32 %v6471, %v6471
      %v7192 = vmul.f32 %v6472, %v6472
      %v7193 = vmul.f32 %v6473, %v6473
      %v7194 = vmul.f32 %v6474, %v6474
      %v7195 = vmul.f32 %v6475, %v6475
      %v7196 = vmul.f32 %v6476, %v6476
      %v7197 = vmul.f32 %v6477, %v6477
      %v7198 = vmul.f32 %v6478, %v6478
      %v7199 = vmul.f32 %v6479, %v6479
      %v7200 = vmul.f32 %v6480, %v6480
      %v7201 = vmul.f32 %v6481, %v6481
      %v7202 = vmul.f32 %v6482, %v6482
      %v7203 = vmul.f32 %v6483, %v6483
      %v7204 = vmul.f32 %v6484, %v6484
      %v7205 = vmul.f32 %v6485, %v6485
      %v7206 = vmul.f32 %v6486, %v6486
      %v7207 = vmul.f32 %v6487, %v6487
      %v7208 = vmul.f32 %v6488, %v6488
      %v7209 = vmul.f32 %v6489, %v6489
      %v7210 = vmul.f32 %v6490, %v6490
      %v7211 = vmul.f32 %v6491, %v6491
      %v7212 = vmul.f32 %v6492, %v6492
      %v7213 = vmul.f32 %v6493, %v6493
      %v7214 = vmul.f32 %v6494, %v6494
      %v7215 = vmul.f32 %v6495, %v6495
      %v7216 = vmul.f32 %v6496, %v6496
      %v7217 = vmul.f32 %v6497, %v6497
      %v7218 = vmul.f32 %v6498, %v6498
      %v7219 = vmul.f32 %v6499, %v6499
      %v7220 = vmul.f32 %v6500, %v6500
      %v7221 = vmul.f32 %v6501, %v6501
      %v7222 = vmul.f32 %v6502, %v6502
      %v7223 = vmul.f32 %v6503, %v6503
      %v7224 = vmul.f32 %v6504, %v6504
      %v7225 = vmul.f32 %v6505, %v6505
      %v7226 = vmul.f32 %v6506, %v6506
      %v7227 = vmul.f32 %v6507, %v6507
      %v7228 = vmul.f32 %v6508, %v6508
      %v7229 = vmul.f32 %v6509, %v6509
      %v7230 = vmul.f32 %v6510, %v6510
      %v7231 = vmul.f32 %v6511, %v6511
      %v7232 = vmul.f32 %v6512, %v6512
      %v7233 = vmul.f32 %v6513, %v6513
      %v7234 = vmul.f32 %v6514, %v6514
      %v7235 = vmul.f32 %v6515, %v6515
      %v7236 = vmul.f32 %v6516, %v6516
      %v7237 = vmul.f32 %v6517, %v6517
      %v7238 = vmul.f32 %v6518, %v6518
      %v7239 = vmul.f32 %v6519, %v6519
      %v7240 = vmul.f32 %v6520, %v6520
      %v7241 = vmul.f32 %v6521, %v6521
      %v7242 = vmul.f32 %v6522, %v6522
      %v7243 = vmul.f32 %v6523, %v6523
      %v7244 = vmul.f32 %v6524, %v6524
      %v7245 = vmul.f32 %v6525, %v6525
      %v7246 = vmul.f32 %v6526, %v6526
      %v7247 = vmul.f32 %v6527, %v6527
      %v7248 = vmul.f32 %v6528, %v6528
      %v7249 = vmul.f32 %v6529, %v6529
      %v7250 = vmul.f32 %v6530, %v6530
      %v7251 = vmul.f32 %v6531, %v6531
      %v7252 = vmul.f32 %v6532, %v6532
      %v7253 = vmul.f32 %v6533, %v6533
      %v7254 = vmul.f32 %v6534, %v6534
      %v7255 = vmul.f32 %v6535, %v6535
      %v7256 = vmul.f32 %v6536, %v6536
      %v7257 = vmul.f32 %v6537, %v6537
      %v7258 = vmul.f32 %v6538, %v6538
      %v7259 = vmul.f32 %v6539, %v6539
      %v7260 = vmul.f32 %v6540, %v6540
      %v7261 = vmul.f32 %v6541, %v6541
      %v7262 = vmul.f32 %v6542, %v6542
      %v7263 = vmul.f32 %v6543, %v6543
      %v7264 = vmul.f32 %v6544, %v6544
      %v7265 = vmul.f32 %v6545, %v6545
      %v7266 = vmul.f32 %v6546, %v6546
      %v7267 = vmul.f32 %v6547, %v6547
      %v7268 = vmul.f32 %v6548, %v6548
      %v7269 = vmul.f32 %v6549, %v6549
      %v7270 = vmul.f32 %v6550, %v6550
      %v7271 = vmul.f32 %v6551, %v6551
      %v7272 = vmul.f32 %v6552, %v6552
      %v7273 = vmul.f32 %v6553, %v6553
      %v7274 = vmul.f32 %v6554, %v6554
      %v7275 = vmul.f32 %v6555, %v6555
      %v7276 = vmul.f32 %v6556, %v6556
      %v7277 = vmul.f32 %v6557, %v6557
      %v7278 = vmul.f32 %v6558, %v6558
      %v7279 = vmul.f32 %v6559, %v6559
      %v7280 = vmul.f32 %v6560, %v6560
      %v7281 = vmul.f32 %v6561, %v6561
      %v7282 = vmul.f32 %v6562, %v6562
      %v7283 = vmul.f32 %v6563, %v6563
      %v7284 = vsub.f32 %v6996, %v7140
      %v7285 = vsub.f32 %v6997, %v7141
      %v7286 = vsub.f32 %v6998, %v7142
      %v7287 = vsub.f32 %v6999, %v7143
      %v7288 = vsub.f32 %v7000, %v7144
      %v7289 = vsub.f32 %v7001, %v7145
      %v7290 = vsub.f32 %v7002, %v7146
      %v7291 = vsub.f32 %v7003, %v7147
      %v7292 = vsub.f32 %v7004, %v7148
      %v7293 = vsub.f32 %v7005, %v7149
      %v7294 = vsub.f32 %v7006, %v7150
      %v7295 = vsub.f32 %v7007, %v7151
      %v7296 = vsub.f32 %v7008, %v7152
      %v7297 = vsub.f32 %v7009, %v7153
      %v7298 = vsub.f32 %v7010, %v7154
      %v7299 = vsub.f32 %v7011, %v7155
      %v7300 = vsub.f32 %v7012, %v7156
      %v7301 = vsub.f32 %v7013, %v7157
      %v7302 = vsub.f32 %v7014, %v7158
      %v7303 = vsub.f32 %v7015, %v7159
      %v7304 = vsub.f32 %v7016, %v7160
      %v7305 = vsub.f32 %v7017, %v7161
      %v7306 = vsub.f32 %v7018, %v7162
      %v7307 = vsub.f32 %v7019, %v7163
      %v7308 = vsub.f32 %v7020, %v7164
      %v7309 = vsub.f32 %v7021, %v7165
      %v7310 = vsub.f32 %v7022, %v7166
      %v7311 = vsub.f32 %v7023, %v7167
      %v7312 = vsub.f32 %v7024, %v7168
      %v7313 = vsub.f32 %v7025, %v7169
      %v7314 = vsub.f32 %v7026, %v7170
      %v7315 = vsub.f32 %v7027, %v7171
      %v7316 = vsub.f32 %v7028, %v7172
      %v7317 = vsub.f32 %v7029, %v7173
      %v7318 = vsub.f32 %v7030, %v7174
      %v7319 = vsub.f32 %v7031, %v7175
      %v7320 = vsub.f32 %v7032, %v7176
      %v7321 = vsub.f32 %v7033, %v7177
      %v7322 = vsub.f32 %v7034, %v7178
      %v7323 = vsub.f32 %v7035, %v7179
      %v7324 = vsub.f32 %v7036, %v7180
      %v7325 = vsub.f32 %v7037, %v7181
      %v7326 = vsub.f32 %v7038, %v7182
      %v7327 = vsub.f32 %v7039, %v7183
      %v7328 = vsub.f32 %v7040, %v7184
      %v7329 = vsub.f32 %v7041, %v7185
      %v7330 = vsub.f32 %v7042, %v7186
      %v7331 = vsub.f32 %v7043, %v7187
      %v7332 = vsub.f32 %v7044, %v7188
      %v7333 = vsub.f32 %v7045, %v7189
      %v7334 = vsub.f32 %v7046, %v7190
      %v7335 = vsub.f32 %v7047, %v7191
      %v7336 = vsub.f32 %v7048, %v7192
      %v7337 = vsub.f32 %v7049, %v7193
      %v7338 = vsub.f32 %v7050, %v7194
      %v7339 = vsub.f32 %v7051, %v7195
      %v7340 = vsub.f32 %v7052, %v7196
      %v7341 = vsub.f32 %v7053, %v7197
      %v7342 = vsub.f32 %v7054, %v7198
      %v7343 = vsub.f32 %v7055, %v7199
      %v7344 = vsub.f32 %v7056, %v7200
      %v7345 = vsub.f32 %v7057, %v7201
      %v7346 = vsub.f32 %v7058, %v7202
      %v7347 = vsub.f32 %v7059, %v7203
      %v7348 = vsub.f32 %v7060, %v7204
      %v7349 = vsub.f32 %v7061, %v7205
      %v7350 = vsub.f32 %v7062, %v7206
      %v7351 = vsub.f32 %v7063, %v7207
      %v7352 = vsub.f32 %v7064, %v7208
      %v7353 = vsub.f32 %v7065, %v7209
      %v7354 = vsub.f32 %v7066, %v7210
      %v7355 = vsub.f32 %v7067, %v7211
      %v7356 = vsub.f32 %v7068, %v7212
      %v7357 = vsub.f32 %v7069, %v7213
      %v7358 = vsub.f32 %v7070, %v7214
      %v7359 = vsub.f32 %v7071, %v7215
      %v7360 = vsub.f32 %v7072, %v7216
      %v7361 = vsub.f32 %v7073, %v7217
      %v7362 = vsub.f32 %v7074, %v7218
      %v7363 = vsub.f32 %v7075, %v7219
      %v7364 = vsub.f32 %v7076, %v7220
      %v7365 = vsub.f32 %v7077, %v7221
      %v7366 = vsub.f32 %v7078, %v7222
      %v7367 = vsub.f32 %v7079, %v7223
      %v7368 = vsub.f32 %v7080, %v7224
      %v7369 = vsub.f32 %v7081, %v7225
      %v7370 = vsub.f32 %v7082, %v7226
      %v7371 = vsub.f32 %v7083, %v7227
      %v7372 = vsub.f32 %v7084, %v7228
      %v7373 = vsub.f32 %v7085, %v7229
      %v7374 = vsub.f32 %v7086, %v7230
      %v7375 = vsub.f32 %v7087, %v7231
      %v7376 = vsub.f32 %v7088, %v7232
      %v7377 = vsub.f32 %v7089, %v7233
      %v7378 = vsub.f32 %v7090, %v7234
      %v7379 = vsub.f32 %v7091, %v7235
      %v7380 = vsub.f32 %v7092, %v7236
      %v7381 = vsub.f32 %v7093, %v7237
      %v7382 = vsub.f32 %v7094, %v7238
      %v7383 = vsub.f32 %v7095, %v7239
      %v7384 = vsub.f32 %v7096, %v7240
      %v7385 = vsub.f32 %v7097, %v7241
      %v7386 = vsub.f32 %v7098, %v7242
      %v7387 = vsub.f32 %v7099, %v7243
      %v7388 = vsub.f32 %v7100, %v7244
      %v7389 = vsub.f32 %v7101, %v7245
      %v7390 = vsub.f32 %v7102, %v7246
      %v7391 = vsub.f32 %v7103, %v7247
      %v7392 = vsub.f32 %v7104, %v7248
      %v7393 = vsub.f32 %v7105, %v7249
      %v7394 = vsub.f32 %v7106, %v7250
      %v7395 = vsub.f32 %v7107, %v7251
      %v7396 = vsub.f32 %v7108, %v7252
      %v7397 = vsub.f32 %v7109, %v7253
      %v7398 = vsub.f32 %v7110, %v7254
      %v7399 = vsub.f32 %v7111, %v7255
      %v7400 = vsub.f32 %v7112, %v7256
      %v7401 = vsub.f32 %v7113, %v7257
      %v7402 = vsub.f32 %v7114, %v7258
      %v7403 = vsub.f32 %v7115, %v7259
      %v7404 = vsub.f32 %v7116, %v7260
      %v7405 = vsub.f32 %v7117, %v7261
      %v7406 = vsub.f32 %v7118, %v7262
      %v7407 = vsub.f32 %v7119, %v7263
      %v7408 = vsub.f32 %v7120, %v7264
      %v7409 = vsub.f32 %v7121, %v7265
      %v7410 = vsub.f32 %v7122, %v7266
      %v7411 = vsub.f32 %v7123, %v7267
      %v7412 = vsub.f32 %v7124, %v7268
      %v7413 = vsub.f32 %v7125, %v7269
      %v7414 = vsub.f32 %v7126, %v7270
      %v7415 = vsub.f32 %v7127, %v7271
      %v7416 = vsub.f32 %v7128, %v7272
      %v7417 = vsub.f32 %v7129, %v7273
      %v7418 = vsub.f32 %v7130, %v7274
      %v7419 = vsub.f32 %v7131, %v7275
      %v7420 = vsub.f32 %v7132, %v7276
      %v7421 = vsub.f32 %v7133, %v7277
      %v7422 = vsub.f32 %v7134, %v7278
      %v7423 = vsub.f32 %v7135, %v7279
      %v7424 = vsub.f32 %v7136, %v7280
      %v7425 = vsub.f32 %v7137, %v7281
      %v7426 = vsub.f32 %v7138, %v7282
      %v7427 = vsub.f32 %v7139, %v7283
      %v7428 = vsub.f32 %v5986, %v6420
      %v7429 = vsub.f32 %v5987, %v6421
      %v7430 = vsub.f32 %v5988, %v6422
      %v7431 = vsub.f32 %v5989, %v6423
      %v7432 = vsub.f32 %v5990, %v6424
      %v7433 = vsub.f32 %v5991, %v6425
      %v7434 = vsub.f32 %v5992, %v6426
      %v7435 = vsub.f32 %v5993, %v6427
      %v7436 = vsub.f32 %v5994, %v6428
      %v7437 = vsub.f32 %v5995, %v6429
      %v7438 = vsub.f32 %v5996, %v6430
      %v7439 = vsub.f32 %v5997, %v6431
      %v7440 = vsub.f32 %v5998, %v6432
      %v7441 = vsub.f32 %v5999, %v6433
      %v7442 = vsub.f32 %v6000, %v6434
      %v7443 = vsub.f32 %v6001, %v6435
      %v7444 = vsub.f32 %v6002, %v6436
      %v7445 = vsub.f32 %v6003, %v6437
      %v7446 = vsub.f32 %v6004, %v6438
      %v7447 = vsub.f32 %v6005, %v6439
      %v7448 = vsub.f32 %v6006, %v6440
      %v7449 = vsub.f32 %v6007, %v6441
      %v7450 = vsub.f32 %v6008, %v6442
      %v7451 = vsub.f32 %v6009, %v6443
      %v7452 = vsub.f32 %v6010, %v6444
      %v7453 = vsub.f32 %v6011, %v6445
      %v7454 = vsub.f32 %v6012, %v6446
      %v7455 = vsub.f32 %v6013, %v6447
      %v7456 = vsub.f32 %v6014, %v6448
      %v7457 = vsub.f32 %v6015, %v6449
      %v7458 = vsub.f32 %v6016, %v6450
      %v7459 = vsub.f32 %v6017, %v6451
      %v7460 = vsub.f32 %v6018, %v6452
      %v7461 = vsub.f32 %v6019, %v6453
      %v7462 = vsub.f32 %v6020, %v6454
      %v7463 = vsub.f32 %v6021, %v6455
      %v7464 = vsub.f32 %v6022, %v6456
      %v7465 = vsub.f32 %v6023, %v6457
      %v7466 = vsub.f32 %v6024, %v6458
      %v7467 = vsub.f32 %v6025, %v6459
      %v7468 = vsub.f32 %v6026, %v6460
      %v7469 = vsub.f32 %v6027, %v6461
      %v7470 = vsub.f32 %v6028, %v6462
      %v7471 = vsub.f32 %v6029, %v6463
      %v7472 = vsub.f32 %v6030, %v6464
      %v7473 = vsub.f32 %v6031, %v6465
      %v7474 = vsub.f32 %v6032, %v6466
      %v7475 = vsub.f32 %v6033, %v6467
      %v7476 = vsub.f32 %v6034, %v6468
      %v7477 = vsub.f32 %v6035, %v6469
      %v7478 = vsub.f32 %v6036, %v6470
      %v7479 = vsub.f32 %v6037, %v6471
      %v7480 = vsub.f32 %v6038, %v6472
      %v7481 = vsub.f32 %v6039, %v6473
      %v7482 = vsub.f32 %v6040, %v6474
      %v7483 = vsub.f32 %v6041, %v6475
      %v7484 = vsub.f32 %v6042, %v6476
      %v7485 = vsub.f32 %v6043, %v6477
      %v7486 = vsub.f32 %v6044, %v6478
      %v7487 = vsub.f32 %v6045, %v6479
      %v7488 = vsub.f32 %v6046, %v6480
      %v7489 = vsub.f32 %v6047, %v6481
      %v7490 = vsub.f32 %v6048, %v6482
      %v7491 = vsub.f32 %v6049, %v6483
      %v7492 = vsub.f32 %v6050, %v6484
      %v7493 = vsub.f32 %v6051, %v6485
      %v7494 = vsub.f32 %v6052, %v6486
      %v7495 = vsub.f32 %v6053, %v6487
      %v7496 = vsub.f32 %v6054, %v6488
      %v7497 = vsub.f32 %v6055, %v6489
      %v7498 = vsub.f32 %v6056, %v6490
      %v7499 = vsub.f32 %v6057, %v6491
      %v7500 = vsub.f32 %v6058, %v6492
      %v7501 = vsub.f32 %v6059, %v6493
      %v7502 = vsub.f32 %v6060, %v6494
      %v7503 = vsub.f32 %v6061, %v6495
      %v7504 = vsub.f32 %v6062, %v6496
      %v7505 = vsub.f32 %v6063, %v6497
      %v7506 = vsub.f32 %v6064, %v6498
      %v7507 = vsub.f32 %v6065, %v6499
      %v7508 = vsub.f32 %v6066, %v6500
      %v7509 = vsub.f32 %v6067, %v6501
      %v7510 = vsub.f32 %v6068, %v6502
      %v7511 = vsub.f32 %v6069, %v6503
      %v7512 = vsub.f32 %v6070, %v6504
      %v7513 = vsub.f32 %v6071, %v6505
      %v7514 = vsub.f32 %v6072, %v6506
      %v7515 = vsub.f32 %v6073, %v6507
      %v7516 = vsub.f32 %v6074, %v6508
      %v7517 = vsub.f32 %v6075, %v6509
      %v7518 = vsub.f32 %v6076, %v6510
      %v7519 = vsub.f32 %v6077, %v6511
      %v7520 = vsub.f32 %v6078, %v6512
      %v7521 = vsub.f32 %v6079, %v6513
      %v7522 = vsub.f32 %v6080, %v6514
      %v7523 = vsub.f32 %v6081, %v6515
      %v7524 = vsub.f32 %v6082, %v6516
      %v7525 = vsub.f32 %v6083, %v6517
      %v7526 = vsub.f32 %v6084, %v6518
      %v7527 = vsub.f32 %v6085, %v6519
      %v7528 = vsub.f32 %v6086, %v6520
      %v7529 = vsub.f32 %v6087, %v6521
      %v7530 = vsub.f32 %v6088, %v6522
      %v7531 = vsub.f32 %v6089, %v6523
      %v7532 = vsub.f32 %v6090, %v6524
      %v7533 = vsub.f32 %v6091, %v6525
      %v7534 = vsub.f32 %v6092, %v6526
      %v7535 = vsub.f32 %v6093, %v6527
      %v7536 = vsub.f32 %v6094, %v6528
      %v7537 = vsub.f32 %v6095, %v6529
      %v7538 = vsub.f32 %v6096, %v6530
      %v7539 = vsub.f32 %v6097, %v6531
      %v7540 = vsub.f32 %v6098, %v6532
      %v7541 = vsub.f32 %v6099, %v6533
      %v7542 = vsub.f32 %v6100, %v6534
      %v7543 = vsub.f32 %v6101, %v6535
      %v7544 = vsub.f32 %v6102, %v6536
      %v7545 = vsub.f32 %v6103, %v6537
      %v7546 = vsub.f32 %v6104, %v6538
      %v7547 = vsub.f32 %v6105, %v6539
      %v7548 = vsub.f32 %v6106, %v6540
      %v7549 = vsub.f32 %v6107, %v6541
      %v7550 = vsub.f32 %v6108, %v6542
      %v7551 = vsub.f32 %v6109, %v6543
      %v7552 = vsub.f32 %v6110, %v6544
      %v7553 = vsub.f32 %v6111, %v6545
      %v7554 = vsub.f32 %v6112, %v6546
      %v7555 = vsub.f32 %v6113, %v6547
      %v7556 = vsub.f32 %v6114, %v6548
      %v7557 = vsub.f32 %v6115, %v6549
      %v7558 = vsub.f32 %v6116, %v6550
      %v7559 = vsub.f32 %v6117, %v6551
      %v7560 = vsub.f32 %v6118, %v6552
      %v7561 = vsub.f32 %v6119, %v6553
      %v7562 = vsub.f32 %v6120, %v6554
      %v7563 = vsub.f32 %v6121, %v6555
      %v7564 = vsub.f32 %v6122, %v6556
      %v7565 = vsub.f32 %v6123, %v6557
      %v7566 = vsub.f32 %v6124, %v6558
      %v7567 = vsub.f32 %v6125, %v6559
      %v7568 = vsub.f32 %v6126, %v6560
      %v7569 = vsub.f32 %v6127, %v6561
      %v7570 = vsub.f32 %v6128, %v6562
      %v7571 = vsub.f32 %v6129, %v6563
      %v7572 = vadd.f32 %v7284, 1e-05
      %v7573 = vadd.f32 %v7285, 1e-05
      %v7574 = vadd.f32 %v7286, 1e-05
      %v7575 = vadd.f32 %v7287, 1e-05
      %v7576 = vadd.f32 %v7288, 1e-05
      %v7577 = vadd.f32 %v7289, 1e-05
      %v7578 = vadd.f32 %v7290, 1e-05
      %v7579 = vadd.f32 %v7291, 1e-05
      %v7580 = vadd.f32 %v7292, 1e-05
      %v7581 = vadd.f32 %v7293, 1e-05
      %v7582 = vadd.f32 %v7294, 1e-05
      %v7583 = vadd.f32 %v7295, 1e-05
      %v7584 = vadd.f32 %v7296, 1e-05
      %v7585 = vadd.f32 %v7297, 1e-05
      %v7586 = vadd.f32 %v7298, 1e-05
      %v7587 = vadd.f32 %v7299, 1e-05
      %v7588 = vadd.f32 %v7300, 1e-05
      %v7589 = vadd.f32 %v7301, 1e-05
      %v7590 = vadd.f32 %v7302, 1e-05
      %v7591 = vadd.f32 %v7303, 1e-05
      %v7592 = vadd.f32 %v7304, 1e-05
      %v7593 = vadd.f32 %v7305, 1e-05
      %v7594 = vadd.f32 %v7306, 1e-05
      %v7595 = vadd.f32 %v7307, 1e-05
      %v7596 = vadd.f32 %v7308, 1e-05
      %v7597 = vadd.f32 %v7309, 1e-05
      %v7598 = vadd.f32 %v7310, 1e-05
      %v7599 = vadd.f32 %v7311, 1e-05
      %v7600 = vadd.f32 %v7312, 1e-05
      %v7601 = vadd.f32 %v7313, 1e-05
      %v7602 = vadd.f32 %v7314, 1e-05
      %v7603 = vadd.f32 %v7315, 1e-05
      %v7604 = vadd.f32 %v7316, 1e-05
      %v7605 = vadd.f32 %v7317, 1e-05
      %v7606 = vadd.f32 %v7318, 1e-05
      %v7607 = vadd.f32 %v7319, 1e-05
      %v7608 = vadd.f32 %v7320, 1e-05
      %v7609 = vadd.f32 %v7321, 1e-05
      %v7610 = vadd.f32 %v7322, 1e-05
      %v7611 = vadd.f32 %v7323, 1e-05
      %v7612 = vadd.f32 %v7324, 1e-05
      %v7613 = vadd.f32 %v7325, 1e-05
      %v7614 = vadd.f32 %v7326, 1e-05
      %v7615 = vadd.f32 %v7327, 1e-05
      %v7616 = vadd.f32 %v7328, 1e-05
      %v7617 = vadd.f32 %v7329, 1e-05
      %v7618 = vadd.f32 %v7330, 1e-05
      %v7619 = vadd.f32 %v7331, 1e-05
      %v7620 = vadd.f32 %v7332, 1e-05
      %v7621 = vadd.f32 %v7333, 1e-05
      %v7622 = vadd.f32 %v7334, 1e-05
      %v7623 = vadd.f32 %v7335, 1e-05
      %v7624 = vadd.f32 %v7336, 1e-05
      %v7625 = vadd.f32 %v7337, 1e-05
      %v7626 = vadd.f32 %v7338, 1e-05
      %v7627 = vadd.f32 %v7339, 1e-05
      %v7628 = vadd.f32 %v7340, 1e-05
      %v7629 = vadd.f32 %v7341, 1e-05
      %v7630 = vadd.f32 %v7342, 1e-05
      %v7631 = vadd.f32 %v7343, 1e-05
      %v7632 = vadd.f32 %v7344, 1e-05
      %v7633 = vadd.f32 %v7345, 1e-05
      %v7634 = vadd.f32 %v7346, 1e-05
      %v7635 = vadd.f32 %v7347, 1e-05
      %v7636 = vadd.f32 %v7348, 1e-05
      %v7637 = vadd.f32 %v7349, 1e-05
      %v7638 = vadd.f32 %v7350, 1e-05
      %v7639 = vadd.f32 %v7351, 1e-05
      %v7640 = vadd.f32 %v7352, 1e-05
      %v7641 = vadd.f32 %v7353, 1e-05
      %v7642 = vadd.f32 %v7354, 1e-05
      %v7643 = vadd.f32 %v7355, 1e-05
      %v7644 = vadd.f32 %v7356, 1e-05
      %v7645 = vadd.f32 %v7357, 1e-05
      %v7646 = vadd.f32 %v7358, 1e-05
      %v7647 = vadd.f32 %v7359, 1e-05
      %v7648 = vadd.f32 %v7360, 1e-05
      %v7649 = vadd.f32 %v7361, 1e-05
      %v7650 = vadd.f32 %v7362, 1e-05
      %v7651 = vadd.f32 %v7363, 1e-05
      %v7652 = vadd.f32 %v7364, 1e-05
      %v7653 = vadd.f32 %v7365, 1e-05
      %v7654 = vadd.f32 %v7366, 1e-05
      %v7655 = vadd.f32 %v7367, 1e-05
      %v7656 = vadd.f32 %v7368, 1e-05
      %v7657 = vadd.f32 %v7369, 1e-05
      %v7658 = vadd.f32 %v7370, 1e-05
      %v7659 = vadd.f32 %v7371, 1e-05
      %v7660 = vadd.f32 %v7372, 1e-05
      %v7661 = vadd.f32 %v7373, 1e-05
      %v7662 = vadd.f32 %v7374, 1e-05
      %v7663 = vadd.f32 %v7375, 1e-05
      %v7664 = vadd.f32 %v7376, 1e-05
      %v7665 = vadd.f32 %v7377, 1e-05
      %v7666 = vadd.f32 %v7378, 1e-05
      %v7667 = vadd.f32 %v7379, 1e-05
      %v7668 = vadd.f32 %v7380, 1e-05
      %v7669 = vadd.f32 %v7381, 1e-05
      %v7670 = vadd.f32 %v7382, 1e-05
      %v7671 = vadd.f32 %v7383, 1e-05
      %v7672 = vadd.f32 %v7384, 1e-05
      %v7673 = vadd.f32 %v7385, 1e-05
      %v7674 = vadd.f32 %v7386, 1e-05
      %v7675 = vadd.f32 %v7387, 1e-05
      %v7676 = vadd.f32 %v7388, 1e-05
      %v7677 = vadd.f32 %v7389, 1e-05
      %v7678 = vadd.f32 %v7390, 1e-05
      %v7679 = vadd.f32 %v7391, 1e-05
      %v7680 = vadd.f32 %v7392, 1e-05
      %v7681 = vadd.f32 %v7393, 1e-05
      %v7682 = vadd.f32 %v7394, 1e-05
      %v7683 = vadd.f32 %v7395, 1e-05
      %v7684 = vadd.f32 %v7396, 1e-05
      %v7685 = vadd.f32 %v7397, 1e-05
      %v7686 = vadd.f32 %v7398, 1e-05
      %v7687 = vadd.f32 %v7399, 1e-05
      %v7688 = vadd.f32 %v7400, 1e-05
      %v7689 = vadd.f32 %v7401, 1e-05
      %v7690 = vadd.f32 %v7402, 1e-05
      %v7691 = vadd.f32 %v7403, 1e-05
      %v7692 = vadd.f32 %v7404, 1e-05
      %v7693 = vadd.f32 %v7405, 1e-05
      %v7694 = vadd.f32 %v7406, 1e-05
      %v7695 = vadd.f32 %v7407, 1e-05
      %v7696 = vadd.f32 %v7408, 1e-05
      %v7697 = vadd.f32 %v7409, 1e-05
      %v7698 = vadd.f32 %v7410, 1e-05
      %v7699 = vadd.f32 %v7411, 1e-05
      %v7700 = vadd.f32 %v7412, 1e-05
      %v7701 = vadd.f32 %v7413, 1e-05
      %v7702 = vadd.f32 %v7414, 1e-05
      %v7703 = vadd.f32 %v7415, 1e-05
      %v7704 = vadd.f32 %v7416, 1e-05
      %v7705 = vadd.f32 %v7417, 1e-05
      %v7706 = vadd.f32 %v7418, 1e-05
      %v7707 = vadd.f32 %v7419, 1e-05
      %v7708 = vadd.f32 %v7420, 1e-05
      %v7709 = vadd.f32 %v7421, 1e-05
      %v7710 = vadd.f32 %v7422, 1e-05
      %v7711 = vadd.f32 %v7423, 1e-05
      %v7712 = vadd.f32 %v7424, 1e-05
      %v7713 = vadd.f32 %v7425, 1e-05
      %v7714 = vadd.f32 %v7426, 1e-05
      %v7715 = vadd.f32 %v7427, 1e-05
      %v7716 = vrsqrt.pop %v7572
      %v7717 = vrsqrt.pop %v7573
      %v7718 = vrsqrt.pop %v7574
      %v7719 = vrsqrt.pop %v7575
      %v7720 = vrsqrt.pop %v7576
      %v7721 = vrsqrt.pop %v7577
      %v7722 = vrsqrt.pop %v7578
      %v7723 = vrsqrt.pop %v7579
      %v7724 = vrsqrt.pop %v7580
      %v7725 = vrsqrt.pop %v7581
      %v7726 = vrsqrt.pop %v7582
      %v7727 = vrsqrt.pop %v7583
      %v7728 = vrsqrt.pop %v7584
      %v7729 = vrsqrt.pop %v7585
      %v7730 = vrsqrt.pop %v7586
      %v7731 = vrsqrt.pop %v7587
      %v7732 = vrsqrt.pop %v7588
      %v7733 = vrsqrt.pop %v7589
      %v7734 = vrsqrt.pop %v7590
      %v7735 = vrsqrt.pop %v7591
      %v7736 = vrsqrt.pop %v7592
      %v7737 = vrsqrt.pop %v7593
      %v7738 = vrsqrt.pop %v7594
      %v7739 = vrsqrt.pop %v7595
      %v7740 = vrsqrt.pop %v7596
      %v7741 = vrsqrt.pop %v7597
      %v7742 = vrsqrt.pop %v7598
      %v7743 = vrsqrt.pop %v7599
      %v7744 = vrsqrt.pop %v7600
      %v7745 = vrsqrt.pop %v7601
      %v7746 = vrsqrt.pop %v7602
      %v7747 = vrsqrt.pop %v7603
      %v7748 = vrsqrt.pop %v7604
      %v7749 = vrsqrt.pop %v7605
      %v7750 = vrsqrt.pop %v7606
      %v7751 = vrsqrt.pop %v7607
      %v7752 = vrsqrt.pop %v7608
      %v7753 = vrsqrt.pop %v7609
      %v7754 = vrsqrt.pop %v7610
      %v7755 = vrsqrt.pop %v7611
      %v7756 = vrsqrt.pop %v7612
      %v7757 = vrsqrt.pop %v7613
      %v7758 = vrsqrt.pop %v7614
      %v7759 = vrsqrt.pop %v7615
      %v7760 = vrsqrt.pop %v7616
      %v7761 = vrsqrt.pop %v7617
      %v7762 = vrsqrt.pop %v7618
      %v7763 = vrsqrt.pop %v7619
      %v7764 = vrsqrt.pop %v7620
      %v7765 = vrsqrt.pop %v7621
      %v7766 = vrsqrt.pop %v7622
      %v7767 = vrsqrt.pop %v7623
      %v7768 = vrsqrt.pop %v7624
      %v7769 = vrsqrt.pop %v7625
      %v7770 = vrsqrt.pop %v7626
      %v7771 = vrsqrt.pop %v7627
      %v7772 = vrsqrt.pop %v7628
      %v7773 = vrsqrt.pop %v7629
      %v7774 = vrsqrt.pop %v7630
      %v7775 = vrsqrt.pop %v7631
      %v7776 = vrsqrt.pop %v7632
      %v7777 = vrsqrt.pop %v7633
      %v7778 = vrsqrt.pop %v7634
      %v7779 = vrsqrt.pop %v7635
      %v7780 = vrsqrt.pop %v7636
      %v7781 = vrsqrt.pop %v7637
      %v7782 = vrsqrt.pop %v7638
      %v7783 = vrsqrt.pop %v7639
      %v7784 = vrsqrt.pop %v7640
      %v7785 = vrsqrt.pop %v7641
      %v7786 = vrsqrt.pop %v7642
      %v7787 = vrsqrt.pop %v7643
      %v7788 = vrsqrt.pop %v7644
      %v7789 = vrsqrt.pop %v7645
      %v7790 = vrsqrt.pop %v7646
      %v7791 = vrsqrt.pop %v7647
      %v7792 = vrsqrt.pop %v7648
      %v7793 = vrsqrt.pop %v7649
      %v7794 = vrsqrt.pop %v7650
      %v7795 = vrsqrt.pop %v7651
      %v7796 = vrsqrt.pop %v7652
      %v7797 = vrsqrt.pop %v7653
      %v7798 = vrsqrt.pop %v7654
      %v7799 = vrsqrt.pop %v7655
      %v7800 = vrsqrt.pop %v7656
      %v7801 = vrsqrt.pop %v7657
      %v7802 = vrsqrt.pop %v7658
      %v7803 = vrsqrt.pop %v7659
      %v7804 = vrsqrt.pop %v7660
      %v7805 = vrsqrt.pop %v7661
      %v7806 = vrsqrt.pop %v7662
      %v7807 = vrsqrt.pop %v7663
      %v7808 = vrsqrt.pop %v7664
      %v7809 = vrsqrt.pop %v7665
      %v7810 = vrsqrt.pop %v7666
      %v7811 = vrsqrt.pop %v7667
      %v7812 = vrsqrt.pop %v7668
      %v7813 = vrsqrt.pop %v7669
      %v7814 = vrsqrt.pop %v7670
      %v7815 = vrsqrt.pop %v7671
      %v7816 = vrsqrt.pop %v7672
      %v7817 = vrsqrt.pop %v7673
      %v7818 = vrsqrt.pop %v7674
      %v7819 = vrsqrt.pop %v7675
      %v7820 = vrsqrt.pop %v7676
      %v7821 = vrsqrt.pop %v7677
      %v7822 = vrsqrt.pop %v7678
      %v7823 = vrsqrt.pop %v7679
      %v7824 = vrsqrt.pop %v7680
      %v7825 = vrsqrt.pop %v7681
      %v7826 = vrsqrt.pop %v7682
      %v7827 = vrsqrt.pop %v7683
      %v7828 = vrsqrt.pop %v7684
      %v7829 = vrsqrt.pop %v7685
      %v7830 = vrsqrt.pop %v7686
      %v7831 = vrsqrt.pop %v7687
      %v7832 = vrsqrt.pop %v7688
      %v7833 = vrsqrt.pop %v7689
      %v7834 = vrsqrt.pop %v7690
      %v7835 = vrsqrt.pop %v7691
      %v7836 = vrsqrt.pop %v7692
      %v7837 = vrsqrt.pop %v7693
      %v7838 = vrsqrt.pop %v7694
      %v7839 = vrsqrt.pop %v7695
      %v7840 = vrsqrt.pop %v7696
      %v7841 = vrsqrt.pop %v7697
      %v7842 = vrsqrt.pop %v7698
      %v7843 = vrsqrt.pop %v7699
      %v7844 = vrsqrt.pop %v7700
      %v7845 = vrsqrt.pop %v7701
      %v7846 = vrsqrt.pop %v7702
      %v7847 = vrsqrt.pop %v7703
      %v7848 = vrsqrt.pop %v7704
      %v7849 = vrsqrt.pop %v7705
      %v7850 = vrsqrt.pop %v7706
      %v7851 = vrsqrt.pop %v7707
      %v7852 = vrsqrt.pop %v7708
      %v7853 = vrsqrt.pop %v7709
      %v7854 = vrsqrt.pop %v7710
      %v7855 = vrsqrt.pop %v7711
      %v7856 = vrsqrt.pop %v7712
      %v7857 = vrsqrt.pop %v7713
      %v7858 = vrsqrt.pop %v7714
      %v7859 = vrsqrt.pop %v7715
      %v7860 = vmul.f32 %v7428, %v7716
      %v7861 = vmul.f32 %v7429, %v7717
      %v7862 = vmul.f32 %v7430, %v7718
      %v7863 = vmul.f32 %v7431, %v7719
      %v7864 = vmul.f32 %v7432, %v7720
      %v7865 = vmul.f32 %v7433, %v7721
      %v7866 = vmul.f32 %v7434, %v7722
      %v7867 = vmul.f32 %v7435, %v7723
      %v7868 = vmul.f32 %v7436, %v7724
      %v7869 = vmul.f32 %v7437, %v7725
      %v7870 = vmul.f32 %v7438, %v7726
      %v7871 = vmul.f32 %v7439, %v7727
      %v7872 = vmul.f32 %v7440, %v7728
      %v7873 = vmul.f32 %v7441, %v7729
      %v7874 = vmul.f32 %v7442, %v7730
      %v7875 = vmul.f32 %v7443, %v7731
      %v7876 = vmul.f32 %v7444, %v7732
      %v7877 = vmul.f32 %v7445, %v7733
      %v7878 = vmul.f32 %v7446, %v7734
      %v7879 = vmul.f32 %v7447, %v7735
      %v7880 = vmul.f32 %v7448, %v7736
      %v7881 = vmul.f32 %v7449, %v7737
      %v7882 = vmul.f32 %v7450, %v7738
      %v7883 = vmul.f32 %v7451, %v7739
      %v7884 = vmul.f32 %v7452, %v7740
      %v7885 = vmul.f32 %v7453, %v7741
      %v7886 = vmul.f32 %v7454, %v7742
      %v7887 = vmul.f32 %v7455, %v7743
      %v7888 = vmul.f32 %v7456, %v7744
      %v7889 = vmul.f32 %v7457, %v7745
      %v7890 = vmul.f32 %v7458, %v7746
      %v7891 = vmul.f32 %v7459, %v7747
      %v7892 = vmul.f32 %v7460, %v7748
      %v7893 = vmul.f32 %v7461, %v7749
      %v7894 = vmul.f32 %v7462, %v7750
      %v7895 = vmul.f32 %v7463, %v7751
      %v7896 = vmul.f32 %v7464, %v7752
      %v7897 = vmul.f32 %v7465, %v7753
      %v7898 = vmul.f32 %v7466, %v7754
      %v7899 = vmul.f32 %v7467, %v7755
      %v7900 = vmul.f32 %v7468, %v7756
      %v7901 = vmul.f32 %v7469, %v7757
      %v7902 = vmul.f32 %v7470, %v7758
      %v7903 = vmul.f32 %v7471, %v7759
      %v7904 = vmul.f32 %v7472, %v7760
      %v7905 = vmul.f32 %v7473, %v7761
      %v7906 = vmul.f32 %v7474, %v7762
      %v7907 = vmul.f32 %v7475, %v7763
      %v7908 = vmul.f32 %v7476, %v7764
      %v7909 = vmul.f32 %v7477, %v7765
      %v7910 = vmul.f32 %v7478, %v7766
      %v7911 = vmul.f32 %v7479, %v7767
      %v7912 = vmul.f32 %v7480, %v7768
      %v7913 = vmul.f32 %v7481, %v7769
      %v7914 = vmul.f32 %v7482, %v7770
      %v7915 = vmul.f32 %v7483, %v7771
      %v7916 = vmul.f32 %v7484, %v7772
      %v7917 = vmul.f32 %v7485, %v7773
      %v7918 = vmul.f32 %v7486, %v7774
      %v7919 = vmul.f32 %v7487, %v7775
      %v7920 = vmul.f32 %v7488, %v7776
      %v7921 = vmul.f32 %v7489, %v7777
      %v7922 = vmul.f32 %v7490, %v7778
      %v7923 = vmul.f32 %v7491, %v7779
      %v7924 = vmul.f32 %v7492, %v7780
      %v7925 = vmul.f32 %v7493, %v7781
      %v7926 = vmul.f32 %v7494, %v7782
      %v7927 = vmul.f32 %v7495, %v7783
      %v7928 = vmul.f32 %v7496, %v7784
      %v7929 = vmul.f32 %v7497, %v7785
      %v7930 = vmul.f32 %v7498, %v7786
      %v7931 = vmul.f32 %v7499, %v7787
      %v7932 = vmul.f32 %v7500, %v7788
      %v7933 = vmul.f32 %v7501, %v7789
      %v7934 = vmul.f32 %v7502, %v7790
      %v7935 = vmul.f32 %v7503, %v7791
      %v7936 = vmul.f32 %v7504, %v7792
      %v7937 = vmul.f32 %v7505, %v7793
      %v7938 = vmul.f32 %v7506, %v7794
      %v7939 = vmul.f32 %v7507, %v7795
      %v7940 = vmul.f32 %v7508, %v7796
      %v7941 = vmul.f32 %v7509, %v7797
      %v7942 = vmul.f32 %v7510, %v7798
      %v7943 = vmul.f32 %v7511, %v7799
      %v7944 = vmul.f32 %v7512, %v7800
      %v7945 = vmul.f32 %v7513, %v7801
      %v7946 = vmul.f32 %v7514, %v7802
      %v7947 = vmul.f32 %v7515, %v7803
      %v7948 = vmul.f32 %v7516, %v7804
      %v7949 = vmul.f32 %v7517, %v7805
      %v7950 = vmul.f32 %v7518, %v7806
      %v7951 = vmul.f32 %v7519, %v7807
      %v7952 = vmul.f32 %v7520, %v7808
      %v7953 = vmul.f32 %v7521, %v7809
      %v7954 = vmul.f32 %v7522, %v7810
      %v7955 = vmul.f32 %v7523, %v7811
      %v7956 = vmul.f32 %v7524, %v7812
      %v7957 = vmul.f32 %v7525, %v7813
      %v7958 = vmul.f32 %v7526, %v7814
      %v7959 = vmul.f32 %v7527, %v7815
      %v7960 = vmul.f32 %v7528, %v7816
      %v7961 = vmul.f32 %v7529, %v7817
      %v7962 = vmul.f32 %v7530, %v7818
      %v7963 = vmul.f32 %v7531, %v7819
      %v7964 = vmul.f32 %v7532, %v7820
      %v7965 = vmul.f32 %v7533, %v7821
      %v7966 = vmul.f32 %v7534, %v7822
      %v7967 = vmul.f32 %v7535, %v7823
      %v7968 = vmul.f32 %v7536, %v7824
      %v7969 = vmul.f32 %v7537, %v7825
      %v7970 = vmul.f32 %v7538, %v7826
      %v7971 = vmul.f32 %v7539, %v7827
      %v7972 = vmul.f32 %v7540, %v7828
      %v7973 = vmul.f32 %v7541, %v7829
      %v7974 = vmul.f32 %v7542, %v7830
      %v7975 = vmul.f32 %v7543, %v7831
      %v7976 = vmul.f32 %v7544, %v7832
      %v7977 = vmul.f32 %v7545, %v7833
      %v7978 = vmul.f32 %v7546, %v7834
      %v7979 = vmul.f32 %v7547, %v7835
      %v7980 = vmul.f32 %v7548, %v7836
      %v7981 = vmul.f32 %v7549, %v7837
      %v7982 = vmul.f32 %v7550, %v7838
      %v7983 = vmul.f32 %v7551, %v7839
      %v7984 = vmul.f32 %v7552, %v7840
      %v7985 = vmul.f32 %v7553, %v7841
      %v7986 = vmul.f32 %v7554, %v7842
      %v7987 = vmul.f32 %v7555, %v7843
      %v7988 = vmul.f32 %v7556, %v7844
      %v7989 = vmul.f32 %v7557, %v7845
      %v7990 = vmul.f32 %v7558, %v7846
      %v7991 = vmul.f32 %v7559, %v7847
      %v7992 = vmul.f32 %v7560, %v7848
      %v7993 = vmul.f32 %v7561, %v7849
      %v7994 = vmul.f32 %v7562, %v7850
      %v7995 = vmul.f32 %v7563, %v7851
      %v7996 = vmul.f32 %v7564, %v7852
      %v7997 = vmul.f32 %v7565, %v7853
      %v7998 = vmul.f32 %v7566, %v7854
      %v7999 = vmul.f32 %v7567, %v7855
      %v8000 = vmul.f32 %v7568, %v7856
      %v8001 = vmul.f32 %v7569, %v7857
      %v8002 = vmul.f32 %v7570, %v7858
      %v8003 = vmul.f32 %v7571, %v7859
      %v8005 = vlaneseq
      %v8006 = vshrl.u32 %v8005, 7
      %v8007 = vsub.s32 0, %v8006
      %v8008 = vrot.slane %v6130, %v8007
      %v8010 = vmul.f32 %v7860, %v8008
      %v8011 = vmul.f32 %v7861, %v8008
      %v8012 = vmul.f32 %v7862, %v8008
      %v8013 = vmul.f32 %v7863, %v8008
      %v8014 = vmul.f32 %v7864, %v8008
      %v8015 = vmul.f32 %v7865, %v8008
      %v8016 = vmul.f32 %v7866, %v8008
      %v8017 = vmul.f32 %v7867, %v8008
      %v8018 = vmul.f32 %v7868, %v8008
      %v8019 = vmul.f32 %v7869, %v8008
      %v8020 = vmul.f32 %v7870, %v8008
      %v8021 = vmul.f32 %v7871, %v8008
      %v8022 = vmul.f32 %v7872, %v8008
      %v8023 = vmul.f32 %v7873, %v8008
      %v8024 = vmul.f32 %v7874, %v8008
      %v8025 = vmul.f32 %v7875, %v8008
      %v8026 = vmul.f32 %v7876, %v8008
      %v8027 = vmul.f32 %v7877, %v8008
      %v8028 = vmul.f32 %v7878, %v8008
      %v8029 = vmul.f32 %v7879, %v8008
      %v8030 = vmul.f32 %v7880, %v8008
      %v8031 = vmul.f32 %v7881, %v8008
      %v8032 = vmul.f32 %v7882, %v8008
      %v8033 = vmul.f32 %v7883, %v8008
      %v8034 = vmul.f32 %v7884, %v8008
      %v8035 = vmul.f32 %v7885, %v8008
      %v8036 = vmul.f32 %v7886, %v8008
      %v8037 = vmul.f32 %v7887, %v8008
      %v8038 = vmul.f32 %v7888, %v8008
      %v8039 = vmul.f32 %v7889, %v8008
      %v8040 = vmul.f32 %v7890, %v8008
      %v8041 = vmul.f32 %v7891, %v8008
      %v8042 = vmul.f32 %v7892, %v8008
      %v8043 = vmul.f32 %v7893, %v8008
      %v8044 = vmul.f32 %v7894, %v8008
      %v8045 = vmul.f32 %v7895, %v8008
      %v8046 = vmul.f32 %v7896, %v8008
      %v8047 = vmul.f32 %v7897, %v8008
      %v8048 = vmul.f32 %v7898, %v8008
      %v8049 = vmul.f32 %v7899, %v8008
      %v8050 = vmul.f32 %v7900, %v8008
      %v8051 = vmul.f32 %v7901, %v8008
      %v8052 = vmul.f32 %v7902, %v8008
      %v8053 = vmul.f32 %v7903, %v8008
      %v8054 = vmul.f32 %v7904, %v8008
      %v8055 = vmul.f32 %v7905, %v8008
      %v8056 = vmul.f32 %v7906, %v8008
      %v8057 = vmul.f32 %v7907, %v8008
      %v8058 = vmul.f32 %v7908, %v8008
      %v8059 = vmul.f32 %v7909, %v8008
      %v8060 = vmul.f32 %v7910, %v8008
      %v8061 = vmul.f32 %v7911, %v8008
      %v8062 = vmul.f32 %v7912, %v8008
      %v8063 = vmul.f32 %v7913, %v8008
      %v8064 = vmul.f32 %v7914, %v8008
      %v8065 = vmul.f32 %v7915, %v8008
      %v8066 = vmul.f32 %v7916, %v8008
      %v8067 = vmul.f32 %v7917, %v8008
      %v8068 = vmul.f32 %v7918, %v8008
      %v8069 = vmul.f32 %v7919, %v8008
      %v8070 = vmul.f32 %v7920, %v8008
      %v8071 = vmul.f32 %v7921, %v8008
      %v8072 = vmul.f32 %v7922, %v8008
      %v8073 = vmul.f32 %v7923, %v8008
      %v8074 = vmul.f32 %v7924, %v8008
      %v8075 = vmul.f32 %v7925, %v8008
      %v8076 = vmul.f32 %v7926, %v8008
      %v8077 = vmul.f32 %v7927, %v8008
      %v8078 = vmul.f32 %v7928, %v8008
      %v8079 = vmul.f32 %v7929, %v8008
      %v8080 = vmul.f32 %v7930, %v8008
      %v8081 = vmul.f32 %v7931, %v8008
      %v8082 = vmul.f32 %v7932, %v8008
      %v8083 = vmul.f32 %v7933, %v8008
      %v8084 = vmul.f32 %v7934, %v8008
      %v8085 = vmul.f32 %v7935, %v8008
      %v8086 = vmul.f32 %v7936, %v8008
      %v8087 = vmul.f32 %v7937, %v8008
      %v8088 = vmul.f32 %v7938, %v8008
      %v8089 = vmul.f32 %v7939, %v8008
      %v8090 = vmul.f32 %v7940, %v8008
      %v8091 = vmul.f32 %v7941, %v8008
      %v8092 = vmul.f32 %v7942, %v8008
      %v8093 = vmul.f32 %v7943, %v8008
      %v8094 = vmul.f32 %v7944, %v8008
      %v8095 = vmul.f32 %v7945, %v8008
      %v8096 = vmul.f32 %v7946, %v8008
      %v8097 = vmul.f32 %v7947, %v8008
      %v8098 = vmul.f32 %v7948, %v8008
      %v8099 = vmul.f32 %v7949, %v8008
      %v8100 = vmul.f32 %v7950, %v8008
      %v8101 = vmul.f32 %v7951, %v8008
      %v8102 = vmul.f32 %v7952, %v8008
      %v8103 = vmul.f32 %v7953, %v8008
      %v8104 = vmul.f32 %v7954, %v8008
      %v8105 = vmul.f32 %v7955, %v8008
      %v8106 = vmul.f32 %v7956, %v8008
      %v8107 = vmul.f32 %v7957, %v8008
      %v8108 = vmul.f32 %v7958, %v8008
      %v8109 = vmul.f32 %v7959, %v8008
      %v8110 = vmul.f32 %v7960, %v8008
      %v8111 = vmul.f32 %v7961, %v8008
      %v8112 = vmul.f32 %v7962, %v8008
      %v8113 = vmul.f32 %v7963, %v8008
      %v8114 = vmul.f32 %v7964, %v8008
      %v8115 = vmul.f32 %v7965, %v8008
      %v8116 = vmul.f32 %v7966, %v8008
      %v8117 = vmul.f32 %v7967, %v8008
      %v8118 = vmul.f32 %v7968, %v8008
      %v8119 = vmul.f32 %v7969, %v8008
      %v8120 = vmul.f32 %v7970, %v8008
      %v8121 = vmul.f32 %v7971, %v8008
      %v8122 = vmul.f32 %v7972, %v8008
      %v8123 = vmul.f32 %v7973, %v8008
      %v8124 = vmul.f32 %v7974, %v8008
      %v8125 = vmul.f32 %v7975, %v8008
      %v8126 = vmul.f32 %v7976, %v8008
      %v8127 = vmul.f32 %v7977, %v8008
      %v8128 = vmul.f32 %v7978, %v8008
      %v8129 = vmul.f32 %v7979, %v8008
      %v8130 = vmul.f32 %v7980, %v8008
      %v8131 = vmul.f32 %v7981, %v8008
      %v8132 = vmul.f32 %v7982, %v8008
      %v8133 = vmul.f32 %v7983, %v8008
      %v8134 = vmul.f32 %v7984, %v8008
      %v8135 = vmul.f32 %v7985, %v8008
      %v8136 = vmul.f32 %v7986, %v8008
      %v8137 = vmul.f32 %v7987, %v8008
      %v8138 = vmul.f32 %v7988, %v8008
      %v8139 = vmul.f32 %v7989, %v8008
      %v8140 = vmul.f32 %v7990, %v8008
      %v8141 = vmul.f32 %v7991, %v8008
      %v8142 = vmul.f32 %v7992, %v8008
      %v8143 = vmul.f32 %v7993, %v8008
      %v8144 = vmul.f32 %v7994, %v8008
      %v8145 = vmul.f32 %v7995, %v8008
      %v8146 = vmul.f32 %v7996, %v8008
      %v8147 = vmul.f32 %v7997, %v8008
      %v8148 = vmul.f32 %v7998, %v8008
      %v8149 = vmul.f32 %v7999, %v8008
      %v8150 = vmul.f32 %v8000, %v8008
      %v8151 = vmul.f32 %v8001, %v8008
      %v8152 = vmul.f32 %v8002, %v8008
      %v8153 = vmul.f32 %v8003, %v8008
      %v8155 = vlaneseq
      %v8156 = vshrl.u32 %v8155, 7
      %v8157 = vsub.s32 0, %v8156
      %v8158 = vrot.slane %v6131, %v8157
      %v8160 = vadd.f32 %v8010, %v8158
      %v8161 = vadd.f32 %v8011, %v8158
      %v8162 = vadd.f32 %v8012, %v8158
      %v8163 = vadd.f32 %v8013, %v8158
      %v8164 = vadd.f32 %v8014, %v8158
      %v8165 = vadd.f32 %v8015, %v8158
      %v8166 = vadd.f32 %v8016, %v8158
      %v8167 = vadd.f32 %v8017, %v8158
      %v8168 = vadd.f32 %v8018, %v8158
      %v8169 = vadd.f32 %v8019, %v8158
      %v8170 = vadd.f32 %v8020, %v8158
      %v8171 = vadd.f32 %v8021, %v8158
      %v8172 = vadd.f32 %v8022, %v8158
      %v8173 = vadd.f32 %v8023, %v8158
      %v8174 = vadd.f32 %v8024, %v8158
      %v8175 = vadd.f32 %v8025, %v8158
      %v8176 = vadd.f32 %v8026, %v8158
      %v8177 = vadd.f32 %v8027, %v8158
      %v8178 = vadd.f32 %v8028, %v8158
      %v8179 = vadd.f32 %v8029, %v8158
      %v8180 = vadd.f32 %v8030, %v8158
      %v8181 = vadd.f32 %v8031, %v8158
      %v8182 = vadd.f32 %v8032, %v8158
      %v8183 = vadd.f32 %v8033, %v8158
      %v8184 = vadd.f32 %v8034, %v8158
      %v8185 = vadd.f32 %v8035, %v8158
      %v8186 = vadd.f32 %v8036, %v8158
      %v8187 = vadd.f32 %v8037, %v8158
      %v8188 = vadd.f32 %v8038, %v8158
      %v8189 = vadd.f32 %v8039, %v8158
      %v8190 = vadd.f32 %v8040, %v8158
      %v8191 = vadd.f32 %v8041, %v8158
      %v8192 = vadd.f32 %v8042, %v8158
      %v8193 = vadd.f32 %v8043, %v8158
      %v8194 = vadd.f32 %v8044, %v8158
      %v8195 = vadd.f32 %v8045, %v8158
      %v8196 = vadd.f32 %v8046, %v8158
      %v8197 = vadd.f32 %v8047, %v8158
      %v8198 = vadd.f32 %v8048, %v8158
      %v8199 = vadd.f32 %v8049, %v8158
      %v8200 = vadd.f32 %v8050, %v8158
      %v8201 = vadd.f32 %v8051, %v8158
      %v8202 = vadd.f32 %v8052, %v8158
      %v8203 = vadd.f32 %v8053, %v8158
      %v8204 = vadd.f32 %v8054, %v8158
      %v8205 = vadd.f32 %v8055, %v8158
      %v8206 = vadd.f32 %v8056, %v8158
      %v8207 = vadd.f32 %v8057, %v8158
      %v8208 = vadd.f32 %v8058, %v8158
      %v8209 = vadd.f32 %v8059, %v8158
      %v8210 = vadd.f32 %v8060, %v8158
      %v8211 = vadd.f32 %v8061, %v8158
      %v8212 = vadd.f32 %v8062, %v8158
      %v8213 = vadd.f32 %v8063, %v8158
      %v8214 = vadd.f32 %v8064, %v8158
      %v8215 = vadd.f32 %v8065, %v8158
      %v8216 = vadd.f32 %v8066, %v8158
      %v8217 = vadd.f32 %v8067, %v8158
      %v8218 = vadd.f32 %v8068, %v8158
      %v8219 = vadd.f32 %v8069, %v8158
      %v8220 = vadd.f32 %v8070, %v8158
      %v8221 = vadd.f32 %v8071, %v8158
      %v8222 = vadd.f32 %v8072, %v8158
      %v8223 = vadd.f32 %v8073, %v8158
      %v8224 = vadd.f32 %v8074, %v8158
      %v8225 = vadd.f32 %v8075, %v8158
      %v8226 = vadd.f32 %v8076, %v8158
      %v8227 = vadd.f32 %v8077, %v8158
      %v8228 = vadd.f32 %v8078, %v8158
      %v8229 = vadd.f32 %v8079, %v8158
      %v8230 = vadd.f32 %v8080, %v8158
      %v8231 = vadd.f32 %v8081, %v8158
      %v8232 = vadd.f32 %v8082, %v8158
      %v8233 = vadd.f32 %v8083, %v8158
      %v8234 = vadd.f32 %v8084, %v8158
      %v8235 = vadd.f32 %v8085, %v8158
      %v8236 = vadd.f32 %v8086, %v8158
      %v8237 = vadd.f32 %v8087, %v8158
      %v8238 = vadd.f32 %v8088, %v8158
      %v8239 = vadd.f32 %v8089, %v8158
      %v8240 = vadd.f32 %v8090, %v8158
      %v8241 = vadd.f32 %v8091, %v8158
      %v8242 = vadd.f32 %v8092, %v8158
      %v8243 = vadd.f32 %v8093, %v8158
      %v8244 = vadd.f32 %v8094, %v8158
      %v8245 = vadd.f32 %v8095, %v8158
      %v8246 = vadd.f32 %v8096, %v8158
      %v8247 = vadd.f32 %v8097, %v8158
      %v8248 = vadd.f32 %v8098, %v8158
      %v8249 = vadd.f32 %v8099, %v8158
      %v8250 = vadd.f32 %v8100, %v8158
      %v8251 = vadd.f32 %v8101, %v8158
      %v8252 = vadd.f32 %v8102, %v8158
      %v8253 = vadd.f32 %v8103, %v8158
      %v8254 = vadd.f32 %v8104, %v8158
      %v8255 = vadd.f32 %v8105, %v8158
      %v8256 = vadd.f32 %v8106, %v8158
      %v8257 = vadd.f32 %v8107, %v8158
      %v8258 = vadd.f32 %v8108, %v8158
      %v8259 = vadd.f32 %v8109, %v8158
      %v8260 = vadd.f32 %v8110, %v8158
      %v8261 = vadd.f32 %v8111, %v8158
      %v8262 = vadd.f32 %v8112, %v8158
      %v8263 = vadd.f32 %v8113, %v8158
      %v8264 = vadd.f32 %v8114, %v8158
      %v8265 = vadd.f32 %v8115, %v8158
      %v8266 = vadd.f32 %v8116, %v8158
      %v8267 = vadd.f32 %v8117, %v8158
      %v8268 = vadd.f32 %v8118, %v8158
      %v8269 = vadd.f32 %v8119, %v8158
      %v8270 = vadd.f32 %v8120, %v8158
      %v8271 = vadd.f32 %v8121, %v8158
      %v8272 = vadd.f32 %v8122, %v8158
      %v8273 = vadd.f32 %v8123, %v8158
      %v8274 = vadd.f32 %v8124, %v8158
      %v8275 = vadd.f32 %v8125, %v8158
      %v8276 = vadd.f32 %v8126, %v8158
      %v8277 = vadd.f32 %v8127, %v8158
      %v8278 = vadd.f32 %v8128, %v8158
      %v8279 = vadd.f32 %v8129, %v8158
      %v8280 = vadd.f32 %v8130, %v8158
      %v8281 = vadd.f32 %v8131, %v8158
      %v8282 = vadd.f32 %v8132, %v8158
      %v8283 = vadd.f32 %v8133, %v8158
      %v8284 = vadd.f32 %v8134, %v8158
      %v8285 = vadd.f32 %v8135, %v8158
      %v8286 = vadd.f32 %v8136, %v8158
      %v8287 = vadd.f32 %v8137, %v8158
      %v8288 = vadd.f32 %v8138, %v8158
      %v8289 = vadd.f32 %v8139, %v8158
      %v8290 = vadd.f32 %v8140, %v8158
      %v8291 = vadd.f32 %v8141, %v8158
      %v8292 = vadd.f32 %v8142, %v8158
      %v8293 = vadd.f32 %v8143, %v8158
      %v8294 = vadd.f32 %v8144, %v8158
      %v8295 = vadd.f32 %v8145, %v8158
      %v8296 = vadd.f32 %v8146, %v8158
      %v8297 = vadd.f32 %v8147, %v8158
      %v8298 = vadd.f32 %v8148, %v8158
      %v8299 = vadd.f32 %v8149, %v8158
      %v8300 = vadd.f32 %v8150, %v8158
      %v8301 = vadd.f32 %v8151, %v8158
      %v8302 = vadd.f32 %v8152, %v8158
      %v8303 = vadd.f32 %v8153, %v8158
      %v8304 = vpack.c.bf16 %v8161, %v8160
      %v8305 = vpack.c.bf16 %v8163, %v8162
      %v8306 = vpack.c.bf16 %v8165, %v8164
      %v8307 = vpack.c.bf16 %v8167, %v8166
      %v8308 = vpack.c.bf16 %v8169, %v8168
      %v8309 = vpack.c.bf16 %v8171, %v8170
      %v8310 = vpack.c.bf16 %v8173, %v8172
      %v8311 = vpack.c.bf16 %v8175, %v8174
      %v8312 = vpack.c.bf16 %v8177, %v8176
      %v8313 = vpack.c.bf16 %v8179, %v8178
      %v8314 = vpack.c.bf16 %v8181, %v8180
      %v8315 = vpack.c.bf16 %v8183, %v8182
      %v8316 = vpack.c.bf16 %v8185, %v8184
      %v8317 = vpack.c.bf16 %v8187, %v8186
      %v8318 = vpack.c.bf16 %v8189, %v8188
      %v8319 = vpack.c.bf16 %v8191, %v8190
      %v8320 = vpack.c.bf16 %v8193, %v8192
      %v8321 = vpack.c.bf16 %v8195, %v8194
      %v8322 = vpack.c.bf16 %v8197, %v8196
      %v8323 = vpack.c.bf16 %v8199, %v8198
      %v8324 = vpack.c.bf16 %v8201, %v8200
      %v8325 = vpack.c.bf16 %v8203, %v8202
      %v8326 = vpack.c.bf16 %v8205, %v8204
      %v8327 = vpack.c.bf16 %v8207, %v8206
      %v8328 = vpack.c.bf16 %v8209, %v8208
      %v8329 = vpack.c.bf16 %v8211, %v8210
      %v8330 = vpack.c.bf16 %v8213, %v8212
      %v8331 = vpack.c.bf16 %v8215, %v8214
      %v8332 = vpack.c.bf16 %v8217, %v8216
      %v8333 = vpack.c.bf16 %v8219, %v8218
      %v8334 = vpack.c.bf16 %v8221, %v8220
      %v8335 = vpack.c.bf16 %v8223, %v8222
      %v8336 = vpack.c.bf16 %v8225, %v8224
      %v8337 = vpack.c.bf16 %v8227, %v8226
      %v8338 = vpack.c.bf16 %v8229, %v8228
      %v8339 = vpack.c.bf16 %v8231, %v8230
      %v8340 = vpack.c.bf16 %v8233, %v8232
      %v8341 = vpack.c.bf16 %v8235, %v8234
      %v8342 = vpack.c.bf16 %v8237, %v8236
      %v8343 = vpack.c.bf16 %v8239, %v8238
      %v8344 = vpack.c.bf16 %v8241, %v8240
      %v8345 = vpack.c.bf16 %v8243, %v8242
      %v8346 = vpack.c.bf16 %v8245, %v8244
      %v8347 = vpack.c.bf16 %v8247, %v8246
      %v8348 = vpack.c.bf16 %v8249, %v8248
      %v8349 = vpack.c.bf16 %v8251, %v8250
      %v8350 = vpack.c.bf16 %v8253, %v8252
      %v8351 = vpack.c.bf16 %v8255, %v8254
      %v8352 = vpack.c.bf16 %v8257, %v8256
      %v8353 = vpack.c.bf16 %v8259, %v8258
      %v8354 = vpack.c.bf16 %v8261, %v8260
      %v8355 = vpack.c.bf16 %v8263, %v8262
      %v8356 = vpack.c.bf16 %v8265, %v8264
      %v8357 = vpack.c.bf16 %v8267, %v8266
      %v8358 = vpack.c.bf16 %v8269, %v8268
      %v8359 = vpack.c.bf16 %v8271, %v8270
      %v8360 = vpack.c.bf16 %v8273, %v8272
      %v8361 = vpack.c.bf16 %v8275, %v8274
      %v8362 = vpack.c.bf16 %v8277, %v8276
      %v8363 = vpack.c.bf16 %v8279, %v8278
      %v8364 = vpack.c.bf16 %v8281, %v8280
      %v8365 = vpack.c.bf16 %v8283, %v8282
      %v8366 = vpack.c.bf16 %v8285, %v8284
      %v8367 = vpack.c.bf16 %v8287, %v8286
      %v8368 = vpack.c.bf16 %v8289, %v8288
      %v8369 = vpack.c.bf16 %v8291, %v8290
      %v8370 = vpack.c.bf16 %v8293, %v8292
      %v8371 = vpack.c.bf16 %v8295, %v8294
      %v8372 = vpack.c.bf16 %v8297, %v8296
      %v8373 = vpack.c.bf16 %v8299, %v8298
      %v8374 = vpack.c.bf16 %v8301, %v8300
      %v8375 = vpack.c.bf16 %v8303, %v8302
      %v8448 = vunpack.c.l.b16 %v8304
      %v8449 = vunpack.c.h.b16 %v8304
      %v8450 = vunpack.c.l.b16 %v8305
      %v8451 = vunpack.c.h.b16 %v8305
      %v8452 = vunpack.c.l.b16 %v8306
      %v8453 = vunpack.c.h.b16 %v8306
      %v8454 = vunpack.c.l.b16 %v8307
      %v8455 = vunpack.c.h.b16 %v8307
      %v8456 = vunpack.c.l.b16 %v8308
      %v8457 = vunpack.c.h.b16 %v8308
      %v8458 = vunpack.c.l.b16 %v8309
      %v8459 = vunpack.c.h.b16 %v8309
      %v8460 = vunpack.c.l.b16 %v8310
      %v8461 = vunpack.c.h.b16 %v8310
      %v8462 = vunpack.c.l.b16 %v8311
      %v8463 = vunpack.c.h.b16 %v8311
      %v8464 = vunpack.c.l.b16 %v8312
      %v8465 = vunpack.c.h.b16 %v8312
      %v8466 = vunpack.c.l.b16 %v8313
      %v8467 = vunpack.c.h.b16 %v8313
      %v8468 = vunpack.c.l.b16 %v8314
      %v8469 = vunpack.c.h.b16 %v8314
      %v8470 = vunpack.c.l.b16 %v8315
      %v8471 = vunpack.c.h.b16 %v8315
      %v8472 = vunpack.c.l.b16 %v8316
      %v8473 = vunpack.c.h.b16 %v8316
      %v8474 = vunpack.c.l.b16 %v8317
      %v8475 = vunpack.c.h.b16 %v8317
      %v8476 = vunpack.c.l.b16 %v8318
      %v8477 = vunpack.c.h.b16 %v8318
      %v8478 = vunpack.c.l.b16 %v8319
      %v8479 = vunpack.c.h.b16 %v8319
      %v8480 = vunpack.c.l.b16 %v8320
      %v8481 = vunpack.c.h.b16 %v8320
      %v8482 = vunpack.c.l.b16 %v8321
      %v8483 = vunpack.c.h.b16 %v8321
      %v8484 = vunpack.c.l.b16 %v8322
      %v8485 = vunpack.c.h.b16 %v8322
      %v8486 = vunpack.c.l.b16 %v8323
      %v8487 = vunpack.c.h.b16 %v8323
      %v8488 = vunpack.c.l.b16 %v8324
      %v8489 = vunpack.c.h.b16 %v8324
      %v8490 = vunpack.c.l.b16 %v8325
      %v8491 = vunpack.c.h.b16 %v8325
      %v8492 = vunpack.c.l.b16 %v8326
      %v8493 = vunpack.c.h.b16 %v8326
      %v8494 = vunpack.c.l.b16 %v8327
      %v8495 = vunpack.c.h.b16 %v8327
      %v8496 = vunpack.c.l.b16 %v8328
      %v8497 = vunpack.c.h.b16 %v8328
      %v8498 = vunpack.c.l.b16 %v8329
      %v8499 = vunpack.c.h.b16 %v8329
      %v8500 = vunpack.c.l.b16 %v8330
      %v8501 = vunpack.c.h.b16 %v8330
      %v8502 = vunpack.c.l.b16 %v8331
      %v8503 = vunpack.c.h.b16 %v8331
      %v8504 = vunpack.c.l.b16 %v8332
      %v8505 = vunpack.c.h.b16 %v8332
      %v8506 = vunpack.c.l.b16 %v8333
      %v8507 = vunpack.c.h.b16 %v8333
      %v8508 = vunpack.c.l.b16 %v8334
      %v8509 = vunpack.c.h.b16 %v8334
      %v8510 = vunpack.c.l.b16 %v8335
      %v8511 = vunpack.c.h.b16 %v8335
      %v8512 = vunpack.c.l.b16 %v8336
      %v8513 = vunpack.c.h.b16 %v8336
      %v8514 = vunpack.c.l.b16 %v8337
      %v8515 = vunpack.c.h.b16 %v8337
      %v8516 = vunpack.c.l.b16 %v8338
      %v8517 = vunpack.c.h.b16 %v8338
      %v8518 = vunpack.c.l.b16 %v8339
      %v8519 = vunpack.c.h.b16 %v8339
      %v8520 = vunpack.c.l.b16 %v8340
      %v8521 = vunpack.c.h.b16 %v8340
      %v8522 = vunpack.c.l.b16 %v8341
      %v8523 = vunpack.c.h.b16 %v8341
      %v8524 = vunpack.c.l.b16 %v8342
      %v8525 = vunpack.c.h.b16 %v8342
      %v8526 = vunpack.c.l.b16 %v8343
      %v8527 = vunpack.c.h.b16 %v8343
      %v8528 = vunpack.c.l.b16 %v8344
      %v8529 = vunpack.c.h.b16 %v8344
      %v8530 = vunpack.c.l.b16 %v8345
      %v8531 = vunpack.c.h.b16 %v8345
      %v8532 = vunpack.c.l.b16 %v8346
      %v8533 = vunpack.c.h.b16 %v8346
      %v8534 = vunpack.c.l.b16 %v8347
      %v8535 = vunpack.c.h.b16 %v8347
      %v8536 = vunpack.c.l.b16 %v8348
      %v8537 = vunpack.c.h.b16 %v8348
      %v8538 = vunpack.c.l.b16 %v8349
      %v8539 = vunpack.c.h.b16 %v8349
      %v8540 = vunpack.c.l.b16 %v8350
      %v8541 = vunpack.c.h.b16 %v8350
      %v8542 = vunpack.c.l.b16 %v8351
      %v8543 = vunpack.c.h.b16 %v8351
      %v8544 = vunpack.c.l.b16 %v8352
      %v8545 = vunpack.c.h.b16 %v8352
      %v8546 = vunpack.c.l.b16 %v8353
      %v8547 = vunpack.c.h.b16 %v8353
      %v8548 = vunpack.c.l.b16 %v8354
      %v8549 = vunpack.c.h.b16 %v8354
      %v8550 = vunpack.c.l.b16 %v8355
      %v8551 = vunpack.c.h.b16 %v8355
      %v8552 = vunpack.c.l.b16 %v8356
      %v8553 = vunpack.c.h.b16 %v8356
      %v8554 = vunpack.c.l.b16 %v8357
      %v8555 = vunpack.c.h.b16 %v8357
      %v8556 = vunpack.c.l.b16 %v8358
      %v8557 = vunpack.c.h.b16 %v8358
      %v8558 = vunpack.c.l.b16 %v8359
      %v8559 = vunpack.c.h.b16 %v8359
      %v8560 = vunpack.c.l.b16 %v8360
      %v8561 = vunpack.c.h.b16 %v8360
      %v8562 = vunpack.c.l.b16 %v8361
      %v8563 = vunpack.c.h.b16 %v8361
      %v8564 = vunpack.c.l.b16 %v8362
      %v8565 = vunpack.c.h.b16 %v8362
      %v8566 = vunpack.c.l.b16 %v8363
      %v8567 = vunpack.c.h.b16 %v8363
      %v8568 = vunpack.c.l.b16 %v8364
      %v8569 = vunpack.c.h.b16 %v8364
      %v8570 = vunpack.c.l.b16 %v8365
      %v8571 = vunpack.c.h.b16 %v8365
      %v8572 = vunpack.c.l.b16 %v8366
      %v8573 = vunpack.c.h.b16 %v8366
      %v8574 = vunpack.c.l.b16 %v8367
      %v8575 = vunpack.c.h.b16 %v8367
      %v8576 = vunpack.c.l.b16 %v8368
      %v8577 = vunpack.c.h.b16 %v8368
      %v8578 = vunpack.c.l.b16 %v8369
      %v8579 = vunpack.c.h.b16 %v8369
      %v8580 = vunpack.c.l.b16 %v8370
      %v8581 = vunpack.c.h.b16 %v8370
      %v8582 = vunpack.c.l.b16 %v8371
      %v8583 = vunpack.c.h.b16 %v8371
      %v8584 = vunpack.c.l.b16 %v8372
      %v8585 = vunpack.c.h.b16 %v8372
      %v8586 = vunpack.c.l.b16 %v8373
      %v8587 = vunpack.c.h.b16 %v8373
      %v8588 = vunpack.c.l.b16 %v8374
      %v8589 = vunpack.c.h.b16 %v8374
      %v8590 = vunpack.c.l.b16 %v8375
      %v8591 = vunpack.c.h.b16 %v8375
      %v8592 = vpack.c.b16 %v8448, %v8448
      %v8593 = vpack.c.b16 %v8449, %v8449
      %v8594 = vpack.c.b16 %v8450, %v8450
      %v8595 = vpack.c.b16 %v8451, %v8451
      %v8596 = vpack.c.b16 %v8452, %v8452
      %v8597 = vpack.c.b16 %v8453, %v8453
      %v8598 = vpack.c.b16 %v8454, %v8454
      %v8599 = vpack.c.b16 %v8455, %v8455
      %v8600 = vpack.c.b16 %v8456, %v8456
      %v8601 = vpack.c.b16 %v8457, %v8457
      %v8602 = vpack.c.b16 %v8458, %v8458
      %v8603 = vpack.c.b16 %v8459, %v8459
      %v8604 = vpack.c.b16 %v8460, %v8460
      %v8605 = vpack.c.b16 %v8461, %v8461
      %v8606 = vpack.c.b16 %v8462, %v8462
      %v8607 = vpack.c.b16 %v8463, %v8463
      %v8608 = vpack.c.b16 %v8464, %v8464
      %v8609 = vpack.c.b16 %v8465, %v8465
      %v8610 = vpack.c.b16 %v8466, %v8466
      %v8611 = vpack.c.b16 %v8467, %v8467
      %v8612 = vpack.c.b16 %v8468, %v8468
      %v8613 = vpack.c.b16 %v8469, %v8469
      %v8614 = vpack.c.b16 %v8470, %v8470
      %v8615 = vpack.c.b16 %v8471, %v8471
      %v8616 = vpack.c.b16 %v8472, %v8472
      %v8617 = vpack.c.b16 %v8473, %v8473
      %v8618 = vpack.c.b16 %v8474, %v8474
      %v8619 = vpack.c.b16 %v8475, %v8475
      %v8620 = vpack.c.b16 %v8476, %v8476
      %v8621 = vpack.c.b16 %v8477, %v8477
      %v8622 = vpack.c.b16 %v8478, %v8478
      %v8623 = vpack.c.b16 %v8479, %v8479
      %v8624 = vpack.c.b16 %v8480, %v8480
      %v8625 = vpack.c.b16 %v8481, %v8481
      %v8626 = vpack.c.b16 %v8482, %v8482
      %v8627 = vpack.c.b16 %v8483, %v8483
      %v8628 = vpack.c.b16 %v8484, %v8484
      %v8629 = vpack.c.b16 %v8485, %v8485
      %v8630 = vpack.c.b16 %v8486, %v8486
      %v8631 = vpack.c.b16 %v8487, %v8487
      %v8632 = vpack.c.b16 %v8488, %v8488
      %v8633 = vpack.c.b16 %v8489, %v8489
      %v8634 = vpack.c.b16 %v8490, %v8490
      %v8635 = vpack.c.b16 %v8491, %v8491
      %v8636 = vpack.c.b16 %v8492, %v8492
      %v8637 = vpack.c.b16 %v8493, %v8493
      %v8638 = vpack.c.b16 %v8494, %v8494
      %v8639 = vpack.c.b16 %v8495, %v8495
      %v8640 = vpack.c.b16 %v8496, %v8496
      %v8641 = vpack.c.b16 %v8497, %v8497
      %v8642 = vpack.c.b16 %v8498, %v8498
      %v8643 = vpack.c.b16 %v8499, %v8499
      %v8644 = vpack.c.b16 %v8500, %v8500
      %v8645 = vpack.c.b16 %v8501, %v8501
      %v8646 = vpack.c.b16 %v8502, %v8502
      %v8647 = vpack.c.b16 %v8503, %v8503
      %v8648 = vpack.c.b16 %v8504, %v8504
      %v8649 = vpack.c.b16 %v8505, %v8505
      %v8650 = vpack.c.b16 %v8506, %v8506
      %v8651 = vpack.c.b16 %v8507, %v8507
      %v8652 = vpack.c.b16 %v8508, %v8508
      %v8653 = vpack.c.b16 %v8509, %v8509
      %v8654 = vpack.c.b16 %v8510, %v8510
      %v8655 = vpack.c.b16 %v8511, %v8511
      %v8656 = vpack.c.b16 %v8512, %v8512
      %v8657 = vpack.c.b16 %v8513, %v8513
      %v8658 = vpack.c.b16 %v8514, %v8514
      %v8659 = vpack.c.b16 %v8515, %v8515
      %v8660 = vpack.c.b16 %v8516, %v8516
      %v8661 = vpack.c.b16 %v8517, %v8517
      %v8662 = vpack.c.b16 %v8518, %v8518
      %v8663 = vpack.c.b16 %v8519, %v8519
      %v8664 = vpack.c.b16 %v8520, %v8520
      %v8665 = vpack.c.b16 %v8521, %v8521
      %v8666 = vpack.c.b16 %v8522, %v8522
      %v8667 = vpack.c.b16 %v8523, %v8523
      %v8668 = vpack.c.b16 %v8524, %v8524
      %v8669 = vpack.c.b16 %v8525, %v8525
      %v8670 = vpack.c.b16 %v8526, %v8526
      %v8671 = vpack.c.b16 %v8527, %v8527
      %v8672 = vpack.c.b16 %v8528, %v8528
      %v8673 = vpack.c.b16 %v8529, %v8529
      %v8674 = vpack.c.b16 %v8530, %v8530
      %v8675 = vpack.c.b16 %v8531, %v8531
      %v8676 = vpack.c.b16 %v8532, %v8532
      %v8677 = vpack.c.b16 %v8533, %v8533
      %v8678 = vpack.c.b16 %v8534, %v8534
      %v8679 = vpack.c.b16 %v8535, %v8535
      %v8680 = vpack.c.b16 %v8536, %v8536
      %v8681 = vpack.c.b16 %v8537, %v8537
      %v8682 = vpack.c.b16 %v8538, %v8538
      %v8683 = vpack.c.b16 %v8539, %v8539
      %v8684 = vpack.c.b16 %v8540, %v8540
      %v8685 = vpack.c.b16 %v8541, %v8541
      %v8686 = vpack.c.b16 %v8542, %v8542
      %v8687 = vpack.c.b16 %v8543, %v8543
      %v8688 = vpack.c.b16 %v8544, %v8544
      %v8689 = vpack.c.b16 %v8545, %v8545
      %v8690 = vpack.c.b16 %v8546, %v8546
      %v8691 = vpack.c.b16 %v8547, %v8547
      %v8692 = vpack.c.b16 %v8548, %v8548
      %v8693 = vpack.c.b16 %v8549, %v8549
      %v8694 = vpack.c.b16 %v8550, %v8550
      %v8695 = vpack.c.b16 %v8551, %v8551
      %v8696 = vpack.c.b16 %v8552, %v8552
      %v8697 = vpack.c.b16 %v8553, %v8553
      %v8698 = vpack.c.b16 %v8554, %v8554
      %v8699 = vpack.c.b16 %v8555, %v8555
      %v8700 = vpack.c.b16 %v8556, %v8556
      %v8701 = vpack.c.b16 %v8557, %v8557
      %v8702 = vpack.c.b16 %v8558, %v8558
      %v8703 = vpack.c.b16 %v8559, %v8559
      %v8704 = vpack.c.b16 %v8560, %v8560
      %v8705 = vpack.c.b16 %v8561, %v8561
      %v8706 = vpack.c.b16 %v8562, %v8562
      %v8707 = vpack.c.b16 %v8563, %v8563
      %v8708 = vpack.c.b16 %v8564, %v8564
      %v8709 = vpack.c.b16 %v8565, %v8565
      %v8710 = vpack.c.b16 %v8566, %v8566
      %v8711 = vpack.c.b16 %v8567, %v8567
      %v8712 = vpack.c.b16 %v8568, %v8568
      %v8713 = vpack.c.b16 %v8569, %v8569
      %v8714 = vpack.c.b16 %v8570, %v8570
      %v8715 = vpack.c.b16 %v8571, %v8571
      %v8716 = vpack.c.b16 %v8572, %v8572
      %v8717 = vpack.c.b16 %v8573, %v8573
      %v8718 = vpack.c.b16 %v8574, %v8574
      %v8719 = vpack.c.b16 %v8575, %v8575
      %v8720 = vpack.c.b16 %v8576, %v8576
      %v8721 = vpack.c.b16 %v8577, %v8577
      %v8722 = vpack.c.b16 %v8578, %v8578
      %v8723 = vpack.c.b16 %v8579, %v8579
      %v8724 = vpack.c.b16 %v8580, %v8580
      %v8725 = vpack.c.b16 %v8581, %v8581
      %v8726 = vpack.c.b16 %v8582, %v8582
      %v8727 = vpack.c.b16 %v8583, %v8583
      %v8728 = vpack.c.b16 %v8584, %v8584
      %v8729 = vpack.c.b16 %v8585, %v8585
      %v8730 = vpack.c.b16 %v8586, %v8586
      %v8731 = vpack.c.b16 %v8587, %v8587
      %v8732 = vpack.c.b16 %v8588, %v8588
      %v8733 = vpack.c.b16 %v8589, %v8589
      %v8734 = vpack.c.b16 %v8590, %v8590
      %v8735 = vpack.c.b16 %v8591, %v8591
      %8880 = vst [vmem:[%s432] sm:$0xf] %v8592
      %8881 = vst [vmem:[%s432 + $0x4] sm:$0xf] %v8593
      %8882 = vst [vmem:[%s432 + $0x8] sm:$0xf] %v8594
      %8883 = vst [vmem:[%s432 + $0xc] sm:$0xf] %v8595
      %8884 = vst [vmem:[%s432 + $0x10] sm:$0xf] %v8596
      %8885 = vst [vmem:[%s432 + $0x14] sm:$0xf] %v8597
      %8886 = vst [vmem:[%s432 + $0x18] sm:$0xf] %v8598
      %8887 = vst [vmem:[%s432 + $0x1c] sm:$0xf] %v8599
      %8888 = vst [vmem:[%s432 + $0x20] sm:$0xf] %v8600
      %8889 = vst [vmem:[%s432 + $0x24] sm:$0xf] %v8601
      %8890 = vst [vmem:[%s432 + $0x28] sm:$0xf] %v8602
      %8891 = vst [vmem:[%s432 + $0x2c] sm:$0xf] %v8603
      %8892 = vst [vmem:[%s432 + $0x30] sm:$0xf] %v8604
      %8893 = vst [vmem:[%s432 + $0x34] sm:$0xf] %v8605
      %8894 = vst [vmem:[%s432 + $0x38] sm:$0xf] %v8606
      %8895 = vst [vmem:[%s432 + $0x3c] sm:$0xf] %v8607
      %8896 = vst [vmem:[%s432 + $0x40] sm:$0xf] %v8608
      %8897 = vst [vmem:[%s432 + $0x44] sm:$0xf] %v8609
      %8898 = vst [vmem:[%s432 + $0x48] sm:$0xf] %v8610
      %8899 = vst [vmem:[%s432 + $0x4c] sm:$0xf] %v8611
      %8900 = vst [vmem:[%s432 + $0x50] sm:$0xf] %v8612
      %8901 = vst [vmem:[%s432 + $0x54] sm:$0xf] %v8613
      %8902 = vst [vmem:[%s432 + $0x58] sm:$0xf] %v8614
      %8903 = vst [vmem:[%s432 + $0x5c] sm:$0xf] %v8615
      %8904 = vst [vmem:[%s432 + $0x60] sm:$0xf] %v8616
      %8905 = vst [vmem:[%s432 + $0x64] sm:$0xf] %v8617
      %8906 = vst [vmem:[%s432 + $0x68] sm:$0xf] %v8618
      %8907 = vst [vmem:[%s432 + $0x6c] sm:$0xf] %v8619
      %8908 = vst [vmem:[%s432 + $0x70] sm:$0xf] %v8620
      %8909 = vst [vmem:[%s432 + $0x74] sm:$0xf] %v8621
      %8910 = vst [vmem:[%s432 + $0x78] sm:$0xf] %v8622
      %8911 = vst [vmem:[%s432 + $0x7c] sm:$0xf] %v8623
      %8912 = vst [vmem:[%s432 + $0x80] sm:$0xf] %v8624
      %8913 = vst [vmem:[%s432 + $0x84] sm:$0xf] %v8625
      %8914 = vst [vmem:[%s432 + $0x88] sm:$0xf] %v8626
      %8915 = vst [vmem:[%s432 + $0x8c] sm:$0xf] %v8627
      %8916 = vst [vmem:[%s432 + $0x90] sm:$0xf] %v8628
      %8917 = vst [vmem:[%s432 + $0x94] sm:$0xf] %v8629
      %8918 = vst [vmem:[%s432 + $0x98] sm:$0xf] %v8630
      %8919 = vst [vmem:[%s432 + $0x9c] sm:$0xf] %v8631
      %8920 = vst [vmem:[%s432 + $0xa0] sm:$0xf] %v8632
      %8921 = vst [vmem:[%s432 + $0xa4] sm:$0xf] %v8633
      %8922 = vst [vmem:[%s432 + $0xa8] sm:$0xf] %v8634
      %8923 = vst [vmem:[%s432 + $0xac] sm:$0xf] %v8635
      %8924 = vst [vmem:[%s432 + $0xb0] sm:$0xf] %v8636
      %8925 = vst [vmem:[%s432 + $0xb4] sm:$0xf] %v8637
      %8926 = vst [vmem:[%s432 + $0xb8] sm:$0xf] %v8638
      %8927 = vst [vmem:[%s432 + $0xbc] sm:$0xf] %v8639
      %8928 = vst [vmem:[%s432 + $0xc0] sm:$0xf] %v8640
      %8929 = vst [vmem:[%s432 + $0xc4] sm:$0xf] %v8641
      %8930 = vst [vmem:[%s432 + $0xc8] sm:$0xf] %v8642
      %8931 = vst [vmem:[%s432 + $0xcc] sm:$0xf] %v8643
      %8932 = vst [vmem:[%s432 + $0xd0] sm:$0xf] %v8644
      %8933 = vst [vmem:[%s432 + $0xd4] sm:$0xf] %v8645
      %8934 = vst [vmem:[%s432 + $0xd8] sm:$0xf] %v8646
      %8935 = vst [vmem:[%s432 + $0xdc] sm:$0xf] %v8647
      %8936 = vst [vmem:[%s432 + $0xe0] sm:$0xf] %v8648
      %8937 = vst [vmem:[%s432 + $0xe4] sm:$0xf] %v8649
      %8938 = vst [vmem:[%s432 + $0xe8] sm:$0xf] %v8650
      %8939 = vst [vmem:[%s432 + $0xec] sm:$0xf] %v8651
      %8940 = vst [vmem:[%s432 + $0xf0] sm:$0xf] %v8652
      %8941 = vst [vmem:[%s432 + $0xf4] sm:$0xf] %v8653
      %8942 = vst [vmem:[%s432 + $0xf8] sm:$0xf] %v8654
      %8943 = vst [vmem:[%s432 + $0xfc] sm:$0xf] %v8655
      %8944 = vst [vmem:[%s432 + $0x100] sm:$0xf] %v8656
      %8945 = vst [vmem:[%s432 + $0x104] sm:$0xf] %v8657
      %8946 = vst [vmem:[%s432 + $0x108] sm:$0xf] %v8658
      %8947 = vst [vmem:[%s432 + $0x10c] sm:$0xf] %v8659
      %8948 = vst [vmem:[%s432 + $0x110] sm:$0xf] %v8660
      %8949 = vst [vmem:[%s432 + $0x114] sm:$0xf] %v8661
      %8950 = vst [vmem:[%s432 + $0x118] sm:$0xf] %v8662
      %8951 = vst [vmem:[%s432 + $0x11c] sm:$0xf] %v8663
      %8952 = vst [vmem:[%s432 + $0x120] sm:$0xf] %v8664
      %8953 = vst [vmem:[%s432 + $0x124] sm:$0xf] %v8665
      %8954 = vst [vmem:[%s432 + $0x128] sm:$0xf] %v8666
      %8955 = vst [vmem:[%s432 + $0x12c] sm:$0xf] %v8667
      %8956 = vst [vmem:[%s432 + $0x130] sm:$0xf] %v8668
      %8957 = vst [vmem:[%s432 + $0x134] sm:$0xf] %v8669
      %8958 = vst [vmem:[%s432 + $0x138] sm:$0xf] %v8670
      %8959 = vst [vmem:[%s432 + $0x13c] sm:$0xf] %v8671
      %8960 = vst [vmem:[%s432 + $0x140] sm:$0xf] %v8672
      %8961 = vst [vmem:[%s432 + $0x144] sm:$0xf] %v8673
      %8962 = vst [vmem:[%s432 + $0x148] sm:$0xf] %v8674
      %8963 = vst [vmem:[%s432 + $0x14c] sm:$0xf] %v8675
      %8964 = vst [vmem:[%s432 + $0x150] sm:$0xf] %v8676
      %8965 = vst [vmem:[%s432 + $0x154] sm:$0xf] %v8677
      %8966 = vst [vmem:[%s432 + $0x158] sm:$0xf] %v8678
      %8967 = vst [vmem:[%s432 + $0x15c] sm:$0xf] %v8679
      %8968 = vst [vmem:[%s432 + $0x160] sm:$0xf] %v8680
      %8969 = vst [vmem:[%s432 + $0x164] sm:$0xf] %v8681
      %8970 = vst [vmem:[%s432 + $0x168] sm:$0xf] %v8682
      %8971 = vst [vmem:[%s432 + $0x16c] sm:$0xf] %v8683
      %8972 = vst [vmem:[%s432 + $0x170] sm:$0xf] %v8684
      %8973 = vst [vmem:[%s432 + $0x174] sm:$0xf] %v8685
      %8974 = vst [vmem:[%s432 + $0x178] sm:$0xf] %v8686
      %8975 = vst [vmem:[%s432 + $0x17c] sm:$0xf] %v8687
      %8976 = vst [vmem:[%s432 + $0x180] sm:$0xf] %v8688
      %8977 = vst [vmem:[%s432 + $0x184] sm:$0xf] %v8689
      %8978 = vst [vmem:[%s432 + $0x188] sm:$0xf] %v8690
      %8979 = vst [vmem:[%s432 + $0x18c] sm:$0xf] %v8691
      %8980 = vst [vmem:[%s432 + $0x190] sm:$0xf] %v8692
      %8981 = vst [vmem:[%s432 + $0x194] sm:$0xf] %v8693
      %8982 = vst [vmem:[%s432 + $0x198] sm:$0xf] %v8694
      %8983 = vst [vmem:[%s432 + $0x19c] sm:$0xf] %v8695
      %8984 = vst [vmem:[%s432 + $0x1a0] sm:$0xf] %v8696
      %8985 = vst [vmem:[%s432 + $0x1a4] sm:$0xf] %v8697
      %8986 = vst [vmem:[%s432 + $0x1a8] sm:$0xf] %v8698
      %8987 = vst [vmem:[%s432 + $0x1ac] sm:$0xf] %v8699
      %8988 = vst [vmem:[%s432 + $0x1b0] sm:$0xf] %v8700
      %8989 = vst [vmem:[%s432 + $0x1b4] sm:$0xf] %v8701
      %8990 = vst [vmem:[%s432 + $0x1b8] sm:$0xf] %v8702
      %8991 = vst [vmem:[%s432 + $0x1bc] sm:$0xf] %v8703
      %8992 = vst [vmem:[%s432 + $0x1c0] sm:$0xf] %v8704
      %8993 = vst [vmem:[%s432 + $0x1c4] sm:$0xf] %v8705
      %8994 = vst [vmem:[%s432 + $0x1c8] sm:$0xf] %v8706
      %8995 = vst [vmem:[%s432 + $0x1cc] sm:$0xf] %v8707
      %8996 = vst [vmem:[%s432 + $0x1d0] sm:$0xf] %v8708
      %8997 = vst [vmem:[%s432 + $0x1d4] sm:$0xf] %v8709
      %8998 = vst [vmem:[%s432 + $0x1d8] sm:$0xf] %v8710
      %8999 = vst [vmem:[%s432 + $0x1dc] sm:$0xf] %v8711
      %9000 = vst [vmem:[%s432 + $0x1e0] sm:$0xf] %v8712
      %9001 = vst [vmem:[%s432 + $0x1e4] sm:$0xf] %v8713
      %9002 = vst [vmem:[%s432 + $0x1e8] sm:$0xf] %v8714
      %9003 = vst [vmem:[%s432 + $0x1ec] sm:$0xf] %v8715
      %9004 = vst [vmem:[%s432 + $0x1f0] sm:$0xf] %v8716
      %9005 = vst [vmem:[%s432 + $0x1f4] sm:$0xf] %v8717
      %9006 = vst [vmem:[%s432 + $0x1f8] sm:$0xf] %v8718
      %9007 = vst [vmem:[%s432 + $0x1fc] sm:$0xf] %v8719
      %9008 = vst [vmem:[%s432 + $0x200] sm:$0xf] %v8720
      %9009 = vst [vmem:[%s432 + $0x204] sm:$0xf] %v8721
      %9010 = vst [vmem:[%s432 + $0x208] sm:$0xf] %v8722
      %9011 = vst [vmem:[%s432 + $0x20c] sm:$0xf] %v8723
      %9012 = vst [vmem:[%s432 + $0x210] sm:$0xf] %v8724
      %9013 = vst [vmem:[%s432 + $0x214] sm:$0xf] %v8725
      %9014 = vst [vmem:[%s432 + $0x218] sm:$0xf] %v8726
      %9015 = vst [vmem:[%s432 + $0x21c] sm:$0xf] %v8727
      %9016 = vst [vmem:[%s432 + $0x220] sm:$0xf] %v8728
      %9017 = vst [vmem:[%s432 + $0x224] sm:$0xf] %v8729
      %9018 = vst [vmem:[%s432 + $0x228] sm:$0xf] %v8730
      %9019 = vst [vmem:[%s432 + $0x22c] sm:$0xf] %v8731
      %9020 = vst [vmem:[%s432 + $0x230] sm:$0xf] %v8732
      %9021 = vst [vmem:[%s432 + $0x234] sm:$0xf] %v8733
      %9022 = vst [vmem:[%s432 + $0x238] sm:$0xf] %v8734
      %9023 = vst [vmem:[%s432 + $0x23c] sm:$0xf] %v8735
      %s9024 = smul.u32 144, %s22
      %p9025 = scmp.lt.s32.totalorder %s9024, 575
      %s9026 = scalar_select %p9025, %s9024, 575
      %s9027 = smul.addr %s9026, 4
      %s9028 = scalar_lea.vmem %s11, %s9027
      // Predicated region
      $region65: #{mdu_forward.1} parent=63 // pred_check
        %p9029 = pneg %p286
      $region66: #{mdu_forward.1} parent=63 // pred_check_branch
        %9031 = sbr.rel (%p9029) target = $region68
      $region67: #{mdu_forward.1} parent=63 // pred_region
        %s9032 = smul.u32 144, %s22
      $region68: #{mdu_forward.1} parent=63 // pred_fallthru
        _
    $region64: #{mdu_forward.1} parent=5 // pred_fallthru
      _
    %p9033 = scmp.le.s32.totalorder 2, %s17
    // Predicated region
    $region69: #{mdu_forward.1} parent=5 // pred_check
      %p9034 = pneg %p9033
    $region70: #{mdu_forward.1} parent=5 // pred_check_branch
      %9036 = sbr.rel (%p9034) target = $region72
    $region71: #{mdu_forward.1} parent=5 // pred_region
      %s9037 = ssub.s32 %s17, 2
      // Predicated region
      $region73: #{mdu_forward.1} parent=71 // pred_check
        %p9038 = pneg %p292
      $region74: #{mdu_forward.1} parent=71 // pred_check_branch
        %9040 = sbr.rel (%p9038) target = $region76
      $region75: #{mdu_forward.1} parent=71 // pred_region
        %s9041 = smul.u32 144, %s23
        %p9042 = scmp.lt.s32.totalorder %s9041, 575
        %s9043 = scalar_select %p9042, %s9041, 575
        %s9044 = smul.addr %s9043, 4
        %s9045 = scalar_lea.vmem %s11, %s9044
      $region76: #{mdu_forward.1} parent=71 // pred_fallthru
        _
    $region72: #{mdu_forward.1} parent=5 // pred_fallthru
      _
  $region6: #{mdu_forward.1} parent=0 // loop_footer
    %s21 = sadd.s32 1, %s17
  $region7: #{mdu_forward.1} parent=0 // loop_footer_branch
    %16 = sbr.rel target = $region3
  $region8: #{mdu_forward.1} parent=0 // loop_exit
    _

</llo_original>
